<compile_context>
chip_gen: v5e
topology: v5e:2x2
jax: 0.10.0
libtpu: 0.0.40
codegen_flags: <defaults>
</compile_context>

<pallas_src>
import functools

import jax
import jax.numpy as jnp
from jax.experimental import pallas as pl
from jax.experimental.pallas import tpu as pltpu

# Fixed architecture constants (from the PyTorch module).
C1, C2, NUM_CLASSES = 16, 32, 10


def _round_up(x, m):
    return (x + m - 1) // m * m


# ---------------- Pallas kernels ----------------

def _conv5_relu_pool_kernel(x_ref, w_ref, b_ref, o_ref, *, Q):
    """Fused 5x5 conv (single 25-tap im2col matmul) + 2x2 max-pool + bias + ReLU.

    x_ref: (1, 4*Q, K) bf16, rows ordered (dh, dw, h', w')  [K = round_up(25*Cin, 16)]
    w_ref: (K, 128)    bf16, Cout zero-padded to 128 lanes
    b_ref: (1, 128)    f32
    o_ref: (1, Q, 128) bf16, pooled output, rows ordered (h', w')
    """
    # One big MXU matmul: receptive-field accumulation happens in the MXU (f32 accumulate).
    y = jnp.dot(x_ref[0], w_ref[...], preferred_element_type=jnp.float32)      # (4Q, 128)
    # 2x2 max-pool = elementwise max of the 4 contiguous (Q, 128) parity blocks (8-aligned slices).
    p = jnp.maximum(jnp.maximum(y[0:Q], y[Q:2 * Q]),
                    jnp.maximum(y[2 * Q:3 * Q], y[3 * Q:4 * Q]))
    # bias + ReLU after the pool (per-channel bias + monotone ReLU commute with max) -> 4x less VPU.
    p = jnp.maximum(p + b_ref[...], 0.0)
    o_ref[0] = p.astype(o_ref.dtype)                                            # single store, bf16


def _fc_fused_kernel(x_ref, w1_ref, b1_ref, w2_ref, b2_ref, o_ref, acc_ref):
    """Fused Linear(2048,1024) -> Dropout(identity) -> Linear(1024,10 pad 128).

    Grid iterates over 512-wide slabs of fc1's output dim; FC2 partials accumulate in acc_ref.
    """
    j = pl.program_id(0)

    @pl.when(j == 0)
    def _():
        acc_ref[...] = jnp.zeros_like(acc_ref)

    h = jnp.dot(x_ref[...], w1_ref[...], preferred_element_type=jnp.float32) + b1_ref[...]
    # TODO(synk): Dropout(p=0.5) is identity at inference; train-mode RNG masking not implemented.
    acc_ref[...] += jnp.dot(h.astype(jnp.bfloat16), w2_ref[...],
                            preferred_element_type=jnp.float32)

    @pl.when(j == pl.num_programs(0) - 1)
    def _():
        o_ref[...] = acc_ref[...] + b2_ref[...]


# ---------------- Pallas wrappers ----------------

def conv5x5_relu_pool(x_nhwc, w_flat, b_pad):
    """Conv2d(k=5, s=1, p=2) + ReLU + MaxPool(2,2); output channels lane-padded to 128 (bf16).

    x_nhwc: (B, H, W, Cin); w_flat: (K, 128) bf16 with K = round_up(25*Cin, 16); b_pad: (1, 128) f32.
    Returns (B, (H//2)*(W//2), 128) bf16 with channels [0:Cout) valid, rows ordered (h', w').
    """
    B, H, W, Cin = x_nhwc.shape
    K = w_flat.shape[0]
    assert K == _round_up(25 * Cin, 16)
    Ho, Wo = H // 2, W // 2
    Q = Ho * Wo

    # Full 25-tap im2col in XLA (tensors are < ~0.5 MiB, fused into one copy fusion by XLA).
    xp = jnp.pad(x_nhwc, ((0, 0), (2, 2), (2, 2), (0, 0)))
    patches = jnp.concatenate(
        [xp[:, kh:kh + H, kw:kw + W, :] for kh in range(5) for kw in range(5)], axis=-1)
    if 25 * Cin < K:
        patches = jnp.pad(patches, ((0, 0), (0, 0), (0, 0), (0, K - 25 * Cin)))
    # Parity reorder to (dh, dw, h', w') so each pool candidate is a contiguous, 8-aligned Q-row block.
    xq = patches.reshape(B, Ho, 2, Wo, 2, K).transpose(0, 2, 4, 1, 3, 5).reshape(B, 4 * Q, K)
    xq = xq.astype(jnp.bfloat16)

    kernel = functools.partial(_conv5_relu_pool_kernel, Q=Q)
    flops = 2 * B * (4 * Q) * K * 128
    bytes_accessed = xq.size * 2 + w_flat.size * 2 + b_pad.size * 4 + B * Q * 128 * 2
    return pl.pallas_call(
        kernel,
        out_shape=jax.ShapeDtypeStruct((B, Q, 128), jnp.bfloat16),
        grid=(B,),
        in_specs=[
            pl.BlockSpec((1, 4 * Q, K), lambda b: (b, 0, 0)),
            pl.BlockSpec((K, 128), lambda b: (0, 0)),
            pl.BlockSpec((1, 128), lambda b: (0, 0)),
        ],
        out_specs=pl.BlockSpec((1, Q, 128), lambda b: (b, 0, 0)),
        compiler_params=pltpu.CompilerParams(dimension_semantics=("parallel",)),
        cost_estimate=pl.CostEstimate(flops=flops, transcendentals=0,
                                      bytes_accessed=bytes_accessed),
    )(xq, w_flat, b_pad)


def fc_forward(x, w1, b1, w2, b2, *, tn1=512):
    """Fused fc1+fc2: x (M, K1) bf16, w1 (K1, N1) bf16, w2 (N1, N2) bf16, biases f32 -> (M, N2) f32."""
    M, K1 = x.shape
    K1b, N1 = w1.shape
    N1b, N2 = w2.shape
    assert K1 == K1b and N1 == N1b and N2 % 128 == 0
    tn1 = min(tn1, N1)
    assert N1 % tn1 == 0
    grid = (N1 // tn1,)
    flops = 2 * M * K1 * N1 + 2 * M * N1 * N2
    bytes_accessed = M * K1 * 2 + K1 * N1 * 2 + N1 * N2 * 2 + (N1 + N2) * 4 + M * N2 * 4
    return pl.pallas_call(
        _fc_fused_kernel,
        out_shape=jax.ShapeDtypeStruct((M, N2), jnp.float32),
        grid=grid,
        in_specs=[
            pl.BlockSpec((M, K1), lambda j: (0, 0)),
            pl.BlockSpec((K1, tn1), lambda j: (0, j)),
            pl.BlockSpec((1, tn1), lambda j: (0, j)),
            pl.BlockSpec((tn1, N2), lambda j: (j, 0)),
            pl.BlockSpec((1, N2), lambda j: (0, 0)),
        ],
        out_specs=pl.BlockSpec((M, N2), lambda j: (0, 0)),
        scratch_shapes=[pltpu.VMEM((M, N2), jnp.float32)],
        compiler_params=pltpu.CompilerParams(dimension_semantics=("arbitrary",)),
        cost_estimate=pl.CostEstimate(flops=flops, transcendentals=0,
                                      bytes_accessed=bytes_accessed),
    )(x.astype(jnp.bfloat16), w1, b1, w2, b2)


# ---------------- ConvNet forward ----------------

def convnet_forward(x_nchw, p):
    x = jnp.transpose(x_nchw, (0, 2, 3, 1)).astype(jnp.float32)      # NCHW -> NHWC
    B, H, W, _ = x.shape

    # layer1: Conv(3->16, k5, p2) + ReLU + MaxPool2  (single fused kernel, one matmul/image)
    h = conv5x5_relu_pool(x, p["w1"], p["b1"])                       # (B, H/2*W/2, 128) bf16
    h = h[:, :, :C1].reshape(B, H // 2, W // 2, C1)
    # TODO(synk): conv1->conv2 im2col re-layout stays in XLA (tiny tensors); fusing it into conv1's
    # epilogue would need an in-kernel 25-way scatter.

    # layer2: Conv(16->32, k5, p2) + ReLU + MaxPool2  (single fused kernel, one matmul/image)
    h = conv5x5_relu_pool(h, p["w2"], p["b2"])                       # (B, H/4*W/4, 128) bf16

    # flatten in (h', w', c) order (layout-preserving); fc1 weight was pre-permuted from PyTorch's
    # (c, h, w) flatten order, so this matches nn.Linear(8*8*32, 1024) exactly.
    h = h[:, :, :C2].reshape(B, (H // 4) * (W // 4) * C2)            # (B, 2048) bf16

    # fc: Linear(2048,1024) -> Dropout(0.5) -> Linear(1024,10), fused into one pallas_call
    out = fc_forward(h, p["fc1_w"], p["fc1_b"], p["fc2_w"], p["fc2_b"])
    return out[:, :NUM_CLASSES]


# ---------------- parameters ----------------

def init_params(key):
    """PyTorch-shaped parameters (Conv: OIHW, Linear: (out, in))."""
    ks = jax.random.split(key, 8)
    s = 0.05
    return {
        "w1": s * jax.random.normal(ks[0], (C1, 3, 5, 5), jnp.float32),
        "b1": s * jax.random.normal(ks[1], (C1,), jnp.float32),
        "w2": s * jax.random.normal(ks[2], (C2, C1, 5, 5), jnp.float32),
        "b2": s * jax.random.normal(ks[3], (C2,), jnp.float32),
        "fc1_w": s * jax.random.normal(ks[4], (1024, 8 * 8 * C2), jnp.float32),
        "fc1_b": s * jax.random.normal(ks[5], (1024,), jnp.float32),
        "fc2_w": s * jax.random.normal(ks[6], (NUM_CLASSES, 1024), jnp.float32),
        "fc2_b": s * jax.random.normal(ks[7], (NUM_CLASSES,), jnp.float32),
    }


def prepare_params(p):
    """One-time conversion to kernel layout (outside jit): 25-tap flattened conv weights padded to
    128 lanes, fc1 weight pre-transposed + column-permuted to (h, w, c) flatten order, fc2 weight
    N-padded to 128; all matmul operands cast to bf16 once."""
    def conv_w(w_oihw):
        cout, cin = w_oihw.shape[0], w_oihw.shape[1]
        k = _round_up(25 * cin, 16)
        w = jnp.transpose(w_oihw, (2, 3, 1, 0)).reshape(25 * cin, cout)   # row = (kh*5+kw)*cin + ci
        w = jnp.pad(w, ((0, k - 25 * cin), (0, 128 - cout)))
        return w.astype(jnp.bfloat16)

    def conv_b(b):
        return jnp.pad(b, (0, 128 - b.shape[0])).reshape(1, 128).astype(jnp.float32)

    # fc1: PyTorch column order is (c, h, w); permute to our (h, w, c) flatten order + transpose.
    w1 = p["fc1_w"].reshape(1024, C2, 8, 8).transpose(2, 3, 1, 0).reshape(8 * 8 * C2, 1024)
    n2 = _round_up(NUM_CLASSES, 128)
    return {
        "w1": conv_w(p["w1"]), "b1": conv_b(p["b1"]),
        "w2": conv_w(p["w2"]), "b2": conv_b(p["b2"]),
        "fc1_w": w1.astype(jnp.bfloat16),                                  # (2048, 1024)
        "fc1_b": p["fc1_b"].reshape(1, -1).astype(jnp.float32),
        "fc2_w": jnp.pad(p["fc2_w"].T, ((0, 0), (0, n2 - NUM_CLASSES))).astype(jnp.bfloat16),
        "fc2_b": jnp.pad(p["fc2_b"], (0, n2 - NUM_CLASSES)).reshape(1, n2).astype(jnp.float32),
    }


# ---------------- pure-JAX f32 reference (for correctness check) ----------------

def reference_forward(x_nchw, p):
    def conv_relu_pool(x, w, b):
        y = jax.lax.conv_general_dilated(
            x, w, window_strides=(1, 1), padding=((2, 2), (2, 2)),
            dimension_numbers=("NCHW", "OIHW", "NCHW"))
        y = jnp.maximum(y + b[None, :, None, None], 0.0)
        B, C, H, W = y.shape
        return y.reshape(B, C, H // 2, 2, W // 2, 2).max(axis=(3, 5))

    h = conv_relu_pool(x_nchw, p["w1"], p["b1"])
    h = conv_relu_pool(h, p["w2"], p["b2"])
    h = h.reshape(h.shape[0], -1)
    h = h @ p["fc1_w"].T + p["fc1_b"]
    h = h @ p["fc2_w"].T + p["fc2_b"]
    return h


if __name__ == "__main__":
    key = jax.random.PRNGKey(0)
    kx, kp = jax.random.split(key)
    # fc expects 8*8*32 features after two 2x pools -> input spatial must be 32x32 (CIFAR-like)
    x = jax.random.normal(kx, (2, 3, 32, 32), jnp.float32)                  # NCHW like PyTorch
    params = init_params(kp)
    prepared = prepare_params(params)                                       # one-time, outside jit

    out = jax.jit(convnet_forward)(x, prepared)
    out = jax.block_until_ready(out)
    assert out.shape == (2, NUM_CLASSES) and out.dtype == jnp.float32

    ref = reference_forward(x, params)
    err = float(jnp.max(jnp.abs(out - ref)))
    assert err < 0.2, f"max abs error vs f32 reference: {err}"              # bf16 matmul/output tolerance
    print("KERNEL_OK")
</pallas_src>

<mosaic_0001>
module attributes {stable_mosaic.version = 11 : i64} {
  func.func @_conv5_relu_pool_kernel(%arg0: i32, %arg1: memref<1x1024x80xbf16, #tpu.memory_space<vmem>>, %arg2: memref<80x128xbf16, #tpu.memory_space<vmem>>, %arg3: memref<1x128xf32, #tpu.memory_space<vmem>>, %arg4: memref<1x256x128xbf16, #tpu.memory_space<vmem>>) attributes {dimension_semantics = [#tpu.dimension_semantics<parallel>], iteration_bounds = array<i64: 2>, scalar_prefetch = 0 : i64, scratch_operands = 0 : i64, tpu.core_type = #tpu.core_type<tc>, window_params = [{transform_indices = @transform_0, window_bounds = array<i64: 1, 1024, 80>}, {pipeline_mode = #tpu.pipeline_mode<synchronous>, transform_indices = @transform_1, window_bounds = array<i64: 80, 128>}, {pipeline_mode = #tpu.pipeline_mode<synchronous>, transform_indices = @transform_2, window_bounds = array<i64: 1, 128>}, {transform_indices = @transform_3, window_bounds = array<i64: 1, 256, 128>}]} {
    %c0 = arith.constant 0 : index
    %c0_0 = arith.constant 0 : index
    %c0_1 = arith.constant 0 : index
    %0 = vector.load %arg1[%c0, %c0_0, %c0_1] : memref<1x1024x80xbf16, #tpu.memory_space<vmem>>, vector<1x1024x80xbf16>
    %1 = vector.shape_cast %0 : vector<1x1024x80xbf16> to vector<1024x80xbf16>
    %c0_2 = arith.constant 0 : index
    %c0_3 = arith.constant 0 : index
    %2 = vector.load %arg2[%c0_2, %c0_3] : memref<80x128xbf16, #tpu.memory_space<vmem>>, vector<80x128xbf16>
    %cst = arith.constant dense<0.000000e+00> : vector<1024x128xf32>
    %3 = tpu.matmul %1, %2, %cst {dimension_numbers = #tpu.dot_dimension_numbers<[1], [0], [0], [1], [0, 0, 1, 1], [], []>} : vector<1024x80xbf16>, vector<80x128xbf16>, vector<1024x128xf32> -> vector<1024x128xf32>
    %4 = vector.extract_strided_slice %3 {offsets = [0, 0], sizes = [256, 128], strides = [1, 1]} : vector<1024x128xf32> to vector<256x128xf32>
    %5 = vector.extract_strided_slice %3 {offsets = [256, 0], sizes = [256, 128], strides = [1, 1]} : vector<1024x128xf32> to vector<256x128xf32>
    %6 = arith.maximumf %4, %5 : vector<256x128xf32>
    %7 = vector.extract_strided_slice %3 {offsets = [512, 0], sizes = [256, 128], strides = [1, 1]} : vector<1024x128xf32> to vector<256x128xf32>
    %8 = vector.extract_strided_slice %3 {offsets = [768, 0], sizes = [256, 128], strides = [1, 1]} : vector<1024x128xf32> to vector<256x128xf32>
    %9 = arith.maximumf %7, %8 : vector<256x128xf32>
    %10 = arith.maximumf %6, %9 : vector<256x128xf32>
    %c0_4 = arith.constant 0 : index
    %c0_5 = arith.constant 0 : index
    %11 = vector.load %arg3[%c0_4, %c0_5] : memref<1x128xf32, #tpu.memory_space<vmem>>, vector<1x128xf32>
    %12 = vector.broadcast %11 : vector<1x128xf32> to vector<256x128xf32>
    %13 = arith.addf %10, %12 : vector<256x128xf32>
    %cst_6 = arith.constant 0.000000e+00 : f32
    %14 = vector.broadcast %cst_6 : f32 to vector<256x128xf32>
    %15 = arith.maximumf %13, %14 : vector<256x128xf32>
    %16 = arith.truncf %15 : vector<256x128xf32> to vector<256x128xbf16>
    %c0_7 = arith.constant 0 : index
    %c0_8 = arith.constant 0 : index
    %c0_9 = arith.constant 0 : index
    %17 = vector.load %arg4[%c0_7, %c0_8, %c0_9] : memref<1x256x128xbf16, #tpu.memory_space<vmem>>, vector<1x256x128xbf16>
    %18 = vector.shape_cast %17 : vector<1x256x128xbf16> to vector<256x128xbf16>
    %19 = vector.shape_cast %16 : vector<256x128xbf16> to vector<1x256x128xbf16>
    tpu.vector_store %arg4[%c0_7, %c0_8, %c0_9], %19 {strides = array<i32>} : memref<1x256x128xbf16, #tpu.memory_space<vmem>>, vector<1x256x128xbf16>,
    return
  }
  func.func @transform_0(%arg0: i32) -> (i32, i32, i32) {
    %c0_i32 = arith.constant 0 : i32
    %c0_i32_0 = arith.constant 0 : i32
    %c0_i32_1 = arith.constant 0 : i32
    return %arg0, %c0_i32, %c0_i32_0 : i32, i32, i32
  }
  func.func @transform_1(%arg0: i32) -> (i32, i32) {
    %c0_i32 = arith.constant 0 : i32
    %c0_i32_0 = arith.constant 0 : i32
    %c0_i32_1 = arith.constant 0 : i32
    return %c0_i32, %c0_i32_0 : i32, i32
  }
  func.func @transform_2(%arg0: i32) -> (i32, i32) {
    %c0_i32 = arith.constant 0 : i32
    %c0_i32_0 = arith.constant 0 : i32
    %c0_i32_1 = arith.constant 0 : i32
    return %c0_i32, %c0_i32_0 : i32, i32
  }
  func.func @transform_3(%arg0: i32) -> (i32, i32, i32) {
    %c0_i32 = arith.constant 0 : i32
    %c0_i32_0 = arith.constant 0 : i32
    %c0_i32_1 = arith.constant 0 : i32
    return %arg0, %c0_i32, %c0_i32_0 : i32, i32, i32
  }
}

module attributes {stable_mosaic.version = 11 : i64} {
  func.func @_conv5_relu_pool_kernel(%arg0: i32, %arg1: memref<1x256x400xbf16, #tpu.memory_space<vmem>>, %arg2: memref<400x128xbf16, #tpu.memory_space<vmem>>, %arg3: memref<1x128xf32, #tpu.memory_space<vmem>>, %arg4: memref<1x64x128xbf16, #tpu.memory_space<vmem>>) attributes {dimension_semantics = [#tpu.dimension_semantics<parallel>], iteration_bounds = array<i64: 2>, scalar_prefetch = 0 : i64, scratch_operands = 0 : i64, tpu.core_type = #tpu.core_type<tc>, window_params = [{transform_indices = @transform_0, window_bounds = array<i64: 1, 256, 400>}, {pipeline_mode = #tpu.pipeline_mode<synchronous>, transform_indices = @transform_1, window_bounds = array<i64: 400, 128>}, {pipeline_mode = #tpu.pipeline_mode<synchronous>, transform_indices = @transform_2, window_bounds = array<i64: 1, 128>}, {transform_indices = @transform_3, window_bounds = array<i64: 1, 64, 128>}]} {
    %c0 = arith.constant 0 : index
    %c0_0 = arith.constant 0 : index
    %c0_1 = arith.constant 0 : index
    %0 = vector.load %arg1[%c0, %c0_0, %c0_1] : memref<1x256x400xbf16, #tpu.memory_space<vmem>>, vector<1x256x400xbf16>
    %1 = vector.shape_cast %0 : vector<1x256x400xbf16> to vector<256x400xbf16>
    %c0_2 = arith.constant 0 : index
    %c0_3 = arith.constant 0 : index
    %2 = vector.load %arg2[%c0_2, %c0_3] : memref<400x128xbf16, #tpu.memory_space<vmem>>, vector<400x128xbf16>
    %cst = arith.constant dense<0.000000e+00> : vector<256x128xf32>
    %3 = tpu.matmul %1, %2, %cst {dimension_numbers = #tpu.dot_dimension_numbers<[1], [0], [0], [1], [0, 0, 1, 1], [], []>} : vector<256x400xbf16>, vector<400x128xbf16>, vector<256x128xf32> -> vector<256x128xf32>
    %4 = vector.extract_strided_slice %3 {offsets = [0, 0], sizes = [64, 128], strides = [1, 1]} : vector<256x128xf32> to vector<64x128xf32>
    %5 = vector.extract_strided_slice %3 {offsets = [64, 0], sizes = [64, 128], strides = [1, 1]} : vector<256x128xf32> to vector<64x128xf32>
    %6 = arith.maximumf %4, %5 : vector<64x128xf32>
    %7 = vector.extract_strided_slice %3 {offsets = [128, 0], sizes = [64, 128], strides = [1, 1]} : vector<256x128xf32> to vector<64x128xf32>
    %8 = vector.extract_strided_slice %3 {offsets = [192, 0], sizes = [64, 128], strides = [1, 1]} : vector<256x128xf32> to vector<64x128xf32>
    %9 = arith.maximumf %7, %8 : vector<64x128xf32>
    %10 = arith.maximumf %6, %9 : vector<64x128xf32>
    %c0_4 = arith.constant 0 : index
    %c0_5 = arith.constant 0 : index
    %11 = vector.load %arg3[%c0_4, %c0_5] : memref<1x128xf32, #tpu.memory_space<vmem>>, vector<1x128xf32>
    %12 = vector.broadcast %11 : vector<1x128xf32> to vector<64x128xf32>
    %13 = arith.addf %10, %12 : vector<64x128xf32>
    %cst_6 = arith.constant 0.000000e+00 : f32
    %14 = vector.broadcast %cst_6 : f32 to vector<64x128xf32>
    %15 = arith.maximumf %13, %14 : vector<64x128xf32>
    %16 = arith.truncf %15 : vector<64x128xf32> to vector<64x128xbf16>
    %c0_7 = arith.constant 0 : index
    %c0_8 = arith.constant 0 : index
    %c0_9 = arith.constant 0 : index
    %17 = vector.load %arg4[%c0_7, %c0_8, %c0_9] : memref<1x64x128xbf16, #tpu.memory_space<vmem>>, vector<1x64x128xbf16>
    %18 = vector.shape_cast %17 : vector<1x64x128xbf16> to vector<64x128xbf16>
    %19 = vector.shape_cast %16 : vector<64x128xbf16> to vector<1x64x128xbf16>
    tpu.vector_store %arg4[%c0_7, %c0_8, %c0_9], %19 {strides = array<i32>} : memref<1x64x128xbf16, #tpu.memory_space<vmem>>, vector<1x64x128xbf16>,
    return
  }
  func.func @transform_0(%arg0: i32) -> (i32, i32, i32) {
    %c0_i32 = arith.constant 0 : i32
    %c0_i32_0 = arith.constant 0 : i32
    %c0_i32_1 = arith.constant 0 : i32
    return %arg0, %c0_i32, %c0_i32_0 : i32, i32, i32
  }
  func.func @transform_1(%arg0: i32) -> (i32, i32) {
    %c0_i32 = arith.constant 0 : i32
    %c0_i32_0 = arith.constant 0 : i32
    %c0_i32_1 = arith.constant 0 : i32
    return %c0_i32, %c0_i32_0 : i32, i32
  }
  func.func @transform_2(%arg0: i32) -> (i32, i32) {
    %c0_i32 = arith.constant 0 : i32
    %c0_i32_0 = arith.constant 0 : i32
    %c0_i32_1 = arith.constant 0 : i32
    return %c0_i32, %c0_i32_0 : i32, i32
  }
  func.func @transform_3(%arg0: i32) -> (i32, i32, i32) {
    %c0_i32 = arith.constant 0 : i32
    %c0_i32_0 = arith.constant 0 : i32
    %c0_i32_1 = arith.constant 0 : i32
    return %arg0, %c0_i32, %c0_i32_0 : i32, i32, i32
  }
}

module attributes {stable_mosaic.version = 11 : i64} {
  func.func @_fc_fused_kernel(%arg0: i32, %arg1: memref<2x2048xbf16, #tpu.memory_space<vmem>>, %arg2: memref<2048x512xbf16, #tpu.memory_space<vmem>>, %arg3: memref<1x512xf32, #tpu.memory_space<vmem>>, %arg4: memref<512x128xbf16, #tpu.memory_space<vmem>>, %arg5: memref<1x128xf32, #tpu.memory_space<vmem>>, %arg6: memref<2x128xf32, #tpu.memory_space<vmem>>, %arg7: memref<2x128xf32, #tpu.memory_space<vmem>>) attributes {dimension_semantics = [#tpu.dimension_semantics<arbitrary>], iteration_bounds = array<i64: 2>, scalar_prefetch = 0 : i64, scratch_operands = 1 : i64, tpu.core_type = #tpu.core_type<tc>, window_params = [{pipeline_mode = #tpu.pipeline_mode<synchronous>, transform_indices = @transform_0, window_bounds = array<i64: 2, 2048>}, {transform_indices = @transform_1, window_bounds = array<i64: 2048, 512>}, {transform_indices = @transform_2, window_bounds = array<i64: 1, 512>}, {transform_indices = @transform_3, window_bounds = array<i64: 512, 128>}, {pipeline_mode = #tpu.pipeline_mode<synchronous>, transform_indices = @transform_4, window_bounds = array<i64: 1, 128>}, {pipeline_mode = #tpu.pipeline_mode<synchronous>, transform_indices = @transform_5, window_bounds = array<i64: 2, 128>}]} {
    %c0_i32 = arith.constant 0 : i32
    %0 = arith.cmpi eq, %arg0, %c0_i32 : i32
    %1 = arith.extui %0 : i1 to i32
    %c0_i32_0 = arith.constant 0 : i32
    %2 = arith.cmpi ne, %1, %c0_i32_0 : i32
    scf.if %2 {
      %cst_14 = arith.constant 0.000000e+00 : f32
      %18 = vector.broadcast %cst_14 : f32 to vector<2x128xf32>
      %c0_15 = arith.constant 0 : index
      %c0_16 = arith.constant 0 : index
      %19 = vector.load %arg7[%c0_15, %c0_16] : memref<2x128xf32, #tpu.memory_space<vmem>>, vector<2x128xf32>
      tpu.vector_store %arg7[%c0_15, %c0_16], %18 {strides = array<i32>} : memref<2x128xf32, #tpu.memory_space<vmem>>, vector<2x128xf32>,
    } else {
    }
    %c0 = arith.constant 0 : index
    %c0_1 = arith.constant 0 : index
    %3 = vector.load %arg1[%c0, %c0_1] : memref<2x2048xbf16, #tpu.memory_space<vmem>>, vector<2x2048xbf16>
    %c0_2 = arith.constant 0 : index
    %c0_3 = arith.constant 0 : index
    %4 = vector.load %arg2[%c0_2, %c0_3] : memref<2048x512xbf16, #tpu.memory_space<vmem>>, vector<2048x512xbf16>
    %cst = arith.constant dense<0.000000e+00> : vector<2x512xf32>
    %5 = tpu.matmul %3, %4, %cst {dimension_numbers = #tpu.dot_dimension_numbers<[1], [0], [0], [1], [0, 0, 1, 1], [], []>} : vector<2x2048xbf16>, vector<2048x512xbf16>, vector<2x512xf32> -> vector<2x512xf32>
    %c0_4 = arith.constant 0 : index
    %c0_5 = arith.constant 0 : index
    %6 = vector.load %arg3[%c0_4, %c0_5] : memref<1x512xf32, #tpu.memory_space<vmem>>, vector<1x512xf32>
    %7 = vector.broadcast %6 : vector<1x512xf32> to vector<2x512xf32>
    %8 = arith.addf %5, %7 : vector<2x512xf32>
    %c0_6 = arith.constant 0 : index
    %c0_7 = arith.constant 0 : index
    %9 = vector.load %arg7[%c0_6, %c0_7] : memref<2x128xf32, #tpu.memory_space<vmem>>, vector<2x128xf32>
    %10 = arith.truncf %8 : vector<2x512xf32> to vector<2x512xbf16>
    %c0_8 = arith.constant 0 : index
    %c0_9 = arith.constant 0 : index
    %11 = vector.load %arg4[%c0_8, %c0_9] : memref<512x128xbf16, #tpu.memory_space<vmem>>, vector<512x128xbf16>
    %cst_10 = arith.constant dense<0.000000e+00> : vector<2x128xf32>
    %12 = tpu.matmul %10, %11, %cst_10 {dimension_numbers = #tpu.dot_dimension_numbers<[1], [0], [0], [1], [0, 0, 1, 1], [], []>} : vector<2x512xbf16>, vector<512x128xbf16>, vector<2x128xf32> -> vector<2x128xf32>
    %13 = arith.addf %9, %12 : vector<2x128xf32>
    %c0_11 = arith.constant 0 : index
    %c0_12 = arith.constant 0 : index
    %14 = vector.load %arg7[%c0_11, %c0_12] : memref<2x128xf32, #tpu.memory_space<vmem>>, vector<2x128xf32>
    tpu.vector_store %arg7[%c0_11, %c0_12], %13 {strides = array<i32>} : memref<2x128xf32, #tpu.memory_space<vmem>>, vector<2x128xf32>,
    %c1_i32 = arith.constant 1 : i32
    %15 = arith.cmpi eq, %arg0, %c1_i32 : i32
    %16 = arith.extui %15 : i1 to i32
    %c0_i32_13 = arith.constant 0 : i32
    %17 = arith.cmpi ne, %16, %c0_i32_13 : i32
    scf.if %17 {
      %c0_14 = arith.constant 0 : index
      %c0_15 = arith.constant 0 : index
      %18 = vector.load %arg7[%c0_14, %c0_15] : memref<2x128xf32, #tpu.memory_space<vmem>>, vector<2x128xf32>
      %c0_16 = arith.constant 0 : index
      %c0_17 = arith.constant 0 : index
      %19 = vector.load %arg5[%c0_16, %c0_17] : memref<1x128xf32, #tpu.memory_space<vmem>>, vector<1x128xf32>
      %20 = vector.broadcast %19 : vector<1x128xf32> to vector<2x128xf32>
      %21 = arith.addf %18, %20 : vector<2x128xf32>
      %c0_18 = arith.constant 0 : index
      %c0_19 = arith.constant 0 : index
      %22 = vector.load %arg6[%c0_18, %c0_19] : memref<2x128xf32, #tpu.memory_space<vmem>>, vector<2x128xf32>
      tpu.vector_store %arg6[%c0_18, %c0_19], %21 {strides = array<i32>} : memref<2x128xf32, #tpu.memory_space<vmem>>, vector<2x128xf32>,
    } else {
    }
    return
  }
  func.func @transform_0(%arg0: i32) -> (i32, i32) {
    %c0_i32 = arith.constant 0 : i32
    %c0_i32_0 = arith.constant 0 : i32
    %c0_i32_1 = arith.constant 0 : i32
    return %c0_i32, %c0_i32_0 : i32, i32
  }
  func.func @transform_1(%arg0: i32) -> (i32, i32) {
    %c0_i32 = arith.constant 0 : i32
    %c0_i32_0 = arith.constant 0 : i32
    return %c0_i32, %arg0 : i32, i32
  }
  func.func @transform_2(%arg0: i32) -> (i32, i32) {
    %c0_i32 = arith.constant 0 : i32
    %c0_i32_0 = arith.constant 0 : i32
    return %c0_i32, %arg0 : i32, i32
  }
  func.func @transform_3(%arg0: i32) -> (i32, i32) {
    %c0_i32 = arith.constant 0 : i32
    %c0_i32_0 = arith.constant 0 : i32
    return %arg0, %c0_i32 : i32, i32
  }
  func.func @transform_4(%arg0: i32) -> (i32, i32) {
    %c0_i32 = arith.constant 0 : i32
    %c0_i32_0 = arith.constant 0 : i32
    %c0_i32_1 = arith.constant 0 : i32
    return %c0_i32, %c0_i32_0 : i32, i32
  }
  func.func @transform_5(%arg0: i32) -> (i32, i32) {
    %c0_i32 = arith.constant 0 : i32
    %c0_i32_0 = arith.constant 0 : i32
    %c0_i32_1 = arith.constant 0 : i32
    return %c0_i32, %c0_i32_0 : i32, i32
  }
}

</mosaic_0001>

<llo_original>
// kernel: convnet_forward.3
$region0: #{convnet_forward.3}
  #allocation0 [shape = 'u32[]', space=smem, size = 0x4, offset = 0x4, fixed_abs, tag = 'smem constant byte address 0x4 - core index']
  #allocation1 [shape = 'u32[72,128]{1,0:T(1,128)}', space=vmem, size = 0x9000, scoped, tag = 'internal scratch']
  %s0 = inlined_call_operand.vmem [shape: bf16[2,1024,80], index: 0, kind: input, shape index: {}]
  %s1 = inlined_call_operand.vmem [shape: bf16[80,128], index: 1, kind: input, shape index: {}]
  %s2 = inlined_call_operand.vmem [shape: f32[1,128], index: 2, kind: input, shape index: {}]
  %s3 = inlined_call_operand.vmem [shape: bf16[2,256,128], index: 3, kind: output, shape index: {}]
  %s4 = sld [smem:[#allocation0]]
  $region45: #{convnet_forward.3} parent=0
    _
  %s6 = ssub.s32 1, %s4
  %s7 = scalar_select 0, %s6, %s4
  loop: start=0, step=1, limit=4
  $region2: #{convnet_forward.3} parent=0 // loop_pre_header
    _
  $region3: #{convnet_forward.3} parent=0 // loop_header
    %s9 = sphi 0, %s13
    %p10 = scmp.ge.s32.totalorder %s9, 4
    %s19 = sphi 0, %s21
    %s22 = sphi 0, %s19
    %s23 = sphi 0, %s22
    %s39 = sphi 0, %s23
    %s43 = sphi 0, %s43
    %s45 = sphi 0, %s43
    %s46 = sphi 0, %s45
    %s60 = sphi 0, %s46
    %s64 = sphi 0, %s64
    %s66 = sphi 0, %s64
    %s67 = sphi 0, %s66
    %s81 = sphi 0, %s67
    %s87 = sphi 0, %s89
    %s90 = sphi 0, %s87
    %s91 = sphi 0, %s90
    %s107 = sphi 0, %s91
  $region4: #{convnet_forward.3} parent=0 // loop_header_branch
    %12 = sbr.rel (%p10) target = $region8
  $region5: #{convnet_forward.3} parent=0 // loop_body
    %s14 = ssub.s32 %s9, 1
    %s15 = ssub.s32 %s9, 2
    %s16 = sadd.s32 %s9, 1
    %s17 = ssub.s32 %s9, %s16
    %p18 = scmp.eq.s32.totalorder %s17, 0
    %s20 = sadd.s32 %s19, 1
    %s21 = scalar_select %p18, %s19, %s20
    %p24 = pneg %p18
    %p25 = scmp.eq.s32.totalorder %s9, 1
    %p26 = por %p24, %p25
    %p27 = scmp.ne.s32.totalorder %s19, %s22
    %p28 = scmp.eq.s32.totalorder %s9, 0
    %p29 = por %p27, %p28
    %p30 = scmp.ne.s32.totalorder %s19, %s22
    %p31 = scmp.eq.s32.totalorder %s14, 1
    %p32 = por %p30, %p31
    %p33 = scmp.ne.s32.totalorder %s22, %s23
    %p34 = scmp.eq.s32.totalorder %s14, 0
    %p35 = por %p33, %p34
    %p36 = scmp.ne.s32.totalorder %s22, %s23
    %p37 = scmp.eq.s32.totalorder %s15, 1
    %p38 = por %p36, %p37
    %p40 = scmp.ne.s32.totalorder %s23, %s39
    %p41 = scmp.eq.s32.totalorder %s15, 0
    %p42 = por %p40, %p41
    %s44 = sadd.s32 %s43, 1
    %p47 = scmp.eq.s32.totalorder %s9, 1
    %p48 = scmp.ne.s32.totalorder %s43, %s45
    %p49 = scmp.eq.s32.totalorder %s9, 0
    %p50 = por %p48, %p49
    %p51 = scmp.ne.s32.totalorder %s43, %s45
    %p52 = scmp.eq.s32.totalorder %s14, 1
    %p53 = por %p51, %p52
    %p54 = scmp.ne.s32.totalorder %s45, %s46
    %p55 = scmp.eq.s32.totalorder %s14, 0
    %p56 = por %p54, %p55
    %p57 = scmp.ne.s32.totalorder %s45, %s46
    %p58 = scmp.eq.s32.totalorder %s15, 1
    %p59 = por %p57, %p58
    %p61 = scmp.ne.s32.totalorder %s46, %s60
    %p62 = scmp.eq.s32.totalorder %s15, 0
    %p63 = por %p61, %p62
    %s65 = sadd.s32 %s64, 1
    %p68 = scmp.eq.s32.totalorder %s9, 1
    %p69 = scmp.ne.s32.totalorder %s64, %s66
    %p70 = scmp.eq.s32.totalorder %s9, 0
    %p71 = por %p69, %p70
    %p72 = scmp.ne.s32.totalorder %s64, %s66
    %p73 = scmp.eq.s32.totalorder %s14, 1
    %p74 = por %p72, %p73
    %p75 = scmp.ne.s32.totalorder %s66, %s67
    %p76 = scmp.eq.s32.totalorder %s14, 0
    %p77 = por %p75, %p76
    %p78 = scmp.ne.s32.totalorder %s66, %s67
    %p79 = scmp.eq.s32.totalorder %s15, 1
    %p80 = por %p78, %p79
    %p82 = scmp.ne.s32.totalorder %s67, %s81
    %p83 = scmp.eq.s32.totalorder %s15, 0
    %p84 = por %p82, %p83
    %s85 = ssub.s32 %s9, %s16
    %p86 = scmp.eq.s32.totalorder %s85, 0
    %s88 = sadd.s32 %s87, 1
    %s89 = scalar_select %p86, %s87, %s88
    %p92 = pneg %p86
    %p93 = scmp.eq.s32.totalorder %s9, 1
    %p94 = por %p92, %p93
    %p95 = scmp.ne.s32.totalorder %s87, %s90
    %p96 = scmp.eq.s32.totalorder %s9, 0
    %p97 = por %p95, %p96
    %p98 = scmp.ne.s32.totalorder %s87, %s90
    %p99 = scmp.eq.s32.totalorder %s14, 1
    %p100 = por %p98, %p99
    %p101 = scmp.ne.s32.totalorder %s90, %s91
    %p102 = scmp.eq.s32.totalorder %s14, 0
    %p103 = por %p101, %p102
    %p104 = scmp.ne.s32.totalorder %s90, %s91
    %p105 = scmp.eq.s32.totalorder %s15, 1
    %p106 = por %p104, %p105
    %p108 = scmp.ne.s32.totalorder %s91, %s107
    %p109 = scmp.eq.s32.totalorder %s15, 0
    %p110 = por %p108, %p109
    %p111 = scmp.le.s32.totalorder 1, %s9
    %p112 = scmp.lt.s32.totalorder %s9, 3
    %p113 = pnand %p111, %p112
    %p114 = pneg %p113
    // Predicated region
    $region9: #{convnet_forward.3} parent=5 // pred_check
      _
    $region10: #{convnet_forward.3} parent=5 // pred_check_branch
      %116 = sbr.rel (%p113) target = $region12
    $region11: #{convnet_forward.3} parent=5 // pred_region
      %s117 = ssub.s32 %s9, 1
      // Predicated region
      $region13: #{convnet_forward.3} parent=11 // pred_check
        %p118 = pneg %p56
      $region14: #{convnet_forward.3} parent=11 // pred_check_branch
        %120 = sbr.rel (%p118) target = $region16
      $region15: #{convnet_forward.3} parent=11 // pred_region
        _
      $region16: #{convnet_forward.3} parent=11 // pred_fallthru
        _
      // Predicated region
      $region17: #{convnet_forward.3} parent=11 // pred_check
        %p121 = pneg %p77
      $region18: #{convnet_forward.3} parent=11 // pred_check_branch
        %123 = sbr.rel (%p121) target = $region20
      $region19: #{convnet_forward.3} parent=11 // pred_region
        _
      $region20: #{convnet_forward.3} parent=11 // pred_fallthru
        _
    $region12: #{convnet_forward.3} parent=5 // pred_fallthru
      _
    %p124 = scmp.lt.s32.totalorder %s9, 2
    // Predicated region
    $region21: #{convnet_forward.3} parent=5 // pred_check
      %p125 = pneg %p124
    $region22: #{convnet_forward.3} parent=5 // pred_check_branch
      %127 = sbr.rel (%p125) target = $region24
    $region23: #{convnet_forward.3} parent=5 // pred_region
      // Predicated region
      $region25: #{convnet_forward.3} parent=23 // pred_check
        %p128 = pneg %p29
      $region26: #{convnet_forward.3} parent=23 // pred_check_branch
        %130 = sbr.rel (%p128) target = $region28
      $region27: #{convnet_forward.3} parent=23 // pred_region
        %p131 = scmp.lt.s32.totalorder %s9, 1
        %s132 = scalar_select %p131, %s9, 1
        %s133 = smul.addr %s132, 128
        %s134 = smul.addr %s133, 4
        %s135 = scalar_lea.vmem %s0, %s134
      $region28: #{convnet_forward.3} parent=23 // pred_fallthru
        _
    $region24: #{convnet_forward.3} parent=5 // pred_fallthru
      _
    %p136 = scmp.le.s32.totalorder 1, %s9
    %p137 = scmp.lt.s32.totalorder %s9, 3
    %p138 = pnand %p136, %p137
    %p139 = pneg %p138
    // Predicated region
    $region29: #{convnet_forward.3} parent=5 // pred_check
      _
    $region30: #{convnet_forward.3} parent=5 // pred_check_branch
      %141 = sbr.rel (%p138) target = $region32
    $region31: #{convnet_forward.3} parent=5 // pred_region
      %s142 = ssub.s32 %s9, 1
      %p143 = scmp.lt.s32.totalorder %s14, 1
      %s144 = scalar_select %p143, %s14, 1
      %s145 = smul.addr %s144, 128
      %s146 = smul.addr %s145, 4
      %s147 = scalar_lea.vmem %s0, %s146
      %p148 = pneg %p35
      %p149 = pneg %p32
      %p150 = pneg %p56
      %p151 = pneg %p53
      %p152 = pneg %p77
      %p153 = pneg %p74
      %p154 = pneg %p103
      %p155 = pneg %p100
      %p156 = scmp.lt.s32.totalorder %s14, 1
      %s157 = scalar_select %p156, %s14, 1
      %s158 = smul.addr %s157, 32
      %s159 = smul.addr %s158, 4
      %s160 = scalar_lea.vmem %s3, %s159
      %p161 = scmp.lt.s32.totalorder %s14, 1
      %s162 = scalar_select %p161, %s14, 1
      %s163 = smul.addr %s162, 128
      %s164 = smul.addr %s163, 4
      %s165 = scalar_lea.vmem %s0, %s164
      %p166 = scmp.lt.s32.totalorder %s14, 1
      %s167 = scalar_select %p166, %s14, 1
      %s168 = smul.addr %s167, 32
      %s169 = smul.addr %s168, 4
      %s170 = scalar_lea.vmem %s3, %s169
      %v172 = vld [vmem:[%s165] sm:$0xf]
      %v173 = vld [vmem:[%s165 + $0x4] sm:$0xf]
      %v174 = vld [vmem:[%s165 + $0x8] sm:$0xf]
      %v175 = vld [vmem:[%s165 + $0xc] sm:$0xf]
      %v176 = vld [vmem:[%s165 + $0x10] sm:$0xf]
      %v177 = vld [vmem:[%s165 + $0x14] sm:$0xf]
      %v178 = vld [vmem:[%s165 + $0x18] sm:$0xf]
      %v179 = vld [vmem:[%s165 + $0x1c] sm:$0xf]
      %v180 = vld [vmem:[%s165 + $0x20] sm:$0xf]
      %v181 = vld [vmem:[%s165 + $0x24] sm:$0xf]
      %v182 = vld [vmem:[%s165 + $0x28] sm:$0xf]
      %v183 = vld [vmem:[%s165 + $0x2c] sm:$0xf]
      %v184 = vld [vmem:[%s165 + $0x30] sm:$0xf]
      %v185 = vld [vmem:[%s165 + $0x34] sm:$0xf]
      %v186 = vld [vmem:[%s165 + $0x38] sm:$0xf]
      %v187 = vld [vmem:[%s165 + $0x3c] sm:$0xf]
      %v188 = vld [vmem:[%s165 + $0x40] sm:$0xf]
      %v189 = vld [vmem:[%s165 + $0x44] sm:$0xf]
      %v190 = vld [vmem:[%s165 + $0x48] sm:$0xf]
      %v191 = vld [vmem:[%s165 + $0x4c] sm:$0xf]
      %v192 = vld [vmem:[%s165 + $0x50] sm:$0xf]
      %v193 = vld [vmem:[%s165 + $0x54] sm:$0xf]
      %v194 = vld [vmem:[%s165 + $0x58] sm:$0xf]
      %v195 = vld [vmem:[%s165 + $0x5c] sm:$0xf]
      %v196 = vld [vmem:[%s165 + $0x60] sm:$0xf]
      %v197 = vld [vmem:[%s165 + $0x64] sm:$0xf]
      %v198 = vld [vmem:[%s165 + $0x68] sm:$0xf]
      %v199 = vld [vmem:[%s165 + $0x6c] sm:$0xf]
      %v200 = vld [vmem:[%s165 + $0x70] sm:$0xf]
      %v201 = vld [vmem:[%s165 + $0x74] sm:$0xf]
      %v202 = vld [vmem:[%s165 + $0x78] sm:$0xf]
      %v203 = vld [vmem:[%s165 + $0x7c] sm:$0xf]
      %v204 = vld [vmem:[%s165 + $0x80] sm:$0xf]
      %v205 = vld [vmem:[%s165 + $0x84] sm:$0xf]
      %v206 = vld [vmem:[%s165 + $0x88] sm:$0xf]
      %v207 = vld [vmem:[%s165 + $0x8c] sm:$0xf]
      %v208 = vld [vmem:[%s165 + $0x90] sm:$0xf]
      %v209 = vld [vmem:[%s165 + $0x94] sm:$0xf]
      %v210 = vld [vmem:[%s165 + $0x98] sm:$0xf]
      %v211 = vld [vmem:[%s165 + $0x9c] sm:$0xf]
      %v212 = vld [vmem:[%s165 + $0xa0] sm:$0xf]
      %v213 = vld [vmem:[%s165 + $0xa4] sm:$0xf]
      %v214 = vld [vmem:[%s165 + $0xa8] sm:$0xf]
      %v215 = vld [vmem:[%s165 + $0xac] sm:$0xf]
      %v216 = vld [vmem:[%s165 + $0xb0] sm:$0xf]
      %v217 = vld [vmem:[%s165 + $0xb4] sm:$0xf]
      %v218 = vld [vmem:[%s165 + $0xb8] sm:$0xf]
      %v219 = vld [vmem:[%s165 + $0xbc] sm:$0xf]
      %v220 = vld [vmem:[%s165 + $0xc0] sm:$0xf]
      %v221 = vld [vmem:[%s165 + $0xc4] sm:$0xf]
      %v222 = vld [vmem:[%s165 + $0xc8] sm:$0xf]
      %v223 = vld [vmem:[%s165 + $0xcc] sm:$0xf]
      %v224 = vld [vmem:[%s165 + $0xd0] sm:$0xf]
      %v225 = vld [vmem:[%s165 + $0xd4] sm:$0xf]
      %v226 = vld [vmem:[%s165 + $0xd8] sm:$0xf]
      %v227 = vld [vmem:[%s165 + $0xdc] sm:$0xf]
      %v228 = vld [vmem:[%s165 + $0xe0] sm:$0xf]
      %v229 = vld [vmem:[%s165 + $0xe4] sm:$0xf]
      %v230 = vld [vmem:[%s165 + $0xe8] sm:$0xf]
      %v231 = vld [vmem:[%s165 + $0xec] sm:$0xf]
      %v232 = vld [vmem:[%s165 + $0xf0] sm:$0xf]
      %v233 = vld [vmem:[%s165 + $0xf4] sm:$0xf]
      %v234 = vld [vmem:[%s165 + $0xf8] sm:$0xf]
      %v235 = vld [vmem:[%s165 + $0xfc] sm:$0xf]
      %v236 = vld [vmem:[%s165 + $0x100] sm:$0xf]
      %v237 = vld [vmem:[%s165 + $0x104] sm:$0xf]
      %v238 = vld [vmem:[%s165 + $0x108] sm:$0xf]
      %v239 = vld [vmem:[%s165 + $0x10c] sm:$0xf]
      %v240 = vld [vmem:[%s165 + $0x110] sm:$0xf]
      %v241 = vld [vmem:[%s165 + $0x114] sm:$0xf]
      %v242 = vld [vmem:[%s165 + $0x118] sm:$0xf]
      %v243 = vld [vmem:[%s165 + $0x11c] sm:$0xf]
      %v244 = vld [vmem:[%s165 + $0x120] sm:$0xf]
      %v245 = vld [vmem:[%s165 + $0x124] sm:$0xf]
      %v246 = vld [vmem:[%s165 + $0x128] sm:$0xf]
      %v247 = vld [vmem:[%s165 + $0x12c] sm:$0xf]
      %v248 = vld [vmem:[%s165 + $0x130] sm:$0xf]
      %v249 = vld [vmem:[%s165 + $0x134] sm:$0xf]
      %v250 = vld [vmem:[%s165 + $0x138] sm:$0xf]
      %v251 = vld [vmem:[%s165 + $0x13c] sm:$0xf]
      %v252 = vld [vmem:[%s165 + $0x140] sm:$0xf]
      %v253 = vld [vmem:[%s165 + $0x144] sm:$0xf]
      %v254 = vld [vmem:[%s165 + $0x148] sm:$0xf]
      %v255 = vld [vmem:[%s165 + $0x14c] sm:$0xf]
      %v256 = vld [vmem:[%s165 + $0x150] sm:$0xf]
      %v257 = vld [vmem:[%s165 + $0x154] sm:$0xf]
      %v258 = vld [vmem:[%s165 + $0x158] sm:$0xf]
      %v259 = vld [vmem:[%s165 + $0x15c] sm:$0xf]
      %v260 = vld [vmem:[%s165 + $0x160] sm:$0xf]
      %v261 = vld [vmem:[%s165 + $0x164] sm:$0xf]
      %v262 = vld [vmem:[%s165 + $0x168] sm:$0xf]
      %v263 = vld [vmem:[%s165 + $0x16c] sm:$0xf]
      %v264 = vld [vmem:[%s165 + $0x170] sm:$0xf]
      %v265 = vld [vmem:[%s165 + $0x174] sm:$0xf]
      %v266 = vld [vmem:[%s165 + $0x178] sm:$0xf]
      %v267 = vld [vmem:[%s165 + $0x17c] sm:$0xf]
      %v268 = vld [vmem:[%s165 + $0x180] sm:$0xf]
      %v269 = vld [vmem:[%s165 + $0x184] sm:$0xf]
      %v270 = vld [vmem:[%s165 + $0x188] sm:$0xf]
      %v271 = vld [vmem:[%s165 + $0x18c] sm:$0xf]
      %v272 = vld [vmem:[%s165 + $0x190] sm:$0xf]
      %v273 = vld [vmem:[%s165 + $0x194] sm:$0xf]
      %v274 = vld [vmem:[%s165 + $0x198] sm:$0xf]
      %v275 = vld [vmem:[%s165 + $0x19c] sm:$0xf]
      %v276 = vld [vmem:[%s165 + $0x1a0] sm:$0xf]
      %v277 = vld [vmem:[%s165 + $0x1a4] sm:$0xf]
      %v278 = vld [vmem:[%s165 + $0x1a8] sm:$0xf]
      %v279 = vld [vmem:[%s165 + $0x1ac] sm:$0xf]
      %v280 = vld [vmem:[%s165 + $0x1b0] sm:$0xf]
      %v281 = vld [vmem:[%s165 + $0x1b4] sm:$0xf]
      %v282 = vld [vmem:[%s165 + $0x1b8] sm:$0xf]
      %v283 = vld [vmem:[%s165 + $0x1bc] sm:$0xf]
      %v284 = vld [vmem:[%s165 + $0x1c0] sm:$0xf]
      %v285 = vld [vmem:[%s165 + $0x1c4] sm:$0xf]
      %v286 = vld [vmem:[%s165 + $0x1c8] sm:$0xf]
      %v287 = vld [vmem:[%s165 + $0x1cc] sm:$0xf]
      %v288 = vld [vmem:[%s165 + $0x1d0] sm:$0xf]
      %v289 = vld [vmem:[%s165 + $0x1d4] sm:$0xf]
      %v290 = vld [vmem:[%s165 + $0x1d8] sm:$0xf]
      %v291 = vld [vmem:[%s165 + $0x1dc] sm:$0xf]
      %v292 = vld [vmem:[%s165 + $0x1e0] sm:$0xf]
      %v293 = vld [vmem:[%s165 + $0x1e4] sm:$0xf]
      %v294 = vld [vmem:[%s165 + $0x1e8] sm:$0xf]
      %v295 = vld [vmem:[%s165 + $0x1ec] sm:$0xf]
      %v296 = vld [vmem:[%s165 + $0x1f0] sm:$0xf]
      %v297 = vld [vmem:[%s165 + $0x1f4] sm:$0xf]
      %v298 = vld [vmem:[%s165 + $0x1f8] sm:$0xf]
      %v299 = vld [vmem:[%s165 + $0x1fc] sm:$0xf]
      %v300 = vld [vmem:[%s1] sm:$0xf]
      %v301 = vld [vmem:[%s1 + $0x4] sm:$0xf]
      %v302 = vld [vmem:[%s1 + $0x8] sm:$0xf]
      %v303 = vld [vmem:[%s1 + $0xc] sm:$0xf]
      %v304 = vld [vmem:[%s1 + $0x10] sm:$0xf]
      %v305 = vld [vmem:[%s1 + $0x14] sm:$0xf]
      %v306 = vld [vmem:[%s1 + $0x18] sm:$0xf]
      %v307 = vld [vmem:[%s1 + $0x1c] sm:$0xf]
      %v308 = vld [vmem:[%s1 + $0x20] sm:$0xf]
      %v309 = vld [vmem:[%s1 + $0x24] sm:$0xf]
      %v438 = vunpack.c.l.b16 %v172
      %v439 = vunpack.c.l.b16 %v173
      %v440 = vunpack.c.l.b16 %v174
      %v441 = vunpack.c.l.b16 %v175
      %v442 = vunpack.c.l.b16 %v176
      %v443 = vunpack.c.l.b16 %v177
      %v444 = vunpack.c.l.b16 %v178
      %v445 = vunpack.c.l.b16 %v179
      %v446 = vunpack.c.l.b16 %v180
      %v447 = vunpack.c.l.b16 %v181
      %v448 = vunpack.c.l.b16 %v182
      %v449 = vunpack.c.l.b16 %v183
      %v450 = vunpack.c.l.b16 %v184
      %v451 = vunpack.c.l.b16 %v185
      %v452 = vunpack.c.l.b16 %v186
      %v453 = vunpack.c.l.b16 %v187
      %v454 = vunpack.c.l.b16 %v188
      %v455 = vunpack.c.l.b16 %v189
      %v456 = vunpack.c.l.b16 %v190
      %v457 = vunpack.c.l.b16 %v191
      %v458 = vunpack.c.l.b16 %v192
      %v459 = vunpack.c.l.b16 %v193
      %v460 = vunpack.c.l.b16 %v194
      %v461 = vunpack.c.l.b16 %v195
      %v462 = vunpack.c.l.b16 %v196
      %v463 = vunpack.c.l.b16 %v197
      %v464 = vunpack.c.l.b16 %v198
      %v465 = vunpack.c.l.b16 %v199
      %v466 = vunpack.c.l.b16 %v200
      %v467 = vunpack.c.l.b16 %v201
      %v468 = vunpack.c.l.b16 %v202
      %v469 = vunpack.c.l.b16 %v203
      %v470 = vunpack.c.l.b16 %v204
      %v471 = vunpack.c.l.b16 %v205
      %v472 = vunpack.c.l.b16 %v206
      %v473 = vunpack.c.l.b16 %v207
      %v474 = vunpack.c.l.b16 %v208
      %v475 = vunpack.c.l.b16 %v209
      %v476 = vunpack.c.l.b16 %v210
      %v477 = vunpack.c.l.b16 %v211
      %v478 = vunpack.c.l.b16 %v212
      %v479 = vunpack.c.l.b16 %v213
      %v480 = vunpack.c.l.b16 %v214
      %v481 = vunpack.c.l.b16 %v215
      %v482 = vunpack.c.l.b16 %v216
      %v483 = vunpack.c.l.b16 %v217
      %v484 = vunpack.c.l.b16 %v218
      %v485 = vunpack.c.l.b16 %v219
      %v486 = vunpack.c.l.b16 %v220
      %v487 = vunpack.c.l.b16 %v221
      %v488 = vunpack.c.l.b16 %v222
      %v489 = vunpack.c.l.b16 %v223
      %v490 = vunpack.c.l.b16 %v224
      %v491 = vunpack.c.l.b16 %v225
      %v492 = vunpack.c.l.b16 %v226
      %v493 = vunpack.c.l.b16 %v227
      %v494 = vunpack.c.l.b16 %v228
      %v495 = vunpack.c.l.b16 %v229
      %v496 = vunpack.c.l.b16 %v230
      %v497 = vunpack.c.l.b16 %v231
      %v498 = vunpack.c.l.b16 %v232
      %v499 = vunpack.c.l.b16 %v233
      %v500 = vunpack.c.l.b16 %v234
      %v501 = vunpack.c.l.b16 %v235
      %v502 = vunpack.c.l.b16 %v236
      %v503 = vunpack.c.l.b16 %v237
      %v504 = vunpack.c.l.b16 %v238
      %v505 = vunpack.c.l.b16 %v239
      %v506 = vunpack.c.l.b16 %v240
      %v507 = vunpack.c.l.b16 %v241
      %v508 = vunpack.c.l.b16 %v242
      %v509 = vunpack.c.l.b16 %v243
      %v510 = vunpack.c.l.b16 %v244
      %v511 = vunpack.c.l.b16 %v245
      %v512 = vunpack.c.l.b16 %v246
      %v513 = vunpack.c.l.b16 %v247
      %v514 = vunpack.c.l.b16 %v248
      %v515 = vunpack.c.l.b16 %v249
      %v516 = vunpack.c.l.b16 %v250
      %v517 = vunpack.c.l.b16 %v251
      %v518 = vunpack.c.l.b16 %v252
      %v519 = vunpack.c.l.b16 %v253
      %v520 = vunpack.c.l.b16 %v254
      %v521 = vunpack.c.l.b16 %v255
      %v522 = vunpack.c.l.b16 %v256
      %v523 = vunpack.c.l.b16 %v257
      %v524 = vunpack.c.l.b16 %v258
      %v525 = vunpack.c.l.b16 %v259
      %v526 = vunpack.c.l.b16 %v260
      %v527 = vunpack.c.l.b16 %v261
      %v528 = vunpack.c.l.b16 %v262
      %v529 = vunpack.c.l.b16 %v263
      %v530 = vunpack.c.l.b16 %v264
      %v531 = vunpack.c.l.b16 %v265
      %v532 = vunpack.c.l.b16 %v266
      %v533 = vunpack.c.l.b16 %v267
      %v534 = vunpack.c.l.b16 %v268
      %v535 = vunpack.c.l.b16 %v269
      %v536 = vunpack.c.l.b16 %v270
      %v537 = vunpack.c.l.b16 %v271
      %v538 = vunpack.c.l.b16 %v272
      %v539 = vunpack.c.l.b16 %v273
      %v540 = vunpack.c.l.b16 %v274
      %v541 = vunpack.c.l.b16 %v275
      %v542 = vunpack.c.l.b16 %v276
      %v543 = vunpack.c.l.b16 %v277
      %v544 = vunpack.c.l.b16 %v278
      %v545 = vunpack.c.l.b16 %v279
      %v546 = vunpack.c.l.b16 %v280
      %v547 = vunpack.c.l.b16 %v281
      %v548 = vunpack.c.l.b16 %v282
      %v549 = vunpack.c.l.b16 %v283
      %v550 = vunpack.c.l.b16 %v284
      %v551 = vunpack.c.l.b16 %v285
      %v552 = vunpack.c.l.b16 %v286
      %v553 = vunpack.c.l.b16 %v287
      %v554 = vunpack.c.l.b16 %v288
      %v555 = vunpack.c.l.b16 %v289
      %v556 = vunpack.c.l.b16 %v290
      %v557 = vunpack.c.l.b16 %v291
      %v558 = vunpack.c.l.b16 %v292
      %v559 = vunpack.c.l.b16 %v293
      %v560 = vunpack.c.l.b16 %v294
      %v561 = vunpack.c.l.b16 %v295
      %v562 = vunpack.c.l.b16 %v296
      %v563 = vunpack.c.l.b16 %v297
      %v564 = vunpack.c.l.b16 %v298
      %v565 = vunpack.c.l.b16 %v299
      %v566 = vpack.c.b16 %v439, %v438
      %v567 = vpack.c.b16 %v441, %v440
      %v568 = vpack.c.b16 %v443, %v442
      %v569 = vpack.c.b16 %v445, %v444
      %v570 = vpack.c.b16 %v447, %v446
      %v571 = vpack.c.b16 %v449, %v448
      %v572 = vpack.c.b16 %v451, %v450
      %v573 = vpack.c.b16 %v453, %v452
      %v574 = vpack.c.b16 %v455, %v454
      %v575 = vpack.c.b16 %v457, %v456
      %v576 = vpack.c.b16 %v459, %v458
      %v577 = vpack.c.b16 %v461, %v460
      %v578 = vpack.c.b16 %v463, %v462
      %v579 = vpack.c.b16 %v465, %v464
      %v580 = vpack.c.b16 %v467, %v466
      %v581 = vpack.c.b16 %v469, %v468
      %v582 = vpack.c.b16 %v471, %v470
      %v583 = vpack.c.b16 %v473, %v472
      %v584 = vpack.c.b16 %v475, %v474
      %v585 = vpack.c.b16 %v477, %v476
      %v586 = vpack.c.b16 %v479, %v478
      %v587 = vpack.c.b16 %v481, %v480
      %v588 = vpack.c.b16 %v483, %v482
      %v589 = vpack.c.b16 %v485, %v484
      %v590 = vpack.c.b16 %v487, %v486
      %v591 = vpack.c.b16 %v489, %v488
      %v592 = vpack.c.b16 %v491, %v490
      %v593 = vpack.c.b16 %v493, %v492
      %v594 = vpack.c.b16 %v495, %v494
      %v595 = vpack.c.b16 %v497, %v496
      %v596 = vpack.c.b16 %v499, %v498
      %v597 = vpack.c.b16 %v501, %v500
      %v598 = vpack.c.b16 %v503, %v502
      %v599 = vpack.c.b16 %v505, %v504
      %v600 = vpack.c.b16 %v507, %v506
      %v601 = vpack.c.b16 %v509, %v508
      %v602 = vpack.c.b16 %v511, %v510
      %v603 = vpack.c.b16 %v513, %v512
      %v604 = vpack.c.b16 %v515, %v514
      %v605 = vpack.c.b16 %v517, %v516
      %v606 = vpack.c.b16 %v519, %v518
      %v607 = vpack.c.b16 %v521, %v520
      %v608 = vpack.c.b16 %v523, %v522
      %v609 = vpack.c.b16 %v525, %v524
      %v610 = vpack.c.b16 %v527, %v526
      %v611 = vpack.c.b16 %v529, %v528
      %v612 = vpack.c.b16 %v531, %v530
      %v613 = vpack.c.b16 %v533, %v532
      %v614 = vpack.c.b16 %v535, %v534
      %v615 = vpack.c.b16 %v537, %v536
      %v616 = vpack.c.b16 %v539, %v538
      %v617 = vpack.c.b16 %v541, %v540
      %v618 = vpack.c.b16 %v543, %v542
      %v619 = vpack.c.b16 %v545, %v544
      %v620 = vpack.c.b16 %v547, %v546
      %v621 = vpack.c.b16 %v549, %v548
      %v622 = vpack.c.b16 %v551, %v550
      %v623 = vpack.c.b16 %v553, %v552
      %v624 = vpack.c.b16 %v555, %v554
      %v625 = vpack.c.b16 %v557, %v556
      %v626 = vpack.c.b16 %v559, %v558
      %v627 = vpack.c.b16 %v561, %v560
      %v628 = vpack.c.b16 %v563, %v562
      %v629 = vpack.c.b16 %v565, %v564
      %v640 = vunpack.c.l.b16 %v300
      %v641 = vunpack.c.l.b16 %v301
      %v642 = vunpack.c.l.b16 %v302
      %v643 = vunpack.c.l.b16 %v303
      %v644 = vunpack.c.l.b16 %v304
      %v645 = vunpack.c.l.b16 %v305
      %v646 = vunpack.c.l.b16 %v306
      %v647 = vunpack.c.l.b16 %v307
      %v648 = vunpack.c.l.b16 %v308
      %v649 = vunpack.c.l.b16 %v309
      %v650 = vpack.c.b16 %v641, %v640
      %v651 = vpack.c.b16 %v643, %v642
      %v652 = vpack.c.b16 %v645, %v644
      %v653 = vpack.c.b16 %v647, %v646
      %v654 = vpack.c.b16 %v649, %v648
      %vm660 = vcmask 654336
      %v662 = vsel %vm660, %v566, 0
      %v665 = vsel %vm660, %v567, 0
      %v668 = vsel %vm660, %v568, 0
      %v671 = vsel %vm660, %v569, 0
      %v674 = vsel %vm660, %v570, 0
      %v677 = vsel %vm660, %v571, 0
      %v680 = vsel %vm660, %v572, 0
      %v683 = vsel %vm660, %v573, 0
      %v686 = vsel %vm660, %v574, 0
      %v689 = vsel %vm660, %v575, 0
      %v692 = vsel %vm660, %v576, 0
      %v695 = vsel %vm660, %v577, 0
      %v698 = vsel %vm660, %v578, 0
      %v701 = vsel %vm660, %v579, 0
      %v704 = vsel %vm660, %v580, 0
      %v707 = vsel %vm660, %v581, 0
      %v710 = vsel %vm660, %v582, 0
      %v713 = vsel %vm660, %v583, 0
      %v716 = vsel %vm660, %v584, 0
      %v719 = vsel %vm660, %v585, 0
      %v722 = vsel %vm660, %v586, 0
      %v725 = vsel %vm660, %v587, 0
      %v728 = vsel %vm660, %v588, 0
      %v731 = vsel %vm660, %v589, 0
      %v734 = vsel %vm660, %v590, 0
      %v737 = vsel %vm660, %v591, 0
      %v740 = vsel %vm660, %v592, 0
      %v743 = vsel %vm660, %v593, 0
      %v746 = vsel %vm660, %v594, 0
      %v749 = vsel %vm660, %v595, 0
      %v752 = vsel %vm660, %v596, 0
      %v755 = vsel %vm660, %v597, 0
      %v758 = vsel %vm660, %v598, 0
      %v761 = vsel %vm660, %v599, 0
      %v764 = vsel %vm660, %v600, 0
      %v767 = vsel %vm660, %v601, 0
      %v770 = vsel %vm660, %v602, 0
      %v773 = vsel %vm660, %v603, 0
      %v776 = vsel %vm660, %v604, 0
      %v779 = vsel %vm660, %v605, 0
      %v782 = vsel %vm660, %v606, 0
      %v785 = vsel %vm660, %v607, 0
      %v788 = vsel %vm660, %v608, 0
      %v791 = vsel %vm660, %v609, 0
      %v794 = vsel %vm660, %v610, 0
      %v797 = vsel %vm660, %v611, 0
      %v800 = vsel %vm660, %v612, 0
      %v803 = vsel %vm660, %v613, 0
      %v806 = vsel %vm660, %v614, 0
      %v809 = vsel %vm660, %v615, 0
      %v812 = vsel %vm660, %v616, 0
      %v815 = vsel %vm660, %v617, 0
      %v818 = vsel %vm660, %v618, 0
      %v821 = vsel %vm660, %v619, 0
      %v824 = vsel %vm660, %v620, 0
      %v827 = vsel %vm660, %v621, 0
      %v830 = vsel %vm660, %v622, 0
      %v833 = vsel %vm660, %v623, 0
      %v836 = vsel %vm660, %v624, 0
      %v839 = vsel %vm660, %v625, 0
      %v842 = vsel %vm660, %v626, 0
      %v845 = vsel %vm660, %v627, 0
      %v848 = vsel %vm660, %v628, 0
      %v851 = vsel %vm660, %v629, 0
      %853 = vmatpush.bf16.msra.mxu0 0
      %854 = vmatpush.bf16.msra.mxu0 0
      %855 = vmatpush.bf16.msra.mxu0 0
      %856 = vmatpush.bf16.msra.mxu0 %v654
      %857 = vmatpush.bf16.msra.mxu0 %v653
      %858 = vmatpush.bf16.msra.mxu0 %v652
      %859 = vmatpush.bf16.msra.mxu0 %v651
      %860 = vmatpush.bf16.msra.mxu0 %v650
      %861 = vmatmul.bf16.gmra.mxu0 %v662
      %v862 = vpop.f32.mrf.mxu0
      %v863 = vadd.f32 0.0, %v862
      %v864 = vpop.f32.mrf.mxu0
      %v865 = vadd.f32 0.0, %v864
      %866 = vmatmul.bf16.gmra.mxu0 %v665
      %v867 = vpop.f32.mrf.mxu0
      %v868 = vadd.f32 0.0, %v867
      %v869 = vpop.f32.mrf.mxu0
      %v870 = vadd.f32 0.0, %v869
      %871 = vmatmul.bf16.gmra.mxu0 %v668
      %v872 = vpop.f32.mrf.mxu0
      %v873 = vadd.f32 0.0, %v872
      %v874 = vpop.f32.mrf.mxu0
      %v875 = vadd.f32 0.0, %v874
      %876 = vmatmul.bf16.gmra.mxu0 %v671
      %v877 = vpop.f32.mrf.mxu0
      %v878 = vadd.f32 0.0, %v877
      %v879 = vpop.f32.mrf.mxu0
      %v880 = vadd.f32 0.0, %v879
      %881 = vmatmul.bf16.gmra.mxu0 %v674
      %v882 = vpop.f32.mrf.mxu0
      %v883 = vadd.f32 0.0, %v882
      %v884 = vpop.f32.mrf.mxu0
      %v885 = vadd.f32 0.0, %v884
      %886 = vmatmul.bf16.gmra.mxu0 %v677
      %v887 = vpop.f32.mrf.mxu0
      %v888 = vadd.f32 0.0, %v887
      %v889 = vpop.f32.mrf.mxu0
      %v890 = vadd.f32 0.0, %v889
      %891 = vmatmul.bf16.gmra.mxu0 %v680
      %v892 = vpop.f32.mrf.mxu0
      %v893 = vadd.f32 0.0, %v892
      %v894 = vpop.f32.mrf.mxu0
      %v895 = vadd.f32 0.0, %v894
      %896 = vmatmul.bf16.gmra.mxu0 %v683
      %v897 = vpop.f32.mrf.mxu0
      %v898 = vadd.f32 0.0, %v897
      %v899 = vpop.f32.mrf.mxu0
      %v900 = vadd.f32 0.0, %v899
      %901 = vmatmul.bf16.gmra.mxu0 %v686
      %v902 = vpop.f32.mrf.mxu0
      %v903 = vadd.f32 0.0, %v902
      %v904 = vpop.f32.mrf.mxu0
      %v905 = vadd.f32 0.0, %v904
      %906 = vmatmul.bf16.gmra.mxu0 %v689
      %v907 = vpop.f32.mrf.mxu0
      %v908 = vadd.f32 0.0, %v907
      %v909 = vpop.f32.mrf.mxu0
      %v910 = vadd.f32 0.0, %v909
      %911 = vmatmul.bf16.gmra.mxu0 %v692
      %v912 = vpop.f32.mrf.mxu0
      %v913 = vadd.f32 0.0, %v912
      %v914 = vpop.f32.mrf.mxu0
      %v915 = vadd.f32 0.0, %v914
      %916 = vmatmul.bf16.gmra.mxu0 %v695
      %v917 = vpop.f32.mrf.mxu0
      %v918 = vadd.f32 0.0, %v917
      %v919 = vpop.f32.mrf.mxu0
      %v920 = vadd.f32 0.0, %v919
      %921 = vmatmul.bf16.gmra.mxu0 %v698
      %v922 = vpop.f32.mrf.mxu0
      %v923 = vadd.f32 0.0, %v922
      %v924 = vpop.f32.mrf.mxu0
      %v925 = vadd.f32 0.0, %v924
      %926 = vmatmul.bf16.gmra.mxu0 %v701
      %v927 = vpop.f32.mrf.mxu0
      %v928 = vadd.f32 0.0, %v927
      %v929 = vpop.f32.mrf.mxu0
      %v930 = vadd.f32 0.0, %v929
      %931 = vmatmul.bf16.gmra.mxu0 %v704
      %v932 = vpop.f32.mrf.mxu0
      %v933 = vadd.f32 0.0, %v932
      %v934 = vpop.f32.mrf.mxu0
      %v935 = vadd.f32 0.0, %v934
      %936 = vmatmul.bf16.gmra.mxu0 %v707
      %v937 = vpop.f32.mrf.mxu0
      %v938 = vadd.f32 0.0, %v937
      %v939 = vpop.f32.mrf.mxu0
      %v940 = vadd.f32 0.0, %v939
      %941 = vmatmul.bf16.gmra.mxu0 %v710
      %v942 = vpop.f32.mrf.mxu0
      %v943 = vadd.f32 0.0, %v942
      %v944 = vpop.f32.mrf.mxu0
      %v945 = vadd.f32 0.0, %v944
      %946 = vmatmul.bf16.gmra.mxu0 %v713
      %v947 = vpop.f32.mrf.mxu0
      %v948 = vadd.f32 0.0, %v947
      %v949 = vpop.f32.mrf.mxu0
      %v950 = vadd.f32 0.0, %v949
      %951 = vmatmul.bf16.gmra.mxu0 %v716
      %v952 = vpop.f32.mrf.mxu0
      %v953 = vadd.f32 0.0, %v952
      %v954 = vpop.f32.mrf.mxu0
      %v955 = vadd.f32 0.0, %v954
      %956 = vmatmul.bf16.gmra.mxu0 %v719
      %v957 = vpop.f32.mrf.mxu0
      %v958 = vadd.f32 0.0, %v957
      %v959 = vpop.f32.mrf.mxu0
      %v960 = vadd.f32 0.0, %v959
      %961 = vmatmul.bf16.gmra.mxu0 %v722
      %v962 = vpop.f32.mrf.mxu0
      %v963 = vadd.f32 0.0, %v962
      %v964 = vpop.f32.mrf.mxu0
      %v965 = vadd.f32 0.0, %v964
      %966 = vmatmul.bf16.gmra.mxu0 %v725
      %v967 = vpop.f32.mrf.mxu0
      %v968 = vadd.f32 0.0, %v967
      %v969 = vpop.f32.mrf.mxu0
      %v970 = vadd.f32 0.0, %v969
      %971 = vmatmul.bf16.gmra.mxu0 %v728
      %v972 = vpop.f32.mrf.mxu0
      %v973 = vadd.f32 0.0, %v972
      %v974 = vpop.f32.mrf.mxu0
      %v975 = vadd.f32 0.0, %v974
      %976 = vmatmul.bf16.gmra.mxu0 %v731
      %v977 = vpop.f32.mrf.mxu0
      %v978 = vadd.f32 0.0, %v977
      %v979 = vpop.f32.mrf.mxu0
      %v980 = vadd.f32 0.0, %v979
      %981 = vmatmul.bf16.gmra.mxu0 %v734
      %v982 = vpop.f32.mrf.mxu0
      %v983 = vadd.f32 0.0, %v982
      %v984 = vpop.f32.mrf.mxu0
      %v985 = vadd.f32 0.0, %v984
      %986 = vmatmul.bf16.gmra.mxu0 %v737
      %v987 = vpop.f32.mrf.mxu0
      %v988 = vadd.f32 0.0, %v987
      %v989 = vpop.f32.mrf.mxu0
      %v990 = vadd.f32 0.0, %v989
      %991 = vmatmul.bf16.gmra.mxu0 %v740
      %v992 = vpop.f32.mrf.mxu0
      %v993 = vadd.f32 0.0, %v992
      %v994 = vpop.f32.mrf.mxu0
      %v995 = vadd.f32 0.0, %v994
      %996 = vmatmul.bf16.gmra.mxu0 %v743
      %v997 = vpop.f32.mrf.mxu0
      %v998 = vadd.f32 0.0, %v997
      %v999 = vpop.f32.mrf.mxu0
      %v1000 = vadd.f32 0.0, %v999
      %1001 = vmatmul.bf16.gmra.mxu0 %v746
      %v1002 = vpop.f32.mrf.mxu0
      %v1003 = vadd.f32 0.0, %v1002
      %v1004 = vpop.f32.mrf.mxu0
      %v1005 = vadd.f32 0.0, %v1004
      %1006 = vmatmul.bf16.gmra.mxu0 %v749
      %v1007 = vpop.f32.mrf.mxu0
      %v1008 = vadd.f32 0.0, %v1007
      %v1009 = vpop.f32.mrf.mxu0
      %v1010 = vadd.f32 0.0, %v1009
      %1011 = vmatmul.bf16.gmra.mxu0 %v752
      %v1012 = vpop.f32.mrf.mxu0
      %v1013 = vadd.f32 0.0, %v1012
      %v1014 = vpop.f32.mrf.mxu0
      %v1015 = vadd.f32 0.0, %v1014
      %1016 = vmatmul.bf16.gmra.mxu0 %v755
      %v1017 = vpop.f32.mrf.mxu0
      %v1018 = vadd.f32 0.0, %v1017
      %v1019 = vpop.f32.mrf.mxu0
      %v1020 = vadd.f32 0.0, %v1019
      %1021 = vmatmul.bf16.gmra.mxu0 %v758
      %v1022 = vpop.f32.mrf.mxu0
      %v1023 = vadd.f32 0.0, %v1022
      %v1024 = vpop.f32.mrf.mxu0
      %v1025 = vadd.f32 0.0, %v1024
      %1026 = vmatmul.bf16.gmra.mxu0 %v761
      %v1027 = vpop.f32.mrf.mxu0
      %v1028 = vadd.f32 0.0, %v1027
      %v1029 = vpop.f32.mrf.mxu0
      %v1030 = vadd.f32 0.0, %v1029
      %1031 = vmatmul.bf16.gmra.mxu0 %v764
      %v1032 = vpop.f32.mrf.mxu0
      %v1033 = vadd.f32 0.0, %v1032
      %v1034 = vpop.f32.mrf.mxu0
      %v1035 = vadd.f32 0.0, %v1034
      %1036 = vmatmul.bf16.gmra.mxu0 %v767
      %v1037 = vpop.f32.mrf.mxu0
      %v1038 = vadd.f32 0.0, %v1037
      %v1039 = vpop.f32.mrf.mxu0
      %v1040 = vadd.f32 0.0, %v1039
      %1041 = vmatmul.bf16.gmra.mxu0 %v770
      %v1042 = vpop.f32.mrf.mxu0
      %v1043 = vadd.f32 0.0, %v1042
      %v1044 = vpop.f32.mrf.mxu0
      %v1045 = vadd.f32 0.0, %v1044
      %1046 = vmatmul.bf16.gmra.mxu0 %v773
      %v1047 = vpop.f32.mrf.mxu0
      %v1048 = vadd.f32 0.0, %v1047
      %v1049 = vpop.f32.mrf.mxu0
      %v1050 = vadd.f32 0.0, %v1049
      %1051 = vmatmul.bf16.gmra.mxu0 %v776
      %v1052 = vpop.f32.mrf.mxu0
      %v1053 = vadd.f32 0.0, %v1052
      %v1054 = vpop.f32.mrf.mxu0
      %v1055 = vadd.f32 0.0, %v1054
      %1056 = vmatmul.bf16.gmra.mxu0 %v779
      %v1057 = vpop.f32.mrf.mxu0
      %v1058 = vadd.f32 0.0, %v1057
      %v1059 = vpop.f32.mrf.mxu0
      %v1060 = vadd.f32 0.0, %v1059
      %1061 = vmatmul.bf16.gmra.mxu0 %v782
      %v1062 = vpop.f32.mrf.mxu0
      %v1063 = vadd.f32 0.0, %v1062
      %v1064 = vpop.f32.mrf.mxu0
      %v1065 = vadd.f32 0.0, %v1064
      %1066 = vmatmul.bf16.gmra.mxu0 %v785
      %v1067 = vpop.f32.mrf.mxu0
      %v1068 = vadd.f32 0.0, %v1067
      %v1069 = vpop.f32.mrf.mxu0
      %v1070 = vadd.f32 0.0, %v1069
      %1071 = vmatmul.bf16.gmra.mxu0 %v788
      %v1072 = vpop.f32.mrf.mxu0
      %v1073 = vadd.f32 0.0, %v1072
      %v1074 = vpop.f32.mrf.mxu0
      %v1075 = vadd.f32 0.0, %v1074
      %1076 = vmatmul.bf16.gmra.mxu0 %v791
      %v1077 = vpop.f32.mrf.mxu0
      %v1078 = vadd.f32 0.0, %v1077
      %v1079 = vpop.f32.mrf.mxu0
      %v1080 = vadd.f32 0.0, %v1079
      %1081 = vmatmul.bf16.gmra.mxu0 %v794
      %v1082 = vpop.f32.mrf.mxu0
      %v1083 = vadd.f32 0.0, %v1082
      %v1084 = vpop.f32.mrf.mxu0
      %v1085 = vadd.f32 0.0, %v1084
      %1086 = vmatmul.bf16.gmra.mxu0 %v797
      %v1087 = vpop.f32.mrf.mxu0
      %v1088 = vadd.f32 0.0, %v1087
      %v1089 = vpop.f32.mrf.mxu0
      %v1090 = vadd.f32 0.0, %v1089
      %1091 = vmatmul.bf16.gmra.mxu0 %v800
      %v1092 = vpop.f32.mrf.mxu0
      %v1093 = vadd.f32 0.0, %v1092
      %v1094 = vpop.f32.mrf.mxu0
      %v1095 = vadd.f32 0.0, %v1094
      %1096 = vmatmul.bf16.gmra.mxu0 %v803
      %v1097 = vpop.f32.mrf.mxu0
      %v1098 = vadd.f32 0.0, %v1097
      %v1099 = vpop.f32.mrf.mxu0
      %v1100 = vadd.f32 0.0, %v1099
      %1101 = vmatmul.bf16.gmra.mxu0 %v806
      %v1102 = vpop.f32.mrf.mxu0
      %v1103 = vadd.f32 0.0, %v1102
      %v1104 = vpop.f32.mrf.mxu0
      %v1105 = vadd.f32 0.0, %v1104
      %1106 = vmatmul.bf16.gmra.mxu0 %v809
      %v1107 = vpop.f32.mrf.mxu0
      %v1108 = vadd.f32 0.0, %v1107
      %v1109 = vpop.f32.mrf.mxu0
      %v1110 = vadd.f32 0.0, %v1109
      %1111 = vmatmul.bf16.gmra.mxu0 %v812
      %v1112 = vpop.f32.mrf.mxu0
      %v1113 = vadd.f32 0.0, %v1112
      %v1114 = vpop.f32.mrf.mxu0
      %v1115 = vadd.f32 0.0, %v1114
      %1116 = vmatmul.bf16.gmra.mxu0 %v815
      %v1117 = vpop.f32.mrf.mxu0
      %v1118 = vadd.f32 0.0, %v1117
      %v1119 = vpop.f32.mrf.mxu0
      %v1120 = vadd.f32 0.0, %v1119
      %1121 = vmatmul.bf16.gmra.mxu0 %v818
      %v1122 = vpop.f32.mrf.mxu0
      %v1123 = vadd.f32 0.0, %v1122
      %v1124 = vpop.f32.mrf.mxu0
      %v1125 = vadd.f32 0.0, %v1124
      %1126 = vmatmul.bf16.gmra.mxu0 %v821
      %v1127 = vpop.f32.mrf.mxu0
      %v1128 = vadd.f32 0.0, %v1127
      %v1129 = vpop.f32.mrf.mxu0
      %v1130 = vadd.f32 0.0, %v1129
      %1131 = vmatmul.bf16.gmra.mxu0 %v824
      %v1132 = vpop.f32.mrf.mxu0
      %v1133 = vadd.f32 0.0, %v1132
      %v1134 = vpop.f32.mrf.mxu0
      %v1135 = vadd.f32 0.0, %v1134
      %1136 = vmatmul.bf16.gmra.mxu0 %v827
      %v1137 = vpop.f32.mrf.mxu0
      %v1138 = vadd.f32 0.0, %v1137
      %v1139 = vpop.f32.mrf.mxu0
      %v1140 = vadd.f32 0.0, %v1139
      %1141 = vmatmul.bf16.gmra.mxu0 %v830
      %v1142 = vpop.f32.mrf.mxu0
      %v1143 = vadd.f32 0.0, %v1142
      %v1144 = vpop.f32.mrf.mxu0
      %v1145 = vadd.f32 0.0, %v1144
      %1146 = vmatmul.bf16.gmra.mxu0 %v833
      %v1147 = vpop.f32.mrf.mxu0
      %v1148 = vadd.f32 0.0, %v1147
      %v1149 = vpop.f32.mrf.mxu0
      %v1150 = vadd.f32 0.0, %v1149
      %1151 = vmatmul.bf16.gmra.mxu0 %v836
      %v1152 = vpop.f32.mrf.mxu0
      %v1153 = vadd.f32 0.0, %v1152
      %v1154 = vpop.f32.mrf.mxu0
      %v1155 = vadd.f32 0.0, %v1154
      %1156 = vmatmul.bf16.gmra.mxu0 %v839
      %v1157 = vpop.f32.mrf.mxu0
      %v1158 = vadd.f32 0.0, %v1157
      %v1159 = vpop.f32.mrf.mxu0
      %v1160 = vadd.f32 0.0, %v1159
      %1161 = vmatmul.bf16.gmra.mxu0 %v842
      %v1162 = vpop.f32.mrf.mxu0
      %v1163 = vadd.f32 0.0, %v1162
      %v1164 = vpop.f32.mrf.mxu0
      %v1165 = vadd.f32 0.0, %v1164
      %1166 = vmatmul.bf16.gmra.mxu0 %v845
      %v1167 = vpop.f32.mrf.mxu0
      %v1168 = vadd.f32 0.0, %v1167
      %v1169 = vpop.f32.mrf.mxu0
      %v1170 = vadd.f32 0.0, %v1169
      %1171 = vmatmul.bf16.gmra.mxu0 %v848
      %v1172 = vpop.f32.mrf.mxu0
      %v1173 = vadd.f32 0.0, %v1172
      %v1174 = vpop.f32.mrf.mxu0
      %v1175 = vadd.f32 0.0, %v1174
      %1176 = vmatmul.bf16.gmra.mxu0 %v851
      %v1177 = vpop.f32.mrf.mxu0
      %v1178 = vadd.f32 0.0, %v1177
      %v1179 = vpop.f32.mrf.mxu0
      %v1180 = vadd.f32 0.0, %v1179
      %1181 = vdwg.mxu0
      %v1182 = vmax.f32 %v863, %v943
      %v1183 = vmax.f32 %v865, %v945
      %v1184 = vmax.f32 %v868, %v948
      %v1185 = vmax.f32 %v870, %v950
      %v1186 = vmax.f32 %v873, %v953
      %v1187 = vmax.f32 %v875, %v955
      %v1188 = vmax.f32 %v878, %v958
      %v1189 = vmax.f32 %v880, %v960
      %v1190 = vmax.f32 %v883, %v963
      %v1191 = vmax.f32 %v885, %v965
      %v1192 = vmax.f32 %v888, %v968
      %v1193 = vmax.f32 %v890, %v970
      %v1194 = vmax.f32 %v893, %v973
      %v1195 = vmax.f32 %v895, %v975
      %v1196 = vmax.f32 %v898, %v978
      %v1197 = vmax.f32 %v900, %v980
      %v1198 = vmax.f32 %v903, %v983
      %v1199 = vmax.f32 %v905, %v985
      %v1200 = vmax.f32 %v908, %v988
      %v1201 = vmax.f32 %v910, %v990
      %v1202 = vmax.f32 %v913, %v993
      %v1203 = vmax.f32 %v915, %v995
      %v1204 = vmax.f32 %v918, %v998
      %v1205 = vmax.f32 %v920, %v1000
      %v1206 = vmax.f32 %v923, %v1003
      %v1207 = vmax.f32 %v925, %v1005
      %v1208 = vmax.f32 %v928, %v1008
      %v1209 = vmax.f32 %v930, %v1010
      %v1210 = vmax.f32 %v933, %v1013
      %v1211 = vmax.f32 %v935, %v1015
      %v1212 = vmax.f32 %v938, %v1018
      %v1213 = vmax.f32 %v940, %v1020
      %v1214 = vmax.f32 %v1023, %v1103
      %v1215 = vmax.f32 %v1025, %v1105
      %v1216 = vmax.f32 %v1028, %v1108
      %v1217 = vmax.f32 %v1030, %v1110
      %v1218 = vmax.f32 %v1033, %v1113
      %v1219 = vmax.f32 %v1035, %v1115
      %v1220 = vmax.f32 %v1038, %v1118
      %v1221 = vmax.f32 %v1040, %v1120
      %v1222 = vmax.f32 %v1043, %v1123
      %v1223 = vmax.f32 %v1045, %v1125
      %v1224 = vmax.f32 %v1048, %v1128
      %v1225 = vmax.f32 %v1050, %v1130
      %v1226 = vmax.f32 %v1053, %v1133
      %v1227 = vmax.f32 %v1055, %v1135
      %v1228 = vmax.f32 %v1058, %v1138
      %v1229 = vmax.f32 %v1060, %v1140
      %v1230 = vmax.f32 %v1063, %v1143
      %v1231 = vmax.f32 %v1065, %v1145
      %v1232 = vmax.f32 %v1068, %v1148
      %v1233 = vmax.f32 %v1070, %v1150
      %v1234 = vmax.f32 %v1073, %v1153
      %v1235 = vmax.f32 %v1075, %v1155
      %v1236 = vmax.f32 %v1078, %v1158
      %v1237 = vmax.f32 %v1080, %v1160
      %v1238 = vmax.f32 %v1083, %v1163
      %v1239 = vmax.f32 %v1085, %v1165
      %v1240 = vmax.f32 %v1088, %v1168
      %v1241 = vmax.f32 %v1090, %v1170
      %v1242 = vmax.f32 %v1093, %v1173
      %v1243 = vmax.f32 %v1095, %v1175
      %v1244 = vmax.f32 %v1098, %v1178
      %v1245 = vmax.f32 %v1100, %v1180
      %v1246 = vmax.f32 %v1182, %v1214
      %v1247 = vmax.f32 %v1183, %v1215
      %v1248 = vmax.f32 %v1184, %v1216
      %v1249 = vmax.f32 %v1185, %v1217
      %v1250 = vmax.f32 %v1186, %v1218
      %v1251 = vmax.f32 %v1187, %v1219
      %v1252 = vmax.f32 %v1188, %v1220
      %v1253 = vmax.f32 %v1189, %v1221
      %v1254 = vmax.f32 %v1190, %v1222
      %v1255 = vmax.f32 %v1191, %v1223
      %v1256 = vmax.f32 %v1192, %v1224
      %v1257 = vmax.f32 %v1193, %v1225
      %v1258 = vmax.f32 %v1194, %v1226
      %v1259 = vmax.f32 %v1195, %v1227
      %v1260 = vmax.f32 %v1196, %v1228
      %v1261 = vmax.f32 %v1197, %v1229
      %v1262 = vmax.f32 %v1198, %v1230
      %v1263 = vmax.f32 %v1199, %v1231
      %v1264 = vmax.f32 %v1200, %v1232
      %v1265 = vmax.f32 %v1201, %v1233
      %v1266 = vmax.f32 %v1202, %v1234
      %v1267 = vmax.f32 %v1203, %v1235
      %v1268 = vmax.f32 %v1204, %v1236
      %v1269 = vmax.f32 %v1205, %v1237
      %v1270 = vmax.f32 %v1206, %v1238
      %v1271 = vmax.f32 %v1207, %v1239
      %v1272 = vmax.f32 %v1208, %v1240
      %v1273 = vmax.f32 %v1209, %v1241
      %v1274 = vmax.f32 %v1210, %v1242
      %v1275 = vmax.f32 %v1211, %v1243
      %v1276 = vmax.f32 %v1212, %v1244
      %v1277 = vmax.f32 %v1213, %v1245
      %v1278 = vld [vmem:[%s2] sm:$0x1]
      %v1280 = vperm.slane %v1278, 0
      %v1282 = vadd.f32 %v1246, %v1280
      %v1283 = vadd.f32 %v1247, %v1280
      %v1284 = vadd.f32 %v1248, %v1280
      %v1285 = vadd.f32 %v1249, %v1280
      %v1286 = vadd.f32 %v1250, %v1280
      %v1287 = vadd.f32 %v1251, %v1280
      %v1288 = vadd.f32 %v1252, %v1280
      %v1289 = vadd.f32 %v1253, %v1280
      %v1290 = vadd.f32 %v1254, %v1280
      %v1291 = vadd.f32 %v1255, %v1280
      %v1292 = vadd.f32 %v1256, %v1280
      %v1293 = vadd.f32 %v1257, %v1280
      %v1294 = vadd.f32 %v1258, %v1280
      %v1295 = vadd.f32 %v1259, %v1280
      %v1296 = vadd.f32 %v1260, %v1280
      %v1297 = vadd.f32 %v1261, %v1280
      %v1298 = vadd.f32 %v1262, %v1280
      %v1299 = vadd.f32 %v1263, %v1280
      %v1300 = vadd.f32 %v1264, %v1280
      %v1301 = vadd.f32 %v1265, %v1280
      %v1302 = vadd.f32 %v1266, %v1280
      %v1303 = vadd.f32 %v1267, %v1280
      %v1304 = vadd.f32 %v1268, %v1280
      %v1305 = vadd.f32 %v1269, %v1280
      %v1306 = vadd.f32 %v1270, %v1280
      %v1307 = vadd.f32 %v1271, %v1280
      %v1308 = vadd.f32 %v1272, %v1280
      %v1309 = vadd.f32 %v1273, %v1280
      %v1310 = vadd.f32 %v1274, %v1280
      %v1311 = vadd.f32 %v1275, %v1280
      %v1312 = vadd.f32 %v1276, %v1280
      %v1313 = vadd.f32 %v1277, %v1280
      %v1314 = vmax.f32 %v1282, 0.0
      %v1315 = vmax.f32 %v1283, 0.0
      %v1316 = vmax.f32 %v1284, 0.0
      %v1317 = vmax.f32 %v1285, 0.0
      %v1318 = vmax.f32 %v1286, 0.0
      %v1319 = vmax.f32 %v1287, 0.0
      %v1320 = vmax.f32 %v1288, 0.0
      %v1321 = vmax.f32 %v1289, 0.0
      %v1322 = vmax.f32 %v1290, 0.0
      %v1323 = vmax.f32 %v1291, 0.0
      %v1324 = vmax.f32 %v1292, 0.0
      %v1325 = vmax.f32 %v1293, 0.0
      %v1326 = vmax.f32 %v1294, 0.0
      %v1327 = vmax.f32 %v1295, 0.0
      %v1328 = vmax.f32 %v1296, 0.0
      %v1329 = vmax.f32 %v1297, 0.0
      %v1330 = vmax.f32 %v1298, 0.0
      %v1331 = vmax.f32 %v1299, 0.0
      %v1332 = vmax.f32 %v1300, 0.0
      %v1333 = vmax.f32 %v1301, 0.0
      %v1334 = vmax.f32 %v1302, 0.0
      %v1335 = vmax.f32 %v1303, 0.0
      %v1336 = vmax.f32 %v1304, 0.0
      %v1337 = vmax.f32 %v1305, 0.0
      %v1338 = vmax.f32 %v1306, 0.0
      %v1339 = vmax.f32 %v1307, 0.0
      %v1340 = vmax.f32 %v1308, 0.0
      %v1341 = vmax.f32 %v1309, 0.0
      %v1342 = vmax.f32 %v1310, 0.0
      %v1343 = vmax.f32 %v1311, 0.0
      %v1344 = vmax.f32 %v1312, 0.0
      %v1345 = vmax.f32 %v1313, 0.0
      %v1346 = vpack.c.bf16 %v1314, %v1314
      %v1347 = vpack.c.bf16 %v1315, %v1315
      %v1348 = vpack.c.bf16 %v1316, %v1316
      %v1349 = vpack.c.bf16 %v1317, %v1317
      %v1350 = vpack.c.bf16 %v1318, %v1318
      %v1351 = vpack.c.bf16 %v1319, %v1319
      %v1352 = vpack.c.bf16 %v1320, %v1320
      %v1353 = vpack.c.bf16 %v1321, %v1321
      %v1354 = vpack.c.bf16 %v1322, %v1322
      %v1355 = vpack.c.bf16 %v1323, %v1323
      %v1356 = vpack.c.bf16 %v1324, %v1324
      %v1357 = vpack.c.bf16 %v1325, %v1325
      %v1358 = vpack.c.bf16 %v1326, %v1326
      %v1359 = vpack.c.bf16 %v1327, %v1327
      %v1360 = vpack.c.bf16 %v1328, %v1328
      %v1361 = vpack.c.bf16 %v1329, %v1329
      %v1362 = vpack.c.bf16 %v1330, %v1330
      %v1363 = vpack.c.bf16 %v1331, %v1331
      %v1364 = vpack.c.bf16 %v1332, %v1332
      %v1365 = vpack.c.bf16 %v1333, %v1333
      %v1366 = vpack.c.bf16 %v1334, %v1334
      %v1367 = vpack.c.bf16 %v1335, %v1335
      %v1368 = vpack.c.bf16 %v1336, %v1336
      %v1369 = vpack.c.bf16 %v1337, %v1337
      %v1370 = vpack.c.bf16 %v1338, %v1338
      %v1371 = vpack.c.bf16 %v1339, %v1339
      %v1372 = vpack.c.bf16 %v1340, %v1340
      %v1373 = vpack.c.bf16 %v1341, %v1341
      %v1374 = vpack.c.bf16 %v1342, %v1342
      %v1375 = vpack.c.bf16 %v1343, %v1343
      %v1376 = vpack.c.bf16 %v1344, %v1344
      %v1377 = vpack.c.bf16 %v1345, %v1345
      %1378 = vst [vmem:[%s170] sm:$0xf] %v1346
      %1379 = vst [vmem:[%s170 + $0x4] sm:$0xf] %v1347
      %1380 = vst [vmem:[%s170 + $0x8] sm:$0xf] %v1348
      %1381 = vst [vmem:[%s170 + $0xc] sm:$0xf] %v1349
      %1382 = vst [vmem:[%s170 + $0x10] sm:$0xf] %v1350
      %1383 = vst [vmem:[%s170 + $0x14] sm:$0xf] %v1351
      %1384 = vst [vmem:[%s170 + $0x18] sm:$0xf] %v1352
      %1385 = vst [vmem:[%s170 + $0x1c] sm:$0xf] %v1353
      %1386 = vst [vmem:[%s170 + $0x20] sm:$0xf] %v1354
      %1387 = vst [vmem:[%s170 + $0x24] sm:$0xf] %v1355
      %1388 = vst [vmem:[%s170 + $0x28] sm:$0xf] %v1356
      %1389 = vst [vmem:[%s170 + $0x2c] sm:$0xf] %v1357
      %1390 = vst [vmem:[%s170 + $0x30] sm:$0xf] %v1358
      %1391 = vst [vmem:[%s170 + $0x34] sm:$0xf] %v1359
      %1392 = vst [vmem:[%s170 + $0x38] sm:$0xf] %v1360
      %1393 = vst [vmem:[%s170 + $0x3c] sm:$0xf] %v1361
      %1394 = vst [vmem:[%s170 + $0x40] sm:$0xf] %v1362
      %1395 = vst [vmem:[%s170 + $0x44] sm:$0xf] %v1363
      %1396 = vst [vmem:[%s170 + $0x48] sm:$0xf] %v1364
      %1397 = vst [vmem:[%s170 + $0x4c] sm:$0xf] %v1365
      %1398 = vst [vmem:[%s170 + $0x50] sm:$0xf] %v1366
      %1399 = vst [vmem:[%s170 + $0x54] sm:$0xf] %v1367
      %1400 = vst [vmem:[%s170 + $0x58] sm:$0xf] %v1368
      %1401 = vst [vmem:[%s170 + $0x5c] sm:$0xf] %v1369
      %1402 = vst [vmem:[%s170 + $0x60] sm:$0xf] %v1370
      %1403 = vst [vmem:[%s170 + $0x64] sm:$0xf] %v1371
      %1404 = vst [vmem:[%s170 + $0x68] sm:$0xf] %v1372
      %1405 = vst [vmem:[%s170 + $0x6c] sm:$0xf] %v1373
      %1406 = vst [vmem:[%s170 + $0x70] sm:$0xf] %v1374
      %1407 = vst [vmem:[%s170 + $0x74] sm:$0xf] %v1375
      %1408 = vst [vmem:[%s170 + $0x78] sm:$0xf] %v1376
      %1409 = vst [vmem:[%s170 + $0x7c] sm:$0xf] %v1377
      %p1410 = scmp.lt.s32.totalorder %s14, 1
      %s1411 = scalar_select %p1410, %s14, 1
      %s1412 = smul.addr %s1411, 32
      %s1413 = smul.addr %s1412, 4
      %s1414 = scalar_lea.vmem %s3, %s1413
      // Predicated region
      $region33: #{convnet_forward.3} parent=31 // pred_check
        %p1415 = pneg %p100
      $region34: #{convnet_forward.3} parent=31 // pred_check_branch
        %1417 = sbr.rel (%p1415) target = $region36
      $region35: #{convnet_forward.3} parent=31 // pred_region
        _
      $region36: #{convnet_forward.3} parent=31 // pred_fallthru
        _
    $region32: #{convnet_forward.3} parent=5 // pred_fallthru
      _
    %p1418 = scmp.le.s32.totalorder 2, %s9
    // Predicated region
    $region37: #{convnet_forward.3} parent=5 // pred_check
      %p1419 = pneg %p1418
    $region38: #{convnet_forward.3} parent=5 // pred_check_branch
      %1421 = sbr.rel (%p1419) target = $region40
    $region39: #{convnet_forward.3} parent=5 // pred_region
      %s1422 = ssub.s32 %s9, 2
      // Predicated region
      $region41: #{convnet_forward.3} parent=39 // pred_check
        %p1423 = pneg %p106
      $region42: #{convnet_forward.3} parent=39 // pred_check_branch
        %1425 = sbr.rel (%p1423) target = $region44
      $region43: #{convnet_forward.3} parent=39 // pred_region
        %p1426 = scmp.lt.s32.totalorder %s15, 1
        %s1427 = scalar_select %p1426, %s15, 1
        %s1428 = smul.addr %s1427, 32
        %s1429 = smul.addr %s1428, 4
        %s1430 = scalar_lea.vmem %s3, %s1429
      $region44: #{convnet_forward.3} parent=39 // pred_fallthru
        _
    $region40: #{convnet_forward.3} parent=5 // pred_fallthru
      _
  $region6: #{convnet_forward.3} parent=0 // loop_footer
    %s13 = sadd.s32 1, %s9
  $region7: #{convnet_forward.3} parent=0 // loop_footer_branch
    %8 = sbr.rel target = $region3
  $region8: #{convnet_forward.3} parent=0 // loop_exit
    _

// kernel: convnet_forward.4
$region0: #{convnet_forward.4}
  #allocation0 [shape = 'u32[]', space=smem, size = 0x4, offset = 0x4, fixed_abs, tag = 'smem constant byte address 0x4 - core index']
  #allocation1 [shape = 'u32[72,128]{1,0:T(1,128)}', space=vmem, size = 0x9000, scoped, tag = 'internal scratch']
  %s0 = inlined_call_operand.vmem [shape: bf16[2,256,400], index: 0, kind: input, shape index: {}]
  %s1 = inlined_call_operand.vmem [shape: bf16[400,128], index: 1, kind: input, shape index: {}]
  %s2 = inlined_call_operand.vmem [shape: f32[1,128], index: 2, kind: input, shape index: {}]
  %s3 = inlined_call_operand.vmem [shape: bf16[2,64,128], index: 3, kind: output, shape index: {}]
  %s4 = sld [smem:[#allocation0]]
  $region45: #{convnet_forward.4} parent=0
    _
  %s6 = ssub.s32 1, %s4
  %s7 = scalar_select 0, %s6, %s4
  loop: start=0, step=1, limit=4
  $region2: #{convnet_forward.4} parent=0 // loop_pre_header
    _
  $region3: #{convnet_forward.4} parent=0 // loop_header
    %s9 = sphi 0, %s13
    %p10 = scmp.ge.s32.totalorder %s9, 4
    %s19 = sphi 0, %s21
    %s22 = sphi 0, %s19
    %s23 = sphi 0, %s22
    %s39 = sphi 0, %s23
    %s43 = sphi 0, %s43
    %s45 = sphi 0, %s43
    %s46 = sphi 0, %s45
    %s60 = sphi 0, %s46
    %s64 = sphi 0, %s64
    %s66 = sphi 0, %s64
    %s67 = sphi 0, %s66
    %s81 = sphi 0, %s67
    %s87 = sphi 0, %s89
    %s90 = sphi 0, %s87
    %s91 = sphi 0, %s90
    %s107 = sphi 0, %s91
  $region4: #{convnet_forward.4} parent=0 // loop_header_branch
    %12 = sbr.rel (%p10) target = $region8
  $region5: #{convnet_forward.4} parent=0 // loop_body
    %s14 = ssub.s32 %s9, 1
    %s15 = ssub.s32 %s9, 2
    %s16 = sadd.s32 %s9, 1
    %s17 = ssub.s32 %s9, %s16
    %p18 = scmp.eq.s32.totalorder %s17, 0
    %s20 = sadd.s32 %s19, 1
    %s21 = scalar_select %p18, %s19, %s20
    %p24 = pneg %p18
    %p25 = scmp.eq.s32.totalorder %s9, 1
    %p26 = por %p24, %p25
    %p27 = scmp.ne.s32.totalorder %s19, %s22
    %p28 = scmp.eq.s32.totalorder %s9, 0
    %p29 = por %p27, %p28
    %p30 = scmp.ne.s32.totalorder %s19, %s22
    %p31 = scmp.eq.s32.totalorder %s14, 1
    %p32 = por %p30, %p31
    %p33 = scmp.ne.s32.totalorder %s22, %s23
    %p34 = scmp.eq.s32.totalorder %s14, 0
    %p35 = por %p33, %p34
    %p36 = scmp.ne.s32.totalorder %s22, %s23
    %p37 = scmp.eq.s32.totalorder %s15, 1
    %p38 = por %p36, %p37
    %p40 = scmp.ne.s32.totalorder %s23, %s39
    %p41 = scmp.eq.s32.totalorder %s15, 0
    %p42 = por %p40, %p41
    %s44 = sadd.s32 %s43, 1
    %p47 = scmp.eq.s32.totalorder %s9, 1
    %p48 = scmp.ne.s32.totalorder %s43, %s45
    %p49 = scmp.eq.s32.totalorder %s9, 0
    %p50 = por %p48, %p49
    %p51 = scmp.ne.s32.totalorder %s43, %s45
    %p52 = scmp.eq.s32.totalorder %s14, 1
    %p53 = por %p51, %p52
    %p54 = scmp.ne.s32.totalorder %s45, %s46
    %p55 = scmp.eq.s32.totalorder %s14, 0
    %p56 = por %p54, %p55
    %p57 = scmp.ne.s32.totalorder %s45, %s46
    %p58 = scmp.eq.s32.totalorder %s15, 1
    %p59 = por %p57, %p58
    %p61 = scmp.ne.s32.totalorder %s46, %s60
    %p62 = scmp.eq.s32.totalorder %s15, 0
    %p63 = por %p61, %p62
    %s65 = sadd.s32 %s64, 1
    %p68 = scmp.eq.s32.totalorder %s9, 1
    %p69 = scmp.ne.s32.totalorder %s64, %s66
    %p70 = scmp.eq.s32.totalorder %s9, 0
    %p71 = por %p69, %p70
    %p72 = scmp.ne.s32.totalorder %s64, %s66
    %p73 = scmp.eq.s32.totalorder %s14, 1
    %p74 = por %p72, %p73
    %p75 = scmp.ne.s32.totalorder %s66, %s67
    %p76 = scmp.eq.s32.totalorder %s14, 0
    %p77 = por %p75, %p76
    %p78 = scmp.ne.s32.totalorder %s66, %s67
    %p79 = scmp.eq.s32.totalorder %s15, 1
    %p80 = por %p78, %p79
    %p82 = scmp.ne.s32.totalorder %s67, %s81
    %p83 = scmp.eq.s32.totalorder %s15, 0
    %p84 = por %p82, %p83
    %s85 = ssub.s32 %s9, %s16
    %p86 = scmp.eq.s32.totalorder %s85, 0
    %s88 = sadd.s32 %s87, 1
    %s89 = scalar_select %p86, %s87, %s88
    %p92 = pneg %p86
    %p93 = scmp.eq.s32.totalorder %s9, 1
    %p94 = por %p92, %p93
    %p95 = scmp.ne.s32.totalorder %s87, %s90
    %p96 = scmp.eq.s32.totalorder %s9, 0
    %p97 = por %p95, %p96
    %p98 = scmp.ne.s32.totalorder %s87, %s90
    %p99 = scmp.eq.s32.totalorder %s14, 1
    %p100 = por %p98, %p99
    %p101 = scmp.ne.s32.totalorder %s90, %s91
    %p102 = scmp.eq.s32.totalorder %s14, 0
    %p103 = por %p101, %p102
    %p104 = scmp.ne.s32.totalorder %s90, %s91
    %p105 = scmp.eq.s32.totalorder %s15, 1
    %p106 = por %p104, %p105
    %p108 = scmp.ne.s32.totalorder %s91, %s107
    %p109 = scmp.eq.s32.totalorder %s15, 0
    %p110 = por %p108, %p109
    %p111 = scmp.le.s32.totalorder 1, %s9
    %p112 = scmp.lt.s32.totalorder %s9, 3
    %p113 = pnand %p111, %p112
    %p114 = pneg %p113
    // Predicated region
    $region9: #{convnet_forward.4} parent=5 // pred_check
      _
    $region10: #{convnet_forward.4} parent=5 // pred_check_branch
      %116 = sbr.rel (%p113) target = $region12
    $region11: #{convnet_forward.4} parent=5 // pred_region
      %s117 = ssub.s32 %s9, 1
      // Predicated region
      $region13: #{convnet_forward.4} parent=11 // pred_check
        %p118 = pneg %p56
      $region14: #{convnet_forward.4} parent=11 // pred_check_branch
        %120 = sbr.rel (%p118) target = $region16
      $region15: #{convnet_forward.4} parent=11 // pred_region
        _
      $region16: #{convnet_forward.4} parent=11 // pred_fallthru
        _
      // Predicated region
      $region17: #{convnet_forward.4} parent=11 // pred_check
        %p121 = pneg %p77
      $region18: #{convnet_forward.4} parent=11 // pred_check_branch
        %123 = sbr.rel (%p121) target = $region20
      $region19: #{convnet_forward.4} parent=11 // pred_region
        _
      $region20: #{convnet_forward.4} parent=11 // pred_fallthru
        _
    $region12: #{convnet_forward.4} parent=5 // pred_fallthru
      _
    %p124 = scmp.lt.s32.totalorder %s9, 2
    // Predicated region
    $region21: #{convnet_forward.4} parent=5 // pred_check
      %p125 = pneg %p124
    $region22: #{convnet_forward.4} parent=5 // pred_check_branch
      %127 = sbr.rel (%p125) target = $region24
    $region23: #{convnet_forward.4} parent=5 // pred_region
      // Predicated region
      $region25: #{convnet_forward.4} parent=23 // pred_check
        %p128 = pneg %p29
      $region26: #{convnet_forward.4} parent=23 // pred_check_branch
        %130 = sbr.rel (%p128) target = $region28
      $region27: #{convnet_forward.4} parent=23 // pred_region
        %p131 = scmp.lt.s32.totalorder %s9, 1
        %s132 = scalar_select %p131, %s9, 1
        %s133 = smul.addr %s132, 128
        %s134 = smul.addr %s133, 4
        %s135 = scalar_lea.vmem %s0, %s134
      $region28: #{convnet_forward.4} parent=23 // pred_fallthru
        _
    $region24: #{convnet_forward.4} parent=5 // pred_fallthru
      _
    %p136 = scmp.le.s32.totalorder 1, %s9
    %p137 = scmp.lt.s32.totalorder %s9, 3
    %p138 = pnand %p136, %p137
    %p139 = pneg %p138
    // Predicated region
    $region29: #{convnet_forward.4} parent=5 // pred_check
      _
    $region30: #{convnet_forward.4} parent=5 // pred_check_branch
      %141 = sbr.rel (%p138) target = $region32
    $region31: #{convnet_forward.4} parent=5 // pred_region
      %s142 = ssub.s32 %s9, 1
      %p143 = scmp.lt.s32.totalorder %s14, 1
      %s144 = scalar_select %p143, %s14, 1
      %s145 = smul.addr %s144, 128
      %s146 = smul.addr %s145, 4
      %s147 = scalar_lea.vmem %s0, %s146
      %p148 = pneg %p35
      %p149 = pneg %p32
      %p150 = pneg %p56
      %p151 = pneg %p53
      %p152 = pneg %p77
      %p153 = pneg %p74
      %p154 = pneg %p103
      %p155 = pneg %p100
      %p156 = scmp.lt.s32.totalorder %s14, 1
      %s157 = scalar_select %p156, %s14, 1
      %s158 = smul.addr %s157, 8
      %s159 = smul.addr %s158, 4
      %s160 = scalar_lea.vmem %s3, %s159
      %p161 = scmp.lt.s32.totalorder %s14, 1
      %s162 = scalar_select %p161, %s14, 1
      %s163 = smul.addr %s162, 128
      %s164 = smul.addr %s163, 4
      %s165 = scalar_lea.vmem %s0, %s164
      %p166 = scmp.lt.s32.totalorder %s14, 1
      %s167 = scalar_select %p166, %s14, 1
      %s168 = smul.addr %s167, 8
      %s169 = smul.addr %s168, 4
      %s170 = scalar_lea.vmem %s3, %s169
      %v172 = vld [vmem:[%s165] sm:$0xff]
      %v173 = vld [vmem:[%s165 + $0x8] sm:$0xff]
      %v174 = vld [vmem:[%s165 + $0x10] sm:$0xff]
      %v175 = vld [vmem:[%s165 + $0x18] sm:$0xff]
      %v176 = vld [vmem:[%s165 + $0x20] sm:$0xff]
      %v177 = vld [vmem:[%s165 + $0x28] sm:$0xff]
      %v178 = vld [vmem:[%s165 + $0x30] sm:$0xff]
      %v179 = vld [vmem:[%s165 + $0x38] sm:$0xff]
      %v180 = vld [vmem:[%s165 + $0x40] sm:$0xff]
      %v181 = vld [vmem:[%s165 + $0x48] sm:$0xff]
      %v182 = vld [vmem:[%s165 + $0x50] sm:$0xff]
      %v183 = vld [vmem:[%s165 + $0x58] sm:$0xff]
      %v184 = vld [vmem:[%s165 + $0x60] sm:$0xff]
      %v185 = vld [vmem:[%s165 + $0x68] sm:$0xff]
      %v186 = vld [vmem:[%s165 + $0x70] sm:$0xff]
      %v187 = vld [vmem:[%s165 + $0x78] sm:$0xff]
      %v188 = vld [vmem:[%s165 + $0x80] sm:$0xff]
      %v189 = vld [vmem:[%s165 + $0x88] sm:$0xff]
      %v190 = vld [vmem:[%s165 + $0x90] sm:$0xff]
      %v191 = vld [vmem:[%s165 + $0x98] sm:$0xff]
      %v192 = vld [vmem:[%s165 + $0xa0] sm:$0xff]
      %v193 = vld [vmem:[%s165 + $0xa8] sm:$0xff]
      %v194 = vld [vmem:[%s165 + $0xb0] sm:$0xff]
      %v195 = vld [vmem:[%s165 + $0xb8] sm:$0xff]
      %v196 = vld [vmem:[%s165 + $0xc0] sm:$0xff]
      %v197 = vld [vmem:[%s165 + $0xc8] sm:$0xff]
      %v198 = vld [vmem:[%s165 + $0xd0] sm:$0xff]
      %v199 = vld [vmem:[%s165 + $0xd8] sm:$0xff]
      %v200 = vld [vmem:[%s165 + $0xe0] sm:$0xff]
      %v201 = vld [vmem:[%s165 + $0xe8] sm:$0xff]
      %v202 = vld [vmem:[%s165 + $0xf0] sm:$0xff]
      %v203 = vld [vmem:[%s165 + $0xf8] sm:$0xff]
      %v204 = vld [vmem:[%s165 + $0x100] sm:$0xff]
      %v205 = vld [vmem:[%s165 + $0x108] sm:$0xff]
      %v206 = vld [vmem:[%s165 + $0x110] sm:$0xff]
      %v207 = vld [vmem:[%s165 + $0x118] sm:$0xff]
      %v208 = vld [vmem:[%s165 + $0x120] sm:$0xff]
      %v209 = vld [vmem:[%s165 + $0x128] sm:$0xff]
      %v210 = vld [vmem:[%s165 + $0x130] sm:$0xff]
      %v211 = vld [vmem:[%s165 + $0x138] sm:$0xff]
      %v212 = vld [vmem:[%s165 + $0x140] sm:$0xff]
      %v213 = vld [vmem:[%s165 + $0x148] sm:$0xff]
      %v214 = vld [vmem:[%s165 + $0x150] sm:$0xff]
      %v215 = vld [vmem:[%s165 + $0x158] sm:$0xff]
      %v216 = vld [vmem:[%s165 + $0x160] sm:$0xff]
      %v217 = vld [vmem:[%s165 + $0x168] sm:$0xff]
      %v218 = vld [vmem:[%s165 + $0x170] sm:$0xff]
      %v219 = vld [vmem:[%s165 + $0x178] sm:$0xff]
      %v220 = vld [vmem:[%s165 + $0x180] sm:$0xff]
      %v221 = vld [vmem:[%s165 + $0x188] sm:$0xff]
      %v222 = vld [vmem:[%s165 + $0x190] sm:$0xff]
      %v223 = vld [vmem:[%s165 + $0x198] sm:$0xff]
      %v224 = vld [vmem:[%s165 + $0x1a0] sm:$0xff]
      %v225 = vld [vmem:[%s165 + $0x1a8] sm:$0xff]
      %v226 = vld [vmem:[%s165 + $0x1b0] sm:$0xff]
      %v227 = vld [vmem:[%s165 + $0x1b8] sm:$0xff]
      %v228 = vld [vmem:[%s165 + $0x1c0] sm:$0xff]
      %v229 = vld [vmem:[%s165 + $0x1c8] sm:$0xff]
      %v230 = vld [vmem:[%s165 + $0x1d0] sm:$0xff]
      %v231 = vld [vmem:[%s165 + $0x1d8] sm:$0xff]
      %v232 = vld [vmem:[%s165 + $0x1e0] sm:$0xff]
      %v233 = vld [vmem:[%s165 + $0x1e8] sm:$0xff]
      %v234 = vld [vmem:[%s165 + $0x1f0] sm:$0xff]
      %v235 = vld [vmem:[%s165 + $0x1f8] sm:$0xff]
      %v236 = vld [vmem:[%s1] sm:$0xf]
      %v237 = vld [vmem:[%s1 + $0x4] sm:$0xf]
      %v238 = vld [vmem:[%s1 + $0x8] sm:$0xf]
      %v239 = vld [vmem:[%s1 + $0xc] sm:$0xf]
      %v240 = vld [vmem:[%s1 + $0x10] sm:$0xf]
      %v241 = vld [vmem:[%s1 + $0x14] sm:$0xf]
      %v242 = vld [vmem:[%s1 + $0x18] sm:$0xf]
      %v243 = vld [vmem:[%s1 + $0x1c] sm:$0xf]
      %v244 = vld [vmem:[%s1 + $0x20] sm:$0xf]
      %v245 = vld [vmem:[%s1 + $0x24] sm:$0xf]
      %v246 = vld [vmem:[%s1 + $0x28] sm:$0xf]
      %v247 = vld [vmem:[%s1 + $0x2c] sm:$0xf]
      %v248 = vld [vmem:[%s1 + $0x30] sm:$0xf]
      %v249 = vld [vmem:[%s1 + $0x34] sm:$0xf]
      %v250 = vld [vmem:[%s1 + $0x38] sm:$0xf]
      %v251 = vld [vmem:[%s1 + $0x3c] sm:$0xf]
      %v252 = vld [vmem:[%s1 + $0x40] sm:$0xf]
      %v253 = vld [vmem:[%s1 + $0x44] sm:$0xf]
      %v254 = vld [vmem:[%s1 + $0x48] sm:$0xf]
      %v255 = vld [vmem:[%s1 + $0x4c] sm:$0xf]
      %v256 = vld [vmem:[%s1 + $0x50] sm:$0xf]
      %v257 = vld [vmem:[%s1 + $0x54] sm:$0xf]
      %v258 = vld [vmem:[%s1 + $0x58] sm:$0xf]
      %v259 = vld [vmem:[%s1 + $0x5c] sm:$0xf]
      %v260 = vld [vmem:[%s1 + $0x60] sm:$0xf]
      %v261 = vld [vmem:[%s1 + $0x64] sm:$0xf]
      %v262 = vld [vmem:[%s1 + $0x68] sm:$0xf]
      %v263 = vld [vmem:[%s1 + $0x6c] sm:$0xf]
      %v264 = vld [vmem:[%s1 + $0x70] sm:$0xf]
      %v265 = vld [vmem:[%s1 + $0x74] sm:$0xf]
      %v266 = vld [vmem:[%s1 + $0x78] sm:$0xf]
      %v267 = vld [vmem:[%s1 + $0x7c] sm:$0xf]
      %v268 = vld [vmem:[%s1 + $0x80] sm:$0xf]
      %v269 = vld [vmem:[%s1 + $0x84] sm:$0xf]
      %v270 = vld [vmem:[%s1 + $0x88] sm:$0xf]
      %v271 = vld [vmem:[%s1 + $0x8c] sm:$0xf]
      %v272 = vld [vmem:[%s1 + $0x90] sm:$0xf]
      %v273 = vld [vmem:[%s1 + $0x94] sm:$0xf]
      %v274 = vld [vmem:[%s1 + $0x98] sm:$0xf]
      %v275 = vld [vmem:[%s1 + $0x9c] sm:$0xf]
      %v276 = vld [vmem:[%s1 + $0xa0] sm:$0xf]
      %v277 = vld [vmem:[%s1 + $0xa4] sm:$0xf]
      %v278 = vld [vmem:[%s1 + $0xa8] sm:$0xf]
      %v279 = vld [vmem:[%s1 + $0xac] sm:$0xf]
      %v280 = vld [vmem:[%s1 + $0xb0] sm:$0xf]
      %v281 = vld [vmem:[%s1 + $0xb4] sm:$0xf]
      %v282 = vld [vmem:[%s1 + $0xb8] sm:$0xf]
      %v283 = vld [vmem:[%s1 + $0xbc] sm:$0xf]
      %v284 = vld [vmem:[%s1 + $0xc0] sm:$0xf]
      %v285 = vld [vmem:[%s1 + $0xc4] sm:$0xf]
      %v350 = vunpack.c.l.b16 %v172
      %v351 = vunpack.c.h.b16 %v172
      %v352 = vunpack.c.l.b16 %v173
      %v353 = vunpack.c.h.b16 %v173
      %v354 = vunpack.c.l.b16 %v174
      %v355 = vunpack.c.h.b16 %v174
      %v356 = vunpack.c.l.b16 %v175
      %v357 = vunpack.c.h.b16 %v175
      %v358 = vunpack.c.l.b16 %v176
      %v359 = vunpack.c.h.b16 %v176
      %v360 = vunpack.c.l.b16 %v177
      %v361 = vunpack.c.h.b16 %v177
      %v362 = vunpack.c.l.b16 %v178
      %v363 = vunpack.c.h.b16 %v178
      %v364 = vunpack.c.l.b16 %v179
      %v365 = vunpack.c.h.b16 %v179
      %v366 = vunpack.c.l.b16 %v180
      %v367 = vunpack.c.h.b16 %v180
      %v368 = vunpack.c.l.b16 %v181
      %v369 = vunpack.c.h.b16 %v181
      %v370 = vunpack.c.l.b16 %v182
      %v371 = vunpack.c.h.b16 %v182
      %v372 = vunpack.c.l.b16 %v183
      %v373 = vunpack.c.h.b16 %v183
      %v374 = vunpack.c.l.b16 %v184
      %v375 = vunpack.c.h.b16 %v184
      %v376 = vunpack.c.l.b16 %v185
      %v377 = vunpack.c.h.b16 %v185
      %v378 = vunpack.c.l.b16 %v186
      %v379 = vunpack.c.h.b16 %v186
      %v380 = vunpack.c.l.b16 %v187
      %v381 = vunpack.c.h.b16 %v187
      %v382 = vunpack.c.l.b16 %v188
      %v383 = vunpack.c.h.b16 %v188
      %v384 = vunpack.c.l.b16 %v189
      %v385 = vunpack.c.h.b16 %v189
      %v386 = vunpack.c.l.b16 %v190
      %v387 = vunpack.c.h.b16 %v190
      %v388 = vunpack.c.l.b16 %v191
      %v389 = vunpack.c.h.b16 %v191
      %v390 = vunpack.c.l.b16 %v192
      %v391 = vunpack.c.h.b16 %v192
      %v392 = vunpack.c.l.b16 %v193
      %v393 = vunpack.c.h.b16 %v193
      %v394 = vunpack.c.l.b16 %v194
      %v395 = vunpack.c.h.b16 %v194
      %v396 = vunpack.c.l.b16 %v195
      %v397 = vunpack.c.h.b16 %v195
      %v398 = vunpack.c.l.b16 %v196
      %v399 = vunpack.c.h.b16 %v196
      %v400 = vunpack.c.l.b16 %v197
      %v401 = vunpack.c.h.b16 %v197
      %v402 = vunpack.c.l.b16 %v198
      %v403 = vunpack.c.h.b16 %v198
      %v404 = vunpack.c.l.b16 %v199
      %v405 = vunpack.c.h.b16 %v199
      %v406 = vunpack.c.l.b16 %v200
      %v407 = vunpack.c.h.b16 %v200
      %v408 = vunpack.c.l.b16 %v201
      %v409 = vunpack.c.h.b16 %v201
      %v410 = vunpack.c.l.b16 %v202
      %v411 = vunpack.c.h.b16 %v202
      %v412 = vunpack.c.l.b16 %v203
      %v413 = vunpack.c.h.b16 %v203
      %v414 = vunpack.c.l.b16 %v204
      %v415 = vunpack.c.h.b16 %v204
      %v416 = vunpack.c.l.b16 %v205
      %v417 = vunpack.c.h.b16 %v205
      %v418 = vunpack.c.l.b16 %v206
      %v419 = vunpack.c.h.b16 %v206
      %v420 = vunpack.c.l.b16 %v207
      %v421 = vunpack.c.h.b16 %v207
      %v422 = vunpack.c.l.b16 %v208
      %v423 = vunpack.c.h.b16 %v208
      %v424 = vunpack.c.l.b16 %v209
      %v425 = vunpack.c.h.b16 %v209
      %v426 = vunpack.c.l.b16 %v210
      %v427 = vunpack.c.h.b16 %v210
      %v428 = vunpack.c.l.b16 %v211
      %v429 = vunpack.c.h.b16 %v211
      %v430 = vunpack.c.l.b16 %v212
      %v431 = vunpack.c.h.b16 %v212
      %v432 = vunpack.c.l.b16 %v213
      %v433 = vunpack.c.h.b16 %v213
      %v434 = vunpack.c.l.b16 %v214
      %v435 = vunpack.c.h.b16 %v214
      %v436 = vunpack.c.l.b16 %v215
      %v437 = vunpack.c.h.b16 %v215
      %v438 = vunpack.c.l.b16 %v216
      %v439 = vunpack.c.h.b16 %v216
      %v440 = vunpack.c.l.b16 %v217
      %v441 = vunpack.c.h.b16 %v217
      %v442 = vunpack.c.l.b16 %v218
      %v443 = vunpack.c.h.b16 %v218
      %v444 = vunpack.c.l.b16 %v219
      %v445 = vunpack.c.h.b16 %v219
      %v446 = vunpack.c.l.b16 %v220
      %v447 = vunpack.c.h.b16 %v220
      %v448 = vunpack.c.l.b16 %v221
      %v449 = vunpack.c.h.b16 %v221
      %v450 = vunpack.c.l.b16 %v222
      %v451 = vunpack.c.h.b16 %v222
      %v452 = vunpack.c.l.b16 %v223
      %v453 = vunpack.c.h.b16 %v223
      %v454 = vunpack.c.l.b16 %v224
      %v455 = vunpack.c.h.b16 %v224
      %v456 = vunpack.c.l.b16 %v225
      %v457 = vunpack.c.h.b16 %v225
      %v458 = vunpack.c.l.b16 %v226
      %v459 = vunpack.c.h.b16 %v226
      %v460 = vunpack.c.l.b16 %v227
      %v461 = vunpack.c.h.b16 %v227
      %v462 = vunpack.c.l.b16 %v228
      %v463 = vunpack.c.h.b16 %v228
      %v464 = vunpack.c.l.b16 %v229
      %v465 = vunpack.c.h.b16 %v229
      %v466 = vunpack.c.l.b16 %v230
      %v467 = vunpack.c.h.b16 %v230
      %v468 = vunpack.c.l.b16 %v231
      %v469 = vunpack.c.h.b16 %v231
      %v470 = vunpack.c.l.b16 %v232
      %v471 = vunpack.c.h.b16 %v232
      %v472 = vunpack.c.l.b16 %v233
      %v473 = vunpack.c.h.b16 %v233
      %v474 = vunpack.c.l.b16 %v234
      %v475 = vunpack.c.h.b16 %v234
      %v476 = vunpack.c.l.b16 %v235
      %v477 = vunpack.c.h.b16 %v235
      %v478 = vpack.c.b16 %v354, %v350
      %v479 = vpack.c.b16 %v355, %v351
      %v480 = vpack.c.b16 %v356, %v352
      %v481 = vpack.c.b16 %v357, %v353
      %v482 = vpack.c.b16 %v362, %v358
      %v483 = vpack.c.b16 %v363, %v359
      %v484 = vpack.c.b16 %v364, %v360
      %v485 = vpack.c.b16 %v365, %v361
      %v486 = vpack.c.b16 %v370, %v366
      %v487 = vpack.c.b16 %v371, %v367
      %v488 = vpack.c.b16 %v372, %v368
      %v489 = vpack.c.b16 %v373, %v369
      %v490 = vpack.c.b16 %v378, %v374
      %v491 = vpack.c.b16 %v379, %v375
      %v492 = vpack.c.b16 %v380, %v376
      %v493 = vpack.c.b16 %v381, %v377
      %v494 = vpack.c.b16 %v386, %v382
      %v495 = vpack.c.b16 %v387, %v383
      %v496 = vpack.c.b16 %v388, %v384
      %v497 = vpack.c.b16 %v389, %v385
      %v498 = vpack.c.b16 %v394, %v390
      %v499 = vpack.c.b16 %v395, %v391
      %v500 = vpack.c.b16 %v396, %v392
      %v501 = vpack.c.b16 %v397, %v393
      %v502 = vpack.c.b16 %v402, %v398
      %v503 = vpack.c.b16 %v403, %v399
      %v504 = vpack.c.b16 %v404, %v400
      %v505 = vpack.c.b16 %v405, %v401
      %v506 = vpack.c.b16 %v410, %v406
      %v507 = vpack.c.b16 %v411, %v407
      %v508 = vpack.c.b16 %v412, %v408
      %v509 = vpack.c.b16 %v413, %v409
      %v510 = vpack.c.b16 %v418, %v414
      %v511 = vpack.c.b16 %v419, %v415
      %v512 = vpack.c.b16 %v420, %v416
      %v513 = vpack.c.b16 %v421, %v417
      %v514 = vpack.c.b16 %v426, %v422
      %v515 = vpack.c.b16 %v427, %v423
      %v516 = vpack.c.b16 %v428, %v424
      %v517 = vpack.c.b16 %v429, %v425
      %v518 = vpack.c.b16 %v434, %v430
      %v519 = vpack.c.b16 %v435, %v431
      %v520 = vpack.c.b16 %v436, %v432
      %v521 = vpack.c.b16 %v437, %v433
      %v522 = vpack.c.b16 %v442, %v438
      %v523 = vpack.c.b16 %v443, %v439
      %v524 = vpack.c.b16 %v444, %v440
      %v525 = vpack.c.b16 %v445, %v441
      %v526 = vpack.c.b16 %v450, %v446
      %v527 = vpack.c.b16 %v451, %v447
      %v528 = vpack.c.b16 %v452, %v448
      %v529 = vpack.c.b16 %v453, %v449
      %v530 = vpack.c.b16 %v458, %v454
      %v531 = vpack.c.b16 %v459, %v455
      %v532 = vpack.c.b16 %v460, %v456
      %v533 = vpack.c.b16 %v461, %v457
      %v534 = vpack.c.b16 %v466, %v462
      %v535 = vpack.c.b16 %v467, %v463
      %v536 = vpack.c.b16 %v468, %v464
      %v537 = vpack.c.b16 %v469, %v465
      %v538 = vpack.c.b16 %v474, %v470
      %v539 = vpack.c.b16 %v475, %v471
      %v540 = vpack.c.b16 %v476, %v472
      %v541 = vpack.c.b16 %v477, %v473
      %v640 = vunpack.c.l.b16 %v236
      %v641 = vunpack.c.l.b16 %v237
      %v642 = vunpack.c.l.b16 %v238
      %v643 = vunpack.c.l.b16 %v239
      %v644 = vunpack.c.l.b16 %v240
      %v645 = vunpack.c.l.b16 %v241
      %v646 = vunpack.c.l.b16 %v242
      %v647 = vunpack.c.l.b16 %v243
      %v648 = vunpack.c.l.b16 %v244
      %v649 = vunpack.c.l.b16 %v245
      %v650 = vunpack.c.l.b16 %v246
      %v651 = vunpack.c.l.b16 %v247
      %v652 = vunpack.c.l.b16 %v248
      %v653 = vunpack.c.l.b16 %v249
      %v654 = vunpack.c.l.b16 %v250
      %v655 = vunpack.c.l.b16 %v251
      %v656 = vunpack.c.l.b16 %v252
      %v657 = vunpack.c.l.b16 %v253
      %v658 = vunpack.c.l.b16 %v254
      %v659 = vunpack.c.l.b16 %v255
      %v660 = vunpack.c.l.b16 %v256
      %v661 = vunpack.c.l.b16 %v257
      %v662 = vunpack.c.l.b16 %v258
      %v663 = vunpack.c.l.b16 %v259
      %v664 = vunpack.c.l.b16 %v260
      %v665 = vunpack.c.l.b16 %v261
      %v666 = vunpack.c.l.b16 %v262
      %v667 = vunpack.c.l.b16 %v263
      %v668 = vunpack.c.l.b16 %v264
      %v669 = vunpack.c.l.b16 %v265
      %v670 = vunpack.c.l.b16 %v266
      %v671 = vunpack.c.l.b16 %v267
      %v672 = vunpack.c.l.b16 %v268
      %v673 = vunpack.c.l.b16 %v269
      %v674 = vunpack.c.l.b16 %v270
      %v675 = vunpack.c.l.b16 %v271
      %v676 = vunpack.c.l.b16 %v272
      %v677 = vunpack.c.l.b16 %v273
      %v678 = vunpack.c.l.b16 %v274
      %v679 = vunpack.c.l.b16 %v275
      %v680 = vunpack.c.l.b16 %v276
      %v681 = vunpack.c.l.b16 %v277
      %v682 = vunpack.c.l.b16 %v278
      %v683 = vunpack.c.l.b16 %v279
      %v684 = vunpack.c.l.b16 %v280
      %v685 = vunpack.c.l.b16 %v281
      %v686 = vunpack.c.l.b16 %v282
      %v687 = vunpack.c.l.b16 %v283
      %v688 = vunpack.c.l.b16 %v284
      %v689 = vunpack.c.l.b16 %v285
      %v690 = vpack.c.b16 %v641, %v640
      %v691 = vpack.c.b16 %v643, %v642
      %v692 = vpack.c.b16 %v645, %v644
      %v693 = vpack.c.b16 %v647, %v646
      %v694 = vpack.c.b16 %v649, %v648
      %v695 = vpack.c.b16 %v651, %v650
      %v696 = vpack.c.b16 %v653, %v652
      %v697 = vpack.c.b16 %v655, %v654
      %v698 = vpack.c.b16 %v657, %v656
      %v699 = vpack.c.b16 %v659, %v658
      %v700 = vpack.c.b16 %v661, %v660
      %v701 = vpack.c.b16 %v663, %v662
      %v702 = vpack.c.b16 %v665, %v664
      %v703 = vpack.c.b16 %v667, %v666
      %v704 = vpack.c.b16 %v669, %v668
      %v705 = vpack.c.b16 %v671, %v670
      %v706 = vpack.c.b16 %v673, %v672
      %v707 = vpack.c.b16 %v675, %v674
      %v708 = vpack.c.b16 %v677, %v676
      %v709 = vpack.c.b16 %v679, %v678
      %v710 = vpack.c.b16 %v681, %v680
      %v711 = vpack.c.b16 %v683, %v682
      %v712 = vpack.c.b16 %v685, %v684
      %v713 = vpack.c.b16 %v687, %v686
      %v714 = vpack.c.b16 %v689, %v688
      %vm740 = vcmask 130048
      %v742 = vsel %vm740, %v481, 0
      %v745 = vsel %vm740, %v485, 0
      %v748 = vsel %vm740, %v489, 0
      %v751 = vsel %vm740, %v493, 0
      %v754 = vsel %vm740, %v497, 0
      %v757 = vsel %vm740, %v501, 0
      %v760 = vsel %vm740, %v505, 0
      %v763 = vsel %vm740, %v509, 0
      %v766 = vsel %vm740, %v513, 0
      %v769 = vsel %vm740, %v517, 0
      %v772 = vsel %vm740, %v521, 0
      %v775 = vsel %vm740, %v525, 0
      %v778 = vsel %vm740, %v529, 0
      %v781 = vsel %vm740, %v533, 0
      %v784 = vsel %vm740, %v537, 0
      %v787 = vsel %vm740, %v541, 0
      %789 = vmatpush.bf16.msra.mxu0 %v697
      %790 = vmatpush.bf16.msra.mxu0 %v696
      %791 = vmatpush.bf16.msra.mxu0 %v695
      %792 = vmatpush.bf16.msra.mxu0 %v694
      %793 = vmatpush.bf16.msra.mxu0 %v693
      %794 = vmatpush.bf16.msra.mxu0 %v692
      %795 = vmatpush.bf16.msra.mxu0 %v691
      %796 = vmatpush.bf16.msra.mxu0 %v690
      %797 = vmatmul.bf16.gmra.mxu0 %v478
      %v798 = vpop.f32.mrf.mxu0
      %v799 = vadd.f32 0.0, %v798
      %v800 = vpop.f32.mrf.mxu0
      %v801 = vadd.f32 0.0, %v800
      %802 = vmatmul.bf16.gmra.mxu0 %v482
      %v803 = vpop.f32.mrf.mxu0
      %v804 = vadd.f32 0.0, %v803
      %v805 = vpop.f32.mrf.mxu0
      %v806 = vadd.f32 0.0, %v805
      %807 = vmatmul.bf16.gmra.mxu0 %v486
      %v808 = vpop.f32.mrf.mxu0
      %v809 = vadd.f32 0.0, %v808
      %v810 = vpop.f32.mrf.mxu0
      %v811 = vadd.f32 0.0, %v810
      %812 = vmatmul.bf16.gmra.mxu0 %v490
      %v813 = vpop.f32.mrf.mxu0
      %v814 = vadd.f32 0.0, %v813
      %v815 = vpop.f32.mrf.mxu0
      %v816 = vadd.f32 0.0, %v815
      %817 = vmatmul.bf16.gmra.mxu0 %v494
      %v818 = vpop.f32.mrf.mxu0
      %v819 = vadd.f32 0.0, %v818
      %v820 = vpop.f32.mrf.mxu0
      %v821 = vadd.f32 0.0, %v820
      %822 = vmatmul.bf16.gmra.mxu0 %v498
      %v823 = vpop.f32.mrf.mxu0
      %v824 = vadd.f32 0.0, %v823
      %v825 = vpop.f32.mrf.mxu0
      %v826 = vadd.f32 0.0, %v825
      %827 = vmatmul.bf16.gmra.mxu0 %v502
      %v828 = vpop.f32.mrf.mxu0
      %v829 = vadd.f32 0.0, %v828
      %v830 = vpop.f32.mrf.mxu0
      %v831 = vadd.f32 0.0, %v830
      %832 = vmatmul.bf16.gmra.mxu0 %v506
      %v833 = vpop.f32.mrf.mxu0
      %v834 = vadd.f32 0.0, %v833
      %v835 = vpop.f32.mrf.mxu0
      %v836 = vadd.f32 0.0, %v835
      %837 = vmatmul.bf16.gmra.mxu0 %v510
      %v838 = vpop.f32.mrf.mxu0
      %v839 = vadd.f32 0.0, %v838
      %v840 = vpop.f32.mrf.mxu0
      %v841 = vadd.f32 0.0, %v840
      %842 = vmatmul.bf16.gmra.mxu0 %v514
      %v843 = vpop.f32.mrf.mxu0
      %v844 = vadd.f32 0.0, %v843
      %v845 = vpop.f32.mrf.mxu0
      %v846 = vadd.f32 0.0, %v845
      %847 = vmatmul.bf16.gmra.mxu0 %v518
      %v848 = vpop.f32.mrf.mxu0
      %v849 = vadd.f32 0.0, %v848
      %v850 = vpop.f32.mrf.mxu0
      %v851 = vadd.f32 0.0, %v850
      %852 = vmatmul.bf16.gmra.mxu0 %v522
      %v853 = vpop.f32.mrf.mxu0
      %v854 = vadd.f32 0.0, %v853
      %v855 = vpop.f32.mrf.mxu0
      %v856 = vadd.f32 0.0, %v855
      %857 = vmatmul.bf16.gmra.mxu0 %v526
      %v858 = vpop.f32.mrf.mxu0
      %v859 = vadd.f32 0.0, %v858
      %v860 = vpop.f32.mrf.mxu0
      %v861 = vadd.f32 0.0, %v860
      %862 = vmatmul.bf16.gmra.mxu0 %v530
      %v863 = vpop.f32.mrf.mxu0
      %v864 = vadd.f32 0.0, %v863
      %v865 = vpop.f32.mrf.mxu0
      %v866 = vadd.f32 0.0, %v865
      %867 = vmatmul.bf16.gmra.mxu0 %v534
      %v868 = vpop.f32.mrf.mxu0
      %v869 = vadd.f32 0.0, %v868
      %v870 = vpop.f32.mrf.mxu0
      %v871 = vadd.f32 0.0, %v870
      %872 = vmatmul.bf16.gmra.mxu0 %v538
      %v873 = vpop.f32.mrf.mxu0
      %v874 = vadd.f32 0.0, %v873
      %v875 = vpop.f32.mrf.mxu0
      %v876 = vadd.f32 0.0, %v875
      %877 = vdwg.mxu0
      %878 = vmatpush.bf16.msra.mxu0 %v705
      %879 = vmatpush.bf16.msra.mxu0 %v704
      %880 = vmatpush.bf16.msra.mxu0 %v703
      %881 = vmatpush.bf16.msra.mxu0 %v702
      %882 = vmatpush.bf16.msra.mxu0 %v701
      %883 = vmatpush.bf16.msra.mxu0 %v700
      %884 = vmatpush.bf16.msra.mxu0 %v699
      %885 = vmatpush.bf16.msra.mxu0 %v698
      %886 = vmatmul.bf16.gmra.mxu0 %v479
      %v887 = vpop.f32.mrf.mxu0
      %v888 = vadd.f32 %v799, %v887
      %v889 = vpop.f32.mrf.mxu0
      %v890 = vadd.f32 %v801, %v889
      %891 = vmatmul.bf16.gmra.mxu0 %v483
      %v892 = vpop.f32.mrf.mxu0
      %v893 = vadd.f32 %v804, %v892
      %v894 = vpop.f32.mrf.mxu0
      %v895 = vadd.f32 %v806, %v894
      %896 = vmatmul.bf16.gmra.mxu0 %v487
      %v897 = vpop.f32.mrf.mxu0
      %v898 = vadd.f32 %v809, %v897
      %v899 = vpop.f32.mrf.mxu0
      %v900 = vadd.f32 %v811, %v899
      %901 = vmatmul.bf16.gmra.mxu0 %v491
      %v902 = vpop.f32.mrf.mxu0
      %v903 = vadd.f32 %v814, %v902
      %v904 = vpop.f32.mrf.mxu0
      %v905 = vadd.f32 %v816, %v904
      %906 = vmatmul.bf16.gmra.mxu0 %v495
      %v907 = vpop.f32.mrf.mxu0
      %v908 = vadd.f32 %v819, %v907
      %v909 = vpop.f32.mrf.mxu0
      %v910 = vadd.f32 %v821, %v909
      %911 = vmatmul.bf16.gmra.mxu0 %v499
      %v912 = vpop.f32.mrf.mxu0
      %v913 = vadd.f32 %v824, %v912
      %v914 = vpop.f32.mrf.mxu0
      %v915 = vadd.f32 %v826, %v914
      %916 = vmatmul.bf16.gmra.mxu0 %v503
      %v917 = vpop.f32.mrf.mxu0
      %v918 = vadd.f32 %v829, %v917
      %v919 = vpop.f32.mrf.mxu0
      %v920 = vadd.f32 %v831, %v919
      %921 = vmatmul.bf16.gmra.mxu0 %v507
      %v922 = vpop.f32.mrf.mxu0
      %v923 = vadd.f32 %v834, %v922
      %v924 = vpop.f32.mrf.mxu0
      %v925 = vadd.f32 %v836, %v924
      %926 = vmatmul.bf16.gmra.mxu0 %v511
      %v927 = vpop.f32.mrf.mxu0
      %v928 = vadd.f32 %v839, %v927
      %v929 = vpop.f32.mrf.mxu0
      %v930 = vadd.f32 %v841, %v929
      %931 = vmatmul.bf16.gmra.mxu0 %v515
      %v932 = vpop.f32.mrf.mxu0
      %v933 = vadd.f32 %v844, %v932
      %v934 = vpop.f32.mrf.mxu0
      %v935 = vadd.f32 %v846, %v934
      %936 = vmatmul.bf16.gmra.mxu0 %v519
      %v937 = vpop.f32.mrf.mxu0
      %v938 = vadd.f32 %v849, %v937
      %v939 = vpop.f32.mrf.mxu0
      %v940 = vadd.f32 %v851, %v939
      %941 = vmatmul.bf16.gmra.mxu0 %v523
      %v942 = vpop.f32.mrf.mxu0
      %v943 = vadd.f32 %v854, %v942
      %v944 = vpop.f32.mrf.mxu0
      %v945 = vadd.f32 %v856, %v944
      %946 = vmatmul.bf16.gmra.mxu0 %v527
      %v947 = vpop.f32.mrf.mxu0
      %v948 = vadd.f32 %v859, %v947
      %v949 = vpop.f32.mrf.mxu0
      %v950 = vadd.f32 %v861, %v949
      %951 = vmatmul.bf16.gmra.mxu0 %v531
      %v952 = vpop.f32.mrf.mxu0
      %v953 = vadd.f32 %v864, %v952
      %v954 = vpop.f32.mrf.mxu0
      %v955 = vadd.f32 %v866, %v954
      %956 = vmatmul.bf16.gmra.mxu0 %v535
      %v957 = vpop.f32.mrf.mxu0
      %v958 = vadd.f32 %v869, %v957
      %v959 = vpop.f32.mrf.mxu0
      %v960 = vadd.f32 %v871, %v959
      %961 = vmatmul.bf16.gmra.mxu0 %v539
      %v962 = vpop.f32.mrf.mxu0
      %v963 = vadd.f32 %v874, %v962
      %v964 = vpop.f32.mrf.mxu0
      %v965 = vadd.f32 %v876, %v964
      %966 = vdwg.mxu0
      %967 = vmatpush.bf16.msra.mxu0 %v713
      %968 = vmatpush.bf16.msra.mxu0 %v712
      %969 = vmatpush.bf16.msra.mxu0 %v711
      %970 = vmatpush.bf16.msra.mxu0 %v710
      %971 = vmatpush.bf16.msra.mxu0 %v709
      %972 = vmatpush.bf16.msra.mxu0 %v708
      %973 = vmatpush.bf16.msra.mxu0 %v707
      %974 = vmatpush.bf16.msra.mxu0 %v706
      %975 = vmatmul.bf16.gmra.mxu0 %v480
      %v976 = vpop.f32.mrf.mxu0
      %v977 = vadd.f32 %v888, %v976
      %v978 = vpop.f32.mrf.mxu0
      %v979 = vadd.f32 %v890, %v978
      %980 = vmatmul.bf16.gmra.mxu0 %v484
      %v981 = vpop.f32.mrf.mxu0
      %v982 = vadd.f32 %v893, %v981
      %v983 = vpop.f32.mrf.mxu0
      %v984 = vadd.f32 %v895, %v983
      %985 = vmatmul.bf16.gmra.mxu0 %v488
      %v986 = vpop.f32.mrf.mxu0
      %v987 = vadd.f32 %v898, %v986
      %v988 = vpop.f32.mrf.mxu0
      %v989 = vadd.f32 %v900, %v988
      %990 = vmatmul.bf16.gmra.mxu0 %v492
      %v991 = vpop.f32.mrf.mxu0
      %v992 = vadd.f32 %v903, %v991
      %v993 = vpop.f32.mrf.mxu0
      %v994 = vadd.f32 %v905, %v993
      %995 = vmatmul.bf16.gmra.mxu0 %v496
      %v996 = vpop.f32.mrf.mxu0
      %v997 = vadd.f32 %v908, %v996
      %v998 = vpop.f32.mrf.mxu0
      %v999 = vadd.f32 %v910, %v998
      %1000 = vmatmul.bf16.gmra.mxu0 %v500
      %v1001 = vpop.f32.mrf.mxu0
      %v1002 = vadd.f32 %v913, %v1001
      %v1003 = vpop.f32.mrf.mxu0
      %v1004 = vadd.f32 %v915, %v1003
      %1005 = vmatmul.bf16.gmra.mxu0 %v504
      %v1006 = vpop.f32.mrf.mxu0
      %v1007 = vadd.f32 %v918, %v1006
      %v1008 = vpop.f32.mrf.mxu0
      %v1009 = vadd.f32 %v920, %v1008
      %1010 = vmatmul.bf16.gmra.mxu0 %v508
      %v1011 = vpop.f32.mrf.mxu0
      %v1012 = vadd.f32 %v923, %v1011
      %v1013 = vpop.f32.mrf.mxu0
      %v1014 = vadd.f32 %v925, %v1013
      %1015 = vmatmul.bf16.gmra.mxu0 %v512
      %v1016 = vpop.f32.mrf.mxu0
      %v1017 = vadd.f32 %v928, %v1016
      %v1018 = vpop.f32.mrf.mxu0
      %v1019 = vadd.f32 %v930, %v1018
      %1020 = vmatmul.bf16.gmra.mxu0 %v516
      %v1021 = vpop.f32.mrf.mxu0
      %v1022 = vadd.f32 %v933, %v1021
      %v1023 = vpop.f32.mrf.mxu0
      %v1024 = vadd.f32 %v935, %v1023
      %1025 = vmatmul.bf16.gmra.mxu0 %v520
      %v1026 = vpop.f32.mrf.mxu0
      %v1027 = vadd.f32 %v938, %v1026
      %v1028 = vpop.f32.mrf.mxu0
      %v1029 = vadd.f32 %v940, %v1028
      %1030 = vmatmul.bf16.gmra.mxu0 %v524
      %v1031 = vpop.f32.mrf.mxu0
      %v1032 = vadd.f32 %v943, %v1031
      %v1033 = vpop.f32.mrf.mxu0
      %v1034 = vadd.f32 %v945, %v1033
      %1035 = vmatmul.bf16.gmra.mxu0 %v528
      %v1036 = vpop.f32.mrf.mxu0
      %v1037 = vadd.f32 %v948, %v1036
      %v1038 = vpop.f32.mrf.mxu0
      %v1039 = vadd.f32 %v950, %v1038
      %1040 = vmatmul.bf16.gmra.mxu0 %v532
      %v1041 = vpop.f32.mrf.mxu0
      %v1042 = vadd.f32 %v953, %v1041
      %v1043 = vpop.f32.mrf.mxu0
      %v1044 = vadd.f32 %v955, %v1043
      %1045 = vmatmul.bf16.gmra.mxu0 %v536
      %v1046 = vpop.f32.mrf.mxu0
      %v1047 = vadd.f32 %v958, %v1046
      %v1048 = vpop.f32.mrf.mxu0
      %v1049 = vadd.f32 %v960, %v1048
      %1050 = vmatmul.bf16.gmra.mxu0 %v540
      %v1051 = vpop.f32.mrf.mxu0
      %v1052 = vadd.f32 %v963, %v1051
      %v1053 = vpop.f32.mrf.mxu0
      %v1054 = vadd.f32 %v965, %v1053
      %1055 = vdwg.mxu0
      %1056 = vmatpush.bf16.msra.mxu0 0
      %1057 = vmatpush.bf16.msra.mxu0 0
      %1058 = vmatpush.bf16.msra.mxu0 0
      %1059 = vmatpush.bf16.msra.mxu0 0
      %1060 = vmatpush.bf16.msra.mxu0 0
      %1061 = vmatpush.bf16.msra.mxu0 0
      %1062 = vmatpush.bf16.msra.mxu0 0
      %1063 = vmatpush.bf16.msra.mxu0 %v714
      %1064 = vmatmul.bf16.gmra.mxu0 %v742
      %v1065 = vpop.f32.mrf.mxu0
      %v1066 = vadd.f32 %v977, %v1065
      %v1067 = vpop.f32.mrf.mxu0
      %v1068 = vadd.f32 %v979, %v1067
      %1069 = vmatmul.bf16.gmra.mxu0 %v745
      %v1070 = vpop.f32.mrf.mxu0
      %v1071 = vadd.f32 %v982, %v1070
      %v1072 = vpop.f32.mrf.mxu0
      %v1073 = vadd.f32 %v984, %v1072
      %1074 = vmatmul.bf16.gmra.mxu0 %v748
      %v1075 = vpop.f32.mrf.mxu0
      %v1076 = vadd.f32 %v987, %v1075
      %v1077 = vpop.f32.mrf.mxu0
      %v1078 = vadd.f32 %v989, %v1077
      %1079 = vmatmul.bf16.gmra.mxu0 %v751
      %v1080 = vpop.f32.mrf.mxu0
      %v1081 = vadd.f32 %v992, %v1080
      %v1082 = vpop.f32.mrf.mxu0
      %v1083 = vadd.f32 %v994, %v1082
      %1084 = vmatmul.bf16.gmra.mxu0 %v754
      %v1085 = vpop.f32.mrf.mxu0
      %v1086 = vadd.f32 %v997, %v1085
      %v1087 = vpop.f32.mrf.mxu0
      %v1088 = vadd.f32 %v999, %v1087
      %1089 = vmatmul.bf16.gmra.mxu0 %v757
      %v1090 = vpop.f32.mrf.mxu0
      %v1091 = vadd.f32 %v1002, %v1090
      %v1092 = vpop.f32.mrf.mxu0
      %v1093 = vadd.f32 %v1004, %v1092
      %1094 = vmatmul.bf16.gmra.mxu0 %v760
      %v1095 = vpop.f32.mrf.mxu0
      %v1096 = vadd.f32 %v1007, %v1095
      %v1097 = vpop.f32.mrf.mxu0
      %v1098 = vadd.f32 %v1009, %v1097
      %1099 = vmatmul.bf16.gmra.mxu0 %v763
      %v1100 = vpop.f32.mrf.mxu0
      %v1101 = vadd.f32 %v1012, %v1100
      %v1102 = vpop.f32.mrf.mxu0
      %v1103 = vadd.f32 %v1014, %v1102
      %1104 = vmatmul.bf16.gmra.mxu0 %v766
      %v1105 = vpop.f32.mrf.mxu0
      %v1106 = vadd.f32 %v1017, %v1105
      %v1107 = vpop.f32.mrf.mxu0
      %v1108 = vadd.f32 %v1019, %v1107
      %1109 = vmatmul.bf16.gmra.mxu0 %v769
      %v1110 = vpop.f32.mrf.mxu0
      %v1111 = vadd.f32 %v1022, %v1110
      %v1112 = vpop.f32.mrf.mxu0
      %v1113 = vadd.f32 %v1024, %v1112
      %1114 = vmatmul.bf16.gmra.mxu0 %v772
      %v1115 = vpop.f32.mrf.mxu0
      %v1116 = vadd.f32 %v1027, %v1115
      %v1117 = vpop.f32.mrf.mxu0
      %v1118 = vadd.f32 %v1029, %v1117
      %1119 = vmatmul.bf16.gmra.mxu0 %v775
      %v1120 = vpop.f32.mrf.mxu0
      %v1121 = vadd.f32 %v1032, %v1120
      %v1122 = vpop.f32.mrf.mxu0
      %v1123 = vadd.f32 %v1034, %v1122
      %1124 = vmatmul.bf16.gmra.mxu0 %v778
      %v1125 = vpop.f32.mrf.mxu0
      %v1126 = vadd.f32 %v1037, %v1125
      %v1127 = vpop.f32.mrf.mxu0
      %v1128 = vadd.f32 %v1039, %v1127
      %1129 = vmatmul.bf16.gmra.mxu0 %v781
      %v1130 = vpop.f32.mrf.mxu0
      %v1131 = vadd.f32 %v1042, %v1130
      %v1132 = vpop.f32.mrf.mxu0
      %v1133 = vadd.f32 %v1044, %v1132
      %1134 = vmatmul.bf16.gmra.mxu0 %v784
      %v1135 = vpop.f32.mrf.mxu0
      %v1136 = vadd.f32 %v1047, %v1135
      %v1137 = vpop.f32.mrf.mxu0
      %v1138 = vadd.f32 %v1049, %v1137
      %1139 = vmatmul.bf16.gmra.mxu0 %v787
      %v1140 = vpop.f32.mrf.mxu0
      %v1141 = vadd.f32 %v1052, %v1140
      %v1142 = vpop.f32.mrf.mxu0
      %v1143 = vadd.f32 %v1054, %v1142
      %1144 = vdwg.mxu0
      %v1145 = vmax.f32 %v1066, %v1086
      %v1146 = vmax.f32 %v1068, %v1088
      %v1147 = vmax.f32 %v1071, %v1091
      %v1148 = vmax.f32 %v1073, %v1093
      %v1149 = vmax.f32 %v1076, %v1096
      %v1150 = vmax.f32 %v1078, %v1098
      %v1151 = vmax.f32 %v1081, %v1101
      %v1152 = vmax.f32 %v1083, %v1103
      %v1153 = vmax.f32 %v1106, %v1126
      %v1154 = vmax.f32 %v1108, %v1128
      %v1155 = vmax.f32 %v1111, %v1131
      %v1156 = vmax.f32 %v1113, %v1133
      %v1157 = vmax.f32 %v1116, %v1136
      %v1158 = vmax.f32 %v1118, %v1138
      %v1159 = vmax.f32 %v1121, %v1141
      %v1160 = vmax.f32 %v1123, %v1143
      %v1161 = vmax.f32 %v1145, %v1153
      %v1162 = vmax.f32 %v1146, %v1154
      %v1163 = vmax.f32 %v1147, %v1155
      %v1164 = vmax.f32 %v1148, %v1156
      %v1165 = vmax.f32 %v1149, %v1157
      %v1166 = vmax.f32 %v1150, %v1158
      %v1167 = vmax.f32 %v1151, %v1159
      %v1168 = vmax.f32 %v1152, %v1160
      %v1169 = vld [vmem:[%s2] sm:$0x1]
      %v1171 = vperm.slane %v1169, 0
      %v1173 = vadd.f32 %v1161, %v1171
      %v1174 = vadd.f32 %v1162, %v1171
      %v1175 = vadd.f32 %v1163, %v1171
      %v1176 = vadd.f32 %v1164, %v1171
      %v1177 = vadd.f32 %v1165, %v1171
      %v1178 = vadd.f32 %v1166, %v1171
      %v1179 = vadd.f32 %v1167, %v1171
      %v1180 = vadd.f32 %v1168, %v1171
      %v1181 = vmax.f32 %v1173, 0.0
      %v1182 = vmax.f32 %v1174, 0.0
      %v1183 = vmax.f32 %v1175, 0.0
      %v1184 = vmax.f32 %v1176, 0.0
      %v1185 = vmax.f32 %v1177, 0.0
      %v1186 = vmax.f32 %v1178, 0.0
      %v1187 = vmax.f32 %v1179, 0.0
      %v1188 = vmax.f32 %v1180, 0.0
      %v1189 = vpack.c.bf16 %v1181, %v1181
      %v1190 = vpack.c.bf16 %v1182, %v1182
      %v1191 = vpack.c.bf16 %v1183, %v1183
      %v1192 = vpack.c.bf16 %v1184, %v1184
      %v1193 = vpack.c.bf16 %v1185, %v1185
      %v1194 = vpack.c.bf16 %v1186, %v1186
      %v1195 = vpack.c.bf16 %v1187, %v1187
      %v1196 = vpack.c.bf16 %v1188, %v1188
      %1197 = vst [vmem:[%s170] sm:$0xf] %v1189
      %1198 = vst [vmem:[%s170 + $0x4] sm:$0xf] %v1190
      %1199 = vst [vmem:[%s170 + $0x8] sm:$0xf] %v1191
      %1200 = vst [vmem:[%s170 + $0xc] sm:$0xf] %v1192
      %1201 = vst [vmem:[%s170 + $0x10] sm:$0xf] %v1193
      %1202 = vst [vmem:[%s170 + $0x14] sm:$0xf] %v1194
      %1203 = vst [vmem:[%s170 + $0x18] sm:$0xf] %v1195
      %1204 = vst [vmem:[%s170 + $0x1c] sm:$0xf] %v1196
      %p1205 = scmp.lt.s32.totalorder %s14, 1
      %s1206 = scalar_select %p1205, %s14, 1
      %s1207 = smul.addr %s1206, 8
      %s1208 = smul.addr %s1207, 4
      %s1209 = scalar_lea.vmem %s3, %s1208
      // Predicated region
      $region33: #{convnet_forward.4} parent=31 // pred_check
        %p1210 = pneg %p100
      $region34: #{convnet_forward.4} parent=31 // pred_check_branch
        %1212 = sbr.rel (%p1210) target = $region36
      $region35: #{convnet_forward.4} parent=31 // pred_region
        _
      $region36: #{convnet_forward.4} parent=31 // pred_fallthru
        _
    $region32: #{convnet_forward.4} parent=5 // pred_fallthru
      _
    %p1213 = scmp.le.s32.totalorder 2, %s9
    // Predicated region
    $region37: #{convnet_forward.4} parent=5 // pred_check
      %p1214 = pneg %p1213
    $region38: #{convnet_forward.4} parent=5 // pred_check_branch
      %1216 = sbr.rel (%p1214) target = $region40
    $region39: #{convnet_forward.4} parent=5 // pred_region
      %s1217 = ssub.s32 %s9, 2
      // Predicated region
      $region41: #{convnet_forward.4} parent=39 // pred_check
        %p1218 = pneg %p106
      $region42: #{convnet_forward.4} parent=39 // pred_check_branch
        %1220 = sbr.rel (%p1218) target = $region44
      $region43: #{convnet_forward.4} parent=39 // pred_region
        %p1221 = scmp.lt.s32.totalorder %s15, 1
        %s1222 = scalar_select %p1221, %s15, 1
        %s1223 = smul.addr %s1222, 8
        %s1224 = smul.addr %s1223, 4
        %s1225 = scalar_lea.vmem %s3, %s1224
      $region44: #{convnet_forward.4} parent=39 // pred_fallthru
        _
    $region40: #{convnet_forward.4} parent=5 // pred_fallthru
      _
  $region6: #{convnet_forward.4} parent=0 // loop_footer
    %s13 = sadd.s32 1, %s9
  $region7: #{convnet_forward.4} parent=0 // loop_footer_branch
    %8 = sbr.rel target = $region3
  $region8: #{convnet_forward.4} parent=0 // loop_exit
    _

// kernel: convnet_forward.5
$region0: #{convnet_forward.5}
  #allocation0 [shape = 'u32[]', space=smem, size = 0x4, offset = 0x4, fixed_abs, tag = 'smem constant byte address 0x4 - core index']
  #allocation1 [shape = 'u32[72,128]{1,0:T(1,128)}', space=vmem, size = 0x9000, scoped, tag = 'internal scratch']
  #allocation2 [shape = 'f32[2,128]{1,0:T(2,128)}', space=vmem, size = 0x400, scoped, tag = 'scratch operand']
  %s0 = inlined_call_operand.vmem [shape: bf16[2,2048], index: 0, kind: input, shape index: {}]
  %s1 = inlined_call_operand.vmem [shape: bf16[2048,1024], index: 1, kind: input, shape index: {}]
  %s2 = inlined_call_operand.vmem [shape: f32[1,1024], index: 2, kind: input, shape index: {}]
  %s3 = inlined_call_operand.vmem [shape: bf16[1024,128], index: 3, kind: input, shape index: {}]
  %s4 = inlined_call_operand.vmem [shape: f32[1,128], index: 4, kind: input, shape index: {}]
  %s5 = inlined_call_operand.hbm [shape: f32[2,128], index: 5, kind: output, shape index: {}]
  %s6 = sld [smem:[#allocation0]]
  $region98: #{convnet_forward.5} parent=0
    _
  %s8 = ssub.s32 1, %s6
  %s9 = scalar_select 0, %s8, %s6
  $region1: #{convnet_forward.5} parent=0
    #allocation3 [shape = 'u8[4194304]{0}', space=vmem, size = 0x400000, scoped, tag = 'input window, operand 1']
    #allocation4 [shape = 'u8[1024]{0}', space=vmem, size = 0x400, scoped, tag = 'output window, operand 0, single buffered']
    #allocation5 [shape = 's32[2]{0}', space=sflag, size = 0x8, scoped, tag = 'scoped memory for convnet_forward.5']
    %10 = vsyncpa [#allocation5], 0
    loop: start=0, step=1, limit=4
    $region2: #{convnet_forward.5} parent=1 // loop_pre_header
      _
    $region3: #{convnet_forward.5} parent=1 // loop_header
      %s12 = sphi 0, %s16
      %p13 = scmp.ge.s32.totalorder %s12, 4
      %s20 = sphi 0, %s20
      %s22 = sphi 0, %s20
      %s23 = sphi 0, %s22
      %s37 = sphi 0, %s23
      %s43 = sphi 0, %s45
      %s46 = sphi 0, %s43
      %s47 = sphi 0, %s46
      %s63 = sphi 0, %s47
      %s69 = sphi 0, %s71
      %s72 = sphi 0, %s69
      %s73 = sphi 0, %s72
      %s89 = sphi 0, %s73
      %s95 = sphi 0, %s97
      %s98 = sphi 0, %s95
      %s99 = sphi 0, %s98
      %s115 = sphi 0, %s99
      %s119 = sphi 0, %s119
      %s121 = sphi 0, %s119
      %s122 = sphi 0, %s121
      %s136 = sphi 0, %s122
      %s140 = sphi 0, %s140
      %s142 = sphi 0, %s140
      %s143 = sphi 0, %s142
      %s157 = sphi 0, %s143
    $region4: #{convnet_forward.5} parent=1 // loop_header_branch
      %15 = sbr.rel (%p13) target = $region8
    $region5: #{convnet_forward.5} parent=1 // loop_body
      %s17 = ssub.s32 %s12, 1
      %s18 = ssub.s32 %s12, 2
      %s19 = sadd.s32 %s12, 1
      %s21 = sadd.s32 %s20, 1
      %p24 = scmp.eq.s32.totalorder %s12, 1
      %p25 = scmp.ne.s32.totalorder %s20, %s22
      %p26 = scmp.eq.s32.totalorder %s12, 0
      %p27 = por %p25, %p26
      %p28 = scmp.ne.s32.totalorder %s20, %s22
      %p29 = scmp.eq.s32.totalorder %s17, 1
      %p30 = por %p28, %p29
      %p31 = scmp.ne.s32.totalorder %s22, %s23
      %p32 = scmp.eq.s32.totalorder %s17, 0
      %p33 = por %p31, %p32
      %p34 = scmp.ne.s32.totalorder %s22, %s23
      %p35 = scmp.eq.s32.totalorder %s18, 1
      %p36 = por %p34, %p35
      %p38 = scmp.ne.s32.totalorder %s23, %s37
      %p39 = scmp.eq.s32.totalorder %s18, 0
      %p40 = por %p38, %p39
      %s41 = ssub.s32 %s12, %s19
      %p42 = scmp.eq.s32.totalorder %s41, 0
      %s44 = sadd.s32 %s43, 1
      %s45 = scalar_select %p42, %s43, %s44
      %p48 = pneg %p42
      %p49 = scmp.eq.s32.totalorder %s12, 1
      %p50 = por %p48, %p49
      %p51 = scmp.ne.s32.totalorder %s43, %s46
      %p52 = scmp.eq.s32.totalorder %s12, 0
      %p53 = por %p51, %p52
      %p54 = scmp.ne.s32.totalorder %s43, %s46
      %p55 = scmp.eq.s32.totalorder %s17, 1
      %p56 = por %p54, %p55
      %p57 = scmp.ne.s32.totalorder %s46, %s47
      %p58 = scmp.eq.s32.totalorder %s17, 0
      %p59 = por %p57, %p58
      %p60 = scmp.ne.s32.totalorder %s46, %s47
      %p61 = scmp.eq.s32.totalorder %s18, 1
      %p62 = por %p60, %p61
      %p64 = scmp.ne.s32.totalorder %s47, %s63
      %p65 = scmp.eq.s32.totalorder %s18, 0
      %p66 = por %p64, %p65
      %s67 = ssub.s32 %s12, %s19
      %p68 = scmp.eq.s32.totalorder %s67, 0
      %s70 = sadd.s32 %s69, 1
      %s71 = scalar_select %p68, %s69, %s70
      %p74 = pneg %p68
      %p75 = scmp.eq.s32.totalorder %s12, 1
      %p76 = por %p74, %p75
      %p77 = scmp.ne.s32.totalorder %s69, %s72
      %p78 = scmp.eq.s32.totalorder %s12, 0
      %p79 = por %p77, %p78
      %p80 = scmp.ne.s32.totalorder %s69, %s72
      %p81 = scmp.eq.s32.totalorder %s17, 1
      %p82 = por %p80, %p81
      %p83 = scmp.ne.s32.totalorder %s72, %s73
      %p84 = scmp.eq.s32.totalorder %s17, 0
      %p85 = por %p83, %p84
      %p86 = scmp.ne.s32.totalorder %s72, %s73
      %p87 = scmp.eq.s32.totalorder %s18, 1
      %p88 = por %p86, %p87
      %p90 = scmp.ne.s32.totalorder %s73, %s89
      %p91 = scmp.eq.s32.totalorder %s18, 0
      %p92 = por %p90, %p91
      %s93 = ssub.s32 %s12, %s19
      %p94 = scmp.eq.s32.totalorder %s93, 0
      %s96 = sadd.s32 %s95, 1
      %s97 = scalar_select %p94, %s95, %s96
      %p100 = pneg %p94
      %p101 = scmp.eq.s32.totalorder %s12, 1
      %p102 = por %p100, %p101
      %p103 = scmp.ne.s32.totalorder %s95, %s98
      %p104 = scmp.eq.s32.totalorder %s12, 0
      %p105 = por %p103, %p104
      %p106 = scmp.ne.s32.totalorder %s95, %s98
      %p107 = scmp.eq.s32.totalorder %s17, 1
      %p108 = por %p106, %p107
      %p109 = scmp.ne.s32.totalorder %s98, %s99
      %p110 = scmp.eq.s32.totalorder %s17, 0
      %p111 = por %p109, %p110
      %p112 = scmp.ne.s32.totalorder %s98, %s99
      %p113 = scmp.eq.s32.totalorder %s18, 1
      %p114 = por %p112, %p113
      %p116 = scmp.ne.s32.totalorder %s99, %s115
      %p117 = scmp.eq.s32.totalorder %s18, 0
      %p118 = por %p116, %p117
      %s120 = sadd.s32 %s119, 1
      %p123 = scmp.eq.s32.totalorder %s12, 1
      %p124 = scmp.ne.s32.totalorder %s119, %s121
      %p125 = scmp.eq.s32.totalorder %s12, 0
      %p126 = por %p124, %p125
      %p127 = scmp.ne.s32.totalorder %s119, %s121
      %p128 = scmp.eq.s32.totalorder %s17, 1
      %p129 = por %p127, %p128
      %p130 = scmp.ne.s32.totalorder %s121, %s122
      %p131 = scmp.eq.s32.totalorder %s17, 0
      %p132 = por %p130, %p131
      %p133 = scmp.ne.s32.totalorder %s121, %s122
      %p134 = scmp.eq.s32.totalorder %s18, 1
      %p135 = por %p133, %p134
      %p137 = scmp.ne.s32.totalorder %s122, %s136
      %p138 = scmp.eq.s32.totalorder %s18, 0
      %p139 = por %p137, %p138
      %s141 = sadd.s32 %s140, 1
      %p144 = scmp.eq.s32.totalorder %s12, 1
      %p145 = scmp.ne.s32.totalorder %s140, %s142
      %p146 = scmp.eq.s32.totalorder %s12, 0
      %p147 = por %p145, %p146
      %p148 = scmp.ne.s32.totalorder %s140, %s142
      %p149 = scmp.eq.s32.totalorder %s17, 1
      %p150 = por %p148, %p149
      %p151 = scmp.ne.s32.totalorder %s142, %s143
      %p152 = scmp.eq.s32.totalorder %s17, 0
      %p153 = por %p151, %p152
      %p154 = scmp.ne.s32.totalorder %s142, %s143
      %p155 = scmp.eq.s32.totalorder %s18, 1
      %p156 = por %p154, %p155
      %p158 = scmp.ne.s32.totalorder %s143, %s157
      %p159 = scmp.eq.s32.totalorder %s18, 0
      %p160 = por %p158, %p159
      %p161 = scmp.le.s32.totalorder 1, %s12
      %p162 = scmp.lt.s32.totalorder %s12, 3
      %p163 = pnand %p161, %p162
      %p164 = pneg %p163
      // Predicated region
      $region9: #{convnet_forward.5} parent=5 // pred_check
        _
      $region10: #{convnet_forward.5} parent=5 // pred_check_branch
        %166 = sbr.rel (%p163) target = $region12
      $region11: #{convnet_forward.5} parent=5 // pred_region
        %s167 = ssub.s32 %s12, 1
        // Predicated region
        $region13: #{convnet_forward.5} parent=11 // pred_check
          %p168 = pneg %p33
        $region14: #{convnet_forward.5} parent=11 // pred_check_branch
          %170 = sbr.rel (%p168) target = $region16
        $region15: #{convnet_forward.5} parent=11 // pred_region
          _
        $region16: #{convnet_forward.5} parent=11 // pred_fallthru
          _
        // Predicated region
        $region17: #{convnet_forward.5} parent=11 // pred_check
          %p171 = pneg %p132
        $region18: #{convnet_forward.5} parent=11 // pred_check_branch
          %173 = sbr.rel (%p171) target = $region20
        $region19: #{convnet_forward.5} parent=11 // pred_region
          _
        $region20: #{convnet_forward.5} parent=11 // pred_fallthru
          _
      $region12: #{convnet_forward.5} parent=5 // pred_fallthru
        _
      %p174 = scmp.lt.s32.totalorder %s12, 2
      // Predicated region
      $region21: #{convnet_forward.5} parent=5 // pred_check
        %p175 = pneg %p174
      $region22: #{convnet_forward.5} parent=5 // pred_check_branch
        %177 = sbr.rel (%p175) target = $region24
      $region23: #{convnet_forward.5} parent=5 // pred_region
        // Predicated region
        $region25: #{convnet_forward.5} parent=23 // pred_check
          %p178 = pneg %p53
        $region26: #{convnet_forward.5} parent=23 // pred_check_branch
          %180 = sbr.rel (%p178) target = $region28
        $region27: #{convnet_forward.5} parent=23 // pred_region
          %s181 = sand.u32 %s43, 1
          %s182 = sand.u32 %s43, 1
          %s183 = smul.addr %s182, 4096
          %s184 = scalar_lea.vmem [#allocation3], %s183
          %s185 = smul.u32 4, %s12
          %s186 = smul.addr %s185, 4
          %s187 = scalar_lea.vmem %s1, %s186
          // Predicated region
          $region29: #{convnet_forward.5} parent=27 // pred_check
            _
          $region30: #{convnet_forward.5} parent=27 // pred_check_branch
            %189 = sbr.rel (0) target = $region32
          $region31: #{convnet_forward.5} parent=27 // pred_region
            // Predicated region
            $region33: #{convnet_forward.5} parent=31 // pred_check
              _
            $region34: #{convnet_forward.5} parent=31 // pred_check_branch
              %191 = sbr.rel (0) target = $region36
            $region35: #{convnet_forward.5} parent=31 // pred_region
              loop: start=0, step=1, limit=2
              $region37: #{convnet_forward.5} parent=35 // loop_pre_header
                _
              $region38: #{convnet_forward.5} parent=35 // loop_header
                %s193 = sphi 0, %s197
                %p194 = scmp.ge.s32.totalorder %s193, 2
                %s198 = sphi 0, %s715
                %s199 = sphi %s187, %s718
                %s200 = sphi %s184, %s719
              $region39: #{convnet_forward.5} parent=35 // loop_header_branch
                %196 = sbr.rel (%p194) target = $region43
              $region40: #{convnet_forward.5} parent=35 // loop_body
                %v201 = vld [vmem:[%s199] sm:$0xff]
                %202 = vst [vmem:[%s200] sm:$0xff] %v201
                %v203 = vld [vmem:[%s199 + $0x20] sm:$0xff]
                %204 = vst [vmem:[%s200 + $0x10] sm:$0xff] %v203
                %v205 = vld [vmem:[%s199 + $0x40] sm:$0xff]
                %206 = vst [vmem:[%s200 + $0x20] sm:$0xff] %v205
                %v207 = vld [vmem:[%s199 + $0x60] sm:$0xff]
                %208 = vst [vmem:[%s200 + $0x30] sm:$0xff] %v207
                %v209 = vld [vmem:[%s199 + $0x80] sm:$0xff]
                %210 = vst [vmem:[%s200 + $0x40] sm:$0xff] %v209
                %v211 = vld [vmem:[%s199 + $0xa0] sm:$0xff]
                %212 = vst [vmem:[%s200 + $0x50] sm:$0xff] %v211
                %v213 = vld [vmem:[%s199 + $0xc0] sm:$0xff]
                %214 = vst [vmem:[%s200 + $0x60] sm:$0xff] %v213
                %v215 = vld [vmem:[%s199 + $0xe0] sm:$0xff]
                %216 = vst [vmem:[%s200 + $0x70] sm:$0xff] %v215
                %v217 = vld [vmem:[%s199 + $0x100] sm:$0xff]
                %218 = vst [vmem:[%s200 + $0x80] sm:$0xff] %v217
                %v219 = vld [vmem:[%s199 + $0x120] sm:$0xff]
                %220 = vst [vmem:[%s200 + $0x90] sm:$0xff] %v219
                %v221 = vld [vmem:[%s199 + $0x140] sm:$0xff]
                %222 = vst [vmem:[%s200 + $0xa0] sm:$0xff] %v221
                %v223 = vld [vmem:[%s199 + $0x160] sm:$0xff]
                %224 = vst [vmem:[%s200 + $0xb0] sm:$0xff] %v223
                %v225 = vld [vmem:[%s199 + $0x180] sm:$0xff]
                %226 = vst [vmem:[%s200 + $0xc0] sm:$0xff] %v225
                %v227 = vld [vmem:[%s199 + $0x1a0] sm:$0xff]
                %228 = vst [vmem:[%s200 + $0xd0] sm:$0xff] %v227
                %v229 = vld [vmem:[%s199 + $0x1c0] sm:$0xff]
                %230 = vst [vmem:[%s200 + $0xe0] sm:$0xff] %v229
                %v231 = vld [vmem:[%s199 + $0x1e0] sm:$0xff]
                %232 = vst [vmem:[%s200 + $0xf0] sm:$0xff] %v231
                %v233 = vld [vmem:[%s199 + $0x200] sm:$0xff]
                %234 = vst [vmem:[%s200 + $0x100] sm:$0xff] %v233
                %v235 = vld [vmem:[%s199 + $0x220] sm:$0xff]
                %236 = vst [vmem:[%s200 + $0x110] sm:$0xff] %v235
                %v237 = vld [vmem:[%s199 + $0x240] sm:$0xff]
                %238 = vst [vmem:[%s200 + $0x120] sm:$0xff] %v237
                %v239 = vld [vmem:[%s199 + $0x260] sm:$0xff]
                %240 = vst [vmem:[%s200 + $0x130] sm:$0xff] %v239
                %v241 = vld [vmem:[%s199 + $0x280] sm:$0xff]
                %242 = vst [vmem:[%s200 + $0x140] sm:$0xff] %v241
                %v243 = vld [vmem:[%s199 + $0x2a0] sm:$0xff]
                %244 = vst [vmem:[%s200 + $0x150] sm:$0xff] %v243
                %v245 = vld [vmem:[%s199 + $0x2c0] sm:$0xff]
                %246 = vst [vmem:[%s200 + $0x160] sm:$0xff] %v245
                %v247 = vld [vmem:[%s199 + $0x2e0] sm:$0xff]
                %248 = vst [vmem:[%s200 + $0x170] sm:$0xff] %v247
                %v249 = vld [vmem:[%s199 + $0x300] sm:$0xff]
                %250 = vst [vmem:[%s200 + $0x180] sm:$0xff] %v249
                %v251 = vld [vmem:[%s199 + $0x320] sm:$0xff]
                %252 = vst [vmem:[%s200 + $0x190] sm:$0xff] %v251
                %v253 = vld [vmem:[%s199 + $0x340] sm:$0xff]
                %254 = vst [vmem:[%s200 + $0x1a0] sm:$0xff] %v253
                %v255 = vld [vmem:[%s199 + $0x360] sm:$0xff]
                %256 = vst [vmem:[%s200 + $0x1b0] sm:$0xff] %v255
                %v257 = vld [vmem:[%s199 + $0x380] sm:$0xff]
                %258 = vst [vmem:[%s200 + $0x1c0] sm:$0xff] %v257
                %v259 = vld [vmem:[%s199 + $0x3a0] sm:$0xff]
                %260 = vst [vmem:[%s200 + $0x1d0] sm:$0xff] %v259
                %v261 = vld [vmem:[%s199 + $0x3c0] sm:$0xff]
                %262 = vst [vmem:[%s200 + $0x1e0] sm:$0xff] %v261
                %v263 = vld [vmem:[%s199 + $0x3e0] sm:$0xff]
                %264 = vst [vmem:[%s200 + $0x1f0] sm:$0xff] %v263
                %v265 = vld [vmem:[%s199 + $0x400] sm:$0xff]
                %266 = vst [vmem:[%s200 + $0x200] sm:$0xff] %v265
                %v267 = vld [vmem:[%s199 + $0x420] sm:$0xff]
                %268 = vst [vmem:[%s200 + $0x210] sm:$0xff] %v267
                %v269 = vld [vmem:[%s199 + $0x440] sm:$0xff]
                %270 = vst [vmem:[%s200 + $0x220] sm:$0xff] %v269
                %v271 = vld [vmem:[%s199 + $0x460] sm:$0xff]
                %272 = vst [vmem:[%s200 + $0x230] sm:$0xff] %v271
                %v273 = vld [vmem:[%s199 + $0x480] sm:$0xff]
                %274 = vst [vmem:[%s200 + $0x240] sm:$0xff] %v273
                %v275 = vld [vmem:[%s199 + $0x4a0] sm:$0xff]
                %276 = vst [vmem:[%s200 + $0x250] sm:$0xff] %v275
                %v277 = vld [vmem:[%s199 + $0x4c0] sm:$0xff]
                %278 = vst [vmem:[%s200 + $0x260] sm:$0xff] %v277
                %v279 = vld [vmem:[%s199 + $0x4e0] sm:$0xff]
                %280 = vst [vmem:[%s200 + $0x270] sm:$0xff] %v279
                %v281 = vld [vmem:[%s199 + $0x500] sm:$0xff]
                %282 = vst [vmem:[%s200 + $0x280] sm:$0xff] %v281
                %v283 = vld [vmem:[%s199 + $0x520] sm:$0xff]
                %284 = vst [vmem:[%s200 + $0x290] sm:$0xff] %v283
                %v285 = vld [vmem:[%s199 + $0x540] sm:$0xff]
                %286 = vst [vmem:[%s200 + $0x2a0] sm:$0xff] %v285
                %v287 = vld [vmem:[%s199 + $0x560] sm:$0xff]
                %288 = vst [vmem:[%s200 + $0x2b0] sm:$0xff] %v287
                %v289 = vld [vmem:[%s199 + $0x580] sm:$0xff]
                %290 = vst [vmem:[%s200 + $0x2c0] sm:$0xff] %v289
                %v291 = vld [vmem:[%s199 + $0x5a0] sm:$0xff]
                %292 = vst [vmem:[%s200 + $0x2d0] sm:$0xff] %v291
                %v293 = vld [vmem:[%s199 + $0x5c0] sm:$0xff]
                %294 = vst [vmem:[%s200 + $0x2e0] sm:$0xff] %v293
                %v295 = vld [vmem:[%s199 + $0x5e0] sm:$0xff]
                %296 = vst [vmem:[%s200 + $0x2f0] sm:$0xff] %v295
                %v297 = vld [vmem:[%s199 + $0x600] sm:$0xff]
                %298 = vst [vmem:[%s200 + $0x300] sm:$0xff] %v297
                %v299 = vld [vmem:[%s199 + $0x620] sm:$0xff]
                %300 = vst [vmem:[%s200 + $0x310] sm:$0xff] %v299
                %v301 = vld [vmem:[%s199 + $0x640] sm:$0xff]
                %302 = vst [vmem:[%s200 + $0x320] sm:$0xff] %v301
                %v303 = vld [vmem:[%s199 + $0x660] sm:$0xff]
                %304 = vst [vmem:[%s200 + $0x330] sm:$0xff] %v303
                %v305 = vld [vmem:[%s199 + $0x680] sm:$0xff]
                %306 = vst [vmem:[%s200 + $0x340] sm:$0xff] %v305
                %v307 = vld [vmem:[%s199 + $0x6a0] sm:$0xff]
                %308 = vst [vmem:[%s200 + $0x350] sm:$0xff] %v307
                %v309 = vld [vmem:[%s199 + $0x6c0] sm:$0xff]
                %310 = vst [vmem:[%s200 + $0x360] sm:$0xff] %v309
                %v311 = vld [vmem:[%s199 + $0x6e0] sm:$0xff]
                %312 = vst [vmem:[%s200 + $0x370] sm:$0xff] %v311
                %v313 = vld [vmem:[%s199 + $0x700] sm:$0xff]
                %314 = vst [vmem:[%s200 + $0x380] sm:$0xff] %v313
                %v315 = vld [vmem:[%s199 + $0x720] sm:$0xff]
                %316 = vst [vmem:[%s200 + $0x390] sm:$0xff] %v315
                %v317 = vld [vmem:[%s199 + $0x740] sm:$0xff]
                %318 = vst [vmem:[%s200 + $0x3a0] sm:$0xff] %v317
                %v319 = vld [vmem:[%s199 + $0x760] sm:$0xff]
                %320 = vst [vmem:[%s200 + $0x3b0] sm:$0xff] %v319
                %v321 = vld [vmem:[%s199 + $0x780] sm:$0xff]
                %322 = vst [vmem:[%s200 + $0x3c0] sm:$0xff] %v321
                %v323 = vld [vmem:[%s199 + $0x7a0] sm:$0xff]
                %324 = vst [vmem:[%s200 + $0x3d0] sm:$0xff] %v323
                %v325 = vld [vmem:[%s199 + $0x7c0] sm:$0xff]
                %326 = vst [vmem:[%s200 + $0x3e0] sm:$0xff] %v325
                %v327 = vld [vmem:[%s199 + $0x7e0] sm:$0xff]
                %328 = vst [vmem:[%s200 + $0x3f0] sm:$0xff] %v327
                %v329 = vld [vmem:[%s199 + $0x800] sm:$0xff]
                %330 = vst [vmem:[%s200 + $0x400] sm:$0xff] %v329
                %v331 = vld [vmem:[%s199 + $0x820] sm:$0xff]
                %332 = vst [vmem:[%s200 + $0x410] sm:$0xff] %v331
                %v333 = vld [vmem:[%s199 + $0x840] sm:$0xff]
                %334 = vst [vmem:[%s200 + $0x420] sm:$0xff] %v333
                %v335 = vld [vmem:[%s199 + $0x860] sm:$0xff]
                %336 = vst [vmem:[%s200 + $0x430] sm:$0xff] %v335
                %v337 = vld [vmem:[%s199 + $0x880] sm:$0xff]
                %338 = vst [vmem:[%s200 + $0x440] sm:$0xff] %v337
                %v339 = vld [vmem:[%s199 + $0x8a0] sm:$0xff]
                %340 = vst [vmem:[%s200 + $0x450] sm:$0xff] %v339
                %v341 = vld [vmem:[%s199 + $0x8c0] sm:$0xff]
                %342 = vst [vmem:[%s200 + $0x460] sm:$0xff] %v341
                %v343 = vld [vmem:[%s199 + $0x8e0] sm:$0xff]
                %344 = vst [vmem:[%s200 + $0x470] sm:$0xff] %v343
                %v345 = vld [vmem:[%s199 + $0x900] sm:$0xff]
                %346 = vst [vmem:[%s200 + $0x480] sm:$0xff] %v345
                %v347 = vld [vmem:[%s199 + $0x920] sm:$0xff]
                %348 = vst [vmem:[%s200 + $0x490] sm:$0xff] %v347
                %v349 = vld [vmem:[%s199 + $0x940] sm:$0xff]
                %350 = vst [vmem:[%s200 + $0x4a0] sm:$0xff] %v349
                %v351 = vld [vmem:[%s199 + $0x960] sm:$0xff]
                %352 = vst [vmem:[%s200 + $0x4b0] sm:$0xff] %v351
                %v353 = vld [vmem:[%s199 + $0x980] sm:$0xff]
                %354 = vst [vmem:[%s200 + $0x4c0] sm:$0xff] %v353
                %v355 = vld [vmem:[%s199 + $0x9a0] sm:$0xff]
                %356 = vst [vmem:[%s200 + $0x4d0] sm:$0xff] %v355
                %v357 = vld [vmem:[%s199 + $0x9c0] sm:$0xff]
                %358 = vst [vmem:[%s200 + $0x4e0] sm:$0xff] %v357
                %v359 = vld [vmem:[%s199 + $0x9e0] sm:$0xff]
                %360 = vst [vmem:[%s200 + $0x4f0] sm:$0xff] %v359
                %v361 = vld [vmem:[%s199 + $0xa00] sm:$0xff]
                %362 = vst [vmem:[%s200 + $0x500] sm:$0xff] %v361
                %v363 = vld [vmem:[%s199 + $0xa20] sm:$0xff]
                %364 = vst [vmem:[%s200 + $0x510] sm:$0xff] %v363
                %v365 = vld [vmem:[%s199 + $0xa40] sm:$0xff]
                %366 = vst [vmem:[%s200 + $0x520] sm:$0xff] %v365
                %v367 = vld [vmem:[%s199 + $0xa60] sm:$0xff]
                %368 = vst [vmem:[%s200 + $0x530] sm:$0xff] %v367
                %v369 = vld [vmem:[%s199 + $0xa80] sm:$0xff]
                %370 = vst [vmem:[%s200 + $0x540] sm:$0xff] %v369
                %v371 = vld [vmem:[%s199 + $0xaa0] sm:$0xff]
                %372 = vst [vmem:[%s200 + $0x550] sm:$0xff] %v371
                %v373 = vld [vmem:[%s199 + $0xac0] sm:$0xff]
                %374 = vst [vmem:[%s200 + $0x560] sm:$0xff] %v373
                %v375 = vld [vmem:[%s199 + $0xae0] sm:$0xff]
                %376 = vst [vmem:[%s200 + $0x570] sm:$0xff] %v375
                %v377 = vld [vmem:[%s199 + $0xb00] sm:$0xff]
                %378 = vst [vmem:[%s200 + $0x580] sm:$0xff] %v377
                %v379 = vld [vmem:[%s199 + $0xb20] sm:$0xff]
                %380 = vst [vmem:[%s200 + $0x590] sm:$0xff] %v379
                %v381 = vld [vmem:[%s199 + $0xb40] sm:$0xff]
                %382 = vst [vmem:[%s200 + $0x5a0] sm:$0xff] %v381
                %v383 = vld [vmem:[%s199 + $0xb60] sm:$0xff]
                %384 = vst [vmem:[%s200 + $0x5b0] sm:$0xff] %v383
                %v385 = vld [vmem:[%s199 + $0xb80] sm:$0xff]
                %386 = vst [vmem:[%s200 + $0x5c0] sm:$0xff] %v385
                %v387 = vld [vmem:[%s199 + $0xba0] sm:$0xff]
                %388 = vst [vmem:[%s200 + $0x5d0] sm:$0xff] %v387
                %v389 = vld [vmem:[%s199 + $0xbc0] sm:$0xff]
                %390 = vst [vmem:[%s200 + $0x5e0] sm:$0xff] %v389
                %v391 = vld [vmem:[%s199 + $0xbe0] sm:$0xff]
                %392 = vst [vmem:[%s200 + $0x5f0] sm:$0xff] %v391
                %v393 = vld [vmem:[%s199 + $0xc00] sm:$0xff]
                %394 = vst [vmem:[%s200 + $0x600] sm:$0xff] %v393
                %v395 = vld [vmem:[%s199 + $0xc20] sm:$0xff]
                %396 = vst [vmem:[%s200 + $0x610] sm:$0xff] %v395
                %v397 = vld [vmem:[%s199 + $0xc40] sm:$0xff]
                %398 = vst [vmem:[%s200 + $0x620] sm:$0xff] %v397
                %v399 = vld [vmem:[%s199 + $0xc60] sm:$0xff]
                %400 = vst [vmem:[%s200 + $0x630] sm:$0xff] %v399
                %v401 = vld [vmem:[%s199 + $0xc80] sm:$0xff]
                %402 = vst [vmem:[%s200 + $0x640] sm:$0xff] %v401
                %v403 = vld [vmem:[%s199 + $0xca0] sm:$0xff]
                %404 = vst [vmem:[%s200 + $0x650] sm:$0xff] %v403
                %v405 = vld [vmem:[%s199 + $0xcc0] sm:$0xff]
                %406 = vst [vmem:[%s200 + $0x660] sm:$0xff] %v405
                %v407 = vld [vmem:[%s199 + $0xce0] sm:$0xff]
                %408 = vst [vmem:[%s200 + $0x670] sm:$0xff] %v407
                %v409 = vld [vmem:[%s199 + $0xd00] sm:$0xff]
                %410 = vst [vmem:[%s200 + $0x680] sm:$0xff] %v409
                %v411 = vld [vmem:[%s199 + $0xd20] sm:$0xff]
                %412 = vst [vmem:[%s200 + $0x690] sm:$0xff] %v411
                %v413 = vld [vmem:[%s199 + $0xd40] sm:$0xff]
                %414 = vst [vmem:[%s200 + $0x6a0] sm:$0xff] %v413
                %v415 = vld [vmem:[%s199 + $0xd60] sm:$0xff]
                %416 = vst [vmem:[%s200 + $0x6b0] sm:$0xff] %v415
                %v417 = vld [vmem:[%s199 + $0xd80] sm:$0xff]
                %418 = vst [vmem:[%s200 + $0x6c0] sm:$0xff] %v417
                %v419 = vld [vmem:[%s199 + $0xda0] sm:$0xff]
                %420 = vst [vmem:[%s200 + $0x6d0] sm:$0xff] %v419
                %v421 = vld [vmem:[%s199 + $0xdc0] sm:$0xff]
                %422 = vst [vmem:[%s200 + $0x6e0] sm:$0xff] %v421
                %v423 = vld [vmem:[%s199 + $0xde0] sm:$0xff]
                %424 = vst [vmem:[%s200 + $0x6f0] sm:$0xff] %v423
                %v425 = vld [vmem:[%s199 + $0xe00] sm:$0xff]
                %426 = vst [vmem:[%s200 + $0x700] sm:$0xff] %v425
                %v427 = vld [vmem:[%s199 + $0xe20] sm:$0xff]
                %428 = vst [vmem:[%s200 + $0x710] sm:$0xff] %v427
                %v429 = vld [vmem:[%s199 + $0xe40] sm:$0xff]
                %430 = vst [vmem:[%s200 + $0x720] sm:$0xff] %v429
                %v431 = vld [vmem:[%s199 + $0xe60] sm:$0xff]
                %432 = vst [vmem:[%s200 + $0x730] sm:$0xff] %v431
                %v433 = vld [vmem:[%s199 + $0xe80] sm:$0xff]
                %434 = vst [vmem:[%s200 + $0x740] sm:$0xff] %v433
                %v435 = vld [vmem:[%s199 + $0xea0] sm:$0xff]
                %436 = vst [vmem:[%s200 + $0x750] sm:$0xff] %v435
                %v437 = vld [vmem:[%s199 + $0xec0] sm:$0xff]
                %438 = vst [vmem:[%s200 + $0x760] sm:$0xff] %v437
                %v439 = vld [vmem:[%s199 + $0xee0] sm:$0xff]
                %440 = vst [vmem:[%s200 + $0x770] sm:$0xff] %v439
                %v441 = vld [vmem:[%s199 + $0xf00] sm:$0xff]
                %442 = vst [vmem:[%s200 + $0x780] sm:$0xff] %v441
                %v443 = vld [vmem:[%s199 + $0xf20] sm:$0xff]
                %444 = vst [vmem:[%s200 + $0x790] sm:$0xff] %v443
                %v445 = vld [vmem:[%s199 + $0xf40] sm:$0xff]
                %446 = vst [vmem:[%s200 + $0x7a0] sm:$0xff] %v445
                %v447 = vld [vmem:[%s199 + $0xf60] sm:$0xff]
                %448 = vst [vmem:[%s200 + $0x7b0] sm:$0xff] %v447
                %v449 = vld [vmem:[%s199 + $0xf80] sm:$0xff]
                %450 = vst [vmem:[%s200 + $0x7c0] sm:$0xff] %v449
                %v451 = vld [vmem:[%s199 + $0xfa0] sm:$0xff]
                %452 = vst [vmem:[%s200 + $0x7d0] sm:$0xff] %v451
                %v453 = vld [vmem:[%s199 + $0xfc0] sm:$0xff]
                %454 = vst [vmem:[%s200 + $0x7e0] sm:$0xff] %v453
                %v455 = vld [vmem:[%s199 + $0xfe0] sm:$0xff]
                %456 = vst [vmem:[%s200 + $0x7f0] sm:$0xff] %v455
                %v457 = vld [vmem:[%s199 + $0x1000] sm:$0xff]
                %458 = vst [vmem:[%s200 + $0x800] sm:$0xff] %v457
                %v459 = vld [vmem:[%s199 + $0x1020] sm:$0xff]
                %460 = vst [vmem:[%s200 + $0x810] sm:$0xff] %v459
                %v461 = vld [vmem:[%s199 + $0x1040] sm:$0xff]
                %462 = vst [vmem:[%s200 + $0x820] sm:$0xff] %v461
                %v463 = vld [vmem:[%s199 + $0x1060] sm:$0xff]
                %464 = vst [vmem:[%s200 + $0x830] sm:$0xff] %v463
                %v465 = vld [vmem:[%s199 + $0x1080] sm:$0xff]
                %466 = vst [vmem:[%s200 + $0x840] sm:$0xff] %v465
                %v467 = vld [vmem:[%s199 + $0x10a0] sm:$0xff]
                %468 = vst [vmem:[%s200 + $0x850] sm:$0xff] %v467
                %v469 = vld [vmem:[%s199 + $0x10c0] sm:$0xff]
                %470 = vst [vmem:[%s200 + $0x860] sm:$0xff] %v469
                %v471 = vld [vmem:[%s199 + $0x10e0] sm:$0xff]
                %472 = vst [vmem:[%s200 + $0x870] sm:$0xff] %v471
                %v473 = vld [vmem:[%s199 + $0x1100] sm:$0xff]
                %474 = vst [vmem:[%s200 + $0x880] sm:$0xff] %v473
                %v475 = vld [vmem:[%s199 + $0x1120] sm:$0xff]
                %476 = vst [vmem:[%s200 + $0x890] sm:$0xff] %v475
                %v477 = vld [vmem:[%s199 + $0x1140] sm:$0xff]
                %478 = vst [vmem:[%s200 + $0x8a0] sm:$0xff] %v477
                %v479 = vld [vmem:[%s199 + $0x1160] sm:$0xff]
                %480 = vst [vmem:[%s200 + $0x8b0] sm:$0xff] %v479
                %v481 = vld [vmem:[%s199 + $0x1180] sm:$0xff]
                %482 = vst [vmem:[%s200 + $0x8c0] sm:$0xff] %v481
                %v483 = vld [vmem:[%s199 + $0x11a0] sm:$0xff]
                %484 = vst [vmem:[%s200 + $0x8d0] sm:$0xff] %v483
                %v485 = vld [vmem:[%s199 + $0x11c0] sm:$0xff]
                %486 = vst [vmem:[%s200 + $0x8e0] sm:$0xff] %v485
                %v487 = vld [vmem:[%s199 + $0x11e0] sm:$0xff]
                %488 = vst [vmem:[%s200 + $0x8f0] sm:$0xff] %v487
                %v489 = vld [vmem:[%s199 + $0x1200] sm:$0xff]
                %490 = vst [vmem:[%s200 + $0x900] sm:$0xff] %v489
                %v491 = vld [vmem:[%s199 + $0x1220] sm:$0xff]
                %492 = vst [vmem:[%s200 + $0x910] sm:$0xff] %v491
                %v493 = vld [vmem:[%s199 + $0x1240] sm:$0xff]
                %494 = vst [vmem:[%s200 + $0x920] sm:$0xff] %v493
                %v495 = vld [vmem:[%s199 + $0x1260] sm:$0xff]
                %496 = vst [vmem:[%s200 + $0x930] sm:$0xff] %v495
                %v497 = vld [vmem:[%s199 + $0x1280] sm:$0xff]
                %498 = vst [vmem:[%s200 + $0x940] sm:$0xff] %v497
                %v499 = vld [vmem:[%s199 + $0x12a0] sm:$0xff]
                %500 = vst [vmem:[%s200 + $0x950] sm:$0xff] %v499
                %v501 = vld [vmem:[%s199 + $0x12c0] sm:$0xff]
                %502 = vst [vmem:[%s200 + $0x960] sm:$0xff] %v501
                %v503 = vld [vmem:[%s199 + $0x12e0] sm:$0xff]
                %504 = vst [vmem:[%s200 + $0x970] sm:$0xff] %v503
                %v505 = vld [vmem:[%s199 + $0x1300] sm:$0xff]
                %506 = vst [vmem:[%s200 + $0x980] sm:$0xff] %v505
                %v507 = vld [vmem:[%s199 + $0x1320] sm:$0xff]
                %508 = vst [vmem:[%s200 + $0x990] sm:$0xff] %v507
                %v509 = vld [vmem:[%s199 + $0x1340] sm:$0xff]
                %510 = vst [vmem:[%s200 + $0x9a0] sm:$0xff] %v509
                %v511 = vld [vmem:[%s199 + $0x1360] sm:$0xff]
                %512 = vst [vmem:[%s200 + $0x9b0] sm:$0xff] %v511
                %v513 = vld [vmem:[%s199 + $0x1380] sm:$0xff]
                %514 = vst [vmem:[%s200 + $0x9c0] sm:$0xff] %v513
                %v515 = vld [vmem:[%s199 + $0x13a0] sm:$0xff]
                %516 = vst [vmem:[%s200 + $0x9d0] sm:$0xff] %v515
                %v517 = vld [vmem:[%s199 + $0x13c0] sm:$0xff]
                %518 = vst [vmem:[%s200 + $0x9e0] sm:$0xff] %v517
                %v519 = vld [vmem:[%s199 + $0x13e0] sm:$0xff]
                %520 = vst [vmem:[%s200 + $0x9f0] sm:$0xff] %v519
                %v521 = vld [vmem:[%s199 + $0x1400] sm:$0xff]
                %522 = vst [vmem:[%s200 + $0xa00] sm:$0xff] %v521
                %v523 = vld [vmem:[%s199 + $0x1420] sm:$0xff]
                %524 = vst [vmem:[%s200 + $0xa10] sm:$0xff] %v523
                %v525 = vld [vmem:[%s199 + $0x1440] sm:$0xff]
                %526 = vst [vmem:[%s200 + $0xa20] sm:$0xff] %v525
                %v527 = vld [vmem:[%s199 + $0x1460] sm:$0xff]
                %528 = vst [vmem:[%s200 + $0xa30] sm:$0xff] %v527
                %v529 = vld [vmem:[%s199 + $0x1480] sm:$0xff]
                %530 = vst [vmem:[%s200 + $0xa40] sm:$0xff] %v529
                %v531 = vld [vmem:[%s199 + $0x14a0] sm:$0xff]
                %532 = vst [vmem:[%s200 + $0xa50] sm:$0xff] %v531
                %v533 = vld [vmem:[%s199 + $0x14c0] sm:$0xff]
                %534 = vst [vmem:[%s200 + $0xa60] sm:$0xff] %v533
                %v535 = vld [vmem:[%s199 + $0x14e0] sm:$0xff]
                %536 = vst [vmem:[%s200 + $0xa70] sm:$0xff] %v535
                %v537 = vld [vmem:[%s199 + $0x1500] sm:$0xff]
                %538 = vst [vmem:[%s200 + $0xa80] sm:$0xff] %v537
                %v539 = vld [vmem:[%s199 + $0x1520] sm:$0xff]
                %540 = vst [vmem:[%s200 + $0xa90] sm:$0xff] %v539
                %v541 = vld [vmem:[%s199 + $0x1540] sm:$0xff]
                %542 = vst [vmem:[%s200 + $0xaa0] sm:$0xff] %v541
                %v543 = vld [vmem:[%s199 + $0x1560] sm:$0xff]
                %544 = vst [vmem:[%s200 + $0xab0] sm:$0xff] %v543
                %v545 = vld [vmem:[%s199 + $0x1580] sm:$0xff]
                %546 = vst [vmem:[%s200 + $0xac0] sm:$0xff] %v545
                %v547 = vld [vmem:[%s199 + $0x15a0] sm:$0xff]
                %548 = vst [vmem:[%s200 + $0xad0] sm:$0xff] %v547
                %v549 = vld [vmem:[%s199 + $0x15c0] sm:$0xff]
                %550 = vst [vmem:[%s200 + $0xae0] sm:$0xff] %v549
                %v551 = vld [vmem:[%s199 + $0x15e0] sm:$0xff]
                %552 = vst [vmem:[%s200 + $0xaf0] sm:$0xff] %v551
                %v553 = vld [vmem:[%s199 + $0x1600] sm:$0xff]
                %554 = vst [vmem:[%s200 + $0xb00] sm:$0xff] %v553
                %v555 = vld [vmem:[%s199 + $0x1620] sm:$0xff]
                %556 = vst [vmem:[%s200 + $0xb10] sm:$0xff] %v555
                %v557 = vld [vmem:[%s199 + $0x1640] sm:$0xff]
                %558 = vst [vmem:[%s200 + $0xb20] sm:$0xff] %v557
                %v559 = vld [vmem:[%s199 + $0x1660] sm:$0xff]
                %560 = vst [vmem:[%s200 + $0xb30] sm:$0xff] %v559
                %v561 = vld [vmem:[%s199 + $0x1680] sm:$0xff]
                %562 = vst [vmem:[%s200 + $0xb40] sm:$0xff] %v561
                %v563 = vld [vmem:[%s199 + $0x16a0] sm:$0xff]
                %564 = vst [vmem:[%s200 + $0xb50] sm:$0xff] %v563
                %v565 = vld [vmem:[%s199 + $0x16c0] sm:$0xff]
                %566 = vst [vmem:[%s200 + $0xb60] sm:$0xff] %v565
                %v567 = vld [vmem:[%s199 + $0x16e0] sm:$0xff]
                %568 = vst [vmem:[%s200 + $0xb70] sm:$0xff] %v567
                %v569 = vld [vmem:[%s199 + $0x1700] sm:$0xff]
                %570 = vst [vmem:[%s200 + $0xb80] sm:$0xff] %v569
                %v571 = vld [vmem:[%s199 + $0x1720] sm:$0xff]
                %572 = vst [vmem:[%s200 + $0xb90] sm:$0xff] %v571
                %v573 = vld [vmem:[%s199 + $0x1740] sm:$0xff]
                %574 = vst [vmem:[%s200 + $0xba0] sm:$0xff] %v573
                %v575 = vld [vmem:[%s199 + $0x1760] sm:$0xff]
                %576 = vst [vmem:[%s200 + $0xbb0] sm:$0xff] %v575
                %v577 = vld [vmem:[%s199 + $0x1780] sm:$0xff]
                %578 = vst [vmem:[%s200 + $0xbc0] sm:$0xff] %v577
                %v579 = vld [vmem:[%s199 + $0x17a0] sm:$0xff]
                %580 = vst [vmem:[%s200 + $0xbd0] sm:$0xff] %v579
                %v581 = vld [vmem:[%s199 + $0x17c0] sm:$0xff]
                %582 = vst [vmem:[%s200 + $0xbe0] sm:$0xff] %v581
                %v583 = vld [vmem:[%s199 + $0x17e0] sm:$0xff]
                %584 = vst [vmem:[%s200 + $0xbf0] sm:$0xff] %v583
                %v585 = vld [vmem:[%s199 + $0x1800] sm:$0xff]
                %586 = vst [vmem:[%s200 + $0xc00] sm:$0xff] %v585
                %v587 = vld [vmem:[%s199 + $0x1820] sm:$0xff]
                %588 = vst [vmem:[%s200 + $0xc10] sm:$0xff] %v587
                %v589 = vld [vmem:[%s199 + $0x1840] sm:$0xff]
                %590 = vst [vmem:[%s200 + $0xc20] sm:$0xff] %v589
                %v591 = vld [vmem:[%s199 + $0x1860] sm:$0xff]
                %592 = vst [vmem:[%s200 + $0xc30] sm:$0xff] %v591
                %v593 = vld [vmem:[%s199 + $0x1880] sm:$0xff]
                %594 = vst [vmem:[%s200 + $0xc40] sm:$0xff] %v593
                %v595 = vld [vmem:[%s199 + $0x18a0] sm:$0xff]
                %596 = vst [vmem:[%s200 + $0xc50] sm:$0xff] %v595
                %v597 = vld [vmem:[%s199 + $0x18c0] sm:$0xff]
                %598 = vst [vmem:[%s200 + $0xc60] sm:$0xff] %v597
                %v599 = vld [vmem:[%s199 + $0x18e0] sm:$0xff]
                %600 = vst [vmem:[%s200 + $0xc70] sm:$0xff] %v599
                %v601 = vld [vmem:[%s199 + $0x1900] sm:$0xff]
                %602 = vst [vmem:[%s200 + $0xc80] sm:$0xff] %v601
                %v603 = vld [vmem:[%s199 + $0x1920] sm:$0xff]
                %604 = vst [vmem:[%s200 + $0xc90] sm:$0xff] %v603
                %v605 = vld [vmem:[%s199 + $0x1940] sm:$0xff]
                %606 = vst [vmem:[%s200 + $0xca0] sm:$0xff] %v605
                %v607 = vld [vmem:[%s199 + $0x1960] sm:$0xff]
                %608 = vst [vmem:[%s200 + $0xcb0] sm:$0xff] %v607
                %v609 = vld [vmem:[%s199 + $0x1980] sm:$0xff]
                %610 = vst [vmem:[%s200 + $0xcc0] sm:$0xff] %v609
                %v611 = vld [vmem:[%s199 + $0x19a0] sm:$0xff]
                %612 = vst [vmem:[%s200 + $0xcd0] sm:$0xff] %v611
                %v613 = vld [vmem:[%s199 + $0x19c0] sm:$0xff]
                %614 = vst [vmem:[%s200 + $0xce0] sm:$0xff] %v613
                %v615 = vld [vmem:[%s199 + $0x19e0] sm:$0xff]
                %616 = vst [vmem:[%s200 + $0xcf0] sm:$0xff] %v615
                %v617 = vld [vmem:[%s199 + $0x1a00] sm:$0xff]
                %618 = vst [vmem:[%s200 + $0xd00] sm:$0xff] %v617
                %v619 = vld [vmem:[%s199 + $0x1a20] sm:$0xff]
                %620 = vst [vmem:[%s200 + $0xd10] sm:$0xff] %v619
                %v621 = vld [vmem:[%s199 + $0x1a40] sm:$0xff]
                %622 = vst [vmem:[%s200 + $0xd20] sm:$0xff] %v621
                %v623 = vld [vmem:[%s199 + $0x1a60] sm:$0xff]
                %624 = vst [vmem:[%s200 + $0xd30] sm:$0xff] %v623
                %v625 = vld [vmem:[%s199 + $0x1a80] sm:$0xff]
                %626 = vst [vmem:[%s200 + $0xd40] sm:$0xff] %v625
                %v627 = vld [vmem:[%s199 + $0x1aa0] sm:$0xff]
                %628 = vst [vmem:[%s200 + $0xd50] sm:$0xff] %v627
                %v629 = vld [vmem:[%s199 + $0x1ac0] sm:$0xff]
                %630 = vst [vmem:[%s200 + $0xd60] sm:$0xff] %v629
                %v631 = vld [vmem:[%s199 + $0x1ae0] sm:$0xff]
                %632 = vst [vmem:[%s200 + $0xd70] sm:$0xff] %v631
                %v633 = vld [vmem:[%s199 + $0x1b00] sm:$0xff]
                %634 = vst [vmem:[%s200 + $0xd80] sm:$0xff] %v633
                %v635 = vld [vmem:[%s199 + $0x1b20] sm:$0xff]
                %636 = vst [vmem:[%s200 + $0xd90] sm:$0xff] %v635
                %v637 = vld [vmem:[%s199 + $0x1b40] sm:$0xff]
                %638 = vst [vmem:[%s200 + $0xda0] sm:$0xff] %v637
                %v639 = vld [vmem:[%s199 + $0x1b60] sm:$0xff]
                %640 = vst [vmem:[%s200 + $0xdb0] sm:$0xff] %v639
                %v641 = vld [vmem:[%s199 + $0x1b80] sm:$0xff]
                %642 = vst [vmem:[%s200 + $0xdc0] sm:$0xff] %v641
                %v643 = vld [vmem:[%s199 + $0x1ba0] sm:$0xff]
                %644 = vst [vmem:[%s200 + $0xdd0] sm:$0xff] %v643
                %v645 = vld [vmem:[%s199 + $0x1bc0] sm:$0xff]
                %646 = vst [vmem:[%s200 + $0xde0] sm:$0xff] %v645
                %v647 = vld [vmem:[%s199 + $0x1be0] sm:$0xff]
                %648 = vst [vmem:[%s200 + $0xdf0] sm:$0xff] %v647
                %v649 = vld [vmem:[%s199 + $0x1c00] sm:$0xff]
                %650 = vst [vmem:[%s200 + $0xe00] sm:$0xff] %v649
                %v651 = vld [vmem:[%s199 + $0x1c20] sm:$0xff]
                %652 = vst [vmem:[%s200 + $0xe10] sm:$0xff] %v651
                %v653 = vld [vmem:[%s199 + $0x1c40] sm:$0xff]
                %654 = vst [vmem:[%s200 + $0xe20] sm:$0xff] %v653
                %v655 = vld [vmem:[%s199 + $0x1c60] sm:$0xff]
                %656 = vst [vmem:[%s200 + $0xe30] sm:$0xff] %v655
                %v657 = vld [vmem:[%s199 + $0x1c80] sm:$0xff]
                %658 = vst [vmem:[%s200 + $0xe40] sm:$0xff] %v657
                %v659 = vld [vmem:[%s199 + $0x1ca0] sm:$0xff]
                %660 = vst [vmem:[%s200 + $0xe50] sm:$0xff] %v659
                %v661 = vld [vmem:[%s199 + $0x1cc0] sm:$0xff]
                %662 = vst [vmem:[%s200 + $0xe60] sm:$0xff] %v661
                %v663 = vld [vmem:[%s199 + $0x1ce0] sm:$0xff]
                %664 = vst [vmem:[%s200 + $0xe70] sm:$0xff] %v663
                %v665 = vld [vmem:[%s199 + $0x1d00] sm:$0xff]
                %666 = vst [vmem:[%s200 + $0xe80] sm:$0xff] %v665
                %v667 = vld [vmem:[%s199 + $0x1d20] sm:$0xff]
                %668 = vst [vmem:[%s200 + $0xe90] sm:$0xff] %v667
                %v669 = vld [vmem:[%s199 + $0x1d40] sm:$0xff]
                %670 = vst [vmem:[%s200 + $0xea0] sm:$0xff] %v669
                %v671 = vld [vmem:[%s199 + $0x1d60] sm:$0xff]
                %672 = vst [vmem:[%s200 + $0xeb0] sm:$0xff] %v671
                %v673 = vld [vmem:[%s199 + $0x1d80] sm:$0xff]
                %674 = vst [vmem:[%s200 + $0xec0] sm:$0xff] %v673
                %v675 = vld [vmem:[%s199 + $0x1da0] sm:$0xff]
                %676 = vst [vmem:[%s200 + $0xed0] sm:$0xff] %v675
                %v677 = vld [vmem:[%s199 + $0x1dc0] sm:$0xff]
                %678 = vst [vmem:[%s200 + $0xee0] sm:$0xff] %v677
                %v679 = vld [vmem:[%s199 + $0x1de0] sm:$0xff]
                %680 = vst [vmem:[%s200 + $0xef0] sm:$0xff] %v679
                %v681 = vld [vmem:[%s199 + $0x1e00] sm:$0xff]
                %682 = vst [vmem:[%s200 + $0xf00] sm:$0xff] %v681
                %v683 = vld [vmem:[%s199 + $0x1e20] sm:$0xff]
                %684 = vst [vmem:[%s200 + $0xf10] sm:$0xff] %v683
                %v685 = vld [vmem:[%s199 + $0x1e40] sm:$0xff]
                %686 = vst [vmem:[%s200 + $0xf20] sm:$0xff] %v685
                %v687 = vld [vmem:[%s199 + $0x1e60] sm:$0xff]
                %688 = vst [vmem:[%s200 + $0xf30] sm:$0xff] %v687
                %v689 = vld [vmem:[%s199 + $0x1e80] sm:$0xff]
                %690 = vst [vmem:[%s200 + $0xf40] sm:$0xff] %v689
                %v691 = vld [vmem:[%s199 + $0x1ea0] sm:$0xff]
                %692 = vst [vmem:[%s200 + $0xf50] sm:$0xff] %v691
                %v693 = vld [vmem:[%s199 + $0x1ec0] sm:$0xff]
                %694 = vst [vmem:[%s200 + $0xf60] sm:$0xff] %v693
                %v695 = vld [vmem:[%s199 + $0x1ee0] sm:$0xff]
                %696 = vst [vmem:[%s200 + $0xf70] sm:$0xff] %v695
                %v697 = vld [vmem:[%s199 + $0x1f00] sm:$0xff]
                %698 = vst [vmem:[%s200 + $0xf80] sm:$0xff] %v697
                %v699 = vld [vmem:[%s199 + $0x1f20] sm:$0xff]
                %700 = vst [vmem:[%s200 + $0xf90] sm:$0xff] %v699
                %v701 = vld [vmem:[%s199 + $0x1f40] sm:$0xff]
                %702 = vst [vmem:[%s200 + $0xfa0] sm:$0xff] %v701
                %v703 = vld [vmem:[%s199 + $0x1f60] sm:$0xff]
                %704 = vst [vmem:[%s200 + $0xfb0] sm:$0xff] %v703
                %v705 = vld [vmem:[%s199 + $0x1f80] sm:$0xff]
                %706 = vst [vmem:[%s200 + $0xfc0] sm:$0xff] %v705
                %v707 = vld [vmem:[%s199 + $0x1fa0] sm:$0xff]
                %708 = vst [vmem:[%s200 + $0xfd0] sm:$0xff] %v707
                %v709 = vld [vmem:[%s199 + $0x1fc0] sm:$0xff]
                %710 = vst [vmem:[%s200 + $0xfe0] sm:$0xff] %v709
                %v711 = vld [vmem:[%s199 + $0x1fe0] sm:$0xff]
                %712 = vst [vmem:[%s200 + $0xff0] sm:$0xff] %v711
                %s713 = sadd.s32 1, %s198
                %p714 = scmp.ge.s32.totalorder %s713, 2
                %s715 = scalar_select %p714, 0, %s713
                %s716 = smul.u32 %s715, 8
                %s717 = smul.u32 %s715, 8
                %s718 = scalar_lea.vmem %s187, %s716
                %s719 = scalar_lea.vmem %s184, %s717 [#allocation3]
              $region41: #{convnet_forward.5} parent=35 // loop_footer
                %s197 = sadd.s32 1, %s193
              $region42: #{convnet_forward.5} parent=35 // loop_footer_branch
                %192 = sbr.rel target = $region38
              $region43: #{convnet_forward.5} parent=35 // loop_exit
                _
            $region36: #{convnet_forward.5} parent=31 // pred_fallthru
              _
            // Predicated region
            $region44: #{convnet_forward.5} parent=31 // pred_check
              _
            $region45: #{convnet_forward.5} parent=31 // pred_check_branch
              %721 = sbr.rel target = $region47
            $region46: #{convnet_forward.5} parent=31 // pred_region
              %s722 = scalar_lea.vmem %s187, 16
              %s723 = scalar_lea.vmem %s184, 16 [#allocation3]
              loop: start=0, step=1, limit=2
              $region48: #{convnet_forward.5} parent=46 // loop_pre_header
                _
              $region49: #{convnet_forward.5} parent=46 // loop_header
                %s725 = sphi 0, %s729
                %p726 = scmp.ge.s32.totalorder %s725, 2
                %s730 = sphi 0, %s1247
                %s731 = sphi %s187, %s1250
                %s732 = sphi %s184, %s1251
              $region50: #{convnet_forward.5} parent=46 // loop_header_branch
                %728 = sbr.rel (%p726) target = $region54
              $region51: #{convnet_forward.5} parent=46 // loop_body
                %v733 = vld [vmem:[%s731] sm:$0xff]
                %734 = vst [vmem:[%s732] sm:$0xff] %v733
                %v735 = vld [vmem:[%s731 + $0x20] sm:$0xff]
                %736 = vst [vmem:[%s732 + $0x10] sm:$0xff] %v735
                %v737 = vld [vmem:[%s731 + $0x40] sm:$0xff]
                %738 = vst [vmem:[%s732 + $0x20] sm:$0xff] %v737
                %v739 = vld [vmem:[%s731 + $0x60] sm:$0xff]
                %740 = vst [vmem:[%s732 + $0x30] sm:$0xff] %v739
                %v741 = vld [vmem:[%s731 + $0x80] sm:$0xff]
                %742 = vst [vmem:[%s732 + $0x40] sm:$0xff] %v741
                %v743 = vld [vmem:[%s731 + $0xa0] sm:$0xff]
                %744 = vst [vmem:[%s732 + $0x50] sm:$0xff] %v743
                %v745 = vld [vmem:[%s731 + $0xc0] sm:$0xff]
                %746 = vst [vmem:[%s732 + $0x60] sm:$0xff] %v745
                %v747 = vld [vmem:[%s731 + $0xe0] sm:$0xff]
                %748 = vst [vmem:[%s732 + $0x70] sm:$0xff] %v747
                %v749 = vld [vmem:[%s731 + $0x100] sm:$0xff]
                %750 = vst [vmem:[%s732 + $0x80] sm:$0xff] %v749
                %v751 = vld [vmem:[%s731 + $0x120] sm:$0xff]
                %752 = vst [vmem:[%s732 + $0x90] sm:$0xff] %v751
                %v753 = vld [vmem:[%s731 + $0x140] sm:$0xff]
                %754 = vst [vmem:[%s732 + $0xa0] sm:$0xff] %v753
                %v755 = vld [vmem:[%s731 + $0x160] sm:$0xff]
                %756 = vst [vmem:[%s732 + $0xb0] sm:$0xff] %v755
                %v757 = vld [vmem:[%s731 + $0x180] sm:$0xff]
                %758 = vst [vmem:[%s732 + $0xc0] sm:$0xff] %v757
                %v759 = vld [vmem:[%s731 + $0x1a0] sm:$0xff]
                %760 = vst [vmem:[%s732 + $0xd0] sm:$0xff] %v759
                %v761 = vld [vmem:[%s731 + $0x1c0] sm:$0xff]
                %762 = vst [vmem:[%s732 + $0xe0] sm:$0xff] %v761
                %v763 = vld [vmem:[%s731 + $0x1e0] sm:$0xff]
                %764 = vst [vmem:[%s732 + $0xf0] sm:$0xff] %v763
                %v765 = vld [vmem:[%s731 + $0x200] sm:$0xff]
                %766 = vst [vmem:[%s732 + $0x100] sm:$0xff] %v765
                %v767 = vld [vmem:[%s731 + $0x220] sm:$0xff]
                %768 = vst [vmem:[%s732 + $0x110] sm:$0xff] %v767
                %v769 = vld [vmem:[%s731 + $0x240] sm:$0xff]
                %770 = vst [vmem:[%s732 + $0x120] sm:$0xff] %v769
                %v771 = vld [vmem:[%s731 + $0x260] sm:$0xff]
                %772 = vst [vmem:[%s732 + $0x130] sm:$0xff] %v771
                %v773 = vld [vmem:[%s731 + $0x280] sm:$0xff]
                %774 = vst [vmem:[%s732 + $0x140] sm:$0xff] %v773
                %v775 = vld [vmem:[%s731 + $0x2a0] sm:$0xff]
                %776 = vst [vmem:[%s732 + $0x150] sm:$0xff] %v775
                %v777 = vld [vmem:[%s731 + $0x2c0] sm:$0xff]
                %778 = vst [vmem:[%s732 + $0x160] sm:$0xff] %v777
                %v779 = vld [vmem:[%s731 + $0x2e0] sm:$0xff]
                %780 = vst [vmem:[%s732 + $0x170] sm:$0xff] %v779
                %v781 = vld [vmem:[%s731 + $0x300] sm:$0xff]
                %782 = vst [vmem:[%s732 + $0x180] sm:$0xff] %v781
                %v783 = vld [vmem:[%s731 + $0x320] sm:$0xff]
                %784 = vst [vmem:[%s732 + $0x190] sm:$0xff] %v783
                %v785 = vld [vmem:[%s731 + $0x340] sm:$0xff]
                %786 = vst [vmem:[%s732 + $0x1a0] sm:$0xff] %v785
                %v787 = vld [vmem:[%s731 + $0x360] sm:$0xff]
                %788 = vst [vmem:[%s732 + $0x1b0] sm:$0xff] %v787
                %v789 = vld [vmem:[%s731 + $0x380] sm:$0xff]
                %790 = vst [vmem:[%s732 + $0x1c0] sm:$0xff] %v789
                %v791 = vld [vmem:[%s731 + $0x3a0] sm:$0xff]
                %792 = vst [vmem:[%s732 + $0x1d0] sm:$0xff] %v791
                %v793 = vld [vmem:[%s731 + $0x3c0] sm:$0xff]
                %794 = vst [vmem:[%s732 + $0x1e0] sm:$0xff] %v793
                %v795 = vld [vmem:[%s731 + $0x3e0] sm:$0xff]
                %796 = vst [vmem:[%s732 + $0x1f0] sm:$0xff] %v795
                %v797 = vld [vmem:[%s731 + $0x400] sm:$0xff]
                %798 = vst [vmem:[%s732 + $0x200] sm:$0xff] %v797
                %v799 = vld [vmem:[%s731 + $0x420] sm:$0xff]
                %800 = vst [vmem:[%s732 + $0x210] sm:$0xff] %v799
                %v801 = vld [vmem:[%s731 + $0x440] sm:$0xff]
                %802 = vst [vmem:[%s732 + $0x220] sm:$0xff] %v801
                %v803 = vld [vmem:[%s731 + $0x460] sm:$0xff]
                %804 = vst [vmem:[%s732 + $0x230] sm:$0xff] %v803
                %v805 = vld [vmem:[%s731 + $0x480] sm:$0xff]
                %806 = vst [vmem:[%s732 + $0x240] sm:$0xff] %v805
                %v807 = vld [vmem:[%s731 + $0x4a0] sm:$0xff]
                %808 = vst [vmem:[%s732 + $0x250] sm:$0xff] %v807
                %v809 = vld [vmem:[%s731 + $0x4c0] sm:$0xff]
                %810 = vst [vmem:[%s732 + $0x260] sm:$0xff] %v809
                %v811 = vld [vmem:[%s731 + $0x4e0] sm:$0xff]
                %812 = vst [vmem:[%s732 + $0x270] sm:$0xff] %v811
                %v813 = vld [vmem:[%s731 + $0x500] sm:$0xff]
                %814 = vst [vmem:[%s732 + $0x280] sm:$0xff] %v813
                %v815 = vld [vmem:[%s731 + $0x520] sm:$0xff]
                %816 = vst [vmem:[%s732 + $0x290] sm:$0xff] %v815
                %v817 = vld [vmem:[%s731 + $0x540] sm:$0xff]
                %818 = vst [vmem:[%s732 + $0x2a0] sm:$0xff] %v817
                %v819 = vld [vmem:[%s731 + $0x560] sm:$0xff]
                %820 = vst [vmem:[%s732 + $0x2b0] sm:$0xff] %v819
                %v821 = vld [vmem:[%s731 + $0x580] sm:$0xff]
                %822 = vst [vmem:[%s732 + $0x2c0] sm:$0xff] %v821
                %v823 = vld [vmem:[%s731 + $0x5a0] sm:$0xff]
                %824 = vst [vmem:[%s732 + $0x2d0] sm:$0xff] %v823
                %v825 = vld [vmem:[%s731 + $0x5c0] sm:$0xff]
                %826 = vst [vmem:[%s732 + $0x2e0] sm:$0xff] %v825
                %v827 = vld [vmem:[%s731 + $0x5e0] sm:$0xff]
                %828 = vst [vmem:[%s732 + $0x2f0] sm:$0xff] %v827
                %v829 = vld [vmem:[%s731 + $0x600] sm:$0xff]
                %830 = vst [vmem:[%s732 + $0x300] sm:$0xff] %v829
                %v831 = vld [vmem:[%s731 + $0x620] sm:$0xff]
                %832 = vst [vmem:[%s732 + $0x310] sm:$0xff] %v831
                %v833 = vld [vmem:[%s731 + $0x640] sm:$0xff]
                %834 = vst [vmem:[%s732 + $0x320] sm:$0xff] %v833
                %v835 = vld [vmem:[%s731 + $0x660] sm:$0xff]
                %836 = vst [vmem:[%s732 + $0x330] sm:$0xff] %v835
                %v837 = vld [vmem:[%s731 + $0x680] sm:$0xff]
                %838 = vst [vmem:[%s732 + $0x340] sm:$0xff] %v837
                %v839 = vld [vmem:[%s731 + $0x6a0] sm:$0xff]
                %840 = vst [vmem:[%s732 + $0x350] sm:$0xff] %v839
                %v841 = vld [vmem:[%s731 + $0x6c0] sm:$0xff]
                %842 = vst [vmem:[%s732 + $0x360] sm:$0xff] %v841
                %v843 = vld [vmem:[%s731 + $0x6e0] sm:$0xff]
                %844 = vst [vmem:[%s732 + $0x370] sm:$0xff] %v843
                %v845 = vld [vmem:[%s731 + $0x700] sm:$0xff]
                %846 = vst [vmem:[%s732 + $0x380] sm:$0xff] %v845
                %v847 = vld [vmem:[%s731 + $0x720] sm:$0xff]
                %848 = vst [vmem:[%s732 + $0x390] sm:$0xff] %v847
                %v849 = vld [vmem:[%s731 + $0x740] sm:$0xff]
                %850 = vst [vmem:[%s732 + $0x3a0] sm:$0xff] %v849
                %v851 = vld [vmem:[%s731 + $0x760] sm:$0xff]
                %852 = vst [vmem:[%s732 + $0x3b0] sm:$0xff] %v851
                %v853 = vld [vmem:[%s731 + $0x780] sm:$0xff]
                %854 = vst [vmem:[%s732 + $0x3c0] sm:$0xff] %v853
                %v855 = vld [vmem:[%s731 + $0x7a0] sm:$0xff]
                %856 = vst [vmem:[%s732 + $0x3d0] sm:$0xff] %v855
                %v857 = vld [vmem:[%s731 + $0x7c0] sm:$0xff]
                %858 = vst [vmem:[%s732 + $0x3e0] sm:$0xff] %v857
                %v859 = vld [vmem:[%s731 + $0x7e0] sm:$0xff]
                %860 = vst [vmem:[%s732 + $0x3f0] sm:$0xff] %v859
                %v861 = vld [vmem:[%s731 + $0x800] sm:$0xff]
                %862 = vst [vmem:[%s732 + $0x400] sm:$0xff] %v861
                %v863 = vld [vmem:[%s731 + $0x820] sm:$0xff]
                %864 = vst [vmem:[%s732 + $0x410] sm:$0xff] %v863
                %v865 = vld [vmem:[%s731 + $0x840] sm:$0xff]
                %866 = vst [vmem:[%s732 + $0x420] sm:$0xff] %v865
                %v867 = vld [vmem:[%s731 + $0x860] sm:$0xff]
                %868 = vst [vmem:[%s732 + $0x430] sm:$0xff] %v867
                %v869 = vld [vmem:[%s731 + $0x880] sm:$0xff]
                %870 = vst [vmem:[%s732 + $0x440] sm:$0xff] %v869
                %v871 = vld [vmem:[%s731 + $0x8a0] sm:$0xff]
                %872 = vst [vmem:[%s732 + $0x450] sm:$0xff] %v871
                %v873 = vld [vmem:[%s731 + $0x8c0] sm:$0xff]
                %874 = vst [vmem:[%s732 + $0x460] sm:$0xff] %v873
                %v875 = vld [vmem:[%s731 + $0x8e0] sm:$0xff]
                %876 = vst [vmem:[%s732 + $0x470] sm:$0xff] %v875
                %v877 = vld [vmem:[%s731 + $0x900] sm:$0xff]
                %878 = vst [vmem:[%s732 + $0x480] sm:$0xff] %v877
                %v879 = vld [vmem:[%s731 + $0x920] sm:$0xff]
                %880 = vst [vmem:[%s732 + $0x490] sm:$0xff] %v879
                %v881 = vld [vmem:[%s731 + $0x940] sm:$0xff]
                %882 = vst [vmem:[%s732 + $0x4a0] sm:$0xff] %v881
                %v883 = vld [vmem:[%s731 + $0x960] sm:$0xff]
                %884 = vst [vmem:[%s732 + $0x4b0] sm:$0xff] %v883
                %v885 = vld [vmem:[%s731 + $0x980] sm:$0xff]
                %886 = vst [vmem:[%s732 + $0x4c0] sm:$0xff] %v885
                %v887 = vld [vmem:[%s731 + $0x9a0] sm:$0xff]
                %888 = vst [vmem:[%s732 + $0x4d0] sm:$0xff] %v887
                %v889 = vld [vmem:[%s731 + $0x9c0] sm:$0xff]
                %890 = vst [vmem:[%s732 + $0x4e0] sm:$0xff] %v889
                %v891 = vld [vmem:[%s731 + $0x9e0] sm:$0xff]
                %892 = vst [vmem:[%s732 + $0x4f0] sm:$0xff] %v891
                %v893 = vld [vmem:[%s731 + $0xa00] sm:$0xff]
                %894 = vst [vmem:[%s732 + $0x500] sm:$0xff] %v893
                %v895 = vld [vmem:[%s731 + $0xa20] sm:$0xff]
                %896 = vst [vmem:[%s732 + $0x510] sm:$0xff] %v895
                %v897 = vld [vmem:[%s731 + $0xa40] sm:$0xff]
                %898 = vst [vmem:[%s732 + $0x520] sm:$0xff] %v897
                %v899 = vld [vmem:[%s731 + $0xa60] sm:$0xff]
                %900 = vst [vmem:[%s732 + $0x530] sm:$0xff] %v899
                %v901 = vld [vmem:[%s731 + $0xa80] sm:$0xff]
                %902 = vst [vmem:[%s732 + $0x540] sm:$0xff] %v901
                %v903 = vld [vmem:[%s731 + $0xaa0] sm:$0xff]
                %904 = vst [vmem:[%s732 + $0x550] sm:$0xff] %v903
                %v905 = vld [vmem:[%s731 + $0xac0] sm:$0xff]
                %906 = vst [vmem:[%s732 + $0x560] sm:$0xff] %v905
                %v907 = vld [vmem:[%s731 + $0xae0] sm:$0xff]
                %908 = vst [vmem:[%s732 + $0x570] sm:$0xff] %v907
                %v909 = vld [vmem:[%s731 + $0xb00] sm:$0xff]
                %910 = vst [vmem:[%s732 + $0x580] sm:$0xff] %v909
                %v911 = vld [vmem:[%s731 + $0xb20] sm:$0xff]
                %912 = vst [vmem:[%s732 + $0x590] sm:$0xff] %v911
                %v913 = vld [vmem:[%s731 + $0xb40] sm:$0xff]
                %914 = vst [vmem:[%s732 + $0x5a0] sm:$0xff] %v913
                %v915 = vld [vmem:[%s731 + $0xb60] sm:$0xff]
                %916 = vst [vmem:[%s732 + $0x5b0] sm:$0xff] %v915
                %v917 = vld [vmem:[%s731 + $0xb80] sm:$0xff]
                %918 = vst [vmem:[%s732 + $0x5c0] sm:$0xff] %v917
                %v919 = vld [vmem:[%s731 + $0xba0] sm:$0xff]
                %920 = vst [vmem:[%s732 + $0x5d0] sm:$0xff] %v919
                %v921 = vld [vmem:[%s731 + $0xbc0] sm:$0xff]
                %922 = vst [vmem:[%s732 + $0x5e0] sm:$0xff] %v921
                %v923 = vld [vmem:[%s731 + $0xbe0] sm:$0xff]
                %924 = vst [vmem:[%s732 + $0x5f0] sm:$0xff] %v923
                %v925 = vld [vmem:[%s731 + $0xc00] sm:$0xff]
                %926 = vst [vmem:[%s732 + $0x600] sm:$0xff] %v925
                %v927 = vld [vmem:[%s731 + $0xc20] sm:$0xff]
                %928 = vst [vmem:[%s732 + $0x610] sm:$0xff] %v927
                %v929 = vld [vmem:[%s731 + $0xc40] sm:$0xff]
                %930 = vst [vmem:[%s732 + $0x620] sm:$0xff] %v929
                %v931 = vld [vmem:[%s731 + $0xc60] sm:$0xff]
                %932 = vst [vmem:[%s732 + $0x630] sm:$0xff] %v931
                %v933 = vld [vmem:[%s731 + $0xc80] sm:$0xff]
                %934 = vst [vmem:[%s732 + $0x640] sm:$0xff] %v933
                %v935 = vld [vmem:[%s731 + $0xca0] sm:$0xff]
                %936 = vst [vmem:[%s732 + $0x650] sm:$0xff] %v935
                %v937 = vld [vmem:[%s731 + $0xcc0] sm:$0xff]
                %938 = vst [vmem:[%s732 + $0x660] sm:$0xff] %v937
                %v939 = vld [vmem:[%s731 + $0xce0] sm:$0xff]
                %940 = vst [vmem:[%s732 + $0x670] sm:$0xff] %v939
                %v941 = vld [vmem:[%s731 + $0xd00] sm:$0xff]
                %942 = vst [vmem:[%s732 + $0x680] sm:$0xff] %v941
                %v943 = vld [vmem:[%s731 + $0xd20] sm:$0xff]
                %944 = vst [vmem:[%s732 + $0x690] sm:$0xff] %v943
                %v945 = vld [vmem:[%s731 + $0xd40] sm:$0xff]
                %946 = vst [vmem:[%s732 + $0x6a0] sm:$0xff] %v945
                %v947 = vld [vmem:[%s731 + $0xd60] sm:$0xff]
                %948 = vst [vmem:[%s732 + $0x6b0] sm:$0xff] %v947
                %v949 = vld [vmem:[%s731 + $0xd80] sm:$0xff]
                %950 = vst [vmem:[%s732 + $0x6c0] sm:$0xff] %v949
                %v951 = vld [vmem:[%s731 + $0xda0] sm:$0xff]
                %952 = vst [vmem:[%s732 + $0x6d0] sm:$0xff] %v951
                %v953 = vld [vmem:[%s731 + $0xdc0] sm:$0xff]
                %954 = vst [vmem:[%s732 + $0x6e0] sm:$0xff] %v953
                %v955 = vld [vmem:[%s731 + $0xde0] sm:$0xff]
                %956 = vst [vmem:[%s732 + $0x6f0] sm:$0xff] %v955
                %v957 = vld [vmem:[%s731 + $0xe00] sm:$0xff]
                %958 = vst [vmem:[%s732 + $0x700] sm:$0xff] %v957
                %v959 = vld [vmem:[%s731 + $0xe20] sm:$0xff]
                %960 = vst [vmem:[%s732 + $0x710] sm:$0xff] %v959
                %v961 = vld [vmem:[%s731 + $0xe40] sm:$0xff]
                %962 = vst [vmem:[%s732 + $0x720] sm:$0xff] %v961
                %v963 = vld [vmem:[%s731 + $0xe60] sm:$0xff]
                %964 = vst [vmem:[%s732 + $0x730] sm:$0xff] %v963
                %v965 = vld [vmem:[%s731 + $0xe80] sm:$0xff]
                %966 = vst [vmem:[%s732 + $0x740] sm:$0xff] %v965
                %v967 = vld [vmem:[%s731 + $0xea0] sm:$0xff]
                %968 = vst [vmem:[%s732 + $0x750] sm:$0xff] %v967
                %v969 = vld [vmem:[%s731 + $0xec0] sm:$0xff]
                %970 = vst [vmem:[%s732 + $0x760] sm:$0xff] %v969
                %v971 = vld [vmem:[%s731 + $0xee0] sm:$0xff]
                %972 = vst [vmem:[%s732 + $0x770] sm:$0xff] %v971
                %v973 = vld [vmem:[%s731 + $0xf00] sm:$0xff]
                %974 = vst [vmem:[%s732 + $0x780] sm:$0xff] %v973
                %v975 = vld [vmem:[%s731 + $0xf20] sm:$0xff]
                %976 = vst [vmem:[%s732 + $0x790] sm:$0xff] %v975
                %v977 = vld [vmem:[%s731 + $0xf40] sm:$0xff]
                %978 = vst [vmem:[%s732 + $0x7a0] sm:$0xff] %v977
                %v979 = vld [vmem:[%s731 + $0xf60] sm:$0xff]
                %980 = vst [vmem:[%s732 + $0x7b0] sm:$0xff] %v979
                %v981 = vld [vmem:[%s731 + $0xf80] sm:$0xff]
                %982 = vst [vmem:[%s732 + $0x7c0] sm:$0xff] %v981
                %v983 = vld [vmem:[%s731 + $0xfa0] sm:$0xff]
                %984 = vst [vmem:[%s732 + $0x7d0] sm:$0xff] %v983
                %v985 = vld [vmem:[%s731 + $0xfc0] sm:$0xff]
                %986 = vst [vmem:[%s732 + $0x7e0] sm:$0xff] %v985
                %v987 = vld [vmem:[%s731 + $0xfe0] sm:$0xff]
                %988 = vst [vmem:[%s732 + $0x7f0] sm:$0xff] %v987
                %v989 = vld [vmem:[%s731 + $0x1000] sm:$0xff]
                %990 = vst [vmem:[%s732 + $0x800] sm:$0xff] %v989
                %v991 = vld [vmem:[%s731 + $0x1020] sm:$0xff]
                %992 = vst [vmem:[%s732 + $0x810] sm:$0xff] %v991
                %v993 = vld [vmem:[%s731 + $0x1040] sm:$0xff]
                %994 = vst [vmem:[%s732 + $0x820] sm:$0xff] %v993
                %v995 = vld [vmem:[%s731 + $0x1060] sm:$0xff]
                %996 = vst [vmem:[%s732 + $0x830] sm:$0xff] %v995
                %v997 = vld [vmem:[%s731 + $0x1080] sm:$0xff]
                %998 = vst [vmem:[%s732 + $0x840] sm:$0xff] %v997
                %v999 = vld [vmem:[%s731 + $0x10a0] sm:$0xff]
                %1000 = vst [vmem:[%s732 + $0x850] sm:$0xff] %v999
                %v1001 = vld [vmem:[%s731 + $0x10c0] sm:$0xff]
                %1002 = vst [vmem:[%s732 + $0x860] sm:$0xff] %v1001
                %v1003 = vld [vmem:[%s731 + $0x10e0] sm:$0xff]
                %1004 = vst [vmem:[%s732 + $0x870] sm:$0xff] %v1003
                %v1005 = vld [vmem:[%s731 + $0x1100] sm:$0xff]
                %1006 = vst [vmem:[%s732 + $0x880] sm:$0xff] %v1005
                %v1007 = vld [vmem:[%s731 + $0x1120] sm:$0xff]
                %1008 = vst [vmem:[%s732 + $0x890] sm:$0xff] %v1007
                %v1009 = vld [vmem:[%s731 + $0x1140] sm:$0xff]
                %1010 = vst [vmem:[%s732 + $0x8a0] sm:$0xff] %v1009
                %v1011 = vld [vmem:[%s731 + $0x1160] sm:$0xff]
                %1012 = vst [vmem:[%s732 + $0x8b0] sm:$0xff] %v1011
                %v1013 = vld [vmem:[%s731 + $0x1180] sm:$0xff]
                %1014 = vst [vmem:[%s732 + $0x8c0] sm:$0xff] %v1013
                %v1015 = vld [vmem:[%s731 + $0x11a0] sm:$0xff]
                %1016 = vst [vmem:[%s732 + $0x8d0] sm:$0xff] %v1015
                %v1017 = vld [vmem:[%s731 + $0x11c0] sm:$0xff]
                %1018 = vst [vmem:[%s732 + $0x8e0] sm:$0xff] %v1017
                %v1019 = vld [vmem:[%s731 + $0x11e0] sm:$0xff]
                %1020 = vst [vmem:[%s732 + $0x8f0] sm:$0xff] %v1019
                %v1021 = vld [vmem:[%s731 + $0x1200] sm:$0xff]
                %1022 = vst [vmem:[%s732 + $0x900] sm:$0xff] %v1021
                %v1023 = vld [vmem:[%s731 + $0x1220] sm:$0xff]
                %1024 = vst [vmem:[%s732 + $0x910] sm:$0xff] %v1023
                %v1025 = vld [vmem:[%s731 + $0x1240] sm:$0xff]
                %1026 = vst [vmem:[%s732 + $0x920] sm:$0xff] %v1025
                %v1027 = vld [vmem:[%s731 + $0x1260] sm:$0xff]
                %1028 = vst [vmem:[%s732 + $0x930] sm:$0xff] %v1027
                %v1029 = vld [vmem:[%s731 + $0x1280] sm:$0xff]
                %1030 = vst [vmem:[%s732 + $0x940] sm:$0xff] %v1029
                %v1031 = vld [vmem:[%s731 + $0x12a0] sm:$0xff]
                %1032 = vst [vmem:[%s732 + $0x950] sm:$0xff] %v1031
                %v1033 = vld [vmem:[%s731 + $0x12c0] sm:$0xff]
                %1034 = vst [vmem:[%s732 + $0x960] sm:$0xff] %v1033
                %v1035 = vld [vmem:[%s731 + $0x12e0] sm:$0xff]
                %1036 = vst [vmem:[%s732 + $0x970] sm:$0xff] %v1035
                %v1037 = vld [vmem:[%s731 + $0x1300] sm:$0xff]
                %1038 = vst [vmem:[%s732 + $0x980] sm:$0xff] %v1037
                %v1039 = vld [vmem:[%s731 + $0x1320] sm:$0xff]
                %1040 = vst [vmem:[%s732 + $0x990] sm:$0xff] %v1039
                %v1041 = vld [vmem:[%s731 + $0x1340] sm:$0xff]
                %1042 = vst [vmem:[%s732 + $0x9a0] sm:$0xff] %v1041
                %v1043 = vld [vmem:[%s731 + $0x1360] sm:$0xff]
                %1044 = vst [vmem:[%s732 + $0x9b0] sm:$0xff] %v1043
                %v1045 = vld [vmem:[%s731 + $0x1380] sm:$0xff]
                %1046 = vst [vmem:[%s732 + $0x9c0] sm:$0xff] %v1045
                %v1047 = vld [vmem:[%s731 + $0x13a0] sm:$0xff]
                %1048 = vst [vmem:[%s732 + $0x9d0] sm:$0xff] %v1047
                %v1049 = vld [vmem:[%s731 + $0x13c0] sm:$0xff]
                %1050 = vst [vmem:[%s732 + $0x9e0] sm:$0xff] %v1049
                %v1051 = vld [vmem:[%s731 + $0x13e0] sm:$0xff]
                %1052 = vst [vmem:[%s732 + $0x9f0] sm:$0xff] %v1051
                %v1053 = vld [vmem:[%s731 + $0x1400] sm:$0xff]
                %1054 = vst [vmem:[%s732 + $0xa00] sm:$0xff] %v1053
                %v1055 = vld [vmem:[%s731 + $0x1420] sm:$0xff]
                %1056 = vst [vmem:[%s732 + $0xa10] sm:$0xff] %v1055
                %v1057 = vld [vmem:[%s731 + $0x1440] sm:$0xff]
                %1058 = vst [vmem:[%s732 + $0xa20] sm:$0xff] %v1057
                %v1059 = vld [vmem:[%s731 + $0x1460] sm:$0xff]
                %1060 = vst [vmem:[%s732 + $0xa30] sm:$0xff] %v1059
                %v1061 = vld [vmem:[%s731 + $0x1480] sm:$0xff]
                %1062 = vst [vmem:[%s732 + $0xa40] sm:$0xff] %v1061
                %v1063 = vld [vmem:[%s731 + $0x14a0] sm:$0xff]
                %1064 = vst [vmem:[%s732 + $0xa50] sm:$0xff] %v1063
                %v1065 = vld [vmem:[%s731 + $0x14c0] sm:$0xff]
                %1066 = vst [vmem:[%s732 + $0xa60] sm:$0xff] %v1065
                %v1067 = vld [vmem:[%s731 + $0x14e0] sm:$0xff]
                %1068 = vst [vmem:[%s732 + $0xa70] sm:$0xff] %v1067
                %v1069 = vld [vmem:[%s731 + $0x1500] sm:$0xff]
                %1070 = vst [vmem:[%s732 + $0xa80] sm:$0xff] %v1069
                %v1071 = vld [vmem:[%s731 + $0x1520] sm:$0xff]
                %1072 = vst [vmem:[%s732 + $0xa90] sm:$0xff] %v1071
                %v1073 = vld [vmem:[%s731 + $0x1540] sm:$0xff]
                %1074 = vst [vmem:[%s732 + $0xaa0] sm:$0xff] %v1073
                %v1075 = vld [vmem:[%s731 + $0x1560] sm:$0xff]
                %1076 = vst [vmem:[%s732 + $0xab0] sm:$0xff] %v1075
                %v1077 = vld [vmem:[%s731 + $0x1580] sm:$0xff]
                %1078 = vst [vmem:[%s732 + $0xac0] sm:$0xff] %v1077
                %v1079 = vld [vmem:[%s731 + $0x15a0] sm:$0xff]
                %1080 = vst [vmem:[%s732 + $0xad0] sm:$0xff] %v1079
                %v1081 = vld [vmem:[%s731 + $0x15c0] sm:$0xff]
                %1082 = vst [vmem:[%s732 + $0xae0] sm:$0xff] %v1081
                %v1083 = vld [vmem:[%s731 + $0x15e0] sm:$0xff]
                %1084 = vst [vmem:[%s732 + $0xaf0] sm:$0xff] %v1083
                %v1085 = vld [vmem:[%s731 + $0x1600] sm:$0xff]
                %1086 = vst [vmem:[%s732 + $0xb00] sm:$0xff] %v1085
                %v1087 = vld [vmem:[%s731 + $0x1620] sm:$0xff]
                %1088 = vst [vmem:[%s732 + $0xb10] sm:$0xff] %v1087
                %v1089 = vld [vmem:[%s731 + $0x1640] sm:$0xff]
                %1090 = vst [vmem:[%s732 + $0xb20] sm:$0xff] %v1089
                %v1091 = vld [vmem:[%s731 + $0x1660] sm:$0xff]
                %1092 = vst [vmem:[%s732 + $0xb30] sm:$0xff] %v1091
                %v1093 = vld [vmem:[%s731 + $0x1680] sm:$0xff]
                %1094 = vst [vmem:[%s732 + $0xb40] sm:$0xff] %v1093
                %v1095 = vld [vmem:[%s731 + $0x16a0] sm:$0xff]
                %1096 = vst [vmem:[%s732 + $0xb50] sm:$0xff] %v1095
                %v1097 = vld [vmem:[%s731 + $0x16c0] sm:$0xff]
                %1098 = vst [vmem:[%s732 + $0xb60] sm:$0xff] %v1097
                %v1099 = vld [vmem:[%s731 + $0x16e0] sm:$0xff]
                %1100 = vst [vmem:[%s732 + $0xb70] sm:$0xff] %v1099
                %v1101 = vld [vmem:[%s731 + $0x1700] sm:$0xff]
                %1102 = vst [vmem:[%s732 + $0xb80] sm:$0xff] %v1101
                %v1103 = vld [vmem:[%s731 + $0x1720] sm:$0xff]
                %1104 = vst [vmem:[%s732 + $0xb90] sm:$0xff] %v1103
                %v1105 = vld [vmem:[%s731 + $0x1740] sm:$0xff]
                %1106 = vst [vmem:[%s732 + $0xba0] sm:$0xff] %v1105
                %v1107 = vld [vmem:[%s731 + $0x1760] sm:$0xff]
                %1108 = vst [vmem:[%s732 + $0xbb0] sm:$0xff] %v1107
                %v1109 = vld [vmem:[%s731 + $0x1780] sm:$0xff]
                %1110 = vst [vmem:[%s732 + $0xbc0] sm:$0xff] %v1109
                %v1111 = vld [vmem:[%s731 + $0x17a0] sm:$0xff]
                %1112 = vst [vmem:[%s732 + $0xbd0] sm:$0xff] %v1111
                %v1113 = vld [vmem:[%s731 + $0x17c0] sm:$0xff]
                %1114 = vst [vmem:[%s732 + $0xbe0] sm:$0xff] %v1113
                %v1115 = vld [vmem:[%s731 + $0x17e0] sm:$0xff]
                %1116 = vst [vmem:[%s732 + $0xbf0] sm:$0xff] %v1115
                %v1117 = vld [vmem:[%s731 + $0x1800] sm:$0xff]
                %1118 = vst [vmem:[%s732 + $0xc00] sm:$0xff] %v1117
                %v1119 = vld [vmem:[%s731 + $0x1820] sm:$0xff]
                %1120 = vst [vmem:[%s732 + $0xc10] sm:$0xff] %v1119
                %v1121 = vld [vmem:[%s731 + $0x1840] sm:$0xff]
                %1122 = vst [vmem:[%s732 + $0xc20] sm:$0xff] %v1121
                %v1123 = vld [vmem:[%s731 + $0x1860] sm:$0xff]
                %1124 = vst [vmem:[%s732 + $0xc30] sm:$0xff] %v1123
                %v1125 = vld [vmem:[%s731 + $0x1880] sm:$0xff]
                %1126 = vst [vmem:[%s732 + $0xc40] sm:$0xff] %v1125
                %v1127 = vld [vmem:[%s731 + $0x18a0] sm:$0xff]
                %1128 = vst [vmem:[%s732 + $0xc50] sm:$0xff] %v1127
                %v1129 = vld [vmem:[%s731 + $0x18c0] sm:$0xff]
                %1130 = vst [vmem:[%s732 + $0xc60] sm:$0xff] %v1129
                %v1131 = vld [vmem:[%s731 + $0x18e0] sm:$0xff]
                %1132 = vst [vmem:[%s732 + $0xc70] sm:$0xff] %v1131
                %v1133 = vld [vmem:[%s731 + $0x1900] sm:$0xff]
                %1134 = vst [vmem:[%s732 + $0xc80] sm:$0xff] %v1133
                %v1135 = vld [vmem:[%s731 + $0x1920] sm:$0xff]
                %1136 = vst [vmem:[%s732 + $0xc90] sm:$0xff] %v1135
                %v1137 = vld [vmem:[%s731 + $0x1940] sm:$0xff]
                %1138 = vst [vmem:[%s732 + $0xca0] sm:$0xff] %v1137
                %v1139 = vld [vmem:[%s731 + $0x1960] sm:$0xff]
                %1140 = vst [vmem:[%s732 + $0xcb0] sm:$0xff] %v1139
                %v1141 = vld [vmem:[%s731 + $0x1980] sm:$0xff]
                %1142 = vst [vmem:[%s732 + $0xcc0] sm:$0xff] %v1141
                %v1143 = vld [vmem:[%s731 + $0x19a0] sm:$0xff]
                %1144 = vst [vmem:[%s732 + $0xcd0] sm:$0xff] %v1143
                %v1145 = vld [vmem:[%s731 + $0x19c0] sm:$0xff]
                %1146 = vst [vmem:[%s732 + $0xce0] sm:$0xff] %v1145
                %v1147 = vld [vmem:[%s731 + $0x19e0] sm:$0xff]
                %1148 = vst [vmem:[%s732 + $0xcf0] sm:$0xff] %v1147
                %v1149 = vld [vmem:[%s731 + $0x1a00] sm:$0xff]
                %1150 = vst [vmem:[%s732 + $0xd00] sm:$0xff] %v1149
                %v1151 = vld [vmem:[%s731 + $0x1a20] sm:$0xff]
                %1152 = vst [vmem:[%s732 + $0xd10] sm:$0xff] %v1151
                %v1153 = vld [vmem:[%s731 + $0x1a40] sm:$0xff]
                %1154 = vst [vmem:[%s732 + $0xd20] sm:$0xff] %v1153
                %v1155 = vld [vmem:[%s731 + $0x1a60] sm:$0xff]
                %1156 = vst [vmem:[%s732 + $0xd30] sm:$0xff] %v1155
                %v1157 = vld [vmem:[%s731 + $0x1a80] sm:$0xff]
                %1158 = vst [vmem:[%s732 + $0xd40] sm:$0xff] %v1157
                %v1159 = vld [vmem:[%s731 + $0x1aa0] sm:$0xff]
                %1160 = vst [vmem:[%s732 + $0xd50] sm:$0xff] %v1159
                %v1161 = vld [vmem:[%s731 + $0x1ac0] sm:$0xff]
                %1162 = vst [vmem:[%s732 + $0xd60] sm:$0xff] %v1161
                %v1163 = vld [vmem:[%s731 + $0x1ae0] sm:$0xff]
                %1164 = vst [vmem:[%s732 + $0xd70] sm:$0xff] %v1163
                %v1165 = vld [vmem:[%s731 + $0x1b00] sm:$0xff]
                %1166 = vst [vmem:[%s732 + $0xd80] sm:$0xff] %v1165
                %v1167 = vld [vmem:[%s731 + $0x1b20] sm:$0xff]
                %1168 = vst [vmem:[%s732 + $0xd90] sm:$0xff] %v1167
                %v1169 = vld [vmem:[%s731 + $0x1b40] sm:$0xff]
                %1170 = vst [vmem:[%s732 + $0xda0] sm:$0xff] %v1169
                %v1171 = vld [vmem:[%s731 + $0x1b60] sm:$0xff]
                %1172 = vst [vmem:[%s732 + $0xdb0] sm:$0xff] %v1171
                %v1173 = vld [vmem:[%s731 + $0x1b80] sm:$0xff]
                %1174 = vst [vmem:[%s732 + $0xdc0] sm:$0xff] %v1173
                %v1175 = vld [vmem:[%s731 + $0x1ba0] sm:$0xff]
                %1176 = vst [vmem:[%s732 + $0xdd0] sm:$0xff] %v1175
                %v1177 = vld [vmem:[%s731 + $0x1bc0] sm:$0xff]
                %1178 = vst [vmem:[%s732 + $0xde0] sm:$0xff] %v1177
                %v1179 = vld [vmem:[%s731 + $0x1be0] sm:$0xff]
                %1180 = vst [vmem:[%s732 + $0xdf0] sm:$0xff] %v1179
                %v1181 = vld [vmem:[%s731 + $0x1c00] sm:$0xff]
                %1182 = vst [vmem:[%s732 + $0xe00] sm:$0xff] %v1181
                %v1183 = vld [vmem:[%s731 + $0x1c20] sm:$0xff]
                %1184 = vst [vmem:[%s732 + $0xe10] sm:$0xff] %v1183
                %v1185 = vld [vmem:[%s731 + $0x1c40] sm:$0xff]
                %1186 = vst [vmem:[%s732 + $0xe20] sm:$0xff] %v1185
                %v1187 = vld [vmem:[%s731 + $0x1c60] sm:$0xff]
                %1188 = vst [vmem:[%s732 + $0xe30] sm:$0xff] %v1187
                %v1189 = vld [vmem:[%s731 + $0x1c80] sm:$0xff]
                %1190 = vst [vmem:[%s732 + $0xe40] sm:$0xff] %v1189
                %v1191 = vld [vmem:[%s731 + $0x1ca0] sm:$0xff]
                %1192 = vst [vmem:[%s732 + $0xe50] sm:$0xff] %v1191
                %v1193 = vld [vmem:[%s731 + $0x1cc0] sm:$0xff]
                %1194 = vst [vmem:[%s732 + $0xe60] sm:$0xff] %v1193
                %v1195 = vld [vmem:[%s731 + $0x1ce0] sm:$0xff]
                %1196 = vst [vmem:[%s732 + $0xe70] sm:$0xff] %v1195
                %v1197 = vld [vmem:[%s731 + $0x1d00] sm:$0xff]
                %1198 = vst [vmem:[%s732 + $0xe80] sm:$0xff] %v1197
                %v1199 = vld [vmem:[%s731 + $0x1d20] sm:$0xff]
                %1200 = vst [vmem:[%s732 + $0xe90] sm:$0xff] %v1199
                %v1201 = vld [vmem:[%s731 + $0x1d40] sm:$0xff]
                %1202 = vst [vmem:[%s732 + $0xea0] sm:$0xff] %v1201
                %v1203 = vld [vmem:[%s731 + $0x1d60] sm:$0xff]
                %1204 = vst [vmem:[%s732 + $0xeb0] sm:$0xff] %v1203
                %v1205 = vld [vmem:[%s731 + $0x1d80] sm:$0xff]
                %1206 = vst [vmem:[%s732 + $0xec0] sm:$0xff] %v1205
                %v1207 = vld [vmem:[%s731 + $0x1da0] sm:$0xff]
                %1208 = vst [vmem:[%s732 + $0xed0] sm:$0xff] %v1207
                %v1209 = vld [vmem:[%s731 + $0x1dc0] sm:$0xff]
                %1210 = vst [vmem:[%s732 + $0xee0] sm:$0xff] %v1209
                %v1211 = vld [vmem:[%s731 + $0x1de0] sm:$0xff]
                %1212 = vst [vmem:[%s732 + $0xef0] sm:$0xff] %v1211
                %v1213 = vld [vmem:[%s731 + $0x1e00] sm:$0xff]
                %1214 = vst [vmem:[%s732 + $0xf00] sm:$0xff] %v1213
                %v1215 = vld [vmem:[%s731 + $0x1e20] sm:$0xff]
                %1216 = vst [vmem:[%s732 + $0xf10] sm:$0xff] %v1215
                %v1217 = vld [vmem:[%s731 + $0x1e40] sm:$0xff]
                %1218 = vst [vmem:[%s732 + $0xf20] sm:$0xff] %v1217
                %v1219 = vld [vmem:[%s731 + $0x1e60] sm:$0xff]
                %1220 = vst [vmem:[%s732 + $0xf30] sm:$0xff] %v1219
                %v1221 = vld [vmem:[%s731 + $0x1e80] sm:$0xff]
                %1222 = vst [vmem:[%s732 + $0xf40] sm:$0xff] %v1221
                %v1223 = vld [vmem:[%s731 + $0x1ea0] sm:$0xff]
                %1224 = vst [vmem:[%s732 + $0xf50] sm:$0xff] %v1223
                %v1225 = vld [vmem:[%s731 + $0x1ec0] sm:$0xff]
                %1226 = vst [vmem:[%s732 + $0xf60] sm:$0xff] %v1225
                %v1227 = vld [vmem:[%s731 + $0x1ee0] sm:$0xff]
                %1228 = vst [vmem:[%s732 + $0xf70] sm:$0xff] %v1227
                %v1229 = vld [vmem:[%s731 + $0x1f00] sm:$0xff]
                %1230 = vst [vmem:[%s732 + $0xf80] sm:$0xff] %v1229
                %v1231 = vld [vmem:[%s731 + $0x1f20] sm:$0xff]
                %1232 = vst [vmem:[%s732 + $0xf90] sm:$0xff] %v1231
                %v1233 = vld [vmem:[%s731 + $0x1f40] sm:$0xff]
                %1234 = vst [vmem:[%s732 + $0xfa0] sm:$0xff] %v1233
                %v1235 = vld [vmem:[%s731 + $0x1f60] sm:$0xff]
                %1236 = vst [vmem:[%s732 + $0xfb0] sm:$0xff] %v1235
                %v1237 = vld [vmem:[%s731 + $0x1f80] sm:$0xff]
                %1238 = vst [vmem:[%s732 + $0xfc0] sm:$0xff] %v1237
                %v1239 = vld [vmem:[%s731 + $0x1fa0] sm:$0xff]
                %1240 = vst [vmem:[%s732 + $0xfd0] sm:$0xff] %v1239
                %v1241 = vld [vmem:[%s731 + $0x1fc0] sm:$0xff]
                %1242 = vst [vmem:[%s732 + $0xfe0] sm:$0xff] %v1241
                %v1243 = vld [vmem:[%s731 + $0x1fe0] sm:$0xff]
                %1244 = vst [vmem:[%s732 + $0xff0] sm:$0xff] %v1243
                %s1245 = sadd.s32 1, %s730
                %p1246 = scmp.ge.s32.totalorder %s1245, 2
                %s1247 = scalar_select %p1246, 0, %s1245
                %s1248 = smul.u32 %s1247, 8
                %s1249 = smul.u32 %s1247, 8
                %s1250 = scalar_lea.vmem %s187, %s1248
                %s1251 = scalar_lea.vmem %s184, %s1249 [#allocation3]
              $region52: #{convnet_forward.5} parent=46 // loop_footer
                %s729 = sadd.s32 1, %s725
              $region53: #{convnet_forward.5} parent=46 // loop_footer_branch
                %724 = sbr.rel target = $region49
              $region54: #{convnet_forward.5} parent=46 // loop_exit
                _
              %s1253 = ssub.s32 1, 1
              loop: start=0, step=1, limit=1
              $region55: #{convnet_forward.5} parent=46 // loop_pre_header
                _
              $region56: #{convnet_forward.5} parent=46 // loop_header
                %s1255 = sphi 0, %s1259
                %p1256 = scmp.ge.s32.totalorder %s1255, 1
                %s1260 = sphi %s722, %s722
                %s1261 = sphi %s723, %s723
              $region57: #{convnet_forward.5} parent=46 // loop_header_branch
                %1258 = sbr.rel (%p1256) target = $region61
              $region58: #{convnet_forward.5} parent=46 // loop_body
                %v1262 = vld [vmem:[%s1260] sm:%s1253]
                %1263 = vst [vmem:[%s1261] sm:%s1253] %v1262
                %v1264 = vld [vmem:[%s1260 + $0x20] sm:%s1253]
                %1265 = vst [vmem:[%s1261 + $0x10] sm:%s1253] %v1264
                %v1266 = vld [vmem:[%s1260 + $0x40] sm:%s1253]
                %1267 = vst [vmem:[%s1261 + $0x20] sm:%s1253] %v1266
                %v1268 = vld [vmem:[%s1260 + $0x60] sm:%s1253]
                %1269 = vst [vmem:[%s1261 + $0x30] sm:%s1253] %v1268
                %v1270 = vld [vmem:[%s1260 + $0x80] sm:%s1253]
                %1271 = vst [vmem:[%s1261 + $0x40] sm:%s1253] %v1270
                %v1272 = vld [vmem:[%s1260 + $0xa0] sm:%s1253]
                %1273 = vst [vmem:[%s1261 + $0x50] sm:%s1253] %v1272
                %v1274 = vld [vmem:[%s1260 + $0xc0] sm:%s1253]
                %1275 = vst [vmem:[%s1261 + $0x60] sm:%s1253] %v1274
                %v1276 = vld [vmem:[%s1260 + $0xe0] sm:%s1253]
                %1277 = vst [vmem:[%s1261 + $0x70] sm:%s1253] %v1276
                %v1278 = vld [vmem:[%s1260 + $0x100] sm:%s1253]
                %1279 = vst [vmem:[%s1261 + $0x80] sm:%s1253] %v1278
                %v1280 = vld [vmem:[%s1260 + $0x120] sm:%s1253]
                %1281 = vst [vmem:[%s1261 + $0x90] sm:%s1253] %v1280
                %v1282 = vld [vmem:[%s1260 + $0x140] sm:%s1253]
                %1283 = vst [vmem:[%s1261 + $0xa0] sm:%s1253] %v1282
                %v1284 = vld [vmem:[%s1260 + $0x160] sm:%s1253]
                %1285 = vst [vmem:[%s1261 + $0xb0] sm:%s1253] %v1284
                %v1286 = vld [vmem:[%s1260 + $0x180] sm:%s1253]
                %1287 = vst [vmem:[%s1261 + $0xc0] sm:%s1253] %v1286
                %v1288 = vld [vmem:[%s1260 + $0x1a0] sm:%s1253]
                %1289 = vst [vmem:[%s1261 + $0xd0] sm:%s1253] %v1288
                %v1290 = vld [vmem:[%s1260 + $0x1c0] sm:%s1253]
                %1291 = vst [vmem:[%s1261 + $0xe0] sm:%s1253] %v1290
                %v1292 = vld [vmem:[%s1260 + $0x1e0] sm:%s1253]
                %1293 = vst [vmem:[%s1261 + $0xf0] sm:%s1253] %v1292
                %v1294 = vld [vmem:[%s1260 + $0x200] sm:%s1253]
                %1295 = vst [vmem:[%s1261 + $0x100] sm:%s1253] %v1294
                %v1296 = vld [vmem:[%s1260 + $0x220] sm:%s1253]
                %1297 = vst [vmem:[%s1261 + $0x110] sm:%s1253] %v1296
                %v1298 = vld [vmem:[%s1260 + $0x240] sm:%s1253]
                %1299 = vst [vmem:[%s1261 + $0x120] sm:%s1253] %v1298
                %v1300 = vld [vmem:[%s1260 + $0x260] sm:%s1253]
                %1301 = vst [vmem:[%s1261 + $0x130] sm:%s1253] %v1300
                %v1302 = vld [vmem:[%s1260 + $0x280] sm:%s1253]
                %1303 = vst [vmem:[%s1261 + $0x140] sm:%s1253] %v1302
                %v1304 = vld [vmem:[%s1260 + $0x2a0] sm:%s1253]
                %1305 = vst [vmem:[%s1261 + $0x150] sm:%s1253] %v1304
                %v1306 = vld [vmem:[%s1260 + $0x2c0] sm:%s1253]
                %1307 = vst [vmem:[%s1261 + $0x160] sm:%s1253] %v1306
                %v1308 = vld [vmem:[%s1260 + $0x2e0] sm:%s1253]
                %1309 = vst [vmem:[%s1261 + $0x170] sm:%s1253] %v1308
                %v1310 = vld [vmem:[%s1260 + $0x300] sm:%s1253]
                %1311 = vst [vmem:[%s1261 + $0x180] sm:%s1253] %v1310
                %v1312 = vld [vmem:[%s1260 + $0x320] sm:%s1253]
                %1313 = vst [vmem:[%s1261 + $0x190] sm:%s1253] %v1312
                %v1314 = vld [vmem:[%s1260 + $0x340] sm:%s1253]
                %1315 = vst [vmem:[%s1261 + $0x1a0] sm:%s1253] %v1314
                %v1316 = vld [vmem:[%s1260 + $0x360] sm:%s1253]
                %1317 = vst [vmem:[%s1261 + $0x1b0] sm:%s1253] %v1316
                %v1318 = vld [vmem:[%s1260 + $0x380] sm:%s1253]
                %1319 = vst [vmem:[%s1261 + $0x1c0] sm:%s1253] %v1318
                %v1320 = vld [vmem:[%s1260 + $0x3a0] sm:%s1253]
                %1321 = vst [vmem:[%s1261 + $0x1d0] sm:%s1253] %v1320
                %v1322 = vld [vmem:[%s1260 + $0x3c0] sm:%s1253]
                %1323 = vst [vmem:[%s1261 + $0x1e0] sm:%s1253] %v1322
                %v1324 = vld [vmem:[%s1260 + $0x3e0] sm:%s1253]
                %1325 = vst [vmem:[%s1261 + $0x1f0] sm:%s1253] %v1324
                %v1326 = vld [vmem:[%s1260 + $0x400] sm:%s1253]
                %1327 = vst [vmem:[%s1261 + $0x200] sm:%s1253] %v1326
                %v1328 = vld [vmem:[%s1260 + $0x420] sm:%s1253]
                %1329 = vst [vmem:[%s1261 + $0x210] sm:%s1253] %v1328
                %v1330 = vld [vmem:[%s1260 + $0x440] sm:%s1253]
                %1331 = vst [vmem:[%s1261 + $0x220] sm:%s1253] %v1330
                %v1332 = vld [vmem:[%s1260 + $0x460] sm:%s1253]
                %1333 = vst [vmem:[%s1261 + $0x230] sm:%s1253] %v1332
                %v1334 = vld [vmem:[%s1260 + $0x480] sm:%s1253]
                %1335 = vst [vmem:[%s1261 + $0x240] sm:%s1253] %v1334
                %v1336 = vld [vmem:[%s1260 + $0x4a0] sm:%s1253]
                %1337 = vst [vmem:[%s1261 + $0x250] sm:%s1253] %v1336
                %v1338 = vld [vmem:[%s1260 + $0x4c0] sm:%s1253]
                %1339 = vst [vmem:[%s1261 + $0x260] sm:%s1253] %v1338
                %v1340 = vld [vmem:[%s1260 + $0x4e0] sm:%s1253]
                %1341 = vst [vmem:[%s1261 + $0x270] sm:%s1253] %v1340
                %v1342 = vld [vmem:[%s1260 + $0x500] sm:%s1253]
                %1343 = vst [vmem:[%s1261 + $0x280] sm:%s1253] %v1342
                %v1344 = vld [vmem:[%s1260 + $0x520] sm:%s1253]
                %1345 = vst [vmem:[%s1261 + $0x290] sm:%s1253] %v1344
                %v1346 = vld [vmem:[%s1260 + $0x540] sm:%s1253]
                %1347 = vst [vmem:[%s1261 + $0x2a0] sm:%s1253] %v1346
                %v1348 = vld [vmem:[%s1260 + $0x560] sm:%s1253]
                %1349 = vst [vmem:[%s1261 + $0x2b0] sm:%s1253] %v1348
                %v1350 = vld [vmem:[%s1260 + $0x580] sm:%s1253]
                %1351 = vst [vmem:[%s1261 + $0x2c0] sm:%s1253] %v1350
                %v1352 = vld [vmem:[%s1260 + $0x5a0] sm:%s1253]
                %1353 = vst [vmem:[%s1261 + $0x2d0] sm:%s1253] %v1352
                %v1354 = vld [vmem:[%s1260 + $0x5c0] sm:%s1253]
                %1355 = vst [vmem:[%s1261 + $0x2e0] sm:%s1253] %v1354
                %v1356 = vld [vmem:[%s1260 + $0x5e0] sm:%s1253]
                %1357 = vst [vmem:[%s1261 + $0x2f0] sm:%s1253] %v1356
                %v1358 = vld [vmem:[%s1260 + $0x600] sm:%s1253]
                %1359 = vst [vmem:[%s1261 + $0x300] sm:%s1253] %v1358
                %v1360 = vld [vmem:[%s1260 + $0x620] sm:%s1253]
                %1361 = vst [vmem:[%s1261 + $0x310] sm:%s1253] %v1360
                %v1362 = vld [vmem:[%s1260 + $0x640] sm:%s1253]
                %1363 = vst [vmem:[%s1261 + $0x320] sm:%s1253] %v1362
                %v1364 = vld [vmem:[%s1260 + $0x660] sm:%s1253]
                %1365 = vst [vmem:[%s1261 + $0x330] sm:%s1253] %v1364
                %v1366 = vld [vmem:[%s1260 + $0x680] sm:%s1253]
                %1367 = vst [vmem:[%s1261 + $0x340] sm:%s1253] %v1366
                %v1368 = vld [vmem:[%s1260 + $0x6a0] sm:%s1253]
                %1369 = vst [vmem:[%s1261 + $0x350] sm:%s1253] %v1368
                %v1370 = vld [vmem:[%s1260 + $0x6c0] sm:%s1253]
                %1371 = vst [vmem:[%s1261 + $0x360] sm:%s1253] %v1370
                %v1372 = vld [vmem:[%s1260 + $0x6e0] sm:%s1253]
                %1373 = vst [vmem:[%s1261 + $0x370] sm:%s1253] %v1372
                %v1374 = vld [vmem:[%s1260 + $0x700] sm:%s1253]
                %1375 = vst [vmem:[%s1261 + $0x380] sm:%s1253] %v1374
                %v1376 = vld [vmem:[%s1260 + $0x720] sm:%s1253]
                %1377 = vst [vmem:[%s1261 + $0x390] sm:%s1253] %v1376
                %v1378 = vld [vmem:[%s1260 + $0x740] sm:%s1253]
                %1379 = vst [vmem:[%s1261 + $0x3a0] sm:%s1253] %v1378
                %v1380 = vld [vmem:[%s1260 + $0x760] sm:%s1253]
                %1381 = vst [vmem:[%s1261 + $0x3b0] sm:%s1253] %v1380
                %v1382 = vld [vmem:[%s1260 + $0x780] sm:%s1253]
                %1383 = vst [vmem:[%s1261 + $0x3c0] sm:%s1253] %v1382
                %v1384 = vld [vmem:[%s1260 + $0x7a0] sm:%s1253]
                %1385 = vst [vmem:[%s1261 + $0x3d0] sm:%s1253] %v1384
                %v1386 = vld [vmem:[%s1260 + $0x7c0] sm:%s1253]
                %1387 = vst [vmem:[%s1261 + $0x3e0] sm:%s1253] %v1386
                %v1388 = vld [vmem:[%s1260 + $0x7e0] sm:%s1253]
                %1389 = vst [vmem:[%s1261 + $0x3f0] sm:%s1253] %v1388
                %v1390 = vld [vmem:[%s1260 + $0x800] sm:%s1253]
                %1391 = vst [vmem:[%s1261 + $0x400] sm:%s1253] %v1390
                %v1392 = vld [vmem:[%s1260 + $0x820] sm:%s1253]
                %1393 = vst [vmem:[%s1261 + $0x410] sm:%s1253] %v1392
                %v1394 = vld [vmem:[%s1260 + $0x840] sm:%s1253]
                %1395 = vst [vmem:[%s1261 + $0x420] sm:%s1253] %v1394
                %v1396 = vld [vmem:[%s1260 + $0x860] sm:%s1253]
                %1397 = vst [vmem:[%s1261 + $0x430] sm:%s1253] %v1396
                %v1398 = vld [vmem:[%s1260 + $0x880] sm:%s1253]
                %1399 = vst [vmem:[%s1261 + $0x440] sm:%s1253] %v1398
                %v1400 = vld [vmem:[%s1260 + $0x8a0] sm:%s1253]
                %1401 = vst [vmem:[%s1261 + $0x450] sm:%s1253] %v1400
                %v1402 = vld [vmem:[%s1260 + $0x8c0] sm:%s1253]
                %1403 = vst [vmem:[%s1261 + $0x460] sm:%s1253] %v1402
                %v1404 = vld [vmem:[%s1260 + $0x8e0] sm:%s1253]
                %1405 = vst [vmem:[%s1261 + $0x470] sm:%s1253] %v1404
                %v1406 = vld [vmem:[%s1260 + $0x900] sm:%s1253]
                %1407 = vst [vmem:[%s1261 + $0x480] sm:%s1253] %v1406
                %v1408 = vld [vmem:[%s1260 + $0x920] sm:%s1253]
                %1409 = vst [vmem:[%s1261 + $0x490] sm:%s1253] %v1408
                %v1410 = vld [vmem:[%s1260 + $0x940] sm:%s1253]
                %1411 = vst [vmem:[%s1261 + $0x4a0] sm:%s1253] %v1410
                %v1412 = vld [vmem:[%s1260 + $0x960] sm:%s1253]
                %1413 = vst [vmem:[%s1261 + $0x4b0] sm:%s1253] %v1412
                %v1414 = vld [vmem:[%s1260 + $0x980] sm:%s1253]
                %1415 = vst [vmem:[%s1261 + $0x4c0] sm:%s1253] %v1414
                %v1416 = vld [vmem:[%s1260 + $0x9a0] sm:%s1253]
                %1417 = vst [vmem:[%s1261 + $0x4d0] sm:%s1253] %v1416
                %v1418 = vld [vmem:[%s1260 + $0x9c0] sm:%s1253]
                %1419 = vst [vmem:[%s1261 + $0x4e0] sm:%s1253] %v1418
                %v1420 = vld [vmem:[%s1260 + $0x9e0] sm:%s1253]
                %1421 = vst [vmem:[%s1261 + $0x4f0] sm:%s1253] %v1420
                %v1422 = vld [vmem:[%s1260 + $0xa00] sm:%s1253]
                %1423 = vst [vmem:[%s1261 + $0x500] sm:%s1253] %v1422
                %v1424 = vld [vmem:[%s1260 + $0xa20] sm:%s1253]
                %1425 = vst [vmem:[%s1261 + $0x510] sm:%s1253] %v1424
                %v1426 = vld [vmem:[%s1260 + $0xa40] sm:%s1253]
                %1427 = vst [vmem:[%s1261 + $0x520] sm:%s1253] %v1426
                %v1428 = vld [vmem:[%s1260 + $0xa60] sm:%s1253]
                %1429 = vst [vmem:[%s1261 + $0x530] sm:%s1253] %v1428
                %v1430 = vld [vmem:[%s1260 + $0xa80] sm:%s1253]
                %1431 = vst [vmem:[%s1261 + $0x540] sm:%s1253] %v1430
                %v1432 = vld [vmem:[%s1260 + $0xaa0] sm:%s1253]
                %1433 = vst [vmem:[%s1261 + $0x550] sm:%s1253] %v1432
                %v1434 = vld [vmem:[%s1260 + $0xac0] sm:%s1253]
                %1435 = vst [vmem:[%s1261 + $0x560] sm:%s1253] %v1434
                %v1436 = vld [vmem:[%s1260 + $0xae0] sm:%s1253]
                %1437 = vst [vmem:[%s1261 + $0x570] sm:%s1253] %v1436
                %v1438 = vld [vmem:[%s1260 + $0xb00] sm:%s1253]
                %1439 = vst [vmem:[%s1261 + $0x580] sm:%s1253] %v1438
                %v1440 = vld [vmem:[%s1260 + $0xb20] sm:%s1253]
                %1441 = vst [vmem:[%s1261 + $0x590] sm:%s1253] %v1440
                %v1442 = vld [vmem:[%s1260 + $0xb40] sm:%s1253]
                %1443 = vst [vmem:[%s1261 + $0x5a0] sm:%s1253] %v1442
                %v1444 = vld [vmem:[%s1260 + $0xb60] sm:%s1253]
                %1445 = vst [vmem:[%s1261 + $0x5b0] sm:%s1253] %v1444
                %v1446 = vld [vmem:[%s1260 + $0xb80] sm:%s1253]
                %1447 = vst [vmem:[%s1261 + $0x5c0] sm:%s1253] %v1446
                %v1448 = vld [vmem:[%s1260 + $0xba0] sm:%s1253]
                %1449 = vst [vmem:[%s1261 + $0x5d0] sm:%s1253] %v1448
                %v1450 = vld [vmem:[%s1260 + $0xbc0] sm:%s1253]
                %1451 = vst [vmem:[%s1261 + $0x5e0] sm:%s1253] %v1450
                %v1452 = vld [vmem:[%s1260 + $0xbe0] sm:%s1253]
                %1453 = vst [vmem:[%s1261 + $0x5f0] sm:%s1253] %v1452
                %v1454 = vld [vmem:[%s1260 + $0xc00] sm:%s1253]
                %1455 = vst [vmem:[%s1261 + $0x600] sm:%s1253] %v1454
                %v1456 = vld [vmem:[%s1260 + $0xc20] sm:%s1253]
                %1457 = vst [vmem:[%s1261 + $0x610] sm:%s1253] %v1456
                %v1458 = vld [vmem:[%s1260 + $0xc40] sm:%s1253]
                %1459 = vst [vmem:[%s1261 + $0x620] sm:%s1253] %v1458
                %v1460 = vld [vmem:[%s1260 + $0xc60] sm:%s1253]
                %1461 = vst [vmem:[%s1261 + $0x630] sm:%s1253] %v1460
                %v1462 = vld [vmem:[%s1260 + $0xc80] sm:%s1253]
                %1463 = vst [vmem:[%s1261 + $0x640] sm:%s1253] %v1462
                %v1464 = vld [vmem:[%s1260 + $0xca0] sm:%s1253]
                %1465 = vst [vmem:[%s1261 + $0x650] sm:%s1253] %v1464
                %v1466 = vld [vmem:[%s1260 + $0xcc0] sm:%s1253]
                %1467 = vst [vmem:[%s1261 + $0x660] sm:%s1253] %v1466
                %v1468 = vld [vmem:[%s1260 + $0xce0] sm:%s1253]
                %1469 = vst [vmem:[%s1261 + $0x670] sm:%s1253] %v1468
                %v1470 = vld [vmem:[%s1260 + $0xd00] sm:%s1253]
                %1471 = vst [vmem:[%s1261 + $0x680] sm:%s1253] %v1470
                %v1472 = vld [vmem:[%s1260 + $0xd20] sm:%s1253]
                %1473 = vst [vmem:[%s1261 + $0x690] sm:%s1253] %v1472
                %v1474 = vld [vmem:[%s1260 + $0xd40] sm:%s1253]
                %1475 = vst [vmem:[%s1261 + $0x6a0] sm:%s1253] %v1474
                %v1476 = vld [vmem:[%s1260 + $0xd60] sm:%s1253]
                %1477 = vst [vmem:[%s1261 + $0x6b0] sm:%s1253] %v1476
                %v1478 = vld [vmem:[%s1260 + $0xd80] sm:%s1253]
                %1479 = vst [vmem:[%s1261 + $0x6c0] sm:%s1253] %v1478
                %v1480 = vld [vmem:[%s1260 + $0xda0] sm:%s1253]
                %1481 = vst [vmem:[%s1261 + $0x6d0] sm:%s1253] %v1480
                %v1482 = vld [vmem:[%s1260 + $0xdc0] sm:%s1253]
                %1483 = vst [vmem:[%s1261 + $0x6e0] sm:%s1253] %v1482
                %v1484 = vld [vmem:[%s1260 + $0xde0] sm:%s1253]
                %1485 = vst [vmem:[%s1261 + $0x6f0] sm:%s1253] %v1484
                %v1486 = vld [vmem:[%s1260 + $0xe00] sm:%s1253]
                %1487 = vst [vmem:[%s1261 + $0x700] sm:%s1253] %v1486
                %v1488 = vld [vmem:[%s1260 + $0xe20] sm:%s1253]
                %1489 = vst [vmem:[%s1261 + $0x710] sm:%s1253] %v1488
                %v1490 = vld [vmem:[%s1260 + $0xe40] sm:%s1253]
                %1491 = vst [vmem:[%s1261 + $0x720] sm:%s1253] %v1490
                %v1492 = vld [vmem:[%s1260 + $0xe60] sm:%s1253]
                %1493 = vst [vmem:[%s1261 + $0x730] sm:%s1253] %v1492
                %v1494 = vld [vmem:[%s1260 + $0xe80] sm:%s1253]
                %1495 = vst [vmem:[%s1261 + $0x740] sm:%s1253] %v1494
                %v1496 = vld [vmem:[%s1260 + $0xea0] sm:%s1253]
                %1497 = vst [vmem:[%s1261 + $0x750] sm:%s1253] %v1496
                %v1498 = vld [vmem:[%s1260 + $0xec0] sm:%s1253]
                %1499 = vst [vmem:[%s1261 + $0x760] sm:%s1253] %v1498
                %v1500 = vld [vmem:[%s1260 + $0xee0] sm:%s1253]
                %1501 = vst [vmem:[%s1261 + $0x770] sm:%s1253] %v1500
                %v1502 = vld [vmem:[%s1260 + $0xf00] sm:%s1253]
                %1503 = vst [vmem:[%s1261 + $0x780] sm:%s1253] %v1502
                %v1504 = vld [vmem:[%s1260 + $0xf20] sm:%s1253]
                %1505 = vst [vmem:[%s1261 + $0x790] sm:%s1253] %v1504
                %v1506 = vld [vmem:[%s1260 + $0xf40] sm:%s1253]
                %1507 = vst [vmem:[%s1261 + $0x7a0] sm:%s1253] %v1506
                %v1508 = vld [vmem:[%s1260 + $0xf60] sm:%s1253]
                %1509 = vst [vmem:[%s1261 + $0x7b0] sm:%s1253] %v1508
                %v1510 = vld [vmem:[%s1260 + $0xf80] sm:%s1253]
                %1511 = vst [vmem:[%s1261 + $0x7c0] sm:%s1253] %v1510
                %v1512 = vld [vmem:[%s1260 + $0xfa0] sm:%s1253]
                %1513 = vst [vmem:[%s1261 + $0x7d0] sm:%s1253] %v1512
                %v1514 = vld [vmem:[%s1260 + $0xfc0] sm:%s1253]
                %1515 = vst [vmem:[%s1261 + $0x7e0] sm:%s1253] %v1514
                %v1516 = vld [vmem:[%s1260 + $0xfe0] sm:%s1253]
                %1517 = vst [vmem:[%s1261 + $0x7f0] sm:%s1253] %v1516
                %v1518 = vld [vmem:[%s1260 + $0x1000] sm:%s1253]
                %1519 = vst [vmem:[%s1261 + $0x800] sm:%s1253] %v1518
                %v1520 = vld [vmem:[%s1260 + $0x1020] sm:%s1253]
                %1521 = vst [vmem:[%s1261 + $0x810] sm:%s1253] %v1520
                %v1522 = vld [vmem:[%s1260 + $0x1040] sm:%s1253]
                %1523 = vst [vmem:[%s1261 + $0x820] sm:%s1253] %v1522
                %v1524 = vld [vmem:[%s1260 + $0x1060] sm:%s1253]
                %1525 = vst [vmem:[%s1261 + $0x830] sm:%s1253] %v1524
                %v1526 = vld [vmem:[%s1260 + $0x1080] sm:%s1253]
                %1527 = vst [vmem:[%s1261 + $0x840] sm:%s1253] %v1526
                %v1528 = vld [vmem:[%s1260 + $0x10a0] sm:%s1253]
                %1529 = vst [vmem:[%s1261 + $0x850] sm:%s1253] %v1528
                %v1530 = vld [vmem:[%s1260 + $0x10c0] sm:%s1253]
                %1531 = vst [vmem:[%s1261 + $0x860] sm:%s1253] %v1530
                %v1532 = vld [vmem:[%s1260 + $0x10e0] sm:%s1253]
                %1533 = vst [vmem:[%s1261 + $0x870] sm:%s1253] %v1532
                %v1534 = vld [vmem:[%s1260 + $0x1100] sm:%s1253]
                %1535 = vst [vmem:[%s1261 + $0x880] sm:%s1253] %v1534
                %v1536 = vld [vmem:[%s1260 + $0x1120] sm:%s1253]
                %1537 = vst [vmem:[%s1261 + $0x890] sm:%s1253] %v1536
                %v1538 = vld [vmem:[%s1260 + $0x1140] sm:%s1253]
                %1539 = vst [vmem:[%s1261 + $0x8a0] sm:%s1253] %v1538
                %v1540 = vld [vmem:[%s1260 + $0x1160] sm:%s1253]
                %1541 = vst [vmem:[%s1261 + $0x8b0] sm:%s1253] %v1540
                %v1542 = vld [vmem:[%s1260 + $0x1180] sm:%s1253]
                %1543 = vst [vmem:[%s1261 + $0x8c0] sm:%s1253] %v1542
                %v1544 = vld [vmem:[%s1260 + $0x11a0] sm:%s1253]
                %1545 = vst [vmem:[%s1261 + $0x8d0] sm:%s1253] %v1544
                %v1546 = vld [vmem:[%s1260 + $0x11c0] sm:%s1253]
                %1547 = vst [vmem:[%s1261 + $0x8e0] sm:%s1253] %v1546
                %v1548 = vld [vmem:[%s1260 + $0x11e0] sm:%s1253]
                %1549 = vst [vmem:[%s1261 + $0x8f0] sm:%s1253] %v1548
                %v1550 = vld [vmem:[%s1260 + $0x1200] sm:%s1253]
                %1551 = vst [vmem:[%s1261 + $0x900] sm:%s1253] %v1550
                %v1552 = vld [vmem:[%s1260 + $0x1220] sm:%s1253]
                %1553 = vst [vmem:[%s1261 + $0x910] sm:%s1253] %v1552
                %v1554 = vld [vmem:[%s1260 + $0x1240] sm:%s1253]
                %1555 = vst [vmem:[%s1261 + $0x920] sm:%s1253] %v1554
                %v1556 = vld [vmem:[%s1260 + $0x1260] sm:%s1253]
                %1557 = vst [vmem:[%s1261 + $0x930] sm:%s1253] %v1556
                %v1558 = vld [vmem:[%s1260 + $0x1280] sm:%s1253]
                %1559 = vst [vmem:[%s1261 + $0x940] sm:%s1253] %v1558
                %v1560 = vld [vmem:[%s1260 + $0x12a0] sm:%s1253]
                %1561 = vst [vmem:[%s1261 + $0x950] sm:%s1253] %v1560
                %v1562 = vld [vmem:[%s1260 + $0x12c0] sm:%s1253]
                %1563 = vst [vmem:[%s1261 + $0x960] sm:%s1253] %v1562
                %v1564 = vld [vmem:[%s1260 + $0x12e0] sm:%s1253]
                %1565 = vst [vmem:[%s1261 + $0x970] sm:%s1253] %v1564
                %v1566 = vld [vmem:[%s1260 + $0x1300] sm:%s1253]
                %1567 = vst [vmem:[%s1261 + $0x980] sm:%s1253] %v1566
                %v1568 = vld [vmem:[%s1260 + $0x1320] sm:%s1253]
                %1569 = vst [vmem:[%s1261 + $0x990] sm:%s1253] %v1568
                %v1570 = vld [vmem:[%s1260 + $0x1340] sm:%s1253]
                %1571 = vst [vmem:[%s1261 + $0x9a0] sm:%s1253] %v1570
                %v1572 = vld [vmem:[%s1260 + $0x1360] sm:%s1253]
                %1573 = vst [vmem:[%s1261 + $0x9b0] sm:%s1253] %v1572
                %v1574 = vld [vmem:[%s1260 + $0x1380] sm:%s1253]
                %1575 = vst [vmem:[%s1261 + $0x9c0] sm:%s1253] %v1574
                %v1576 = vld [vmem:[%s1260 + $0x13a0] sm:%s1253]
                %1577 = vst [vmem:[%s1261 + $0x9d0] sm:%s1253] %v1576
                %v1578 = vld [vmem:[%s1260 + $0x13c0] sm:%s1253]
                %1579 = vst [vmem:[%s1261 + $0x9e0] sm:%s1253] %v1578
                %v1580 = vld [vmem:[%s1260 + $0x13e0] sm:%s1253]
                %1581 = vst [vmem:[%s1261 + $0x9f0] sm:%s1253] %v1580
                %v1582 = vld [vmem:[%s1260 + $0x1400] sm:%s1253]
                %1583 = vst [vmem:[%s1261 + $0xa00] sm:%s1253] %v1582
                %v1584 = vld [vmem:[%s1260 + $0x1420] sm:%s1253]
                %1585 = vst [vmem:[%s1261 + $0xa10] sm:%s1253] %v1584
                %v1586 = vld [vmem:[%s1260 + $0x1440] sm:%s1253]
                %1587 = vst [vmem:[%s1261 + $0xa20] sm:%s1253] %v1586
                %v1588 = vld [vmem:[%s1260 + $0x1460] sm:%s1253]
                %1589 = vst [vmem:[%s1261 + $0xa30] sm:%s1253] %v1588
                %v1590 = vld [vmem:[%s1260 + $0x1480] sm:%s1253]
                %1591 = vst [vmem:[%s1261 + $0xa40] sm:%s1253] %v1590
                %v1592 = vld [vmem:[%s1260 + $0x14a0] sm:%s1253]
                %1593 = vst [vmem:[%s1261 + $0xa50] sm:%s1253] %v1592
                %v1594 = vld [vmem:[%s1260 + $0x14c0] sm:%s1253]
                %1595 = vst [vmem:[%s1261 + $0xa60] sm:%s1253] %v1594
                %v1596 = vld [vmem:[%s1260 + $0x14e0] sm:%s1253]
                %1597 = vst [vmem:[%s1261 + $0xa70] sm:%s1253] %v1596
                %v1598 = vld [vmem:[%s1260 + $0x1500] sm:%s1253]
                %1599 = vst [vmem:[%s1261 + $0xa80] sm:%s1253] %v1598
                %v1600 = vld [vmem:[%s1260 + $0x1520] sm:%s1253]
                %1601 = vst [vmem:[%s1261 + $0xa90] sm:%s1253] %v1600
                %v1602 = vld [vmem:[%s1260 + $0x1540] sm:%s1253]
                %1603 = vst [vmem:[%s1261 + $0xaa0] sm:%s1253] %v1602
                %v1604 = vld [vmem:[%s1260 + $0x1560] sm:%s1253]
                %1605 = vst [vmem:[%s1261 + $0xab0] sm:%s1253] %v1604
                %v1606 = vld [vmem:[%s1260 + $0x1580] sm:%s1253]
                %1607 = vst [vmem:[%s1261 + $0xac0] sm:%s1253] %v1606
                %v1608 = vld [vmem:[%s1260 + $0x15a0] sm:%s1253]
                %1609 = vst [vmem:[%s1261 + $0xad0] sm:%s1253] %v1608
                %v1610 = vld [vmem:[%s1260 + $0x15c0] sm:%s1253]
                %1611 = vst [vmem:[%s1261 + $0xae0] sm:%s1253] %v1610
                %v1612 = vld [vmem:[%s1260 + $0x15e0] sm:%s1253]
                %1613 = vst [vmem:[%s1261 + $0xaf0] sm:%s1253] %v1612
                %v1614 = vld [vmem:[%s1260 + $0x1600] sm:%s1253]
                %1615 = vst [vmem:[%s1261 + $0xb00] sm:%s1253] %v1614
                %v1616 = vld [vmem:[%s1260 + $0x1620] sm:%s1253]
                %1617 = vst [vmem:[%s1261 + $0xb10] sm:%s1253] %v1616
                %v1618 = vld [vmem:[%s1260 + $0x1640] sm:%s1253]
                %1619 = vst [vmem:[%s1261 + $0xb20] sm:%s1253] %v1618
                %v1620 = vld [vmem:[%s1260 + $0x1660] sm:%s1253]
                %1621 = vst [vmem:[%s1261 + $0xb30] sm:%s1253] %v1620
                %v1622 = vld [vmem:[%s1260 + $0x1680] sm:%s1253]
                %1623 = vst [vmem:[%s1261 + $0xb40] sm:%s1253] %v1622
                %v1624 = vld [vmem:[%s1260 + $0x16a0] sm:%s1253]
                %1625 = vst [vmem:[%s1261 + $0xb50] sm:%s1253] %v1624
                %v1626 = vld [vmem:[%s1260 + $0x16c0] sm:%s1253]
                %1627 = vst [vmem:[%s1261 + $0xb60] sm:%s1253] %v1626
                %v1628 = vld [vmem:[%s1260 + $0x16e0] sm:%s1253]
                %1629 = vst [vmem:[%s1261 + $0xb70] sm:%s1253] %v1628
                %v1630 = vld [vmem:[%s1260 + $0x1700] sm:%s1253]
                %1631 = vst [vmem:[%s1261 + $0xb80] sm:%s1253] %v1630
                %v1632 = vld [vmem:[%s1260 + $0x1720] sm:%s1253]
                %1633 = vst [vmem:[%s1261 + $0xb90] sm:%s1253] %v1632
                %v1634 = vld [vmem:[%s1260 + $0x1740] sm:%s1253]
                %1635 = vst [vmem:[%s1261 + $0xba0] sm:%s1253] %v1634
                %v1636 = vld [vmem:[%s1260 + $0x1760] sm:%s1253]
                %1637 = vst [vmem:[%s1261 + $0xbb0] sm:%s1253] %v1636
                %v1638 = vld [vmem:[%s1260 + $0x1780] sm:%s1253]
                %1639 = vst [vmem:[%s1261 + $0xbc0] sm:%s1253] %v1638
                %v1640 = vld [vmem:[%s1260 + $0x17a0] sm:%s1253]
                %1641 = vst [vmem:[%s1261 + $0xbd0] sm:%s1253] %v1640
                %v1642 = vld [vmem:[%s1260 + $0x17c0] sm:%s1253]
                %1643 = vst [vmem:[%s1261 + $0xbe0] sm:%s1253] %v1642
                %v1644 = vld [vmem:[%s1260 + $0x17e0] sm:%s1253]
                %1645 = vst [vmem:[%s1261 + $0xbf0] sm:%s1253] %v1644
                %v1646 = vld [vmem:[%s1260 + $0x1800] sm:%s1253]
                %1647 = vst [vmem:[%s1261 + $0xc00] sm:%s1253] %v1646
                %v1648 = vld [vmem:[%s1260 + $0x1820] sm:%s1253]
                %1649 = vst [vmem:[%s1261 + $0xc10] sm:%s1253] %v1648
                %v1650 = vld [vmem:[%s1260 + $0x1840] sm:%s1253]
                %1651 = vst [vmem:[%s1261 + $0xc20] sm:%s1253] %v1650
                %v1652 = vld [vmem:[%s1260 + $0x1860] sm:%s1253]
                %1653 = vst [vmem:[%s1261 + $0xc30] sm:%s1253] %v1652
                %v1654 = vld [vmem:[%s1260 + $0x1880] sm:%s1253]
                %1655 = vst [vmem:[%s1261 + $0xc40] sm:%s1253] %v1654
                %v1656 = vld [vmem:[%s1260 + $0x18a0] sm:%s1253]
                %1657 = vst [vmem:[%s1261 + $0xc50] sm:%s1253] %v1656
                %v1658 = vld [vmem:[%s1260 + $0x18c0] sm:%s1253]
                %1659 = vst [vmem:[%s1261 + $0xc60] sm:%s1253] %v1658
                %v1660 = vld [vmem:[%s1260 + $0x18e0] sm:%s1253]
                %1661 = vst [vmem:[%s1261 + $0xc70] sm:%s1253] %v1660
                %v1662 = vld [vmem:[%s1260 + $0x1900] sm:%s1253]
                %1663 = vst [vmem:[%s1261 + $0xc80] sm:%s1253] %v1662
                %v1664 = vld [vmem:[%s1260 + $0x1920] sm:%s1253]
                %1665 = vst [vmem:[%s1261 + $0xc90] sm:%s1253] %v1664
                %v1666 = vld [vmem:[%s1260 + $0x1940] sm:%s1253]
                %1667 = vst [vmem:[%s1261 + $0xca0] sm:%s1253] %v1666
                %v1668 = vld [vmem:[%s1260 + $0x1960] sm:%s1253]
                %1669 = vst [vmem:[%s1261 + $0xcb0] sm:%s1253] %v1668
                %v1670 = vld [vmem:[%s1260 + $0x1980] sm:%s1253]
                %1671 = vst [vmem:[%s1261 + $0xcc0] sm:%s1253] %v1670
                %v1672 = vld [vmem:[%s1260 + $0x19a0] sm:%s1253]
                %1673 = vst [vmem:[%s1261 + $0xcd0] sm:%s1253] %v1672
                %v1674 = vld [vmem:[%s1260 + $0x19c0] sm:%s1253]
                %1675 = vst [vmem:[%s1261 + $0xce0] sm:%s1253] %v1674
                %v1676 = vld [vmem:[%s1260 + $0x19e0] sm:%s1253]
                %1677 = vst [vmem:[%s1261 + $0xcf0] sm:%s1253] %v1676
                %v1678 = vld [vmem:[%s1260 + $0x1a00] sm:%s1253]
                %1679 = vst [vmem:[%s1261 + $0xd00] sm:%s1253] %v1678
                %v1680 = vld [vmem:[%s1260 + $0x1a20] sm:%s1253]
                %1681 = vst [vmem:[%s1261 + $0xd10] sm:%s1253] %v1680
                %v1682 = vld [vmem:[%s1260 + $0x1a40] sm:%s1253]
                %1683 = vst [vmem:[%s1261 + $0xd20] sm:%s1253] %v1682
                %v1684 = vld [vmem:[%s1260 + $0x1a60] sm:%s1253]
                %1685 = vst [vmem:[%s1261 + $0xd30] sm:%s1253] %v1684
                %v1686 = vld [vmem:[%s1260 + $0x1a80] sm:%s1253]
                %1687 = vst [vmem:[%s1261 + $0xd40] sm:%s1253] %v1686
                %v1688 = vld [vmem:[%s1260 + $0x1aa0] sm:%s1253]
                %1689 = vst [vmem:[%s1261 + $0xd50] sm:%s1253] %v1688
                %v1690 = vld [vmem:[%s1260 + $0x1ac0] sm:%s1253]
                %1691 = vst [vmem:[%s1261 + $0xd60] sm:%s1253] %v1690
                %v1692 = vld [vmem:[%s1260 + $0x1ae0] sm:%s1253]
                %1693 = vst [vmem:[%s1261 + $0xd70] sm:%s1253] %v1692
                %v1694 = vld [vmem:[%s1260 + $0x1b00] sm:%s1253]
                %1695 = vst [vmem:[%s1261 + $0xd80] sm:%s1253] %v1694
                %v1696 = vld [vmem:[%s1260 + $0x1b20] sm:%s1253]
                %1697 = vst [vmem:[%s1261 + $0xd90] sm:%s1253] %v1696
                %v1698 = vld [vmem:[%s1260 + $0x1b40] sm:%s1253]
                %1699 = vst [vmem:[%s1261 + $0xda0] sm:%s1253] %v1698
                %v1700 = vld [vmem:[%s1260 + $0x1b60] sm:%s1253]
                %1701 = vst [vmem:[%s1261 + $0xdb0] sm:%s1253] %v1700
                %v1702 = vld [vmem:[%s1260 + $0x1b80] sm:%s1253]
                %1703 = vst [vmem:[%s1261 + $0xdc0] sm:%s1253] %v1702
                %v1704 = vld [vmem:[%s1260 + $0x1ba0] sm:%s1253]
                %1705 = vst [vmem:[%s1261 + $0xdd0] sm:%s1253] %v1704
                %v1706 = vld [vmem:[%s1260 + $0x1bc0] sm:%s1253]
                %1707 = vst [vmem:[%s1261 + $0xde0] sm:%s1253] %v1706
                %v1708 = vld [vmem:[%s1260 + $0x1be0] sm:%s1253]
                %1709 = vst [vmem:[%s1261 + $0xdf0] sm:%s1253] %v1708
                %v1710 = vld [vmem:[%s1260 + $0x1c00] sm:%s1253]
                %1711 = vst [vmem:[%s1261 + $0xe00] sm:%s1253] %v1710
                %v1712 = vld [vmem:[%s1260 + $0x1c20] sm:%s1253]
                %1713 = vst [vmem:[%s1261 + $0xe10] sm:%s1253] %v1712
                %v1714 = vld [vmem:[%s1260 + $0x1c40] sm:%s1253]
                %1715 = vst [vmem:[%s1261 + $0xe20] sm:%s1253] %v1714
                %v1716 = vld [vmem:[%s1260 + $0x1c60] sm:%s1253]
                %1717 = vst [vmem:[%s1261 + $0xe30] sm:%s1253] %v1716
                %v1718 = vld [vmem:[%s1260 + $0x1c80] sm:%s1253]
                %1719 = vst [vmem:[%s1261 + $0xe40] sm:%s1253] %v1718
                %v1720 = vld [vmem:[%s1260 + $0x1ca0] sm:%s1253]
                %1721 = vst [vmem:[%s1261 + $0xe50] sm:%s1253] %v1720
                %v1722 = vld [vmem:[%s1260 + $0x1cc0] sm:%s1253]
                %1723 = vst [vmem:[%s1261 + $0xe60] sm:%s1253] %v1722
                %v1724 = vld [vmem:[%s1260 + $0x1ce0] sm:%s1253]
                %1725 = vst [vmem:[%s1261 + $0xe70] sm:%s1253] %v1724
                %v1726 = vld [vmem:[%s1260 + $0x1d00] sm:%s1253]
                %1727 = vst [vmem:[%s1261 + $0xe80] sm:%s1253] %v1726
                %v1728 = vld [vmem:[%s1260 + $0x1d20] sm:%s1253]
                %1729 = vst [vmem:[%s1261 + $0xe90] sm:%s1253] %v1728
                %v1730 = vld [vmem:[%s1260 + $0x1d40] sm:%s1253]
                %1731 = vst [vmem:[%s1261 + $0xea0] sm:%s1253] %v1730
                %v1732 = vld [vmem:[%s1260 + $0x1d60] sm:%s1253]
                %1733 = vst [vmem:[%s1261 + $0xeb0] sm:%s1253] %v1732
                %v1734 = vld [vmem:[%s1260 + $0x1d80] sm:%s1253]
                %1735 = vst [vmem:[%s1261 + $0xec0] sm:%s1253] %v1734
                %v1736 = vld [vmem:[%s1260 + $0x1da0] sm:%s1253]
                %1737 = vst [vmem:[%s1261 + $0xed0] sm:%s1253] %v1736
                %v1738 = vld [vmem:[%s1260 + $0x1dc0] sm:%s1253]
                %1739 = vst [vmem:[%s1261 + $0xee0] sm:%s1253] %v1738
                %v1740 = vld [vmem:[%s1260 + $0x1de0] sm:%s1253]
                %1741 = vst [vmem:[%s1261 + $0xef0] sm:%s1253] %v1740
                %v1742 = vld [vmem:[%s1260 + $0x1e00] sm:%s1253]
                %1743 = vst [vmem:[%s1261 + $0xf00] sm:%s1253] %v1742
                %v1744 = vld [vmem:[%s1260 + $0x1e20] sm:%s1253]
                %1745 = vst [vmem:[%s1261 + $0xf10] sm:%s1253] %v1744
                %v1746 = vld [vmem:[%s1260 + $0x1e40] sm:%s1253]
                %1747 = vst [vmem:[%s1261 + $0xf20] sm:%s1253] %v1746
                %v1748 = vld [vmem:[%s1260 + $0x1e60] sm:%s1253]
                %1749 = vst [vmem:[%s1261 + $0xf30] sm:%s1253] %v1748
                %v1750 = vld [vmem:[%s1260 + $0x1e80] sm:%s1253]
                %1751 = vst [vmem:[%s1261 + $0xf40] sm:%s1253] %v1750
                %v1752 = vld [vmem:[%s1260 + $0x1ea0] sm:%s1253]
                %1753 = vst [vmem:[%s1261 + $0xf50] sm:%s1253] %v1752
                %v1754 = vld [vmem:[%s1260 + $0x1ec0] sm:%s1253]
                %1755 = vst [vmem:[%s1261 + $0xf60] sm:%s1253] %v1754
                %v1756 = vld [vmem:[%s1260 + $0x1ee0] sm:%s1253]
                %1757 = vst [vmem:[%s1261 + $0xf70] sm:%s1253] %v1756
                %v1758 = vld [vmem:[%s1260 + $0x1f00] sm:%s1253]
                %1759 = vst [vmem:[%s1261 + $0xf80] sm:%s1253] %v1758
                %v1760 = vld [vmem:[%s1260 + $0x1f20] sm:%s1253]
                %1761 = vst [vmem:[%s1261 + $0xf90] sm:%s1253] %v1760
                %v1762 = vld [vmem:[%s1260 + $0x1f40] sm:%s1253]
                %1763 = vst [vmem:[%s1261 + $0xfa0] sm:%s1253] %v1762
                %v1764 = vld [vmem:[%s1260 + $0x1f60] sm:%s1253]
                %1765 = vst [vmem:[%s1261 + $0xfb0] sm:%s1253] %v1764
                %v1766 = vld [vmem:[%s1260 + $0x1f80] sm:%s1253]
                %1767 = vst [vmem:[%s1261 + $0xfc0] sm:%s1253] %v1766
                %v1768 = vld [vmem:[%s1260 + $0x1fa0] sm:%s1253]
                %1769 = vst [vmem:[%s1261 + $0xfd0] sm:%s1253] %v1768
                %v1770 = vld [vmem:[%s1260 + $0x1fc0] sm:%s1253]
                %1771 = vst [vmem:[%s1261 + $0xfe0] sm:%s1253] %v1770
                %v1772 = vld [vmem:[%s1260 + $0x1fe0] sm:%s1253]
                %1773 = vst [vmem:[%s1261 + $0xff0] sm:%s1253] %v1772
              $region59: #{convnet_forward.5} parent=46 // loop_footer
                %s1259 = sadd.s32 1, %s1255
              $region60: #{convnet_forward.5} parent=46 // loop_footer_branch
                %1254 = sbr.rel target = $region56
              $region61: #{convnet_forward.5} parent=46 // loop_exit
                _
            $region47: #{convnet_forward.5} parent=31 // pred_fallthru
              _
          $region32: #{convnet_forward.5} parent=27 // pred_fallthru
            _
          %1774 = vnop
        $region28: #{convnet_forward.5} parent=23 // pred_fallthru
          _
        // Predicated region
        $region62: #{convnet_forward.5} parent=23 // pred_check
          %p1775 = pneg %p79
        $region63: #{convnet_forward.5} parent=23 // pred_check_branch
          %1777 = sbr.rel (%p1775) target = $region65
        $region64: #{convnet_forward.5} parent=23 // pred_region
          %s1778 = smul.u32 4, %s12
          %p1779 = scmp.lt.s32.totalorder %s1778, 7
          %s1780 = scalar_select %p1779, %s1778, 7
          %s1781 = scalar_lea.vmem %s2, %s1780
          %s1782 = smul.u32 4, %s12
        $region65: #{convnet_forward.5} parent=23 // pred_fallthru
          _
        // Predicated region
        $region66: #{convnet_forward.5} parent=23 // pred_check
          %p1783 = pneg %p105
        $region67: #{convnet_forward.5} parent=23 // pred_check_branch
          %1785 = sbr.rel (%p1783) target = $region69
        $region68: #{convnet_forward.5} parent=23 // pred_region
          %s1786 = smul.u32 64, %s12
          %p1787 = scmp.lt.s32.totalorder %s1786, 127
          %s1788 = scalar_select %p1787, %s1786, 127
          %s1789 = smul.addr %s1788, 4
          %s1790 = scalar_lea.vmem %s3, %s1789
          %s1791 = smul.u32 64, %s12
        $region69: #{convnet_forward.5} parent=23 // pred_fallthru
          _
      $region24: #{convnet_forward.5} parent=5 // pred_fallthru
        _
      %p1792 = scmp.le.s32.totalorder 1, %s12
      %p1793 = scmp.lt.s32.totalorder %s12, 3
      %p1794 = pnand %p1792, %p1793
      %p1795 = pneg %p1794
      // Predicated region
      $region70: #{convnet_forward.5} parent=5 // pred_check
        _
      $region71: #{convnet_forward.5} parent=5 // pred_check_branch
        %1797 = sbr.rel (%p1794) target = $region73
      $region72: #{convnet_forward.5} parent=5 // pred_region
        %s1798 = ssub.s32 %s12, 1
        %s1799 = sand.u32 %s46, 1
        %s1800 = sand.u32 %s46, 1
        %s1801 = smul.addr %s1800, 4096
        %s1802 = scalar_lea.vmem [#allocation3], %s1801
        // Predicated region
        $region74: #{convnet_forward.5} parent=72 // pred_check
          %p1803 = pneg %p59
        $region75: #{convnet_forward.5} parent=72 // pred_check_branch
          %1805 = sbr.rel (%p1803) target = $region77
        $region76: #{convnet_forward.5} parent=72 // pred_region
          _
        $region77: #{convnet_forward.5} parent=72 // pred_fallthru
          _
        %p1806 = pneg %p33
        %p1807 = pneg %p30
        %s1808 = sand.u32 %s46, 1
        %s1809 = sand.u32 %s46, 1
        %s1810 = smul.addr %s1809, 4096
        %s1811 = scalar_lea.vmem [#allocation3], %s1810
        %p1812 = pneg %p59
        %p1813 = pneg %p56
        %s1814 = smul.u32 4, %s17
        %p1815 = scmp.lt.s32.totalorder %s1814, 7
        %s1816 = scalar_select %p1815, %s1814, 7
        %s1817 = scalar_lea.vmem %s2, %s1816
        %p1818 = pneg %p85
        %p1819 = pneg %p82
        %s1820 = smul.u32 64, %s17
        %p1821 = scmp.lt.s32.totalorder %s1820, 127
        %s1822 = scalar_select %p1821, %s1820, 127
        %s1823 = smul.addr %s1822, 4
        %s1824 = scalar_lea.vmem %s3, %s1823
        %p1825 = pneg %p111
        %p1826 = pneg %p108
        %p1827 = pneg %p132
        %p1828 = pneg %p129
        %p1829 = pneg %p153
        %p1830 = pneg %p150
        %s1831 = smul.u32 4, %s17
        %s1832 = smul.u32 4, %s17
        %p1833 = scmp.lt.s32.totalorder %s1832, 7
        %s1834 = scalar_select %p1833, %s1832, 7
        %s1835 = scalar_lea.vmem %s2, %s1834
        %s1836 = smul.u32 4, %s17
        %s1837 = smul.u32 64, %s17
        %p1838 = scmp.lt.s32.totalorder %s1837, 127
        %s1839 = scalar_select %p1838, %s1837, 127
        %s1840 = smul.addr %s1839, 4
        %s1841 = scalar_lea.vmem %s3, %s1840
        %s1842 = smul.u32 64, %s17
        %p1843 = scmp.eq.s32.totalorder %s17, 0
        // Predicated region
        $region78: #{convnet_forward.5} parent=72 // pred_check
          %p1844 = pneg %p1843
        $region79: #{convnet_forward.5} parent=72 // pred_check_branch
          %1846 = sbr.rel (%p1844) target = $region81
        $region80: #{convnet_forward.5} parent=72 // pred_region
          %1847 = vst [vmem:[#allocation2] sm:$0x3] 0.0
        $region81: #{convnet_forward.5} parent=72 // pred_fallthru
          _
        %v1848 = vld [vmem:[%s0] sm:$0xff]
        %v1849 = vld [vmem:[%s0 + $0x8] sm:$0xff]
        %v1850 = vld [vmem:[%s1802] sm:$0xff]
        %v1851 = vld [vmem:[%s1802 + $0x8] sm:$0xff]
        %v1852 = vld [vmem:[%s1802 + $0x10] sm:$0xff]
        %v1853 = vld [vmem:[%s1802 + $0x18] sm:$0xff]
        %v1854 = vld [vmem:[%s1802 + $0x20] sm:$0xff]
        %v1855 = vld [vmem:[%s1802 + $0x28] sm:$0xff]
        %v1856 = vld [vmem:[%s1802 + $0x30] sm:$0xff]
        %v1857 = vld [vmem:[%s1802 + $0x38] sm:$0xff]
        %v1858 = vld [vmem:[%s1802 + $0x40] sm:$0xff]
        %v1859 = vld [vmem:[%s1802 + $0x48] sm:$0xff]
        %v1860 = vld [vmem:[%s1802 + $0x50] sm:$0xff]
        %v1861 = vld [vmem:[%s1802 + $0x58] sm:$0xff]
        %v1862 = vld [vmem:[%s1802 + $0x60] sm:$0xff]
        %v1863 = vld [vmem:[%s1802 + $0x68] sm:$0xff]
        %v1864 = vld [vmem:[%s1802 + $0x70] sm:$0xff]
        %v1865 = vld [vmem:[%s1802 + $0x78] sm:$0xff]
        %v1866 = vld [vmem:[%s1802 + $0x80] sm:$0xff]
        %v1867 = vld [vmem:[%s1802 + $0x88] sm:$0xff]
        %v1868 = vld [vmem:[%s1802 + $0x90] sm:$0xff]
        %v1869 = vld [vmem:[%s1802 + $0x98] sm:$0xff]
        %v1870 = vld [vmem:[%s1802 + $0xa0] sm:$0xff]
        %v1871 = vld [vmem:[%s1802 + $0xa8] sm:$0xff]
        %v1872 = vld [vmem:[%s1802 + $0xb0] sm:$0xff]
        %v1873 = vld [vmem:[%s1802 + $0xb8] sm:$0xff]
        %v1874 = vld [vmem:[%s1802 + $0xc0] sm:$0xff]
        %v1875 = vld [vmem:[%s1802 + $0xc8] sm:$0xff]
        %v1876 = vld [vmem:[%s1802 + $0xd0] sm:$0xff]
        %v1877 = vld [vmem:[%s1802 + $0xd8] sm:$0xff]
        %v1878 = vld [vmem:[%s1802 + $0xe0] sm:$0xff]
        %v1879 = vld [vmem:[%s1802 + $0xe8] sm:$0xff]
        %v1880 = vld [vmem:[%s1802 + $0xf0] sm:$0xff]
        %v1881 = vld [vmem:[%s1802 + $0xf8] sm:$0xff]
        %v1882 = vld [vmem:[%s1802 + $0x100] sm:$0xff]
        %v1883 = vld [vmem:[%s1802 + $0x108] sm:$0xff]
        %v1884 = vld [vmem:[%s1802 + $0x110] sm:$0xff]
        %v1885 = vld [vmem:[%s1802 + $0x118] sm:$0xff]
        %v1886 = vld [vmem:[%s1802 + $0x120] sm:$0xff]
        %v1887 = vld [vmem:[%s1802 + $0x128] sm:$0xff]
        %v1888 = vld [vmem:[%s1802 + $0x130] sm:$0xff]
        %v1889 = vld [vmem:[%s1802 + $0x138] sm:$0xff]
        %v1890 = vld [vmem:[%s1802 + $0x140] sm:$0xff]
        %v1891 = vld [vmem:[%s1802 + $0x148] sm:$0xff]
        %v1892 = vld [vmem:[%s1802 + $0x150] sm:$0xff]
        %v1893 = vld [vmem:[%s1802 + $0x158] sm:$0xff]
        %v1894 = vld [vmem:[%s1802 + $0x160] sm:$0xff]
        %v1895 = vld [vmem:[%s1802 + $0x168] sm:$0xff]
        %v1896 = vld [vmem:[%s1802 + $0x170] sm:$0xff]
        %v1897 = vld [vmem:[%s1802 + $0x178] sm:$0xff]
        %v1898 = vld [vmem:[%s1802 + $0x180] sm:$0xff]
        %v1899 = vld [vmem:[%s1802 + $0x188] sm:$0xff]
        %v1900 = vld [vmem:[%s1802 + $0x190] sm:$0xff]
        %v1901 = vld [vmem:[%s1802 + $0x198] sm:$0xff]
        %v1902 = vld [vmem:[%s1802 + $0x1a0] sm:$0xff]
        %v1903 = vld [vmem:[%s1802 + $0x1a8] sm:$0xff]
        %v1904 = vld [vmem:[%s1802 + $0x1b0] sm:$0xff]
        %v1905 = vld [vmem:[%s1802 + $0x1b8] sm:$0xff]
        %v1906 = vld [vmem:[%s1802 + $0x1c0] sm:$0xff]
        %v1907 = vld [vmem:[%s1802 + $0x1c8] sm:$0xff]
        %v1908 = vld [vmem:[%s1802 + $0x1d0] sm:$0xff]
        %v1909 = vld [vmem:[%s1802 + $0x1d8] sm:$0xff]
        %v1910 = vld [vmem:[%s1802 + $0x1e0] sm:$0xff]
        %v1911 = vld [vmem:[%s1802 + $0x1e8] sm:$0xff]
        %v1912 = vld [vmem:[%s1802 + $0x1f0] sm:$0xff]
        %v1913 = vld [vmem:[%s1802 + $0x1f8] sm:$0xff]
        %v1914 = vld [vmem:[%s1802 + $0x200] sm:$0xff]
        %v1915 = vld [vmem:[%s1802 + $0x208] sm:$0xff]
        %v1916 = vld [vmem:[%s1802 + $0x210] sm:$0xff]
        %v1917 = vld [vmem:[%s1802 + $0x218] sm:$0xff]
        %v1918 = vld [vmem:[%s1802 + $0x220] sm:$0xff]
        %v1919 = vld [vmem:[%s1802 + $0x228] sm:$0xff]
        %v1920 = vld [vmem:[%s1802 + $0x230] sm:$0xff]
        %v1921 = vld [vmem:[%s1802 + $0x238] sm:$0xff]
        %v1922 = vld [vmem:[%s1802 + $0x240] sm:$0xff]
        %v1923 = vld [vmem:[%s1802 + $0x248] sm:$0xff]
        %v1924 = vld [vmem:[%s1802 + $0x250] sm:$0xff]
        %v1925 = vld [vmem:[%s1802 + $0x258] sm:$0xff]
        %v1926 = vld [vmem:[%s1802 + $0x260] sm:$0xff]
        %v1927 = vld [vmem:[%s1802 + $0x268] sm:$0xff]
        %v1928 = vld [vmem:[%s1802 + $0x270] sm:$0xff]
        %v1929 = vld [vmem:[%s1802 + $0x278] sm:$0xff]
        %v1930 = vld [vmem:[%s1802 + $0x280] sm:$0xff]
        %v1931 = vld [vmem:[%s1802 + $0x288] sm:$0xff]
        %v1932 = vld [vmem:[%s1802 + $0x290] sm:$0xff]
        %v1933 = vld [vmem:[%s1802 + $0x298] sm:$0xff]
        %v1934 = vld [vmem:[%s1802 + $0x2a0] sm:$0xff]
        %v1935 = vld [vmem:[%s1802 + $0x2a8] sm:$0xff]
        %v1936 = vld [vmem:[%s1802 + $0x2b0] sm:$0xff]
        %v1937 = vld [vmem:[%s1802 + $0x2b8] sm:$0xff]
        %v1938 = vld [vmem:[%s1802 + $0x2c0] sm:$0xff]
        %v1939 = vld [vmem:[%s1802 + $0x2c8] sm:$0xff]
        %v1940 = vld [vmem:[%s1802 + $0x2d0] sm:$0xff]
        %v1941 = vld [vmem:[%s1802 + $0x2d8] sm:$0xff]
        %v1942 = vld [vmem:[%s1802 + $0x2e0] sm:$0xff]
        %v1943 = vld [vmem:[%s1802 + $0x2e8] sm:$0xff]
        %v1944 = vld [vmem:[%s1802 + $0x2f0] sm:$0xff]
        %v1945 = vld [vmem:[%s1802 + $0x2f8] sm:$0xff]
        %v1946 = vld [vmem:[%s1802 + $0x300] sm:$0xff]
        %v1947 = vld [vmem:[%s1802 + $0x308] sm:$0xff]
        %v1948 = vld [vmem:[%s1802 + $0x310] sm:$0xff]
        %v1949 = vld [vmem:[%s1802 + $0x318] sm:$0xff]
        %v1950 = vld [vmem:[%s1802 + $0x320] sm:$0xff]
        %v1951 = vld [vmem:[%s1802 + $0x328] sm:$0xff]
        %v1952 = vld [vmem:[%s1802 + $0x330] sm:$0xff]
        %v1953 = vld [vmem:[%s1802 + $0x338] sm:$0xff]
        %v1954 = vld [vmem:[%s1802 + $0x340] sm:$0xff]
        %v1955 = vld [vmem:[%s1802 + $0x348] sm:$0xff]
        %v1956 = vld [vmem:[%s1802 + $0x350] sm:$0xff]
        %v1957 = vld [vmem:[%s1802 + $0x358] sm:$0xff]
        %v1958 = vld [vmem:[%s1802 + $0x360] sm:$0xff]
        %v1959 = vld [vmem:[%s1802 + $0x368] sm:$0xff]
        %v1960 = vld [vmem:[%s1802 + $0x370] sm:$0xff]
        %v1961 = vld [vmem:[%s1802 + $0x378] sm:$0xff]
        %v1962 = vld [vmem:[%s1802 + $0x380] sm:$0xff]
        %v1963 = vld [vmem:[%s1802 + $0x388] sm:$0xff]
        %v1964 = vld [vmem:[%s1802 + $0x390] sm:$0xff]
        %v1965 = vld [vmem:[%s1802 + $0x398] sm:$0xff]
        %v1966 = vld [vmem:[%s1802 + $0x3a0] sm:$0xff]
        %v1967 = vld [vmem:[%s1802 + $0x3a8] sm:$0xff]
        %v1968 = vld [vmem:[%s1802 + $0x3b0] sm:$0xff]
        %v1969 = vld [vmem:[%s1802 + $0x3b8] sm:$0xff]
        %v1970 = vld [vmem:[%s1802 + $0x3c0] sm:$0xff]
        %v1971 = vld [vmem:[%s1802 + $0x3c8] sm:$0xff]
        %v1972 = vld [vmem:[%s1802 + $0x3d0] sm:$0xff]
        %v1973 = vld [vmem:[%s1802 + $0x3d8] sm:$0xff]
        %v1974 = vld [vmem:[%s1802 + $0x3e0] sm:$0xff]
        %v1975 = vld [vmem:[%s1802 + $0x3e8] sm:$0xff]
        %v1976 = vld [vmem:[%s1802 + $0x3f0] sm:$0xff]
        %v1977 = vld [vmem:[%s1802 + $0x3f8] sm:$0xff]
        %v1978 = vld [vmem:[%s1802 + $0x400] sm:$0xff]
        %v1979 = vld [vmem:[%s1802 + $0x408] sm:$0xff]
        %v1980 = vld [vmem:[%s1802 + $0x410] sm:$0xff]
        %v1981 = vld [vmem:[%s1802 + $0x418] sm:$0xff]
        %v1982 = vld [vmem:[%s1802 + $0x420] sm:$0xff]
        %v1983 = vld [vmem:[%s1802 + $0x428] sm:$0xff]
        %v1984 = vld [vmem:[%s1802 + $0x430] sm:$0xff]
        %v1985 = vld [vmem:[%s1802 + $0x438] sm:$0xff]
        %v1986 = vld [vmem:[%s1802 + $0x440] sm:$0xff]
        %v1987 = vld [vmem:[%s1802 + $0x448] sm:$0xff]
        %v1988 = vld [vmem:[%s1802 + $0x450] sm:$0xff]
        %v1989 = vld [vmem:[%s1802 + $0x458] sm:$0xff]
        %v1990 = vld [vmem:[%s1802 + $0x460] sm:$0xff]
        %v1991 = vld [vmem:[%s1802 + $0x468] sm:$0xff]
        %v1992 = vld [vmem:[%s1802 + $0x470] sm:$0xff]
        %v1993 = vld [vmem:[%s1802 + $0x478] sm:$0xff]
        %v1994 = vld [vmem:[%s1802 + $0x480] sm:$0xff]
        %v1995 = vld [vmem:[%s1802 + $0x488] sm:$0xff]
        %v1996 = vld [vmem:[%s1802 + $0x490] sm:$0xff]
        %v1997 = vld [vmem:[%s1802 + $0x498] sm:$0xff]
        %v1998 = vld [vmem:[%s1802 + $0x4a0] sm:$0xff]
        %v1999 = vld [vmem:[%s1802 + $0x4a8] sm:$0xff]
        %v2000 = vld [vmem:[%s1802 + $0x4b0] sm:$0xff]
        %v2001 = vld [vmem:[%s1802 + $0x4b8] sm:$0xff]
        %v2002 = vld [vmem:[%s1802 + $0x4c0] sm:$0xff]
        %v2003 = vld [vmem:[%s1802 + $0x4c8] sm:$0xff]
        %v2004 = vld [vmem:[%s1802 + $0x4d0] sm:$0xff]
        %v2005 = vld [vmem:[%s1802 + $0x4d8] sm:$0xff]
        %v2006 = vld [vmem:[%s1802 + $0x4e0] sm:$0xff]
        %v2007 = vld [vmem:[%s1802 + $0x4e8] sm:$0xff]
        %v2008 = vld [vmem:[%s1802 + $0x4f0] sm:$0xff]
        %v2009 = vld [vmem:[%s1802 + $0x4f8] sm:$0xff]
        %v2010 = vld [vmem:[%s1802 + $0x500] sm:$0xff]
        %v2011 = vld [vmem:[%s1802 + $0x508] sm:$0xff]
        %v2012 = vld [vmem:[%s1802 + $0x510] sm:$0xff]
        %v2013 = vld [vmem:[%s1802 + $0x518] sm:$0xff]
        %v2014 = vld [vmem:[%s1802 + $0x520] sm:$0xff]
        %v2015 = vld [vmem:[%s1802 + $0x528] sm:$0xff]
        %v2016 = vld [vmem:[%s1802 + $0x530] sm:$0xff]
        %v2017 = vld [vmem:[%s1802 + $0x538] sm:$0xff]
        %v2018 = vld [vmem:[%s1802 + $0x540] sm:$0xff]
        %v2019 = vld [vmem:[%s1802 + $0x548] sm:$0xff]
        %v2020 = vld [vmem:[%s1802 + $0x550] sm:$0xff]
        %v2021 = vld [vmem:[%s1802 + $0x558] sm:$0xff]
        %v2022 = vld [vmem:[%s1802 + $0x560] sm:$0xff]
        %v2023 = vld [vmem:[%s1802 + $0x568] sm:$0xff]
        %v2024 = vld [vmem:[%s1802 + $0x570] sm:$0xff]
        %v2025 = vld [vmem:[%s1802 + $0x578] sm:$0xff]
        %v2026 = vld [vmem:[%s1802 + $0x580] sm:$0xff]
        %v2027 = vld [vmem:[%s1802 + $0x588] sm:$0xff]
        %v2028 = vld [vmem:[%s1802 + $0x590] sm:$0xff]
        %v2029 = vld [vmem:[%s1802 + $0x598] sm:$0xff]
        %v2030 = vld [vmem:[%s1802 + $0x5a0] sm:$0xff]
        %v2031 = vld [vmem:[%s1802 + $0x5a8] sm:$0xff]
        %v2032 = vld [vmem:[%s1802 + $0x5b0] sm:$0xff]
        %v2033 = vld [vmem:[%s1802 + $0x5b8] sm:$0xff]
        %v2034 = vld [vmem:[%s1802 + $0x5c0] sm:$0xff]
        %v2035 = vld [vmem:[%s1802 + $0x5c8] sm:$0xff]
        %v2036 = vld [vmem:[%s1802 + $0x5d0] sm:$0xff]
        %v2037 = vld [vmem:[%s1802 + $0x5d8] sm:$0xff]
        %v2038 = vld [vmem:[%s1802 + $0x5e0] sm:$0xff]
        %v2039 = vld [vmem:[%s1802 + $0x5e8] sm:$0xff]
        %v2040 = vld [vmem:[%s1802 + $0x5f0] sm:$0xff]
        %v2041 = vld [vmem:[%s1802 + $0x5f8] sm:$0xff]
        %v2042 = vld [vmem:[%s1802 + $0x600] sm:$0xff]
        %v2043 = vld [vmem:[%s1802 + $0x608] sm:$0xff]
        %v2044 = vld [vmem:[%s1802 + $0x610] sm:$0xff]
        %v2045 = vld [vmem:[%s1802 + $0x618] sm:$0xff]
        %v2046 = vld [vmem:[%s1802 + $0x620] sm:$0xff]
        %v2047 = vld [vmem:[%s1802 + $0x628] sm:$0xff]
        %v2048 = vld [vmem:[%s1802 + $0x630] sm:$0xff]
        %v2049 = vld [vmem:[%s1802 + $0x638] sm:$0xff]
        %v2050 = vld [vmem:[%s1802 + $0x640] sm:$0xff]
        %v2051 = vld [vmem:[%s1802 + $0x648] sm:$0xff]
        %v2052 = vld [vmem:[%s1802 + $0x650] sm:$0xff]
        %v2053 = vld [vmem:[%s1802 + $0x658] sm:$0xff]
        %v2054 = vld [vmem:[%s1802 + $0x660] sm:$0xff]
        %v2055 = vld [vmem:[%s1802 + $0x668] sm:$0xff]
        %v2056 = vld [vmem:[%s1802 + $0x670] sm:$0xff]
        %v2057 = vld [vmem:[%s1802 + $0x678] sm:$0xff]
        %v2058 = vld [vmem:[%s1802 + $0x680] sm:$0xff]
        %v2059 = vld [vmem:[%s1802 + $0x688] sm:$0xff]
        %v2060 = vld [vmem:[%s1802 + $0x690] sm:$0xff]
        %v2061 = vld [vmem:[%s1802 + $0x698] sm:$0xff]
        %v2062 = vld [vmem:[%s1802 + $0x6a0] sm:$0xff]
        %v2063 = vld [vmem:[%s1802 + $0x6a8] sm:$0xff]
        %v2064 = vld [vmem:[%s1802 + $0x6b0] sm:$0xff]
        %v2065 = vld [vmem:[%s1802 + $0x6b8] sm:$0xff]
        %v2066 = vld [vmem:[%s1802 + $0x6c0] sm:$0xff]
        %v2067 = vld [vmem:[%s1802 + $0x6c8] sm:$0xff]
        %v2068 = vld [vmem:[%s1802 + $0x6d0] sm:$0xff]
        %v2069 = vld [vmem:[%s1802 + $0x6d8] sm:$0xff]
        %v2070 = vld [vmem:[%s1802 + $0x6e0] sm:$0xff]
        %v2071 = vld [vmem:[%s1802 + $0x6e8] sm:$0xff]
        %v2072 = vld [vmem:[%s1802 + $0x6f0] sm:$0xff]
        %v2073 = vld [vmem:[%s1802 + $0x6f8] sm:$0xff]
        %v2074 = vld [vmem:[%s1802 + $0x700] sm:$0xff]
        %v2075 = vld [vmem:[%s1802 + $0x708] sm:$0xff]
        %v2076 = vld [vmem:[%s1802 + $0x710] sm:$0xff]
        %v2077 = vld [vmem:[%s1802 + $0x718] sm:$0xff]
        %v2078 = vld [vmem:[%s1802 + $0x720] sm:$0xff]
        %v2079 = vld [vmem:[%s1802 + $0x728] sm:$0xff]
        %v2080 = vld [vmem:[%s1802 + $0x730] sm:$0xff]
        %v2081 = vld [vmem:[%s1802 + $0x738] sm:$0xff]
        %v2082 = vld [vmem:[%s1802 + $0x740] sm:$0xff]
        %v2083 = vld [vmem:[%s1802 + $0x748] sm:$0xff]
        %v2084 = vld [vmem:[%s1802 + $0x750] sm:$0xff]
        %v2085 = vld [vmem:[%s1802 + $0x758] sm:$0xff]
        %v2086 = vld [vmem:[%s1802 + $0x760] sm:$0xff]
        %v2087 = vld [vmem:[%s1802 + $0x768] sm:$0xff]
        %v2088 = vld [vmem:[%s1802 + $0x770] sm:$0xff]
        %v2089 = vld [vmem:[%s1802 + $0x778] sm:$0xff]
        %v2090 = vld [vmem:[%s1802 + $0x780] sm:$0xff]
        %v2091 = vld [vmem:[%s1802 + $0x788] sm:$0xff]
        %v2092 = vld [vmem:[%s1802 + $0x790] sm:$0xff]
        %v2093 = vld [vmem:[%s1802 + $0x798] sm:$0xff]
        %v2094 = vld [vmem:[%s1802 + $0x7a0] sm:$0xff]
        %v2095 = vld [vmem:[%s1802 + $0x7a8] sm:$0xff]
        %v2096 = vld [vmem:[%s1802 + $0x7b0] sm:$0xff]
        %v2097 = vld [vmem:[%s1802 + $0x7b8] sm:$0xff]
        %v2098 = vld [vmem:[%s1802 + $0x7c0] sm:$0xff]
        %v2099 = vld [vmem:[%s1802 + $0x7c8] sm:$0xff]
        %v2100 = vld [vmem:[%s1802 + $0x7d0] sm:$0xff]
        %v2101 = vld [vmem:[%s1802 + $0x7d8] sm:$0xff]
        %v2102 = vld [vmem:[%s1802 + $0x7e0] sm:$0xff]
        %v2103 = vld [vmem:[%s1802 + $0x7e8] sm:$0xff]
        %v2104 = vld [vmem:[%s1802 + $0x7f0] sm:$0xff]
        %v2105 = vld [vmem:[%s1802 + $0x7f8] sm:$0xff]
        %v2106 = vld [vmem:[%s1802 + $0x800] sm:$0xff]
        %v2107 = vld [vmem:[%s1802 + $0x808] sm:$0xff]
        %v2108 = vld [vmem:[%s1802 + $0x810] sm:$0xff]
        %v2109 = vld [vmem:[%s1802 + $0x818] sm:$0xff]
        %v2110 = vld [vmem:[%s1802 + $0x820] sm:$0xff]
        %v2111 = vld [vmem:[%s1802 + $0x828] sm:$0xff]
        %v2112 = vld [vmem:[%s1802 + $0x830] sm:$0xff]
        %v2113 = vld [vmem:[%s1802 + $0x838] sm:$0xff]
        %v2114 = vld [vmem:[%s1802 + $0x840] sm:$0xff]
        %v2115 = vld [vmem:[%s1802 + $0x848] sm:$0xff]
        %v2116 = vld [vmem:[%s1802 + $0x850] sm:$0xff]
        %v2117 = vld [vmem:[%s1802 + $0x858] sm:$0xff]
        %v2118 = vld [vmem:[%s1802 + $0x860] sm:$0xff]
        %v2119 = vld [vmem:[%s1802 + $0x868] sm:$0xff]
        %v2120 = vld [vmem:[%s1802 + $0x870] sm:$0xff]
        %v2121 = vld [vmem:[%s1802 + $0x878] sm:$0xff]
        %v2122 = vld [vmem:[%s1802 + $0x880] sm:$0xff]
        %v2123 = vld [vmem:[%s1802 + $0x888] sm:$0xff]
        %v2124 = vld [vmem:[%s1802 + $0x890] sm:$0xff]
        %v2125 = vld [vmem:[%s1802 + $0x898] sm:$0xff]
        %v2126 = vld [vmem:[%s1802 + $0x8a0] sm:$0xff]
        %v2127 = vld [vmem:[%s1802 + $0x8a8] sm:$0xff]
        %v2128 = vld [vmem:[%s1802 + $0x8b0] sm:$0xff]
        %v2129 = vld [vmem:[%s1802 + $0x8b8] sm:$0xff]
        %v2130 = vld [vmem:[%s1802 + $0x8c0] sm:$0xff]
        %v2131 = vld [vmem:[%s1802 + $0x8c8] sm:$0xff]
        %v2132 = vld [vmem:[%s1802 + $0x8d0] sm:$0xff]
        %v2133 = vld [vmem:[%s1802 + $0x8d8] sm:$0xff]
        %v2134 = vld [vmem:[%s1802 + $0x8e0] sm:$0xff]
        %v2135 = vld [vmem:[%s1802 + $0x8e8] sm:$0xff]
        %v2136 = vld [vmem:[%s1802 + $0x8f0] sm:$0xff]
        %v2137 = vld [vmem:[%s1802 + $0x8f8] sm:$0xff]
        %v2138 = vld [vmem:[%s1802 + $0x900] sm:$0xff]
        %v2139 = vld [vmem:[%s1802 + $0x908] sm:$0xff]
        %v2140 = vld [vmem:[%s1802 + $0x910] sm:$0xff]
        %v2141 = vld [vmem:[%s1802 + $0x918] sm:$0xff]
        %v2142 = vld [vmem:[%s1802 + $0x920] sm:$0xff]
        %v2143 = vld [vmem:[%s1802 + $0x928] sm:$0xff]
        %v2144 = vld [vmem:[%s1802 + $0x930] sm:$0xff]
        %v2145 = vld [vmem:[%s1802 + $0x938] sm:$0xff]
        %v2146 = vld [vmem:[%s1802 + $0x940] sm:$0xff]
        %v2147 = vld [vmem:[%s1802 + $0x948] sm:$0xff]
        %v2148 = vld [vmem:[%s1802 + $0x950] sm:$0xff]
        %v2149 = vld [vmem:[%s1802 + $0x958] sm:$0xff]
        %v2150 = vld [vmem:[%s1802 + $0x960] sm:$0xff]
        %v2151 = vld [vmem:[%s1802 + $0x968] sm:$0xff]
        %v2152 = vld [vmem:[%s1802 + $0x970] sm:$0xff]
        %v2153 = vld [vmem:[%s1802 + $0x978] sm:$0xff]
        %v2154 = vld [vmem:[%s1802 + $0x980] sm:$0xff]
        %v2155 = vld [vmem:[%s1802 + $0x988] sm:$0xff]
        %v2156 = vld [vmem:[%s1802 + $0x990] sm:$0xff]
        %v2157 = vld [vmem:[%s1802 + $0x998] sm:$0xff]
        %v2158 = vld [vmem:[%s1802 + $0x9a0] sm:$0xff]
        %v2159 = vld [vmem:[%s1802 + $0x9a8] sm:$0xff]
        %v2160 = vld [vmem:[%s1802 + $0x9b0] sm:$0xff]
        %v2161 = vld [vmem:[%s1802 + $0x9b8] sm:$0xff]
        %v2162 = vld [vmem:[%s1802 + $0x9c0] sm:$0xff]
        %v2163 = vld [vmem:[%s1802 + $0x9c8] sm:$0xff]
        %v2164 = vld [vmem:[%s1802 + $0x9d0] sm:$0xff]
        %v2165 = vld [vmem:[%s1802 + $0x9d8] sm:$0xff]
        %v2166 = vld [vmem:[%s1802 + $0x9e0] sm:$0xff]
        %v2167 = vld [vmem:[%s1802 + $0x9e8] sm:$0xff]
        %v2168 = vld [vmem:[%s1802 + $0x9f0] sm:$0xff]
        %v2169 = vld [vmem:[%s1802 + $0x9f8] sm:$0xff]
        %v2170 = vld [vmem:[%s1802 + $0xa00] sm:$0xff]
        %v2171 = vld [vmem:[%s1802 + $0xa08] sm:$0xff]
        %v2172 = vld [vmem:[%s1802 + $0xa10] sm:$0xff]
        %v2173 = vld [vmem:[%s1802 + $0xa18] sm:$0xff]
        %v2174 = vld [vmem:[%s1802 + $0xa20] sm:$0xff]
        %v2175 = vld [vmem:[%s1802 + $0xa28] sm:$0xff]
        %v2176 = vld [vmem:[%s1802 + $0xa30] sm:$0xff]
        %v2177 = vld [vmem:[%s1802 + $0xa38] sm:$0xff]
        %v2178 = vld [vmem:[%s1802 + $0xa40] sm:$0xff]
        %v2179 = vld [vmem:[%s1802 + $0xa48] sm:$0xff]
        %v2180 = vld [vmem:[%s1802 + $0xa50] sm:$0xff]
        %v2181 = vld [vmem:[%s1802 + $0xa58] sm:$0xff]
        %v2182 = vld [vmem:[%s1802 + $0xa60] sm:$0xff]
        %v2183 = vld [vmem:[%s1802 + $0xa68] sm:$0xff]
        %v2184 = vld [vmem:[%s1802 + $0xa70] sm:$0xff]
        %v2185 = vld [vmem:[%s1802 + $0xa78] sm:$0xff]
        %v2186 = vld [vmem:[%s1802 + $0xa80] sm:$0xff]
        %v2187 = vld [vmem:[%s1802 + $0xa88] sm:$0xff]
        %v2188 = vld [vmem:[%s1802 + $0xa90] sm:$0xff]
        %v2189 = vld [vmem:[%s1802 + $0xa98] sm:$0xff]
        %v2190 = vld [vmem:[%s1802 + $0xaa0] sm:$0xff]
        %v2191 = vld [vmem:[%s1802 + $0xaa8] sm:$0xff]
        %v2192 = vld [vmem:[%s1802 + $0xab0] sm:$0xff]
        %v2193 = vld [vmem:[%s1802 + $0xab8] sm:$0xff]
        %v2194 = vld [vmem:[%s1802 + $0xac0] sm:$0xff]
        %v2195 = vld [vmem:[%s1802 + $0xac8] sm:$0xff]
        %v2196 = vld [vmem:[%s1802 + $0xad0] sm:$0xff]
        %v2197 = vld [vmem:[%s1802 + $0xad8] sm:$0xff]
        %v2198 = vld [vmem:[%s1802 + $0xae0] sm:$0xff]
        %v2199 = vld [vmem:[%s1802 + $0xae8] sm:$0xff]
        %v2200 = vld [vmem:[%s1802 + $0xaf0] sm:$0xff]
        %v2201 = vld [vmem:[%s1802 + $0xaf8] sm:$0xff]
        %v2202 = vld [vmem:[%s1802 + $0xb00] sm:$0xff]
        %v2203 = vld [vmem:[%s1802 + $0xb08] sm:$0xff]
        %v2204 = vld [vmem:[%s1802 + $0xb10] sm:$0xff]
        %v2205 = vld [vmem:[%s1802 + $0xb18] sm:$0xff]
        %v2206 = vld [vmem:[%s1802 + $0xb20] sm:$0xff]
        %v2207 = vld [vmem:[%s1802 + $0xb28] sm:$0xff]
        %v2208 = vld [vmem:[%s1802 + $0xb30] sm:$0xff]
        %v2209 = vld [vmem:[%s1802 + $0xb38] sm:$0xff]
        %v2210 = vld [vmem:[%s1802 + $0xb40] sm:$0xff]
        %v2211 = vld [vmem:[%s1802 + $0xb48] sm:$0xff]
        %v2212 = vld [vmem:[%s1802 + $0xb50] sm:$0xff]
        %v2213 = vld [vmem:[%s1802 + $0xb58] sm:$0xff]
        %v2214 = vld [vmem:[%s1802 + $0xb60] sm:$0xff]
        %v2215 = vld [vmem:[%s1802 + $0xb68] sm:$0xff]
        %v2216 = vld [vmem:[%s1802 + $0xb70] sm:$0xff]
        %v2217 = vld [vmem:[%s1802 + $0xb78] sm:$0xff]
        %v2218 = vld [vmem:[%s1802 + $0xb80] sm:$0xff]
        %v2219 = vld [vmem:[%s1802 + $0xb88] sm:$0xff]
        %v2220 = vld [vmem:[%s1802 + $0xb90] sm:$0xff]
        %v2221 = vld [vmem:[%s1802 + $0xb98] sm:$0xff]
        %v2222 = vld [vmem:[%s1802 + $0xba0] sm:$0xff]
        %v2223 = vld [vmem:[%s1802 + $0xba8] sm:$0xff]
        %v2224 = vld [vmem:[%s1802 + $0xbb0] sm:$0xff]
        %v2225 = vld [vmem:[%s1802 + $0xbb8] sm:$0xff]
        %v2226 = vld [vmem:[%s1802 + $0xbc0] sm:$0xff]
        %v2227 = vld [vmem:[%s1802 + $0xbc8] sm:$0xff]
        %v2228 = vld [vmem:[%s1802 + $0xbd0] sm:$0xff]
        %v2229 = vld [vmem:[%s1802 + $0xbd8] sm:$0xff]
        %v2230 = vld [vmem:[%s1802 + $0xbe0] sm:$0xff]
        %v2231 = vld [vmem:[%s1802 + $0xbe8] sm:$0xff]
        %v2232 = vld [vmem:[%s1802 + $0xbf0] sm:$0xff]
        %v2233 = vld [vmem:[%s1802 + $0xbf8] sm:$0xff]
        %v2234 = vld [vmem:[%s1802 + $0xc00] sm:$0xff]
        %v2235 = vld [vmem:[%s1802 + $0xc08] sm:$0xff]
        %v2236 = vld [vmem:[%s1802 + $0xc10] sm:$0xff]
        %v2237 = vld [vmem:[%s1802 + $0xc18] sm:$0xff]
        %v2238 = vld [vmem:[%s1802 + $0xc20] sm:$0xff]
        %v2239 = vld [vmem:[%s1802 + $0xc28] sm:$0xff]
        %v2240 = vld [vmem:[%s1802 + $0xc30] sm:$0xff]
        %v2241 = vld [vmem:[%s1802 + $0xc38] sm:$0xff]
        %v2242 = vld [vmem:[%s1802 + $0xc40] sm:$0xff]
        %v2243 = vld [vmem:[%s1802 + $0xc48] sm:$0xff]
        %v2244 = vld [vmem:[%s1802 + $0xc50] sm:$0xff]
        %v2245 = vld [vmem:[%s1802 + $0xc58] sm:$0xff]
        %v2246 = vld [vmem:[%s1802 + $0xc60] sm:$0xff]
        %v2247 = vld [vmem:[%s1802 + $0xc68] sm:$0xff]
        %v2248 = vld [vmem:[%s1802 + $0xc70] sm:$0xff]
        %v2249 = vld [vmem:[%s1802 + $0xc78] sm:$0xff]
        %v2250 = vld [vmem:[%s1802 + $0xc80] sm:$0xff]
        %v2251 = vld [vmem:[%s1802 + $0xc88] sm:$0xff]
        %v2252 = vld [vmem:[%s1802 + $0xc90] sm:$0xff]
        %v2253 = vld [vmem:[%s1802 + $0xc98] sm:$0xff]
        %v2254 = vld [vmem:[%s1802 + $0xca0] sm:$0xff]
        %v2255 = vld [vmem:[%s1802 + $0xca8] sm:$0xff]
        %v2256 = vld [vmem:[%s1802 + $0xcb0] sm:$0xff]
        %v2257 = vld [vmem:[%s1802 + $0xcb8] sm:$0xff]
        %v2258 = vld [vmem:[%s1802 + $0xcc0] sm:$0xff]
        %v2259 = vld [vmem:[%s1802 + $0xcc8] sm:$0xff]
        %v2260 = vld [vmem:[%s1802 + $0xcd0] sm:$0xff]
        %v2261 = vld [vmem:[%s1802 + $0xcd8] sm:$0xff]
        %v2262 = vld [vmem:[%s1802 + $0xce0] sm:$0xff]
        %v2263 = vld [vmem:[%s1802 + $0xce8] sm:$0xff]
        %v2264 = vld [vmem:[%s1802 + $0xcf0] sm:$0xff]
        %v2265 = vld [vmem:[%s1802 + $0xcf8] sm:$0xff]
        %v2266 = vld [vmem:[%s1802 + $0xd00] sm:$0xff]
        %v2267 = vld [vmem:[%s1802 + $0xd08] sm:$0xff]
        %v2268 = vld [vmem:[%s1802 + $0xd10] sm:$0xff]
        %v2269 = vld [vmem:[%s1802 + $0xd18] sm:$0xff]
        %v2270 = vld [vmem:[%s1802 + $0xd20] sm:$0xff]
        %v2271 = vld [vmem:[%s1802 + $0xd28] sm:$0xff]
        %v2272 = vld [vmem:[%s1802 + $0xd30] sm:$0xff]
        %v2273 = vld [vmem:[%s1802 + $0xd38] sm:$0xff]
        %v2274 = vld [vmem:[%s1802 + $0xd40] sm:$0xff]
        %v2275 = vld [vmem:[%s1802 + $0xd48] sm:$0xff]
        %v2276 = vld [vmem:[%s1802 + $0xd50] sm:$0xff]
        %v2277 = vld [vmem:[%s1802 + $0xd58] sm:$0xff]
        %v2278 = vld [vmem:[%s1802 + $0xd60] sm:$0xff]
        %v2279 = vld [vmem:[%s1802 + $0xd68] sm:$0xff]
        %v2280 = vld [vmem:[%s1802 + $0xd70] sm:$0xff]
        %v2281 = vld [vmem:[%s1802 + $0xd78] sm:$0xff]
        %v2282 = vld [vmem:[%s1802 + $0xd80] sm:$0xff]
        %v2283 = vld [vmem:[%s1802 + $0xd88] sm:$0xff]
        %v2284 = vld [vmem:[%s1802 + $0xd90] sm:$0xff]
        %v2285 = vld [vmem:[%s1802 + $0xd98] sm:$0xff]
        %v2286 = vld [vmem:[%s1802 + $0xda0] sm:$0xff]
        %v2287 = vld [vmem:[%s1802 + $0xda8] sm:$0xff]
        %v2288 = vld [vmem:[%s1802 + $0xdb0] sm:$0xff]
        %v2289 = vld [vmem:[%s1802 + $0xdb8] sm:$0xff]
        %v2290 = vld [vmem:[%s1802 + $0xdc0] sm:$0xff]
        %v2291 = vld [vmem:[%s1802 + $0xdc8] sm:$0xff]
        %v2292 = vld [vmem:[%s1802 + $0xdd0] sm:$0xff]
        %v2293 = vld [vmem:[%s1802 + $0xdd8] sm:$0xff]
        %v2294 = vld [vmem:[%s1802 + $0xde0] sm:$0xff]
        %v2295 = vld [vmem:[%s1802 + $0xde8] sm:$0xff]
        %v2296 = vld [vmem:[%s1802 + $0xdf0] sm:$0xff]
        %v2297 = vld [vmem:[%s1802 + $0xdf8] sm:$0xff]
        %v2298 = vld [vmem:[%s1802 + $0xe00] sm:$0xff]
        %v2299 = vld [vmem:[%s1802 + $0xe08] sm:$0xff]
        %v2300 = vld [vmem:[%s1802 + $0xe10] sm:$0xff]
        %v2301 = vld [vmem:[%s1802 + $0xe18] sm:$0xff]
        %v2302 = vld [vmem:[%s1802 + $0xe20] sm:$0xff]
        %v2303 = vld [vmem:[%s1802 + $0xe28] sm:$0xff]
        %v2304 = vld [vmem:[%s1802 + $0xe30] sm:$0xff]
        %v2305 = vld [vmem:[%s1802 + $0xe38] sm:$0xff]
        %v2306 = vld [vmem:[%s1802 + $0xe40] sm:$0xff]
        %v2307 = vld [vmem:[%s1802 + $0xe48] sm:$0xff]
        %v2308 = vld [vmem:[%s1802 + $0xe50] sm:$0xff]
        %v2309 = vld [vmem:[%s1802 + $0xe58] sm:$0xff]
        %v2310 = vld [vmem:[%s1802 + $0xe60] sm:$0xff]
        %v2311 = vld [vmem:[%s1802 + $0xe68] sm:$0xff]
        %v2312 = vld [vmem:[%s1802 + $0xe70] sm:$0xff]
        %v2313 = vld [vmem:[%s1802 + $0xe78] sm:$0xff]
        %v2314 = vld [vmem:[%s1802 + $0xe80] sm:$0xff]
        %v2315 = vld [vmem:[%s1802 + $0xe88] sm:$0xff]
        %v2316 = vld [vmem:[%s1802 + $0xe90] sm:$0xff]
        %v2317 = vld [vmem:[%s1802 + $0xe98] sm:$0xff]
        %v2318 = vld [vmem:[%s1802 + $0xea0] sm:$0xff]
        %v2319 = vld [vmem:[%s1802 + $0xea8] sm:$0xff]
        %v2320 = vld [vmem:[%s1802 + $0xeb0] sm:$0xff]
        %v2321 = vld [vmem:[%s1802 + $0xeb8] sm:$0xff]
        %v2322 = vld [vmem:[%s1802 + $0xec0] sm:$0xff]
        %v2323 = vld [vmem:[%s1802 + $0xec8] sm:$0xff]
        %v2324 = vld [vmem:[%s1802 + $0xed0] sm:$0xff]
        %v2325 = vld [vmem:[%s1802 + $0xed8] sm:$0xff]
        %v2326 = vld [vmem:[%s1802 + $0xee0] sm:$0xff]
        %v2327 = vld [vmem:[%s1802 + $0xee8] sm:$0xff]
        %v2328 = vld [vmem:[%s1802 + $0xef0] sm:$0xff]
        %v2329 = vld [vmem:[%s1802 + $0xef8] sm:$0xff]
        %v2330 = vld [vmem:[%s1802 + $0xf00] sm:$0xff]
        %v2331 = vld [vmem:[%s1802 + $0xf08] sm:$0xff]
        %v2332 = vld [vmem:[%s1802 + $0xf10] sm:$0xff]
        %v2333 = vld [vmem:[%s1802 + $0xf18] sm:$0xff]
        %v2334 = vld [vmem:[%s1802 + $0xf20] sm:$0xff]
        %v2335 = vld [vmem:[%s1802 + $0xf28] sm:$0xff]
        %v2336 = vld [vmem:[%s1802 + $0xf30] sm:$0xff]
        %v2337 = vld [vmem:[%s1802 + $0xf38] sm:$0xff]
        %v2338 = vld [vmem:[%s1802 + $0xf40] sm:$0xff]
        %v2339 = vld [vmem:[%s1802 + $0xf48] sm:$0xff]
        %v2340 = vld [vmem:[%s1802 + $0xf50] sm:$0xff]
        %v2341 = vld [vmem:[%s1802 + $0xf58] sm:$0xff]
        %v2342 = vld [vmem:[%s1802 + $0xf60] sm:$0xff]
        %v2343 = vld [vmem:[%s1802 + $0xf68] sm:$0xff]
        %v2344 = vld [vmem:[%s1802 + $0xf70] sm:$0xff]
        %v2345 = vld [vmem:[%s1802 + $0xf78] sm:$0xff]
        %v2346 = vld [vmem:[%s1802 + $0xf80] sm:$0xff]
        %v2347 = vld [vmem:[%s1802 + $0xf88] sm:$0xff]
        %v2348 = vld [vmem:[%s1802 + $0xf90] sm:$0xff]
        %v2349 = vld [vmem:[%s1802 + $0xf98] sm:$0xff]
        %v2350 = vld [vmem:[%s1802 + $0xfa0] sm:$0xff]
        %v2351 = vld [vmem:[%s1802 + $0xfa8] sm:$0xff]
        %v2352 = vld [vmem:[%s1802 + $0xfb0] sm:$0xff]
        %v2353 = vld [vmem:[%s1802 + $0xfb8] sm:$0xff]
        %v2354 = vld [vmem:[%s1802 + $0xfc0] sm:$0xff]
        %v2355 = vld [vmem:[%s1802 + $0xfc8] sm:$0xff]
        %v2356 = vld [vmem:[%s1802 + $0xfd0] sm:$0xff]
        %v2357 = vld [vmem:[%s1802 + $0xfd8] sm:$0xff]
        %v2358 = vld [vmem:[%s1802 + $0xfe0] sm:$0xff]
        %v2359 = vld [vmem:[%s1802 + $0xfe8] sm:$0xff]
        %v2360 = vld [vmem:[%s1802 + $0xff0] sm:$0xff]
        %v2361 = vld [vmem:[%s1802 + $0xff8] sm:$0xff]
        %v2362 = vld [vmem:[%s1835] sm:$0xf]
        %v2364 = vperm.slane %v2362, 0
        %v2365 = vperm.slane %v2362, 1
        %v2366 = vperm.slane %v2362, 2
        %v2367 = vperm.slane %v2362, 3
        %2373 = vst [vmem:[#allocation1] ss:$9 sm:$0xff] %v1848
        %v2374 = vld [vmem:[#allocation1] sm:$0xff]
        %v2375 = vld [vmem:[#allocation1 + $0x9] sm:$0xff]
        %v2376 = vld [vmem:[#allocation1 + $0x12] sm:$0xff]
        %v2377 = vld [vmem:[#allocation1 + $0x1b] sm:$0xff]
        %v2378 = vld [vmem:[#allocation1 + $0x24] sm:$0xff]
        %v2379 = vld [vmem:[#allocation1 + $0x2d] sm:$0xff]
        %v2380 = vld [vmem:[#allocation1 + $0x36] sm:$0xff]
        %v2381 = vld [vmem:[#allocation1 + $0x3f] sm:$0xff]
        %2383 = vst [vmem:[#allocation1] ss:$9 sm:$0xff] %v1849
        %v2384 = vld [vmem:[#allocation1] sm:$0xff]
        %v2385 = vld [vmem:[#allocation1 + $0x9] sm:$0xff]
        %v2386 = vld [vmem:[#allocation1 + $0x12] sm:$0xff]
        %v2387 = vld [vmem:[#allocation1 + $0x1b] sm:$0xff]
        %v2388 = vld [vmem:[#allocation1 + $0x24] sm:$0xff]
        %v2389 = vld [vmem:[#allocation1 + $0x2d] sm:$0xff]
        %v2390 = vld [vmem:[#allocation1 + $0x36] sm:$0xff]
        %v2391 = vld [vmem:[#allocation1 + $0x3f] sm:$0xff]
        %v2920 = vunpack.c.l.b16 %v1850
        %v2921 = vunpack.c.h.b16 %v1850
        %v2922 = vunpack.c.l.b16 %v1851
        %v2923 = vunpack.c.h.b16 %v1851
        %v2924 = vunpack.c.l.b16 %v1852
        %v2925 = vunpack.c.h.b16 %v1852
        %v2926 = vunpack.c.l.b16 %v1853
        %v2927 = vunpack.c.h.b16 %v1853
        %v2928 = vunpack.c.l.b16 %v1854
        %v2929 = vunpack.c.h.b16 %v1854
        %v2930 = vunpack.c.l.b16 %v1855
        %v2931 = vunpack.c.h.b16 %v1855
        %v2932 = vunpack.c.l.b16 %v1856
        %v2933 = vunpack.c.h.b16 %v1856
        %v2934 = vunpack.c.l.b16 %v1857
        %v2935 = vunpack.c.h.b16 %v1857
        %v2936 = vunpack.c.l.b16 %v1858
        %v2937 = vunpack.c.h.b16 %v1858
        %v2938 = vunpack.c.l.b16 %v1859
        %v2939 = vunpack.c.h.b16 %v1859
        %v2940 = vunpack.c.l.b16 %v1860
        %v2941 = vunpack.c.h.b16 %v1860
        %v2942 = vunpack.c.l.b16 %v1861
        %v2943 = vunpack.c.h.b16 %v1861
        %v2944 = vunpack.c.l.b16 %v1862
        %v2945 = vunpack.c.h.b16 %v1862
        %v2946 = vunpack.c.l.b16 %v1863
        %v2947 = vunpack.c.h.b16 %v1863
        %v2948 = vunpack.c.l.b16 %v1864
        %v2949 = vunpack.c.h.b16 %v1864
        %v2950 = vunpack.c.l.b16 %v1865
        %v2951 = vunpack.c.h.b16 %v1865
        %v2952 = vunpack.c.l.b16 %v1866
        %v2953 = vunpack.c.h.b16 %v1866
        %v2954 = vunpack.c.l.b16 %v1867
        %v2955 = vunpack.c.h.b16 %v1867
        %v2956 = vunpack.c.l.b16 %v1868
        %v2957 = vunpack.c.h.b16 %v1868
        %v2958 = vunpack.c.l.b16 %v1869
        %v2959 = vunpack.c.h.b16 %v1869
        %v2960 = vunpack.c.l.b16 %v1870
        %v2961 = vunpack.c.h.b16 %v1870
        %v2962 = vunpack.c.l.b16 %v1871
        %v2963 = vunpack.c.h.b16 %v1871
        %v2964 = vunpack.c.l.b16 %v1872
        %v2965 = vunpack.c.h.b16 %v1872
        %v2966 = vunpack.c.l.b16 %v1873
        %v2967 = vunpack.c.h.b16 %v1873
        %v2968 = vunpack.c.l.b16 %v1874
        %v2969 = vunpack.c.h.b16 %v1874
        %v2970 = vunpack.c.l.b16 %v1875
        %v2971 = vunpack.c.h.b16 %v1875
        %v2972 = vunpack.c.l.b16 %v1876
        %v2973 = vunpack.c.h.b16 %v1876
        %v2974 = vunpack.c.l.b16 %v1877
        %v2975 = vunpack.c.h.b16 %v1877
        %v2976 = vunpack.c.l.b16 %v1878
        %v2977 = vunpack.c.h.b16 %v1878
        %v2978 = vunpack.c.l.b16 %v1879
        %v2979 = vunpack.c.h.b16 %v1879
        %v2980 = vunpack.c.l.b16 %v1880
        %v2981 = vunpack.c.h.b16 %v1880
        %v2982 = vunpack.c.l.b16 %v1881
        %v2983 = vunpack.c.h.b16 %v1881
        %v2984 = vunpack.c.l.b16 %v1882
        %v2985 = vunpack.c.h.b16 %v1882
        %v2986 = vunpack.c.l.b16 %v1883
        %v2987 = vunpack.c.h.b16 %v1883
        %v2988 = vunpack.c.l.b16 %v1884
        %v2989 = vunpack.c.h.b16 %v1884
        %v2990 = vunpack.c.l.b16 %v1885
        %v2991 = vunpack.c.h.b16 %v1885
        %v2992 = vunpack.c.l.b16 %v1886
        %v2993 = vunpack.c.h.b16 %v1886
        %v2994 = vunpack.c.l.b16 %v1887
        %v2995 = vunpack.c.h.b16 %v1887
        %v2996 = vunpack.c.l.b16 %v1888
        %v2997 = vunpack.c.h.b16 %v1888
        %v2998 = vunpack.c.l.b16 %v1889
        %v2999 = vunpack.c.h.b16 %v1889
        %v3000 = vunpack.c.l.b16 %v1890
        %v3001 = vunpack.c.h.b16 %v1890
        %v3002 = vunpack.c.l.b16 %v1891
        %v3003 = vunpack.c.h.b16 %v1891
        %v3004 = vunpack.c.l.b16 %v1892
        %v3005 = vunpack.c.h.b16 %v1892
        %v3006 = vunpack.c.l.b16 %v1893
        %v3007 = vunpack.c.h.b16 %v1893
        %v3008 = vunpack.c.l.b16 %v1894
        %v3009 = vunpack.c.h.b16 %v1894
        %v3010 = vunpack.c.l.b16 %v1895
        %v3011 = vunpack.c.h.b16 %v1895
        %v3012 = vunpack.c.l.b16 %v1896
        %v3013 = vunpack.c.h.b16 %v1896
        %v3014 = vunpack.c.l.b16 %v1897
        %v3015 = vunpack.c.h.b16 %v1897
        %v3016 = vunpack.c.l.b16 %v1898
        %v3017 = vunpack.c.h.b16 %v1898
        %v3018 = vunpack.c.l.b16 %v1899
        %v3019 = vunpack.c.h.b16 %v1899
        %v3020 = vunpack.c.l.b16 %v1900
        %v3021 = vunpack.c.h.b16 %v1900
        %v3022 = vunpack.c.l.b16 %v1901
        %v3023 = vunpack.c.h.b16 %v1901
        %v3024 = vunpack.c.l.b16 %v1902
        %v3025 = vunpack.c.h.b16 %v1902
        %v3026 = vunpack.c.l.b16 %v1903
        %v3027 = vunpack.c.h.b16 %v1903
        %v3028 = vunpack.c.l.b16 %v1904
        %v3029 = vunpack.c.h.b16 %v1904
        %v3030 = vunpack.c.l.b16 %v1905
        %v3031 = vunpack.c.h.b16 %v1905
        %v3032 = vunpack.c.l.b16 %v1906
        %v3033 = vunpack.c.h.b16 %v1906
        %v3034 = vunpack.c.l.b16 %v1907
        %v3035 = vunpack.c.h.b16 %v1907
        %v3036 = vunpack.c.l.b16 %v1908
        %v3037 = vunpack.c.h.b16 %v1908
        %v3038 = vunpack.c.l.b16 %v1909
        %v3039 = vunpack.c.h.b16 %v1909
        %v3040 = vunpack.c.l.b16 %v1910
        %v3041 = vunpack.c.h.b16 %v1910
        %v3042 = vunpack.c.l.b16 %v1911
        %v3043 = vunpack.c.h.b16 %v1911
        %v3044 = vunpack.c.l.b16 %v1912
        %v3045 = vunpack.c.h.b16 %v1912
        %v3046 = vunpack.c.l.b16 %v1913
        %v3047 = vunpack.c.h.b16 %v1913
        %v3048 = vunpack.c.l.b16 %v1914
        %v3049 = vunpack.c.h.b16 %v1914
        %v3050 = vunpack.c.l.b16 %v1915
        %v3051 = vunpack.c.h.b16 %v1915
        %v3052 = vunpack.c.l.b16 %v1916
        %v3053 = vunpack.c.h.b16 %v1916
        %v3054 = vunpack.c.l.b16 %v1917
        %v3055 = vunpack.c.h.b16 %v1917
        %v3056 = vunpack.c.l.b16 %v1918
        %v3057 = vunpack.c.h.b16 %v1918
        %v3058 = vunpack.c.l.b16 %v1919
        %v3059 = vunpack.c.h.b16 %v1919
        %v3060 = vunpack.c.l.b16 %v1920
        %v3061 = vunpack.c.h.b16 %v1920
        %v3062 = vunpack.c.l.b16 %v1921
        %v3063 = vunpack.c.h.b16 %v1921
        %v3064 = vunpack.c.l.b16 %v1922
        %v3065 = vunpack.c.h.b16 %v1922
        %v3066 = vunpack.c.l.b16 %v1923
        %v3067 = vunpack.c.h.b16 %v1923
        %v3068 = vunpack.c.l.b16 %v1924
        %v3069 = vunpack.c.h.b16 %v1924
        %v3070 = vunpack.c.l.b16 %v1925
        %v3071 = vunpack.c.h.b16 %v1925
        %v3072 = vunpack.c.l.b16 %v1926
        %v3073 = vunpack.c.h.b16 %v1926
        %v3074 = vunpack.c.l.b16 %v1927
        %v3075 = vunpack.c.h.b16 %v1927
        %v3076 = vunpack.c.l.b16 %v1928
        %v3077 = vunpack.c.h.b16 %v1928
        %v3078 = vunpack.c.l.b16 %v1929
        %v3079 = vunpack.c.h.b16 %v1929
        %v3080 = vunpack.c.l.b16 %v1930
        %v3081 = vunpack.c.h.b16 %v1930
        %v3082 = vunpack.c.l.b16 %v1931
        %v3083 = vunpack.c.h.b16 %v1931
        %v3084 = vunpack.c.l.b16 %v1932
        %v3085 = vunpack.c.h.b16 %v1932
        %v3086 = vunpack.c.l.b16 %v1933
        %v3087 = vunpack.c.h.b16 %v1933
        %v3088 = vunpack.c.l.b16 %v1934
        %v3089 = vunpack.c.h.b16 %v1934
        %v3090 = vunpack.c.l.b16 %v1935
        %v3091 = vunpack.c.h.b16 %v1935
        %v3092 = vunpack.c.l.b16 %v1936
        %v3093 = vunpack.c.h.b16 %v1936
        %v3094 = vunpack.c.l.b16 %v1937
        %v3095 = vunpack.c.h.b16 %v1937
        %v3096 = vunpack.c.l.b16 %v1938
        %v3097 = vunpack.c.h.b16 %v1938
        %v3098 = vunpack.c.l.b16 %v1939
        %v3099 = vunpack.c.h.b16 %v1939
        %v3100 = vunpack.c.l.b16 %v1940
        %v3101 = vunpack.c.h.b16 %v1940
        %v3102 = vunpack.c.l.b16 %v1941
        %v3103 = vunpack.c.h.b16 %v1941
        %v3104 = vunpack.c.l.b16 %v1942
        %v3105 = vunpack.c.h.b16 %v1942
        %v3106 = vunpack.c.l.b16 %v1943
        %v3107 = vunpack.c.h.b16 %v1943
        %v3108 = vunpack.c.l.b16 %v1944
        %v3109 = vunpack.c.h.b16 %v1944
        %v3110 = vunpack.c.l.b16 %v1945
        %v3111 = vunpack.c.h.b16 %v1945
        %v3112 = vunpack.c.l.b16 %v1946
        %v3113 = vunpack.c.h.b16 %v1946
        %v3114 = vunpack.c.l.b16 %v1947
        %v3115 = vunpack.c.h.b16 %v1947
        %v3116 = vunpack.c.l.b16 %v1948
        %v3117 = vunpack.c.h.b16 %v1948
        %v3118 = vunpack.c.l.b16 %v1949
        %v3119 = vunpack.c.h.b16 %v1949
        %v3120 = vunpack.c.l.b16 %v1950
        %v3121 = vunpack.c.h.b16 %v1950
        %v3122 = vunpack.c.l.b16 %v1951
        %v3123 = vunpack.c.h.b16 %v1951
        %v3124 = vunpack.c.l.b16 %v1952
        %v3125 = vunpack.c.h.b16 %v1952
        %v3126 = vunpack.c.l.b16 %v1953
        %v3127 = vunpack.c.h.b16 %v1953
        %v3128 = vunpack.c.l.b16 %v1954
        %v3129 = vunpack.c.h.b16 %v1954
        %v3130 = vunpack.c.l.b16 %v1955
        %v3131 = vunpack.c.h.b16 %v1955
        %v3132 = vunpack.c.l.b16 %v1956
        %v3133 = vunpack.c.h.b16 %v1956
        %v3134 = vunpack.c.l.b16 %v1957
        %v3135 = vunpack.c.h.b16 %v1957
        %v3136 = vunpack.c.l.b16 %v1958
        %v3137 = vunpack.c.h.b16 %v1958
        %v3138 = vunpack.c.l.b16 %v1959
        %v3139 = vunpack.c.h.b16 %v1959
        %v3140 = vunpack.c.l.b16 %v1960
        %v3141 = vunpack.c.h.b16 %v1960
        %v3142 = vunpack.c.l.b16 %v1961
        %v3143 = vunpack.c.h.b16 %v1961
        %v3144 = vunpack.c.l.b16 %v1962
        %v3145 = vunpack.c.h.b16 %v1962
        %v3146 = vunpack.c.l.b16 %v1963
        %v3147 = vunpack.c.h.b16 %v1963
        %v3148 = vunpack.c.l.b16 %v1964
        %v3149 = vunpack.c.h.b16 %v1964
        %v3150 = vunpack.c.l.b16 %v1965
        %v3151 = vunpack.c.h.b16 %v1965
        %v3152 = vunpack.c.l.b16 %v1966
        %v3153 = vunpack.c.h.b16 %v1966
        %v3154 = vunpack.c.l.b16 %v1967
        %v3155 = vunpack.c.h.b16 %v1967
        %v3156 = vunpack.c.l.b16 %v1968
        %v3157 = vunpack.c.h.b16 %v1968
        %v3158 = vunpack.c.l.b16 %v1969
        %v3159 = vunpack.c.h.b16 %v1969
        %v3160 = vunpack.c.l.b16 %v1970
        %v3161 = vunpack.c.h.b16 %v1970
        %v3162 = vunpack.c.l.b16 %v1971
        %v3163 = vunpack.c.h.b16 %v1971
        %v3164 = vunpack.c.l.b16 %v1972
        %v3165 = vunpack.c.h.b16 %v1972
        %v3166 = vunpack.c.l.b16 %v1973
        %v3167 = vunpack.c.h.b16 %v1973
        %v3168 = vunpack.c.l.b16 %v1974
        %v3169 = vunpack.c.h.b16 %v1974
        %v3170 = vunpack.c.l.b16 %v1975
        %v3171 = vunpack.c.h.b16 %v1975
        %v3172 = vunpack.c.l.b16 %v1976
        %v3173 = vunpack.c.h.b16 %v1976
        %v3174 = vunpack.c.l.b16 %v1977
        %v3175 = vunpack.c.h.b16 %v1977
        %v3176 = vunpack.c.l.b16 %v1978
        %v3177 = vunpack.c.h.b16 %v1978
        %v3178 = vunpack.c.l.b16 %v1979
        %v3179 = vunpack.c.h.b16 %v1979
        %v3180 = vunpack.c.l.b16 %v1980
        %v3181 = vunpack.c.h.b16 %v1980
        %v3182 = vunpack.c.l.b16 %v1981
        %v3183 = vunpack.c.h.b16 %v1981
        %v3184 = vunpack.c.l.b16 %v1982
        %v3185 = vunpack.c.h.b16 %v1982
        %v3186 = vunpack.c.l.b16 %v1983
        %v3187 = vunpack.c.h.b16 %v1983
        %v3188 = vunpack.c.l.b16 %v1984
        %v3189 = vunpack.c.h.b16 %v1984
        %v3190 = vunpack.c.l.b16 %v1985
        %v3191 = vunpack.c.h.b16 %v1985
        %v3192 = vunpack.c.l.b16 %v1986
        %v3193 = vunpack.c.h.b16 %v1986
        %v3194 = vunpack.c.l.b16 %v1987
        %v3195 = vunpack.c.h.b16 %v1987
        %v3196 = vunpack.c.l.b16 %v1988
        %v3197 = vunpack.c.h.b16 %v1988
        %v3198 = vunpack.c.l.b16 %v1989
        %v3199 = vunpack.c.h.b16 %v1989
        %v3200 = vunpack.c.l.b16 %v1990
        %v3201 = vunpack.c.h.b16 %v1990
        %v3202 = vunpack.c.l.b16 %v1991
        %v3203 = vunpack.c.h.b16 %v1991
        %v3204 = vunpack.c.l.b16 %v1992
        %v3205 = vunpack.c.h.b16 %v1992
        %v3206 = vunpack.c.l.b16 %v1993
        %v3207 = vunpack.c.h.b16 %v1993
        %v3208 = vunpack.c.l.b16 %v1994
        %v3209 = vunpack.c.h.b16 %v1994
        %v3210 = vunpack.c.l.b16 %v1995
        %v3211 = vunpack.c.h.b16 %v1995
        %v3212 = vunpack.c.l.b16 %v1996
        %v3213 = vunpack.c.h.b16 %v1996
        %v3214 = vunpack.c.l.b16 %v1997
        %v3215 = vunpack.c.h.b16 %v1997
        %v3216 = vunpack.c.l.b16 %v1998
        %v3217 = vunpack.c.h.b16 %v1998
        %v3218 = vunpack.c.l.b16 %v1999
        %v3219 = vunpack.c.h.b16 %v1999
        %v3220 = vunpack.c.l.b16 %v2000
        %v3221 = vunpack.c.h.b16 %v2000
        %v3222 = vunpack.c.l.b16 %v2001
        %v3223 = vunpack.c.h.b16 %v2001
        %v3224 = vunpack.c.l.b16 %v2002
        %v3225 = vunpack.c.h.b16 %v2002
        %v3226 = vunpack.c.l.b16 %v2003
        %v3227 = vunpack.c.h.b16 %v2003
        %v3228 = vunpack.c.l.b16 %v2004
        %v3229 = vunpack.c.h.b16 %v2004
        %v3230 = vunpack.c.l.b16 %v2005
        %v3231 = vunpack.c.h.b16 %v2005
        %v3232 = vunpack.c.l.b16 %v2006
        %v3233 = vunpack.c.h.b16 %v2006
        %v3234 = vunpack.c.l.b16 %v2007
        %v3235 = vunpack.c.h.b16 %v2007
        %v3236 = vunpack.c.l.b16 %v2008
        %v3237 = vunpack.c.h.b16 %v2008
        %v3238 = vunpack.c.l.b16 %v2009
        %v3239 = vunpack.c.h.b16 %v2009
        %v3240 = vunpack.c.l.b16 %v2010
        %v3241 = vunpack.c.h.b16 %v2010
        %v3242 = vunpack.c.l.b16 %v2011
        %v3243 = vunpack.c.h.b16 %v2011
        %v3244 = vunpack.c.l.b16 %v2012
        %v3245 = vunpack.c.h.b16 %v2012
        %v3246 = vunpack.c.l.b16 %v2013
        %v3247 = vunpack.c.h.b16 %v2013
        %v3248 = vunpack.c.l.b16 %v2014
        %v3249 = vunpack.c.h.b16 %v2014
        %v3250 = vunpack.c.l.b16 %v2015
        %v3251 = vunpack.c.h.b16 %v2015
        %v3252 = vunpack.c.l.b16 %v2016
        %v3253 = vunpack.c.h.b16 %v2016
        %v3254 = vunpack.c.l.b16 %v2017
        %v3255 = vunpack.c.h.b16 %v2017
        %v3256 = vunpack.c.l.b16 %v2018
        %v3257 = vunpack.c.h.b16 %v2018
        %v3258 = vunpack.c.l.b16 %v2019
        %v3259 = vunpack.c.h.b16 %v2019
        %v3260 = vunpack.c.l.b16 %v2020
        %v3261 = vunpack.c.h.b16 %v2020
        %v3262 = vunpack.c.l.b16 %v2021
        %v3263 = vunpack.c.h.b16 %v2021
        %v3264 = vunpack.c.l.b16 %v2022
        %v3265 = vunpack.c.h.b16 %v2022
        %v3266 = vunpack.c.l.b16 %v2023
        %v3267 = vunpack.c.h.b16 %v2023
        %v3268 = vunpack.c.l.b16 %v2024
        %v3269 = vunpack.c.h.b16 %v2024
        %v3270 = vunpack.c.l.b16 %v2025
        %v3271 = vunpack.c.h.b16 %v2025
        %v3272 = vunpack.c.l.b16 %v2026
        %v3273 = vunpack.c.h.b16 %v2026
        %v3274 = vunpack.c.l.b16 %v2027
        %v3275 = vunpack.c.h.b16 %v2027
        %v3276 = vunpack.c.l.b16 %v2028
        %v3277 = vunpack.c.h.b16 %v2028
        %v3278 = vunpack.c.l.b16 %v2029
        %v3279 = vunpack.c.h.b16 %v2029
        %v3280 = vunpack.c.l.b16 %v2030
        %v3281 = vunpack.c.h.b16 %v2030
        %v3282 = vunpack.c.l.b16 %v2031
        %v3283 = vunpack.c.h.b16 %v2031
        %v3284 = vunpack.c.l.b16 %v2032
        %v3285 = vunpack.c.h.b16 %v2032
        %v3286 = vunpack.c.l.b16 %v2033
        %v3287 = vunpack.c.h.b16 %v2033
        %v3288 = vunpack.c.l.b16 %v2034
        %v3289 = vunpack.c.h.b16 %v2034
        %v3290 = vunpack.c.l.b16 %v2035
        %v3291 = vunpack.c.h.b16 %v2035
        %v3292 = vunpack.c.l.b16 %v2036
        %v3293 = vunpack.c.h.b16 %v2036
        %v3294 = vunpack.c.l.b16 %v2037
        %v3295 = vunpack.c.h.b16 %v2037
        %v3296 = vunpack.c.l.b16 %v2038
        %v3297 = vunpack.c.h.b16 %v2038
        %v3298 = vunpack.c.l.b16 %v2039
        %v3299 = vunpack.c.h.b16 %v2039
        %v3300 = vunpack.c.l.b16 %v2040
        %v3301 = vunpack.c.h.b16 %v2040
        %v3302 = vunpack.c.l.b16 %v2041
        %v3303 = vunpack.c.h.b16 %v2041
        %v3304 = vunpack.c.l.b16 %v2042
        %v3305 = vunpack.c.h.b16 %v2042
        %v3306 = vunpack.c.l.b16 %v2043
        %v3307 = vunpack.c.h.b16 %v2043
        %v3308 = vunpack.c.l.b16 %v2044
        %v3309 = vunpack.c.h.b16 %v2044
        %v3310 = vunpack.c.l.b16 %v2045
        %v3311 = vunpack.c.h.b16 %v2045
        %v3312 = vunpack.c.l.b16 %v2046
        %v3313 = vunpack.c.h.b16 %v2046
        %v3314 = vunpack.c.l.b16 %v2047
        %v3315 = vunpack.c.h.b16 %v2047
        %v3316 = vunpack.c.l.b16 %v2048
        %v3317 = vunpack.c.h.b16 %v2048
        %v3318 = vunpack.c.l.b16 %v2049
        %v3319 = vunpack.c.h.b16 %v2049
        %v3320 = vunpack.c.l.b16 %v2050
        %v3321 = vunpack.c.h.b16 %v2050
        %v3322 = vunpack.c.l.b16 %v2051
        %v3323 = vunpack.c.h.b16 %v2051
        %v3324 = vunpack.c.l.b16 %v2052
        %v3325 = vunpack.c.h.b16 %v2052
        %v3326 = vunpack.c.l.b16 %v2053
        %v3327 = vunpack.c.h.b16 %v2053
        %v3328 = vunpack.c.l.b16 %v2054
        %v3329 = vunpack.c.h.b16 %v2054
        %v3330 = vunpack.c.l.b16 %v2055
        %v3331 = vunpack.c.h.b16 %v2055
        %v3332 = vunpack.c.l.b16 %v2056
        %v3333 = vunpack.c.h.b16 %v2056
        %v3334 = vunpack.c.l.b16 %v2057
        %v3335 = vunpack.c.h.b16 %v2057
        %v3336 = vunpack.c.l.b16 %v2058
        %v3337 = vunpack.c.h.b16 %v2058
        %v3338 = vunpack.c.l.b16 %v2059
        %v3339 = vunpack.c.h.b16 %v2059
        %v3340 = vunpack.c.l.b16 %v2060
        %v3341 = vunpack.c.h.b16 %v2060
        %v3342 = vunpack.c.l.b16 %v2061
        %v3343 = vunpack.c.h.b16 %v2061
        %v3344 = vunpack.c.l.b16 %v2062
        %v3345 = vunpack.c.h.b16 %v2062
        %v3346 = vunpack.c.l.b16 %v2063
        %v3347 = vunpack.c.h.b16 %v2063
        %v3348 = vunpack.c.l.b16 %v2064
        %v3349 = vunpack.c.h.b16 %v2064
        %v3350 = vunpack.c.l.b16 %v2065
        %v3351 = vunpack.c.h.b16 %v2065
        %v3352 = vunpack.c.l.b16 %v2066
        %v3353 = vunpack.c.h.b16 %v2066
        %v3354 = vunpack.c.l.b16 %v2067
        %v3355 = vunpack.c.h.b16 %v2067
        %v3356 = vunpack.c.l.b16 %v2068
        %v3357 = vunpack.c.h.b16 %v2068
        %v3358 = vunpack.c.l.b16 %v2069
        %v3359 = vunpack.c.h.b16 %v2069
        %v3360 = vunpack.c.l.b16 %v2070
        %v3361 = vunpack.c.h.b16 %v2070
        %v3362 = vunpack.c.l.b16 %v2071
        %v3363 = vunpack.c.h.b16 %v2071
        %v3364 = vunpack.c.l.b16 %v2072
        %v3365 = vunpack.c.h.b16 %v2072
        %v3366 = vunpack.c.l.b16 %v2073
        %v3367 = vunpack.c.h.b16 %v2073
        %v3368 = vunpack.c.l.b16 %v2074
        %v3369 = vunpack.c.h.b16 %v2074
        %v3370 = vunpack.c.l.b16 %v2075
        %v3371 = vunpack.c.h.b16 %v2075
        %v3372 = vunpack.c.l.b16 %v2076
        %v3373 = vunpack.c.h.b16 %v2076
        %v3374 = vunpack.c.l.b16 %v2077
        %v3375 = vunpack.c.h.b16 %v2077
        %v3376 = vunpack.c.l.b16 %v2078
        %v3377 = vunpack.c.h.b16 %v2078
        %v3378 = vunpack.c.l.b16 %v2079
        %v3379 = vunpack.c.h.b16 %v2079
        %v3380 = vunpack.c.l.b16 %v2080
        %v3381 = vunpack.c.h.b16 %v2080
        %v3382 = vunpack.c.l.b16 %v2081
        %v3383 = vunpack.c.h.b16 %v2081
        %v3384 = vunpack.c.l.b16 %v2082
        %v3385 = vunpack.c.h.b16 %v2082
        %v3386 = vunpack.c.l.b16 %v2083
        %v3387 = vunpack.c.h.b16 %v2083
        %v3388 = vunpack.c.l.b16 %v2084
        %v3389 = vunpack.c.h.b16 %v2084
        %v3390 = vunpack.c.l.b16 %v2085
        %v3391 = vunpack.c.h.b16 %v2085
        %v3392 = vunpack.c.l.b16 %v2086
        %v3393 = vunpack.c.h.b16 %v2086
        %v3394 = vunpack.c.l.b16 %v2087
        %v3395 = vunpack.c.h.b16 %v2087
        %v3396 = vunpack.c.l.b16 %v2088
        %v3397 = vunpack.c.h.b16 %v2088
        %v3398 = vunpack.c.l.b16 %v2089
        %v3399 = vunpack.c.h.b16 %v2089
        %v3400 = vunpack.c.l.b16 %v2090
        %v3401 = vunpack.c.h.b16 %v2090
        %v3402 = vunpack.c.l.b16 %v2091
        %v3403 = vunpack.c.h.b16 %v2091
        %v3404 = vunpack.c.l.b16 %v2092
        %v3405 = vunpack.c.h.b16 %v2092
        %v3406 = vunpack.c.l.b16 %v2093
        %v3407 = vunpack.c.h.b16 %v2093
        %v3408 = vunpack.c.l.b16 %v2094
        %v3409 = vunpack.c.h.b16 %v2094
        %v3410 = vunpack.c.l.b16 %v2095
        %v3411 = vunpack.c.h.b16 %v2095
        %v3412 = vunpack.c.l.b16 %v2096
        %v3413 = vunpack.c.h.b16 %v2096
        %v3414 = vunpack.c.l.b16 %v2097
        %v3415 = vunpack.c.h.b16 %v2097
        %v3416 = vunpack.c.l.b16 %v2098
        %v3417 = vunpack.c.h.b16 %v2098
        %v3418 = vunpack.c.l.b16 %v2099
        %v3419 = vunpack.c.h.b16 %v2099
        %v3420 = vunpack.c.l.b16 %v2100
        %v3421 = vunpack.c.h.b16 %v2100
        %v3422 = vunpack.c.l.b16 %v2101
        %v3423 = vunpack.c.h.b16 %v2101
        %v3424 = vunpack.c.l.b16 %v2102
        %v3425 = vunpack.c.h.b16 %v2102
        %v3426 = vunpack.c.l.b16 %v2103
        %v3427 = vunpack.c.h.b16 %v2103
        %v3428 = vunpack.c.l.b16 %v2104
        %v3429 = vunpack.c.h.b16 %v2104
        %v3430 = vunpack.c.l.b16 %v2105
        %v3431 = vunpack.c.h.b16 %v2105
        %v3432 = vunpack.c.l.b16 %v2106
        %v3433 = vunpack.c.h.b16 %v2106
        %v3434 = vunpack.c.l.b16 %v2107
        %v3435 = vunpack.c.h.b16 %v2107
        %v3436 = vunpack.c.l.b16 %v2108
        %v3437 = vunpack.c.h.b16 %v2108
        %v3438 = vunpack.c.l.b16 %v2109
        %v3439 = vunpack.c.h.b16 %v2109
        %v3440 = vunpack.c.l.b16 %v2110
        %v3441 = vunpack.c.h.b16 %v2110
        %v3442 = vunpack.c.l.b16 %v2111
        %v3443 = vunpack.c.h.b16 %v2111
        %v3444 = vunpack.c.l.b16 %v2112
        %v3445 = vunpack.c.h.b16 %v2112
        %v3446 = vunpack.c.l.b16 %v2113
        %v3447 = vunpack.c.h.b16 %v2113
        %v3448 = vunpack.c.l.b16 %v2114
        %v3449 = vunpack.c.h.b16 %v2114
        %v3450 = vunpack.c.l.b16 %v2115
        %v3451 = vunpack.c.h.b16 %v2115
        %v3452 = vunpack.c.l.b16 %v2116
        %v3453 = vunpack.c.h.b16 %v2116
        %v3454 = vunpack.c.l.b16 %v2117
        %v3455 = vunpack.c.h.b16 %v2117
        %v3456 = vunpack.c.l.b16 %v2118
        %v3457 = vunpack.c.h.b16 %v2118
        %v3458 = vunpack.c.l.b16 %v2119
        %v3459 = vunpack.c.h.b16 %v2119
        %v3460 = vunpack.c.l.b16 %v2120
        %v3461 = vunpack.c.h.b16 %v2120
        %v3462 = vunpack.c.l.b16 %v2121
        %v3463 = vunpack.c.h.b16 %v2121
        %v3464 = vunpack.c.l.b16 %v2122
        %v3465 = vunpack.c.h.b16 %v2122
        %v3466 = vunpack.c.l.b16 %v2123
        %v3467 = vunpack.c.h.b16 %v2123
        %v3468 = vunpack.c.l.b16 %v2124
        %v3469 = vunpack.c.h.b16 %v2124
        %v3470 = vunpack.c.l.b16 %v2125
        %v3471 = vunpack.c.h.b16 %v2125
        %v3472 = vunpack.c.l.b16 %v2126
        %v3473 = vunpack.c.h.b16 %v2126
        %v3474 = vunpack.c.l.b16 %v2127
        %v3475 = vunpack.c.h.b16 %v2127
        %v3476 = vunpack.c.l.b16 %v2128
        %v3477 = vunpack.c.h.b16 %v2128
        %v3478 = vunpack.c.l.b16 %v2129
        %v3479 = vunpack.c.h.b16 %v2129
        %v3480 = vunpack.c.l.b16 %v2130
        %v3481 = vunpack.c.h.b16 %v2130
        %v3482 = vunpack.c.l.b16 %v2131
        %v3483 = vunpack.c.h.b16 %v2131
        %v3484 = vunpack.c.l.b16 %v2132
        %v3485 = vunpack.c.h.b16 %v2132
        %v3486 = vunpack.c.l.b16 %v2133
        %v3487 = vunpack.c.h.b16 %v2133
        %v3488 = vunpack.c.l.b16 %v2134
        %v3489 = vunpack.c.h.b16 %v2134
        %v3490 = vunpack.c.l.b16 %v2135
        %v3491 = vunpack.c.h.b16 %v2135
        %v3492 = vunpack.c.l.b16 %v2136
        %v3493 = vunpack.c.h.b16 %v2136
        %v3494 = vunpack.c.l.b16 %v2137
        %v3495 = vunpack.c.h.b16 %v2137
        %v3496 = vunpack.c.l.b16 %v2138
        %v3497 = vunpack.c.h.b16 %v2138
        %v3498 = vunpack.c.l.b16 %v2139
        %v3499 = vunpack.c.h.b16 %v2139
        %v3500 = vunpack.c.l.b16 %v2140
        %v3501 = vunpack.c.h.b16 %v2140
        %v3502 = vunpack.c.l.b16 %v2141
        %v3503 = vunpack.c.h.b16 %v2141
        %v3504 = vunpack.c.l.b16 %v2142
        %v3505 = vunpack.c.h.b16 %v2142
        %v3506 = vunpack.c.l.b16 %v2143
        %v3507 = vunpack.c.h.b16 %v2143
        %v3508 = vunpack.c.l.b16 %v2144
        %v3509 = vunpack.c.h.b16 %v2144
        %v3510 = vunpack.c.l.b16 %v2145
        %v3511 = vunpack.c.h.b16 %v2145
        %v3512 = vunpack.c.l.b16 %v2146
        %v3513 = vunpack.c.h.b16 %v2146
        %v3514 = vunpack.c.l.b16 %v2147
        %v3515 = vunpack.c.h.b16 %v2147
        %v3516 = vunpack.c.l.b16 %v2148
        %v3517 = vunpack.c.h.b16 %v2148
        %v3518 = vunpack.c.l.b16 %v2149
        %v3519 = vunpack.c.h.b16 %v2149
        %v3520 = vunpack.c.l.b16 %v2150
        %v3521 = vunpack.c.h.b16 %v2150
        %v3522 = vunpack.c.l.b16 %v2151
        %v3523 = vunpack.c.h.b16 %v2151
        %v3524 = vunpack.c.l.b16 %v2152
        %v3525 = vunpack.c.h.b16 %v2152
        %v3526 = vunpack.c.l.b16 %v2153
        %v3527 = vunpack.c.h.b16 %v2153
        %v3528 = vunpack.c.l.b16 %v2154
        %v3529 = vunpack.c.h.b16 %v2154
        %v3530 = vunpack.c.l.b16 %v2155
        %v3531 = vunpack.c.h.b16 %v2155
        %v3532 = vunpack.c.l.b16 %v2156
        %v3533 = vunpack.c.h.b16 %v2156
        %v3534 = vunpack.c.l.b16 %v2157
        %v3535 = vunpack.c.h.b16 %v2157
        %v3536 = vunpack.c.l.b16 %v2158
        %v3537 = vunpack.c.h.b16 %v2158
        %v3538 = vunpack.c.l.b16 %v2159
        %v3539 = vunpack.c.h.b16 %v2159
        %v3540 = vunpack.c.l.b16 %v2160
        %v3541 = vunpack.c.h.b16 %v2160
        %v3542 = vunpack.c.l.b16 %v2161
        %v3543 = vunpack.c.h.b16 %v2161
        %v3544 = vunpack.c.l.b16 %v2162
        %v3545 = vunpack.c.h.b16 %v2162
        %v3546 = vunpack.c.l.b16 %v2163
        %v3547 = vunpack.c.h.b16 %v2163
        %v3548 = vunpack.c.l.b16 %v2164
        %v3549 = vunpack.c.h.b16 %v2164
        %v3550 = vunpack.c.l.b16 %v2165
        %v3551 = vunpack.c.h.b16 %v2165
        %v3552 = vunpack.c.l.b16 %v2166
        %v3553 = vunpack.c.h.b16 %v2166
        %v3554 = vunpack.c.l.b16 %v2167
        %v3555 = vunpack.c.h.b16 %v2167
        %v3556 = vunpack.c.l.b16 %v2168
        %v3557 = vunpack.c.h.b16 %v2168
        %v3558 = vunpack.c.l.b16 %v2169
        %v3559 = vunpack.c.h.b16 %v2169
        %v3560 = vunpack.c.l.b16 %v2170
        %v3561 = vunpack.c.h.b16 %v2170
        %v3562 = vunpack.c.l.b16 %v2171
        %v3563 = vunpack.c.h.b16 %v2171
        %v3564 = vunpack.c.l.b16 %v2172
        %v3565 = vunpack.c.h.b16 %v2172
        %v3566 = vunpack.c.l.b16 %v2173
        %v3567 = vunpack.c.h.b16 %v2173
        %v3568 = vunpack.c.l.b16 %v2174
        %v3569 = vunpack.c.h.b16 %v2174
        %v3570 = vunpack.c.l.b16 %v2175
        %v3571 = vunpack.c.h.b16 %v2175
        %v3572 = vunpack.c.l.b16 %v2176
        %v3573 = vunpack.c.h.b16 %v2176
        %v3574 = vunpack.c.l.b16 %v2177
        %v3575 = vunpack.c.h.b16 %v2177
        %v3576 = vunpack.c.l.b16 %v2178
        %v3577 = vunpack.c.h.b16 %v2178
        %v3578 = vunpack.c.l.b16 %v2179
        %v3579 = vunpack.c.h.b16 %v2179
        %v3580 = vunpack.c.l.b16 %v2180
        %v3581 = vunpack.c.h.b16 %v2180
        %v3582 = vunpack.c.l.b16 %v2181
        %v3583 = vunpack.c.h.b16 %v2181
        %v3584 = vunpack.c.l.b16 %v2182
        %v3585 = vunpack.c.h.b16 %v2182
        %v3586 = vunpack.c.l.b16 %v2183
        %v3587 = vunpack.c.h.b16 %v2183
        %v3588 = vunpack.c.l.b16 %v2184
        %v3589 = vunpack.c.h.b16 %v2184
        %v3590 = vunpack.c.l.b16 %v2185
        %v3591 = vunpack.c.h.b16 %v2185
        %v3592 = vunpack.c.l.b16 %v2186
        %v3593 = vunpack.c.h.b16 %v2186
        %v3594 = vunpack.c.l.b16 %v2187
        %v3595 = vunpack.c.h.b16 %v2187
        %v3596 = vunpack.c.l.b16 %v2188
        %v3597 = vunpack.c.h.b16 %v2188
        %v3598 = vunpack.c.l.b16 %v2189
        %v3599 = vunpack.c.h.b16 %v2189
        %v3600 = vunpack.c.l.b16 %v2190
        %v3601 = vunpack.c.h.b16 %v2190
        %v3602 = vunpack.c.l.b16 %v2191
        %v3603 = vunpack.c.h.b16 %v2191
        %v3604 = vunpack.c.l.b16 %v2192
        %v3605 = vunpack.c.h.b16 %v2192
        %v3606 = vunpack.c.l.b16 %v2193
        %v3607 = vunpack.c.h.b16 %v2193
        %v3608 = vunpack.c.l.b16 %v2194
        %v3609 = vunpack.c.h.b16 %v2194
        %v3610 = vunpack.c.l.b16 %v2195
        %v3611 = vunpack.c.h.b16 %v2195
        %v3612 = vunpack.c.l.b16 %v2196
        %v3613 = vunpack.c.h.b16 %v2196
        %v3614 = vunpack.c.l.b16 %v2197
        %v3615 = vunpack.c.h.b16 %v2197
        %v3616 = vunpack.c.l.b16 %v2198
        %v3617 = vunpack.c.h.b16 %v2198
        %v3618 = vunpack.c.l.b16 %v2199
        %v3619 = vunpack.c.h.b16 %v2199
        %v3620 = vunpack.c.l.b16 %v2200
        %v3621 = vunpack.c.h.b16 %v2200
        %v3622 = vunpack.c.l.b16 %v2201
        %v3623 = vunpack.c.h.b16 %v2201
        %v3624 = vunpack.c.l.b16 %v2202
        %v3625 = vunpack.c.h.b16 %v2202
        %v3626 = vunpack.c.l.b16 %v2203
        %v3627 = vunpack.c.h.b16 %v2203
        %v3628 = vunpack.c.l.b16 %v2204
        %v3629 = vunpack.c.h.b16 %v2204
        %v3630 = vunpack.c.l.b16 %v2205
        %v3631 = vunpack.c.h.b16 %v2205
        %v3632 = vunpack.c.l.b16 %v2206
        %v3633 = vunpack.c.h.b16 %v2206
        %v3634 = vunpack.c.l.b16 %v2207
        %v3635 = vunpack.c.h.b16 %v2207
        %v3636 = vunpack.c.l.b16 %v2208
        %v3637 = vunpack.c.h.b16 %v2208
        %v3638 = vunpack.c.l.b16 %v2209
        %v3639 = vunpack.c.h.b16 %v2209
        %v3640 = vunpack.c.l.b16 %v2210
        %v3641 = vunpack.c.h.b16 %v2210
        %v3642 = vunpack.c.l.b16 %v2211
        %v3643 = vunpack.c.h.b16 %v2211
        %v3644 = vunpack.c.l.b16 %v2212
        %v3645 = vunpack.c.h.b16 %v2212
        %v3646 = vunpack.c.l.b16 %v2213
        %v3647 = vunpack.c.h.b16 %v2213
        %v3648 = vunpack.c.l.b16 %v2214
        %v3649 = vunpack.c.h.b16 %v2214
        %v3650 = vunpack.c.l.b16 %v2215
        %v3651 = vunpack.c.h.b16 %v2215
        %v3652 = vunpack.c.l.b16 %v2216
        %v3653 = vunpack.c.h.b16 %v2216
        %v3654 = vunpack.c.l.b16 %v2217
        %v3655 = vunpack.c.h.b16 %v2217
        %v3656 = vunpack.c.l.b16 %v2218
        %v3657 = vunpack.c.h.b16 %v2218
        %v3658 = vunpack.c.l.b16 %v2219
        %v3659 = vunpack.c.h.b16 %v2219
        %v3660 = vunpack.c.l.b16 %v2220
        %v3661 = vunpack.c.h.b16 %v2220
        %v3662 = vunpack.c.l.b16 %v2221
        %v3663 = vunpack.c.h.b16 %v2221
        %v3664 = vunpack.c.l.b16 %v2222
        %v3665 = vunpack.c.h.b16 %v2222
        %v3666 = vunpack.c.l.b16 %v2223
        %v3667 = vunpack.c.h.b16 %v2223
        %v3668 = vunpack.c.l.b16 %v2224
        %v3669 = vunpack.c.h.b16 %v2224
        %v3670 = vunpack.c.l.b16 %v2225
        %v3671 = vunpack.c.h.b16 %v2225
        %v3672 = vunpack.c.l.b16 %v2226
        %v3673 = vunpack.c.h.b16 %v2226
        %v3674 = vunpack.c.l.b16 %v2227
        %v3675 = vunpack.c.h.b16 %v2227
        %v3676 = vunpack.c.l.b16 %v2228
        %v3677 = vunpack.c.h.b16 %v2228
        %v3678 = vunpack.c.l.b16 %v2229
        %v3679 = vunpack.c.h.b16 %v2229
        %v3680 = vunpack.c.l.b16 %v2230
        %v3681 = vunpack.c.h.b16 %v2230
        %v3682 = vunpack.c.l.b16 %v2231
        %v3683 = vunpack.c.h.b16 %v2231
        %v3684 = vunpack.c.l.b16 %v2232
        %v3685 = vunpack.c.h.b16 %v2232
        %v3686 = vunpack.c.l.b16 %v2233
        %v3687 = vunpack.c.h.b16 %v2233
        %v3688 = vunpack.c.l.b16 %v2234
        %v3689 = vunpack.c.h.b16 %v2234
        %v3690 = vunpack.c.l.b16 %v2235
        %v3691 = vunpack.c.h.b16 %v2235
        %v3692 = vunpack.c.l.b16 %v2236
        %v3693 = vunpack.c.h.b16 %v2236
        %v3694 = vunpack.c.l.b16 %v2237
        %v3695 = vunpack.c.h.b16 %v2237
        %v3696 = vunpack.c.l.b16 %v2238
        %v3697 = vunpack.c.h.b16 %v2238
        %v3698 = vunpack.c.l.b16 %v2239
        %v3699 = vunpack.c.h.b16 %v2239
        %v3700 = vunpack.c.l.b16 %v2240
        %v3701 = vunpack.c.h.b16 %v2240
        %v3702 = vunpack.c.l.b16 %v2241
        %v3703 = vunpack.c.h.b16 %v2241
        %v3704 = vunpack.c.l.b16 %v2242
        %v3705 = vunpack.c.h.b16 %v2242
        %v3706 = vunpack.c.l.b16 %v2243
        %v3707 = vunpack.c.h.b16 %v2243
        %v3708 = vunpack.c.l.b16 %v2244
        %v3709 = vunpack.c.h.b16 %v2244
        %v3710 = vunpack.c.l.b16 %v2245
        %v3711 = vunpack.c.h.b16 %v2245
        %v3712 = vunpack.c.l.b16 %v2246
        %v3713 = vunpack.c.h.b16 %v2246
        %v3714 = vunpack.c.l.b16 %v2247
        %v3715 = vunpack.c.h.b16 %v2247
        %v3716 = vunpack.c.l.b16 %v2248
        %v3717 = vunpack.c.h.b16 %v2248
        %v3718 = vunpack.c.l.b16 %v2249
        %v3719 = vunpack.c.h.b16 %v2249
        %v3720 = vunpack.c.l.b16 %v2250
        %v3721 = vunpack.c.h.b16 %v2250
        %v3722 = vunpack.c.l.b16 %v2251
        %v3723 = vunpack.c.h.b16 %v2251
        %v3724 = vunpack.c.l.b16 %v2252
        %v3725 = vunpack.c.h.b16 %v2252
        %v3726 = vunpack.c.l.b16 %v2253
        %v3727 = vunpack.c.h.b16 %v2253
        %v3728 = vunpack.c.l.b16 %v2254
        %v3729 = vunpack.c.h.b16 %v2254
        %v3730 = vunpack.c.l.b16 %v2255
        %v3731 = vunpack.c.h.b16 %v2255
        %v3732 = vunpack.c.l.b16 %v2256
        %v3733 = vunpack.c.h.b16 %v2256
        %v3734 = vunpack.c.l.b16 %v2257
        %v3735 = vunpack.c.h.b16 %v2257
        %v3736 = vunpack.c.l.b16 %v2258
        %v3737 = vunpack.c.h.b16 %v2258
        %v3738 = vunpack.c.l.b16 %v2259
        %v3739 = vunpack.c.h.b16 %v2259
        %v3740 = vunpack.c.l.b16 %v2260
        %v3741 = vunpack.c.h.b16 %v2260
        %v3742 = vunpack.c.l.b16 %v2261
        %v3743 = vunpack.c.h.b16 %v2261
        %v3744 = vunpack.c.l.b16 %v2262
        %v3745 = vunpack.c.h.b16 %v2262
        %v3746 = vunpack.c.l.b16 %v2263
        %v3747 = vunpack.c.h.b16 %v2263
        %v3748 = vunpack.c.l.b16 %v2264
        %v3749 = vunpack.c.h.b16 %v2264
        %v3750 = vunpack.c.l.b16 %v2265
        %v3751 = vunpack.c.h.b16 %v2265
        %v3752 = vunpack.c.l.b16 %v2266
        %v3753 = vunpack.c.h.b16 %v2266
        %v3754 = vunpack.c.l.b16 %v2267
        %v3755 = vunpack.c.h.b16 %v2267
        %v3756 = vunpack.c.l.b16 %v2268
        %v3757 = vunpack.c.h.b16 %v2268
        %v3758 = vunpack.c.l.b16 %v2269
        %v3759 = vunpack.c.h.b16 %v2269
        %v3760 = vunpack.c.l.b16 %v2270
        %v3761 = vunpack.c.h.b16 %v2270
        %v3762 = vunpack.c.l.b16 %v2271
        %v3763 = vunpack.c.h.b16 %v2271
        %v3764 = vunpack.c.l.b16 %v2272
        %v3765 = vunpack.c.h.b16 %v2272
        %v3766 = vunpack.c.l.b16 %v2273
        %v3767 = vunpack.c.h.b16 %v2273
        %v3768 = vunpack.c.l.b16 %v2274
        %v3769 = vunpack.c.h.b16 %v2274
        %v3770 = vunpack.c.l.b16 %v2275
        %v3771 = vunpack.c.h.b16 %v2275
        %v3772 = vunpack.c.l.b16 %v2276
        %v3773 = vunpack.c.h.b16 %v2276
        %v3774 = vunpack.c.l.b16 %v2277
        %v3775 = vunpack.c.h.b16 %v2277
        %v3776 = vunpack.c.l.b16 %v2278
        %v3777 = vunpack.c.h.b16 %v2278
        %v3778 = vunpack.c.l.b16 %v2279
        %v3779 = vunpack.c.h.b16 %v2279
        %v3780 = vunpack.c.l.b16 %v2280
        %v3781 = vunpack.c.h.b16 %v2280
        %v3782 = vunpack.c.l.b16 %v2281
        %v3783 = vunpack.c.h.b16 %v2281
        %v3784 = vunpack.c.l.b16 %v2282
        %v3785 = vunpack.c.h.b16 %v2282
        %v3786 = vunpack.c.l.b16 %v2283
        %v3787 = vunpack.c.h.b16 %v2283
        %v3788 = vunpack.c.l.b16 %v2284
        %v3789 = vunpack.c.h.b16 %v2284
        %v3790 = vunpack.c.l.b16 %v2285
        %v3791 = vunpack.c.h.b16 %v2285
        %v3792 = vunpack.c.l.b16 %v2286
        %v3793 = vunpack.c.h.b16 %v2286
        %v3794 = vunpack.c.l.b16 %v2287
        %v3795 = vunpack.c.h.b16 %v2287
        %v3796 = vunpack.c.l.b16 %v2288
        %v3797 = vunpack.c.h.b16 %v2288
        %v3798 = vunpack.c.l.b16 %v2289
        %v3799 = vunpack.c.h.b16 %v2289
        %v3800 = vunpack.c.l.b16 %v2290
        %v3801 = vunpack.c.h.b16 %v2290
        %v3802 = vunpack.c.l.b16 %v2291
        %v3803 = vunpack.c.h.b16 %v2291
        %v3804 = vunpack.c.l.b16 %v2292
        %v3805 = vunpack.c.h.b16 %v2292
        %v3806 = vunpack.c.l.b16 %v2293
        %v3807 = vunpack.c.h.b16 %v2293
        %v3808 = vunpack.c.l.b16 %v2294
        %v3809 = vunpack.c.h.b16 %v2294
        %v3810 = vunpack.c.l.b16 %v2295
        %v3811 = vunpack.c.h.b16 %v2295
        %v3812 = vunpack.c.l.b16 %v2296
        %v3813 = vunpack.c.h.b16 %v2296
        %v3814 = vunpack.c.l.b16 %v2297
        %v3815 = vunpack.c.h.b16 %v2297
        %v3816 = vunpack.c.l.b16 %v2298
        %v3817 = vunpack.c.h.b16 %v2298
        %v3818 = vunpack.c.l.b16 %v2299
        %v3819 = vunpack.c.h.b16 %v2299
        %v3820 = vunpack.c.l.b16 %v2300
        %v3821 = vunpack.c.h.b16 %v2300
        %v3822 = vunpack.c.l.b16 %v2301
        %v3823 = vunpack.c.h.b16 %v2301
        %v3824 = vunpack.c.l.b16 %v2302
        %v3825 = vunpack.c.h.b16 %v2302
        %v3826 = vunpack.c.l.b16 %v2303
        %v3827 = vunpack.c.h.b16 %v2303
        %v3828 = vunpack.c.l.b16 %v2304
        %v3829 = vunpack.c.h.b16 %v2304
        %v3830 = vunpack.c.l.b16 %v2305
        %v3831 = vunpack.c.h.b16 %v2305
        %v3832 = vunpack.c.l.b16 %v2306
        %v3833 = vunpack.c.h.b16 %v2306
        %v3834 = vunpack.c.l.b16 %v2307
        %v3835 = vunpack.c.h.b16 %v2307
        %v3836 = vunpack.c.l.b16 %v2308
        %v3837 = vunpack.c.h.b16 %v2308
        %v3838 = vunpack.c.l.b16 %v2309
        %v3839 = vunpack.c.h.b16 %v2309
        %v3840 = vunpack.c.l.b16 %v2310
        %v3841 = vunpack.c.h.b16 %v2310
        %v3842 = vunpack.c.l.b16 %v2311
        %v3843 = vunpack.c.h.b16 %v2311
        %v3844 = vunpack.c.l.b16 %v2312
        %v3845 = vunpack.c.h.b16 %v2312
        %v3846 = vunpack.c.l.b16 %v2313
        %v3847 = vunpack.c.h.b16 %v2313
        %v3848 = vunpack.c.l.b16 %v2314
        %v3849 = vunpack.c.h.b16 %v2314
        %v3850 = vunpack.c.l.b16 %v2315
        %v3851 = vunpack.c.h.b16 %v2315
        %v3852 = vunpack.c.l.b16 %v2316
        %v3853 = vunpack.c.h.b16 %v2316
        %v3854 = vunpack.c.l.b16 %v2317
        %v3855 = vunpack.c.h.b16 %v2317
        %v3856 = vunpack.c.l.b16 %v2318
        %v3857 = vunpack.c.h.b16 %v2318
        %v3858 = vunpack.c.l.b16 %v2319
        %v3859 = vunpack.c.h.b16 %v2319
        %v3860 = vunpack.c.l.b16 %v2320
        %v3861 = vunpack.c.h.b16 %v2320
        %v3862 = vunpack.c.l.b16 %v2321
        %v3863 = vunpack.c.h.b16 %v2321
        %v3864 = vunpack.c.l.b16 %v2322
        %v3865 = vunpack.c.h.b16 %v2322
        %v3866 = vunpack.c.l.b16 %v2323
        %v3867 = vunpack.c.h.b16 %v2323
        %v3868 = vunpack.c.l.b16 %v2324
        %v3869 = vunpack.c.h.b16 %v2324
        %v3870 = vunpack.c.l.b16 %v2325
        %v3871 = vunpack.c.h.b16 %v2325
        %v3872 = vunpack.c.l.b16 %v2326
        %v3873 = vunpack.c.h.b16 %v2326
        %v3874 = vunpack.c.l.b16 %v2327
        %v3875 = vunpack.c.h.b16 %v2327
        %v3876 = vunpack.c.l.b16 %v2328
        %v3877 = vunpack.c.h.b16 %v2328
        %v3878 = vunpack.c.l.b16 %v2329
        %v3879 = vunpack.c.h.b16 %v2329
        %v3880 = vunpack.c.l.b16 %v2330
        %v3881 = vunpack.c.h.b16 %v2330
        %v3882 = vunpack.c.l.b16 %v2331
        %v3883 = vunpack.c.h.b16 %v2331
        %v3884 = vunpack.c.l.b16 %v2332
        %v3885 = vunpack.c.h.b16 %v2332
        %v3886 = vunpack.c.l.b16 %v2333
        %v3887 = vunpack.c.h.b16 %v2333
        %v3888 = vunpack.c.l.b16 %v2334
        %v3889 = vunpack.c.h.b16 %v2334
        %v3890 = vunpack.c.l.b16 %v2335
        %v3891 = vunpack.c.h.b16 %v2335
        %v3892 = vunpack.c.l.b16 %v2336
        %v3893 = vunpack.c.h.b16 %v2336
        %v3894 = vunpack.c.l.b16 %v2337
        %v3895 = vunpack.c.h.b16 %v2337
        %v3896 = vunpack.c.l.b16 %v2338
        %v3897 = vunpack.c.h.b16 %v2338
        %v3898 = vunpack.c.l.b16 %v2339
        %v3899 = vunpack.c.h.b16 %v2339
        %v3900 = vunpack.c.l.b16 %v2340
        %v3901 = vunpack.c.h.b16 %v2340
        %v3902 = vunpack.c.l.b16 %v2341
        %v3903 = vunpack.c.h.b16 %v2341
        %v3904 = vunpack.c.l.b16 %v2342
        %v3905 = vunpack.c.h.b16 %v2342
        %v3906 = vunpack.c.l.b16 %v2343
        %v3907 = vunpack.c.h.b16 %v2343
        %v3908 = vunpack.c.l.b16 %v2344
        %v3909 = vunpack.c.h.b16 %v2344
        %v3910 = vunpack.c.l.b16 %v2345
        %v3911 = vunpack.c.h.b16 %v2345
        %v3912 = vunpack.c.l.b16 %v2346
        %v3913 = vunpack.c.h.b16 %v2346
        %v3914 = vunpack.c.l.b16 %v2347
        %v3915 = vunpack.c.h.b16 %v2347
        %v3916 = vunpack.c.l.b16 %v2348
        %v3917 = vunpack.c.h.b16 %v2348
        %v3918 = vunpack.c.l.b16 %v2349
        %v3919 = vunpack.c.h.b16 %v2349
        %v3920 = vunpack.c.l.b16 %v2350
        %v3921 = vunpack.c.h.b16 %v2350
        %v3922 = vunpack.c.l.b16 %v2351
        %v3923 = vunpack.c.h.b16 %v2351
        %v3924 = vunpack.c.l.b16 %v2352
        %v3925 = vunpack.c.h.b16 %v2352
        %v3926 = vunpack.c.l.b16 %v2353
        %v3927 = vunpack.c.h.b16 %v2353
        %v3928 = vunpack.c.l.b16 %v2354
        %v3929 = vunpack.c.h.b16 %v2354
        %v3930 = vunpack.c.l.b16 %v2355
        %v3931 = vunpack.c.h.b16 %v2355
        %v3932 = vunpack.c.l.b16 %v2356
        %v3933 = vunpack.c.h.b16 %v2356
        %v3934 = vunpack.c.l.b16 %v2357
        %v3935 = vunpack.c.h.b16 %v2357
        %v3936 = vunpack.c.l.b16 %v2358
        %v3937 = vunpack.c.h.b16 %v2358
        %v3938 = vunpack.c.l.b16 %v2359
        %v3939 = vunpack.c.h.b16 %v2359
        %v3940 = vunpack.c.l.b16 %v2360
        %v3941 = vunpack.c.h.b16 %v2360
        %v3942 = vunpack.c.l.b16 %v2361
        %v3943 = vunpack.c.h.b16 %v2361
        %v3944 = vpack.c.b16 %v2924, %v2920
        %v3945 = vpack.c.b16 %v2925, %v2921
        %v3946 = vpack.c.b16 %v2926, %v2922
        %v3947 = vpack.c.b16 %v2927, %v2923
        %v3948 = vpack.c.b16 %v2932, %v2928
        %v3949 = vpack.c.b16 %v2933, %v2929
        %v3950 = vpack.c.b16 %v2934, %v2930
        %v3951 = vpack.c.b16 %v2935, %v2931
        %v3952 = vpack.c.b16 %v2940, %v2936
        %v3953 = vpack.c.b16 %v2941, %v2937
        %v3954 = vpack.c.b16 %v2942, %v2938
        %v3955 = vpack.c.b16 %v2943, %v2939
        %v3956 = vpack.c.b16 %v2948, %v2944
        %v3957 = vpack.c.b16 %v2949, %v2945
        %v3958 = vpack.c.b16 %v2950, %v2946
        %v3959 = vpack.c.b16 %v2951, %v2947
        %v3960 = vpack.c.b16 %v2956, %v2952
        %v3961 = vpack.c.b16 %v2957, %v2953
        %v3962 = vpack.c.b16 %v2958, %v2954
        %v3963 = vpack.c.b16 %v2959, %v2955
        %v3964 = vpack.c.b16 %v2964, %v2960
        %v3965 = vpack.c.b16 %v2965, %v2961
        %v3966 = vpack.c.b16 %v2966, %v2962
        %v3967 = vpack.c.b16 %v2967, %v2963
        %v3968 = vpack.c.b16 %v2972, %v2968
        %v3969 = vpack.c.b16 %v2973, %v2969
        %v3970 = vpack.c.b16 %v2974, %v2970
        %v3971 = vpack.c.b16 %v2975, %v2971
        %v3972 = vpack.c.b16 %v2980, %v2976
        %v3973 = vpack.c.b16 %v2981, %v2977
        %v3974 = vpack.c.b16 %v2982, %v2978
        %v3975 = vpack.c.b16 %v2983, %v2979
        %v3976 = vpack.c.b16 %v2988, %v2984
        %v3977 = vpack.c.b16 %v2989, %v2985
        %v3978 = vpack.c.b16 %v2990, %v2986
        %v3979 = vpack.c.b16 %v2991, %v2987
        %v3980 = vpack.c.b16 %v2996, %v2992
        %v3981 = vpack.c.b16 %v2997, %v2993
        %v3982 = vpack.c.b16 %v2998, %v2994
        %v3983 = vpack.c.b16 %v2999, %v2995
        %v3984 = vpack.c.b16 %v3004, %v3000
        %v3985 = vpack.c.b16 %v3005, %v3001
        %v3986 = vpack.c.b16 %v3006, %v3002
        %v3987 = vpack.c.b16 %v3007, %v3003
        %v3988 = vpack.c.b16 %v3012, %v3008
        %v3989 = vpack.c.b16 %v3013, %v3009
        %v3990 = vpack.c.b16 %v3014, %v3010
        %v3991 = vpack.c.b16 %v3015, %v3011
        %v3992 = vpack.c.b16 %v3020, %v3016
        %v3993 = vpack.c.b16 %v3021, %v3017
        %v3994 = vpack.c.b16 %v3022, %v3018
        %v3995 = vpack.c.b16 %v3023, %v3019
        %v3996 = vpack.c.b16 %v3028, %v3024
        %v3997 = vpack.c.b16 %v3029, %v3025
        %v3998 = vpack.c.b16 %v3030, %v3026
        %v3999 = vpack.c.b16 %v3031, %v3027
        %v4000 = vpack.c.b16 %v3036, %v3032
        %v4001 = vpack.c.b16 %v3037, %v3033
        %v4002 = vpack.c.b16 %v3038, %v3034
        %v4003 = vpack.c.b16 %v3039, %v3035
        %v4004 = vpack.c.b16 %v3044, %v3040
        %v4005 = vpack.c.b16 %v3045, %v3041
        %v4006 = vpack.c.b16 %v3046, %v3042
        %v4007 = vpack.c.b16 %v3047, %v3043
        %v4008 = vpack.c.b16 %v3052, %v3048
        %v4009 = vpack.c.b16 %v3053, %v3049
        %v4010 = vpack.c.b16 %v3054, %v3050
        %v4011 = vpack.c.b16 %v3055, %v3051
        %v4012 = vpack.c.b16 %v3060, %v3056
        %v4013 = vpack.c.b16 %v3061, %v3057
        %v4014 = vpack.c.b16 %v3062, %v3058
        %v4015 = vpack.c.b16 %v3063, %v3059
        %v4016 = vpack.c.b16 %v3068, %v3064
        %v4017 = vpack.c.b16 %v3069, %v3065
        %v4018 = vpack.c.b16 %v3070, %v3066
        %v4019 = vpack.c.b16 %v3071, %v3067
        %v4020 = vpack.c.b16 %v3076, %v3072
        %v4021 = vpack.c.b16 %v3077, %v3073
        %v4022 = vpack.c.b16 %v3078, %v3074
        %v4023 = vpack.c.b16 %v3079, %v3075
        %v4024 = vpack.c.b16 %v3084, %v3080
        %v4025 = vpack.c.b16 %v3085, %v3081
        %v4026 = vpack.c.b16 %v3086, %v3082
        %v4027 = vpack.c.b16 %v3087, %v3083
        %v4028 = vpack.c.b16 %v3092, %v3088
        %v4029 = vpack.c.b16 %v3093, %v3089
        %v4030 = vpack.c.b16 %v3094, %v3090
        %v4031 = vpack.c.b16 %v3095, %v3091
        %v4032 = vpack.c.b16 %v3100, %v3096
        %v4033 = vpack.c.b16 %v3101, %v3097
        %v4034 = vpack.c.b16 %v3102, %v3098
        %v4035 = vpack.c.b16 %v3103, %v3099
        %v4036 = vpack.c.b16 %v3108, %v3104
        %v4037 = vpack.c.b16 %v3109, %v3105
        %v4038 = vpack.c.b16 %v3110, %v3106
        %v4039 = vpack.c.b16 %v3111, %v3107
        %v4040 = vpack.c.b16 %v3116, %v3112
        %v4041 = vpack.c.b16 %v3117, %v3113
        %v4042 = vpack.c.b16 %v3118, %v3114
        %v4043 = vpack.c.b16 %v3119, %v3115
        %v4044 = vpack.c.b16 %v3124, %v3120
        %v4045 = vpack.c.b16 %v3125, %v3121
        %v4046 = vpack.c.b16 %v3126, %v3122
        %v4047 = vpack.c.b16 %v3127, %v3123
        %v4048 = vpack.c.b16 %v3132, %v3128
        %v4049 = vpack.c.b16 %v3133, %v3129
        %v4050 = vpack.c.b16 %v3134, %v3130
        %v4051 = vpack.c.b16 %v3135, %v3131
        %v4052 = vpack.c.b16 %v3140, %v3136
        %v4053 = vpack.c.b16 %v3141, %v3137
        %v4054 = vpack.c.b16 %v3142, %v3138
        %v4055 = vpack.c.b16 %v3143, %v3139
        %v4056 = vpack.c.b16 %v3148, %v3144
        %v4057 = vpack.c.b16 %v3149, %v3145
        %v4058 = vpack.c.b16 %v3150, %v3146
        %v4059 = vpack.c.b16 %v3151, %v3147
        %v4060 = vpack.c.b16 %v3156, %v3152
        %v4061 = vpack.c.b16 %v3157, %v3153
        %v4062 = vpack.c.b16 %v3158, %v3154
        %v4063 = vpack.c.b16 %v3159, %v3155
        %v4064 = vpack.c.b16 %v3164, %v3160
        %v4065 = vpack.c.b16 %v3165, %v3161
        %v4066 = vpack.c.b16 %v3166, %v3162
        %v4067 = vpack.c.b16 %v3167, %v3163
        %v4068 = vpack.c.b16 %v3172, %v3168
        %v4069 = vpack.c.b16 %v3173, %v3169
        %v4070 = vpack.c.b16 %v3174, %v3170
        %v4071 = vpack.c.b16 %v3175, %v3171
        %v4072 = vpack.c.b16 %v3180, %v3176
        %v4073 = vpack.c.b16 %v3181, %v3177
        %v4074 = vpack.c.b16 %v3182, %v3178
        %v4075 = vpack.c.b16 %v3183, %v3179
        %v4076 = vpack.c.b16 %v3188, %v3184
        %v4077 = vpack.c.b16 %v3189, %v3185
        %v4078 = vpack.c.b16 %v3190, %v3186
        %v4079 = vpack.c.b16 %v3191, %v3187
        %v4080 = vpack.c.b16 %v3196, %v3192
        %v4081 = vpack.c.b16 %v3197, %v3193
        %v4082 = vpack.c.b16 %v3198, %v3194
        %v4083 = vpack.c.b16 %v3199, %v3195
        %v4084 = vpack.c.b16 %v3204, %v3200
        %v4085 = vpack.c.b16 %v3205, %v3201
        %v4086 = vpack.c.b16 %v3206, %v3202
        %v4087 = vpack.c.b16 %v3207, %v3203
        %v4088 = vpack.c.b16 %v3212, %v3208
        %v4089 = vpack.c.b16 %v3213, %v3209
        %v4090 = vpack.c.b16 %v3214, %v3210
        %v4091 = vpack.c.b16 %v3215, %v3211
        %v4092 = vpack.c.b16 %v3220, %v3216
        %v4093 = vpack.c.b16 %v3221, %v3217
        %v4094 = vpack.c.b16 %v3222, %v3218
        %v4095 = vpack.c.b16 %v3223, %v3219
        %v4096 = vpack.c.b16 %v3228, %v3224
        %v4097 = vpack.c.b16 %v3229, %v3225
        %v4098 = vpack.c.b16 %v3230, %v3226
        %v4099 = vpack.c.b16 %v3231, %v3227
        %v4100 = vpack.c.b16 %v3236, %v3232
        %v4101 = vpack.c.b16 %v3237, %v3233
        %v4102 = vpack.c.b16 %v3238, %v3234
        %v4103 = vpack.c.b16 %v3239, %v3235
        %v4104 = vpack.c.b16 %v3244, %v3240
        %v4105 = vpack.c.b16 %v3245, %v3241
        %v4106 = vpack.c.b16 %v3246, %v3242
        %v4107 = vpack.c.b16 %v3247, %v3243
        %v4108 = vpack.c.b16 %v3252, %v3248
        %v4109 = vpack.c.b16 %v3253, %v3249
        %v4110 = vpack.c.b16 %v3254, %v3250
        %v4111 = vpack.c.b16 %v3255, %v3251
        %v4112 = vpack.c.b16 %v3260, %v3256
        %v4113 = vpack.c.b16 %v3261, %v3257
        %v4114 = vpack.c.b16 %v3262, %v3258
        %v4115 = vpack.c.b16 %v3263, %v3259
        %v4116 = vpack.c.b16 %v3268, %v3264
        %v4117 = vpack.c.b16 %v3269, %v3265
        %v4118 = vpack.c.b16 %v3270, %v3266
        %v4119 = vpack.c.b16 %v3271, %v3267
        %v4120 = vpack.c.b16 %v3276, %v3272
        %v4121 = vpack.c.b16 %v3277, %v3273
        %v4122 = vpack.c.b16 %v3278, %v3274
        %v4123 = vpack.c.b16 %v3279, %v3275
        %v4124 = vpack.c.b16 %v3284, %v3280
        %v4125 = vpack.c.b16 %v3285, %v3281
        %v4126 = vpack.c.b16 %v3286, %v3282
        %v4127 = vpack.c.b16 %v3287, %v3283
        %v4128 = vpack.c.b16 %v3292, %v3288
        %v4129 = vpack.c.b16 %v3293, %v3289
        %v4130 = vpack.c.b16 %v3294, %v3290
        %v4131 = vpack.c.b16 %v3295, %v3291
        %v4132 = vpack.c.b16 %v3300, %v3296
        %v4133 = vpack.c.b16 %v3301, %v3297
        %v4134 = vpack.c.b16 %v3302, %v3298
        %v4135 = vpack.c.b16 %v3303, %v3299
        %v4136 = vpack.c.b16 %v3308, %v3304
        %v4137 = vpack.c.b16 %v3309, %v3305
        %v4138 = vpack.c.b16 %v3310, %v3306
        %v4139 = vpack.c.b16 %v3311, %v3307
        %v4140 = vpack.c.b16 %v3316, %v3312
        %v4141 = vpack.c.b16 %v3317, %v3313
        %v4142 = vpack.c.b16 %v3318, %v3314
        %v4143 = vpack.c.b16 %v3319, %v3315
        %v4144 = vpack.c.b16 %v3324, %v3320
        %v4145 = vpack.c.b16 %v3325, %v3321
        %v4146 = vpack.c.b16 %v3326, %v3322
        %v4147 = vpack.c.b16 %v3327, %v3323
        %v4148 = vpack.c.b16 %v3332, %v3328
        %v4149 = vpack.c.b16 %v3333, %v3329
        %v4150 = vpack.c.b16 %v3334, %v3330
        %v4151 = vpack.c.b16 %v3335, %v3331
        %v4152 = vpack.c.b16 %v3340, %v3336
        %v4153 = vpack.c.b16 %v3341, %v3337
        %v4154 = vpack.c.b16 %v3342, %v3338
        %v4155 = vpack.c.b16 %v3343, %v3339
        %v4156 = vpack.c.b16 %v3348, %v3344
        %v4157 = vpack.c.b16 %v3349, %v3345
        %v4158 = vpack.c.b16 %v3350, %v3346
        %v4159 = vpack.c.b16 %v3351, %v3347
        %v4160 = vpack.c.b16 %v3356, %v3352
        %v4161 = vpack.c.b16 %v3357, %v3353
        %v4162 = vpack.c.b16 %v3358, %v3354
        %v4163 = vpack.c.b16 %v3359, %v3355
        %v4164 = vpack.c.b16 %v3364, %v3360
        %v4165 = vpack.c.b16 %v3365, %v3361
        %v4166 = vpack.c.b16 %v3366, %v3362
        %v4167 = vpack.c.b16 %v3367, %v3363
        %v4168 = vpack.c.b16 %v3372, %v3368
        %v4169 = vpack.c.b16 %v3373, %v3369
        %v4170 = vpack.c.b16 %v3374, %v3370
        %v4171 = vpack.c.b16 %v3375, %v3371
        %v4172 = vpack.c.b16 %v3380, %v3376
        %v4173 = vpack.c.b16 %v3381, %v3377
        %v4174 = vpack.c.b16 %v3382, %v3378
        %v4175 = vpack.c.b16 %v3383, %v3379
        %v4176 = vpack.c.b16 %v3388, %v3384
        %v4177 = vpack.c.b16 %v3389, %v3385
        %v4178 = vpack.c.b16 %v3390, %v3386
        %v4179 = vpack.c.b16 %v3391, %v3387
        %v4180 = vpack.c.b16 %v3396, %v3392
        %v4181 = vpack.c.b16 %v3397, %v3393
        %v4182 = vpack.c.b16 %v3398, %v3394
        %v4183 = vpack.c.b16 %v3399, %v3395
        %v4184 = vpack.c.b16 %v3404, %v3400
        %v4185 = vpack.c.b16 %v3405, %v3401
        %v4186 = vpack.c.b16 %v3406, %v3402
        %v4187 = vpack.c.b16 %v3407, %v3403
        %v4188 = vpack.c.b16 %v3412, %v3408
        %v4189 = vpack.c.b16 %v3413, %v3409
        %v4190 = vpack.c.b16 %v3414, %v3410
        %v4191 = vpack.c.b16 %v3415, %v3411
        %v4192 = vpack.c.b16 %v3420, %v3416
        %v4193 = vpack.c.b16 %v3421, %v3417
        %v4194 = vpack.c.b16 %v3422, %v3418
        %v4195 = vpack.c.b16 %v3423, %v3419
        %v4196 = vpack.c.b16 %v3428, %v3424
        %v4197 = vpack.c.b16 %v3429, %v3425
        %v4198 = vpack.c.b16 %v3430, %v3426
        %v4199 = vpack.c.b16 %v3431, %v3427
        %v4200 = vpack.c.b16 %v3436, %v3432
        %v4201 = vpack.c.b16 %v3437, %v3433
        %v4202 = vpack.c.b16 %v3438, %v3434
        %v4203 = vpack.c.b16 %v3439, %v3435
        %v4204 = vpack.c.b16 %v3444, %v3440
        %v4205 = vpack.c.b16 %v3445, %v3441
        %v4206 = vpack.c.b16 %v3446, %v3442
        %v4207 = vpack.c.b16 %v3447, %v3443
        %v4208 = vpack.c.b16 %v3452, %v3448
        %v4209 = vpack.c.b16 %v3453, %v3449
        %v4210 = vpack.c.b16 %v3454, %v3450
        %v4211 = vpack.c.b16 %v3455, %v3451
        %v4212 = vpack.c.b16 %v3460, %v3456
        %v4213 = vpack.c.b16 %v3461, %v3457
        %v4214 = vpack.c.b16 %v3462, %v3458
        %v4215 = vpack.c.b16 %v3463, %v3459
        %v4216 = vpack.c.b16 %v3468, %v3464
        %v4217 = vpack.c.b16 %v3469, %v3465
        %v4218 = vpack.c.b16 %v3470, %v3466
        %v4219 = vpack.c.b16 %v3471, %v3467
        %v4220 = vpack.c.b16 %v3476, %v3472
        %v4221 = vpack.c.b16 %v3477, %v3473
        %v4222 = vpack.c.b16 %v3478, %v3474
        %v4223 = vpack.c.b16 %v3479, %v3475
        %v4224 = vpack.c.b16 %v3484, %v3480
        %v4225 = vpack.c.b16 %v3485, %v3481
        %v4226 = vpack.c.b16 %v3486, %v3482
        %v4227 = vpack.c.b16 %v3487, %v3483
        %v4228 = vpack.c.b16 %v3492, %v3488
        %v4229 = vpack.c.b16 %v3493, %v3489
        %v4230 = vpack.c.b16 %v3494, %v3490
        %v4231 = vpack.c.b16 %v3495, %v3491
        %v4232 = vpack.c.b16 %v3500, %v3496
        %v4233 = vpack.c.b16 %v3501, %v3497
        %v4234 = vpack.c.b16 %v3502, %v3498
        %v4235 = vpack.c.b16 %v3503, %v3499
        %v4236 = vpack.c.b16 %v3508, %v3504
        %v4237 = vpack.c.b16 %v3509, %v3505
        %v4238 = vpack.c.b16 %v3510, %v3506
        %v4239 = vpack.c.b16 %v3511, %v3507
        %v4240 = vpack.c.b16 %v3516, %v3512
        %v4241 = vpack.c.b16 %v3517, %v3513
        %v4242 = vpack.c.b16 %v3518, %v3514
        %v4243 = vpack.c.b16 %v3519, %v3515
        %v4244 = vpack.c.b16 %v3524, %v3520
        %v4245 = vpack.c.b16 %v3525, %v3521
        %v4246 = vpack.c.b16 %v3526, %v3522
        %v4247 = vpack.c.b16 %v3527, %v3523
        %v4248 = vpack.c.b16 %v3532, %v3528
        %v4249 = vpack.c.b16 %v3533, %v3529
        %v4250 = vpack.c.b16 %v3534, %v3530
        %v4251 = vpack.c.b16 %v3535, %v3531
        %v4252 = vpack.c.b16 %v3540, %v3536
        %v4253 = vpack.c.b16 %v3541, %v3537
        %v4254 = vpack.c.b16 %v3542, %v3538
        %v4255 = vpack.c.b16 %v3543, %v3539
        %v4256 = vpack.c.b16 %v3548, %v3544
        %v4257 = vpack.c.b16 %v3549, %v3545
        %v4258 = vpack.c.b16 %v3550, %v3546
        %v4259 = vpack.c.b16 %v3551, %v3547
        %v4260 = vpack.c.b16 %v3556, %v3552
        %v4261 = vpack.c.b16 %v3557, %v3553
        %v4262 = vpack.c.b16 %v3558, %v3554
        %v4263 = vpack.c.b16 %v3559, %v3555
        %v4264 = vpack.c.b16 %v3564, %v3560
        %v4265 = vpack.c.b16 %v3565, %v3561
        %v4266 = vpack.c.b16 %v3566, %v3562
        %v4267 = vpack.c.b16 %v3567, %v3563
        %v4268 = vpack.c.b16 %v3572, %v3568
        %v4269 = vpack.c.b16 %v3573, %v3569
        %v4270 = vpack.c.b16 %v3574, %v3570
        %v4271 = vpack.c.b16 %v3575, %v3571
        %v4272 = vpack.c.b16 %v3580, %v3576
        %v4273 = vpack.c.b16 %v3581, %v3577
        %v4274 = vpack.c.b16 %v3582, %v3578
        %v4275 = vpack.c.b16 %v3583, %v3579
        %v4276 = vpack.c.b16 %v3588, %v3584
        %v4277 = vpack.c.b16 %v3589, %v3585
        %v4278 = vpack.c.b16 %v3590, %v3586
        %v4279 = vpack.c.b16 %v3591, %v3587
        %v4280 = vpack.c.b16 %v3596, %v3592
        %v4281 = vpack.c.b16 %v3597, %v3593
        %v4282 = vpack.c.b16 %v3598, %v3594
        %v4283 = vpack.c.b16 %v3599, %v3595
        %v4284 = vpack.c.b16 %v3604, %v3600
        %v4285 = vpack.c.b16 %v3605, %v3601
        %v4286 = vpack.c.b16 %v3606, %v3602
        %v4287 = vpack.c.b16 %v3607, %v3603
        %v4288 = vpack.c.b16 %v3612, %v3608
        %v4289 = vpack.c.b16 %v3613, %v3609
        %v4290 = vpack.c.b16 %v3614, %v3610
        %v4291 = vpack.c.b16 %v3615, %v3611
        %v4292 = vpack.c.b16 %v3620, %v3616
        %v4293 = vpack.c.b16 %v3621, %v3617
        %v4294 = vpack.c.b16 %v3622, %v3618
        %v4295 = vpack.c.b16 %v3623, %v3619
        %v4296 = vpack.c.b16 %v3628, %v3624
        %v4297 = vpack.c.b16 %v3629, %v3625
        %v4298 = vpack.c.b16 %v3630, %v3626
        %v4299 = vpack.c.b16 %v3631, %v3627
        %v4300 = vpack.c.b16 %v3636, %v3632
        %v4301 = vpack.c.b16 %v3637, %v3633
        %v4302 = vpack.c.b16 %v3638, %v3634
        %v4303 = vpack.c.b16 %v3639, %v3635
        %v4304 = vpack.c.b16 %v3644, %v3640
        %v4305 = vpack.c.b16 %v3645, %v3641
        %v4306 = vpack.c.b16 %v3646, %v3642
        %v4307 = vpack.c.b16 %v3647, %v3643
        %v4308 = vpack.c.b16 %v3652, %v3648
        %v4309 = vpack.c.b16 %v3653, %v3649
        %v4310 = vpack.c.b16 %v3654, %v3650
        %v4311 = vpack.c.b16 %v3655, %v3651
        %v4312 = vpack.c.b16 %v3660, %v3656
        %v4313 = vpack.c.b16 %v3661, %v3657
        %v4314 = vpack.c.b16 %v3662, %v3658
        %v4315 = vpack.c.b16 %v3663, %v3659
        %v4316 = vpack.c.b16 %v3668, %v3664
        %v4317 = vpack.c.b16 %v3669, %v3665
        %v4318 = vpack.c.b16 %v3670, %v3666
        %v4319 = vpack.c.b16 %v3671, %v3667
        %v4320 = vpack.c.b16 %v3676, %v3672
        %v4321 = vpack.c.b16 %v3677, %v3673
        %v4322 = vpack.c.b16 %v3678, %v3674
        %v4323 = vpack.c.b16 %v3679, %v3675
        %v4324 = vpack.c.b16 %v3684, %v3680
        %v4325 = vpack.c.b16 %v3685, %v3681
        %v4326 = vpack.c.b16 %v3686, %v3682
        %v4327 = vpack.c.b16 %v3687, %v3683
        %v4328 = vpack.c.b16 %v3692, %v3688
        %v4329 = vpack.c.b16 %v3693, %v3689
        %v4330 = vpack.c.b16 %v3694, %v3690
        %v4331 = vpack.c.b16 %v3695, %v3691
        %v4332 = vpack.c.b16 %v3700, %v3696
        %v4333 = vpack.c.b16 %v3701, %v3697
        %v4334 = vpack.c.b16 %v3702, %v3698
        %v4335 = vpack.c.b16 %v3703, %v3699
        %v4336 = vpack.c.b16 %v3708, %v3704
        %v4337 = vpack.c.b16 %v3709, %v3705
        %v4338 = vpack.c.b16 %v3710, %v3706
        %v4339 = vpack.c.b16 %v3711, %v3707
        %v4340 = vpack.c.b16 %v3716, %v3712
        %v4341 = vpack.c.b16 %v3717, %v3713
        %v4342 = vpack.c.b16 %v3718, %v3714
        %v4343 = vpack.c.b16 %v3719, %v3715
        %v4344 = vpack.c.b16 %v3724, %v3720
        %v4345 = vpack.c.b16 %v3725, %v3721
        %v4346 = vpack.c.b16 %v3726, %v3722
        %v4347 = vpack.c.b16 %v3727, %v3723
        %v4348 = vpack.c.b16 %v3732, %v3728
        %v4349 = vpack.c.b16 %v3733, %v3729
        %v4350 = vpack.c.b16 %v3734, %v3730
        %v4351 = vpack.c.b16 %v3735, %v3731
        %v4352 = vpack.c.b16 %v3740, %v3736
        %v4353 = vpack.c.b16 %v3741, %v3737
        %v4354 = vpack.c.b16 %v3742, %v3738
        %v4355 = vpack.c.b16 %v3743, %v3739
        %v4356 = vpack.c.b16 %v3748, %v3744
        %v4357 = vpack.c.b16 %v3749, %v3745
        %v4358 = vpack.c.b16 %v3750, %v3746
        %v4359 = vpack.c.b16 %v3751, %v3747
        %v4360 = vpack.c.b16 %v3756, %v3752
        %v4361 = vpack.c.b16 %v3757, %v3753
        %v4362 = vpack.c.b16 %v3758, %v3754
        %v4363 = vpack.c.b16 %v3759, %v3755
        %v4364 = vpack.c.b16 %v3764, %v3760
        %v4365 = vpack.c.b16 %v3765, %v3761
        %v4366 = vpack.c.b16 %v3766, %v3762
        %v4367 = vpack.c.b16 %v3767, %v3763
        %v4368 = vpack.c.b16 %v3772, %v3768
        %v4369 = vpack.c.b16 %v3773, %v3769
        %v4370 = vpack.c.b16 %v3774, %v3770
        %v4371 = vpack.c.b16 %v3775, %v3771
        %v4372 = vpack.c.b16 %v3780, %v3776
        %v4373 = vpack.c.b16 %v3781, %v3777
        %v4374 = vpack.c.b16 %v3782, %v3778
        %v4375 = vpack.c.b16 %v3783, %v3779
        %v4376 = vpack.c.b16 %v3788, %v3784
        %v4377 = vpack.c.b16 %v3789, %v3785
        %v4378 = vpack.c.b16 %v3790, %v3786
        %v4379 = vpack.c.b16 %v3791, %v3787
        %v4380 = vpack.c.b16 %v3796, %v3792
        %v4381 = vpack.c.b16 %v3797, %v3793
        %v4382 = vpack.c.b16 %v3798, %v3794
        %v4383 = vpack.c.b16 %v3799, %v3795
        %v4384 = vpack.c.b16 %v3804, %v3800
        %v4385 = vpack.c.b16 %v3805, %v3801
        %v4386 = vpack.c.b16 %v3806, %v3802
        %v4387 = vpack.c.b16 %v3807, %v3803
        %v4388 = vpack.c.b16 %v3812, %v3808
        %v4389 = vpack.c.b16 %v3813, %v3809
        %v4390 = vpack.c.b16 %v3814, %v3810
        %v4391 = vpack.c.b16 %v3815, %v3811
        %v4392 = vpack.c.b16 %v3820, %v3816
        %v4393 = vpack.c.b16 %v3821, %v3817
        %v4394 = vpack.c.b16 %v3822, %v3818
        %v4395 = vpack.c.b16 %v3823, %v3819
        %v4396 = vpack.c.b16 %v3828, %v3824
        %v4397 = vpack.c.b16 %v3829, %v3825
        %v4398 = vpack.c.b16 %v3830, %v3826
        %v4399 = vpack.c.b16 %v3831, %v3827
        %v4400 = vpack.c.b16 %v3836, %v3832
        %v4401 = vpack.c.b16 %v3837, %v3833
        %v4402 = vpack.c.b16 %v3838, %v3834
        %v4403 = vpack.c.b16 %v3839, %v3835
        %v4404 = vpack.c.b16 %v3844, %v3840
        %v4405 = vpack.c.b16 %v3845, %v3841
        %v4406 = vpack.c.b16 %v3846, %v3842
        %v4407 = vpack.c.b16 %v3847, %v3843
        %v4408 = vpack.c.b16 %v3852, %v3848
        %v4409 = vpack.c.b16 %v3853, %v3849
        %v4410 = vpack.c.b16 %v3854, %v3850
        %v4411 = vpack.c.b16 %v3855, %v3851
        %v4412 = vpack.c.b16 %v3860, %v3856
        %v4413 = vpack.c.b16 %v3861, %v3857
        %v4414 = vpack.c.b16 %v3862, %v3858
        %v4415 = vpack.c.b16 %v3863, %v3859
        %v4416 = vpack.c.b16 %v3868, %v3864
        %v4417 = vpack.c.b16 %v3869, %v3865
        %v4418 = vpack.c.b16 %v3870, %v3866
        %v4419 = vpack.c.b16 %v3871, %v3867
        %v4420 = vpack.c.b16 %v3876, %v3872
        %v4421 = vpack.c.b16 %v3877, %v3873
        %v4422 = vpack.c.b16 %v3878, %v3874
        %v4423 = vpack.c.b16 %v3879, %v3875
        %v4424 = vpack.c.b16 %v3884, %v3880
        %v4425 = vpack.c.b16 %v3885, %v3881
        %v4426 = vpack.c.b16 %v3886, %v3882
        %v4427 = vpack.c.b16 %v3887, %v3883
        %v4428 = vpack.c.b16 %v3892, %v3888
        %v4429 = vpack.c.b16 %v3893, %v3889
        %v4430 = vpack.c.b16 %v3894, %v3890
        %v4431 = vpack.c.b16 %v3895, %v3891
        %v4432 = vpack.c.b16 %v3900, %v3896
        %v4433 = vpack.c.b16 %v3901, %v3897
        %v4434 = vpack.c.b16 %v3902, %v3898
        %v4435 = vpack.c.b16 %v3903, %v3899
        %v4436 = vpack.c.b16 %v3908, %v3904
        %v4437 = vpack.c.b16 %v3909, %v3905
        %v4438 = vpack.c.b16 %v3910, %v3906
        %v4439 = vpack.c.b16 %v3911, %v3907
        %v4440 = vpack.c.b16 %v3916, %v3912
        %v4441 = vpack.c.b16 %v3917, %v3913
        %v4442 = vpack.c.b16 %v3918, %v3914
        %v4443 = vpack.c.b16 %v3919, %v3915
        %v4444 = vpack.c.b16 %v3924, %v3920
        %v4445 = vpack.c.b16 %v3925, %v3921
        %v4446 = vpack.c.b16 %v3926, %v3922
        %v4447 = vpack.c.b16 %v3927, %v3923
        %v4448 = vpack.c.b16 %v3932, %v3928
        %v4449 = vpack.c.b16 %v3933, %v3929
        %v4450 = vpack.c.b16 %v3934, %v3930
        %v4451 = vpack.c.b16 %v3935, %v3931
        %v4452 = vpack.c.b16 %v3940, %v3936
        %v4453 = vpack.c.b16 %v3941, %v3937
        %v4454 = vpack.c.b16 %v3942, %v3938
        %v4455 = vpack.c.b16 %v3943, %v3939
        %4968 = vmatpush.bf16.msra.mxu0 %v3972
        %4969 = vmatpush.bf16.msra.mxu0 %v3968
        %4970 = vmatpush.bf16.msra.mxu0 %v3964
        %4971 = vmatpush.bf16.msra.mxu0 %v3960
        %4972 = vmatpush.bf16.msra.mxu0 %v3956
        %4973 = vmatpush.bf16.msra.mxu0 %v3952
        %4974 = vmatpush.bf16.msra.mxu0 %v3948
        %4975 = vmatpush.bf16.msra.mxu0 %v3944
        %4976 = vmatmul.bf16.gmra.mxu0 %v2374
        %v4977 = vpop.f32.mrf.mxu0
        %v4978 = vadd.f32 %v2364, %v4977
        %v4979 = vpop.f32.mrf.mxu0
        %4980 = vdwg.mxu0
        %4981 = vmatpush.bf16.msra.mxu0 %v4004
        %4982 = vmatpush.bf16.msra.mxu0 %v4000
        %4983 = vmatpush.bf16.msra.mxu0 %v3996
        %4984 = vmatpush.bf16.msra.mxu0 %v3992
        %4985 = vmatpush.bf16.msra.mxu0 %v3988
        %4986 = vmatpush.bf16.msra.mxu0 %v3984
        %4987 = vmatpush.bf16.msra.mxu0 %v3980
        %4988 = vmatpush.bf16.msra.mxu0 %v3976
        %4989 = vmatmul.bf16.gmra.mxu0 %v2375
        %v4990 = vpop.f32.mrf.mxu0
        %v4991 = vadd.f32 %v4978, %v4990
        %v4992 = vpop.f32.mrf.mxu0
        %4993 = vdwg.mxu0
        %4994 = vmatpush.bf16.msra.mxu0 %v4036
        %4995 = vmatpush.bf16.msra.mxu0 %v4032
        %4996 = vmatpush.bf16.msra.mxu0 %v4028
        %4997 = vmatpush.bf16.msra.mxu0 %v4024
        %4998 = vmatpush.bf16.msra.mxu0 %v4020
        %4999 = vmatpush.bf16.msra.mxu0 %v4016
        %5000 = vmatpush.bf16.msra.mxu0 %v4012
        %5001 = vmatpush.bf16.msra.mxu0 %v4008
        %5002 = vmatmul.bf16.gmra.mxu0 %v2376
        %v5003 = vpop.f32.mrf.mxu0
        %v5004 = vadd.f32 %v4991, %v5003
        %v5005 = vpop.f32.mrf.mxu0
        %5006 = vdwg.mxu0
        %5007 = vmatpush.bf16.msra.mxu0 %v4068
        %5008 = vmatpush.bf16.msra.mxu0 %v4064
        %5009 = vmatpush.bf16.msra.mxu0 %v4060
        %5010 = vmatpush.bf16.msra.mxu0 %v4056
        %5011 = vmatpush.bf16.msra.mxu0 %v4052
        %5012 = vmatpush.bf16.msra.mxu0 %v4048
        %5013 = vmatpush.bf16.msra.mxu0 %v4044
        %5014 = vmatpush.bf16.msra.mxu0 %v4040
        %5015 = vmatmul.bf16.gmra.mxu0 %v2377
        %v5016 = vpop.f32.mrf.mxu0
        %v5017 = vadd.f32 %v5004, %v5016
        %v5018 = vpop.f32.mrf.mxu0
        %5019 = vdwg.mxu0
        %5020 = vmatpush.bf16.msra.mxu0 %v4100
        %5021 = vmatpush.bf16.msra.mxu0 %v4096
        %5022 = vmatpush.bf16.msra.mxu0 %v4092
        %5023 = vmatpush.bf16.msra.mxu0 %v4088
        %5024 = vmatpush.bf16.msra.mxu0 %v4084
        %5025 = vmatpush.bf16.msra.mxu0 %v4080
        %5026 = vmatpush.bf16.msra.mxu0 %v4076
        %5027 = vmatpush.bf16.msra.mxu0 %v4072
        %5028 = vmatmul.bf16.gmra.mxu0 %v2378
        %v5029 = vpop.f32.mrf.mxu0
        %v5030 = vadd.f32 %v5017, %v5029
        %v5031 = vpop.f32.mrf.mxu0
        %5032 = vdwg.mxu0
        %5033 = vmatpush.bf16.msra.mxu0 %v4132
        %5034 = vmatpush.bf16.msra.mxu0 %v4128
        %5035 = vmatpush.bf16.msra.mxu0 %v4124
        %5036 = vmatpush.bf16.msra.mxu0 %v4120
        %5037 = vmatpush.bf16.msra.mxu0 %v4116
        %5038 = vmatpush.bf16.msra.mxu0 %v4112
        %5039 = vmatpush.bf16.msra.mxu0 %v4108
        %5040 = vmatpush.bf16.msra.mxu0 %v4104
        %5041 = vmatmul.bf16.gmra.mxu0 %v2379
        %v5042 = vpop.f32.mrf.mxu0
        %v5043 = vadd.f32 %v5030, %v5042
        %v5044 = vpop.f32.mrf.mxu0
        %5045 = vdwg.mxu0
        %5046 = vmatpush.bf16.msra.mxu0 %v4164
        %5047 = vmatpush.bf16.msra.mxu0 %v4160
        %5048 = vmatpush.bf16.msra.mxu0 %v4156
        %5049 = vmatpush.bf16.msra.mxu0 %v4152
        %5050 = vmatpush.bf16.msra.mxu0 %v4148
        %5051 = vmatpush.bf16.msra.mxu0 %v4144
        %5052 = vmatpush.bf16.msra.mxu0 %v4140
        %5053 = vmatpush.bf16.msra.mxu0 %v4136
        %5054 = vmatmul.bf16.gmra.mxu0 %v2380
        %v5055 = vpop.f32.mrf.mxu0
        %v5056 = vadd.f32 %v5043, %v5055
        %v5057 = vpop.f32.mrf.mxu0
        %5058 = vdwg.mxu0
        %5059 = vmatpush.bf16.msra.mxu0 %v4196
        %5060 = vmatpush.bf16.msra.mxu0 %v4192
        %5061 = vmatpush.bf16.msra.mxu0 %v4188
        %5062 = vmatpush.bf16.msra.mxu0 %v4184
        %5063 = vmatpush.bf16.msra.mxu0 %v4180
        %5064 = vmatpush.bf16.msra.mxu0 %v4176
        %5065 = vmatpush.bf16.msra.mxu0 %v4172
        %5066 = vmatpush.bf16.msra.mxu0 %v4168
        %5067 = vmatmul.bf16.gmra.mxu0 %v2381
        %v5068 = vpop.f32.mrf.mxu0
        %v5069 = vadd.f32 %v5056, %v5068
        %v5070 = vpop.f32.mrf.mxu0
        %5071 = vdwg.mxu0
        %5072 = vmatpush.bf16.msra.mxu0 %v4228
        %5073 = vmatpush.bf16.msra.mxu0 %v4224
        %5074 = vmatpush.bf16.msra.mxu0 %v4220
        %5075 = vmatpush.bf16.msra.mxu0 %v4216
        %5076 = vmatpush.bf16.msra.mxu0 %v4212
        %5077 = vmatpush.bf16.msra.mxu0 %v4208
        %5078 = vmatpush.bf16.msra.mxu0 %v4204
        %5079 = vmatpush.bf16.msra.mxu0 %v4200
        %5080 = vmatmul.bf16.gmra.mxu0 %v2384
        %v5081 = vpop.f32.mrf.mxu0
        %v5082 = vadd.f32 %v5069, %v5081
        %v5083 = vpop.f32.mrf.mxu0
        %5084 = vdwg.mxu0
        %5085 = vmatpush.bf16.msra.mxu0 %v4260
        %5086 = vmatpush.bf16.msra.mxu0 %v4256
        %5087 = vmatpush.bf16.msra.mxu0 %v4252
        %5088 = vmatpush.bf16.msra.mxu0 %v4248
        %5089 = vmatpush.bf16.msra.mxu0 %v4244
        %5090 = vmatpush.bf16.msra.mxu0 %v4240
        %5091 = vmatpush.bf16.msra.mxu0 %v4236
        %5092 = vmatpush.bf16.msra.mxu0 %v4232
        %5093 = vmatmul.bf16.gmra.mxu0 %v2385
        %v5094 = vpop.f32.mrf.mxu0
        %v5095 = vadd.f32 %v5082, %v5094
        %v5096 = vpop.f32.mrf.mxu0
        %5097 = vdwg.mxu0
        %5098 = vmatpush.bf16.msra.mxu0 %v4292
        %5099 = vmatpush.bf16.msra.mxu0 %v4288
        %5100 = vmatpush.bf16.msra.mxu0 %v4284
        %5101 = vmatpush.bf16.msra.mxu0 %v4280
        %5102 = vmatpush.bf16.msra.mxu0 %v4276
        %5103 = vmatpush.bf16.msra.mxu0 %v4272
        %5104 = vmatpush.bf16.msra.mxu0 %v4268
        %5105 = vmatpush.bf16.msra.mxu0 %v4264
        %5106 = vmatmul.bf16.gmra.mxu0 %v2386
        %v5107 = vpop.f32.mrf.mxu0
        %v5108 = vadd.f32 %v5095, %v5107
        %v5109 = vpop.f32.mrf.mxu0
        %5110 = vdwg.mxu0
        %5111 = vmatpush.bf16.msra.mxu0 %v4324
        %5112 = vmatpush.bf16.msra.mxu0 %v4320
        %5113 = vmatpush.bf16.msra.mxu0 %v4316
        %5114 = vmatpush.bf16.msra.mxu0 %v4312
        %5115 = vmatpush.bf16.msra.mxu0 %v4308
        %5116 = vmatpush.bf16.msra.mxu0 %v4304
        %5117 = vmatpush.bf16.msra.mxu0 %v4300
        %5118 = vmatpush.bf16.msra.mxu0 %v4296
        %5119 = vmatmul.bf16.gmra.mxu0 %v2387
        %v5120 = vpop.f32.mrf.mxu0
        %v5121 = vadd.f32 %v5108, %v5120
        %v5122 = vpop.f32.mrf.mxu0
        %5123 = vdwg.mxu0
        %5124 = vmatpush.bf16.msra.mxu0 %v4356
        %5125 = vmatpush.bf16.msra.mxu0 %v4352
        %5126 = vmatpush.bf16.msra.mxu0 %v4348
        %5127 = vmatpush.bf16.msra.mxu0 %v4344
        %5128 = vmatpush.bf16.msra.mxu0 %v4340
        %5129 = vmatpush.bf16.msra.mxu0 %v4336
        %5130 = vmatpush.bf16.msra.mxu0 %v4332
        %5131 = vmatpush.bf16.msra.mxu0 %v4328
        %5132 = vmatmul.bf16.gmra.mxu0 %v2388
        %v5133 = vpop.f32.mrf.mxu0
        %v5134 = vadd.f32 %v5121, %v5133
        %v5135 = vpop.f32.mrf.mxu0
        %5136 = vdwg.mxu0
        %5137 = vmatpush.bf16.msra.mxu0 %v4388
        %5138 = vmatpush.bf16.msra.mxu0 %v4384
        %5139 = vmatpush.bf16.msra.mxu0 %v4380
        %5140 = vmatpush.bf16.msra.mxu0 %v4376
        %5141 = vmatpush.bf16.msra.mxu0 %v4372
        %5142 = vmatpush.bf16.msra.mxu0 %v4368
        %5143 = vmatpush.bf16.msra.mxu0 %v4364
        %5144 = vmatpush.bf16.msra.mxu0 %v4360
        %5145 = vmatmul.bf16.gmra.mxu0 %v2389
        %v5146 = vpop.f32.mrf.mxu0
        %v5147 = vadd.f32 %v5134, %v5146
        %v5148 = vpop.f32.mrf.mxu0
        %5149 = vdwg.mxu0
        %5150 = vmatpush.bf16.msra.mxu0 %v4420
        %5151 = vmatpush.bf16.msra.mxu0 %v4416
        %5152 = vmatpush.bf16.msra.mxu0 %v4412
        %5153 = vmatpush.bf16.msra.mxu0 %v4408
        %5154 = vmatpush.bf16.msra.mxu0 %v4404
        %5155 = vmatpush.bf16.msra.mxu0 %v4400
        %5156 = vmatpush.bf16.msra.mxu0 %v4396
        %5157 = vmatpush.bf16.msra.mxu0 %v4392
        %5158 = vmatmul.bf16.gmra.mxu0 %v2390
        %v5159 = vpop.f32.mrf.mxu0
        %v5160 = vadd.f32 %v5147, %v5159
        %v5161 = vpop.f32.mrf.mxu0
        %5162 = vdwg.mxu0
        %5163 = vmatpush.bf16.msra.mxu0 %v4452
        %5164 = vmatpush.bf16.msra.mxu0 %v4448
        %5165 = vmatpush.bf16.msra.mxu0 %v4444
        %5166 = vmatpush.bf16.msra.mxu0 %v4440
        %5167 = vmatpush.bf16.msra.mxu0 %v4436
        %5168 = vmatpush.bf16.msra.mxu0 %v4432
        %5169 = vmatpush.bf16.msra.mxu0 %v4428
        %5170 = vmatpush.bf16.msra.mxu0 %v4424
        %5171 = vmatmul.bf16.gmra.mxu0 %v2391
        %v5172 = vpop.f32.mrf.mxu0
        %v5173 = vadd.f32 %v5160, %v5172
        %v5174 = vpop.f32.mrf.mxu0
        %5175 = vdwg.mxu0
        %5176 = vmatpush.bf16.msra.mxu0 %v3973
        %5177 = vmatpush.bf16.msra.mxu0 %v3969
        %5178 = vmatpush.bf16.msra.mxu0 %v3965
        %5179 = vmatpush.bf16.msra.mxu0 %v3961
        %5180 = vmatpush.bf16.msra.mxu0 %v3957
        %5181 = vmatpush.bf16.msra.mxu0 %v3953
        %5182 = vmatpush.bf16.msra.mxu0 %v3949
        %5183 = vmatpush.bf16.msra.mxu0 %v3945
        %5184 = vmatmul.bf16.gmra.mxu0 %v2374
        %v5185 = vpop.f32.mrf.mxu0
        %v5186 = vadd.f32 %v2365, %v5185
        %v5187 = vpop.f32.mrf.mxu0
        %5188 = vdwg.mxu0
        %5189 = vmatpush.bf16.msra.mxu0 %v4005
        %5190 = vmatpush.bf16.msra.mxu0 %v4001
        %5191 = vmatpush.bf16.msra.mxu0 %v3997
        %5192 = vmatpush.bf16.msra.mxu0 %v3993
        %5193 = vmatpush.bf16.msra.mxu0 %v3989
        %5194 = vmatpush.bf16.msra.mxu0 %v3985
        %5195 = vmatpush.bf16.msra.mxu0 %v3981
        %5196 = vmatpush.bf16.msra.mxu0 %v3977
        %5197 = vmatmul.bf16.gmra.mxu0 %v2375
        %v5198 = vpop.f32.mrf.mxu0
        %v5199 = vadd.f32 %v5186, %v5198
        %v5200 = vpop.f32.mrf.mxu0
        %5201 = vdwg.mxu0
        %5202 = vmatpush.bf16.msra.mxu0 %v4037
        %5203 = vmatpush.bf16.msra.mxu0 %v4033
        %5204 = vmatpush.bf16.msra.mxu0 %v4029
        %5205 = vmatpush.bf16.msra.mxu0 %v4025
        %5206 = vmatpush.bf16.msra.mxu0 %v4021
        %5207 = vmatpush.bf16.msra.mxu0 %v4017
        %5208 = vmatpush.bf16.msra.mxu0 %v4013
        %5209 = vmatpush.bf16.msra.mxu0 %v4009
        %5210 = vmatmul.bf16.gmra.mxu0 %v2376
        %v5211 = vpop.f32.mrf.mxu0
        %v5212 = vadd.f32 %v5199, %v5211
        %v5213 = vpop.f32.mrf.mxu0
        %5214 = vdwg.mxu0
        %5215 = vmatpush.bf16.msra.mxu0 %v4069
        %5216 = vmatpush.bf16.msra.mxu0 %v4065
        %5217 = vmatpush.bf16.msra.mxu0 %v4061
        %5218 = vmatpush.bf16.msra.mxu0 %v4057
        %5219 = vmatpush.bf16.msra.mxu0 %v4053
        %5220 = vmatpush.bf16.msra.mxu0 %v4049
        %5221 = vmatpush.bf16.msra.mxu0 %v4045
        %5222 = vmatpush.bf16.msra.mxu0 %v4041
        %5223 = vmatmul.bf16.gmra.mxu0 %v2377
        %v5224 = vpop.f32.mrf.mxu0
        %v5225 = vadd.f32 %v5212, %v5224
        %v5226 = vpop.f32.mrf.mxu0
        %5227 = vdwg.mxu0
        %5228 = vmatpush.bf16.msra.mxu0 %v4101
        %5229 = vmatpush.bf16.msra.mxu0 %v4097
        %5230 = vmatpush.bf16.msra.mxu0 %v4093
        %5231 = vmatpush.bf16.msra.mxu0 %v4089
        %5232 = vmatpush.bf16.msra.mxu0 %v4085
        %5233 = vmatpush.bf16.msra.mxu0 %v4081
        %5234 = vmatpush.bf16.msra.mxu0 %v4077
        %5235 = vmatpush.bf16.msra.mxu0 %v4073
        %5236 = vmatmul.bf16.gmra.mxu0 %v2378
        %v5237 = vpop.f32.mrf.mxu0
        %v5238 = vadd.f32 %v5225, %v5237
        %v5239 = vpop.f32.mrf.mxu0
        %5240 = vdwg.mxu0
        %5241 = vmatpush.bf16.msra.mxu0 %v4133
        %5242 = vmatpush.bf16.msra.mxu0 %v4129
        %5243 = vmatpush.bf16.msra.mxu0 %v4125
        %5244 = vmatpush.bf16.msra.mxu0 %v4121
        %5245 = vmatpush.bf16.msra.mxu0 %v4117
        %5246 = vmatpush.bf16.msra.mxu0 %v4113
        %5247 = vmatpush.bf16.msra.mxu0 %v4109
        %5248 = vmatpush.bf16.msra.mxu0 %v4105
        %5249 = vmatmul.bf16.gmra.mxu0 %v2379
        %v5250 = vpop.f32.mrf.mxu0
        %v5251 = vadd.f32 %v5238, %v5250
        %v5252 = vpop.f32.mrf.mxu0
        %5253 = vdwg.mxu0
        %5254 = vmatpush.bf16.msra.mxu0 %v4165
        %5255 = vmatpush.bf16.msra.mxu0 %v4161
        %5256 = vmatpush.bf16.msra.mxu0 %v4157
        %5257 = vmatpush.bf16.msra.mxu0 %v4153
        %5258 = vmatpush.bf16.msra.mxu0 %v4149
        %5259 = vmatpush.bf16.msra.mxu0 %v4145
        %5260 = vmatpush.bf16.msra.mxu0 %v4141
        %5261 = vmatpush.bf16.msra.mxu0 %v4137
        %5262 = vmatmul.bf16.gmra.mxu0 %v2380
        %v5263 = vpop.f32.mrf.mxu0
        %v5264 = vadd.f32 %v5251, %v5263
        %v5265 = vpop.f32.mrf.mxu0
        %5266 = vdwg.mxu0
        %5267 = vmatpush.bf16.msra.mxu0 %v4197
        %5268 = vmatpush.bf16.msra.mxu0 %v4193
        %5269 = vmatpush.bf16.msra.mxu0 %v4189
        %5270 = vmatpush.bf16.msra.mxu0 %v4185
        %5271 = vmatpush.bf16.msra.mxu0 %v4181
        %5272 = vmatpush.bf16.msra.mxu0 %v4177
        %5273 = vmatpush.bf16.msra.mxu0 %v4173
        %5274 = vmatpush.bf16.msra.mxu0 %v4169
        %5275 = vmatmul.bf16.gmra.mxu0 %v2381
        %v5276 = vpop.f32.mrf.mxu0
        %v5277 = vadd.f32 %v5264, %v5276
        %v5278 = vpop.f32.mrf.mxu0
        %5279 = vdwg.mxu0
        %5280 = vmatpush.bf16.msra.mxu0 %v4229
        %5281 = vmatpush.bf16.msra.mxu0 %v4225
        %5282 = vmatpush.bf16.msra.mxu0 %v4221
        %5283 = vmatpush.bf16.msra.mxu0 %v4217
        %5284 = vmatpush.bf16.msra.mxu0 %v4213
        %5285 = vmatpush.bf16.msra.mxu0 %v4209
        %5286 = vmatpush.bf16.msra.mxu0 %v4205
        %5287 = vmatpush.bf16.msra.mxu0 %v4201
        %5288 = vmatmul.bf16.gmra.mxu0 %v2384
        %v5289 = vpop.f32.mrf.mxu0
        %v5290 = vadd.f32 %v5277, %v5289
        %v5291 = vpop.f32.mrf.mxu0
        %5292 = vdwg.mxu0
        %5293 = vmatpush.bf16.msra.mxu0 %v4261
        %5294 = vmatpush.bf16.msra.mxu0 %v4257
        %5295 = vmatpush.bf16.msra.mxu0 %v4253
        %5296 = vmatpush.bf16.msra.mxu0 %v4249
        %5297 = vmatpush.bf16.msra.mxu0 %v4245
        %5298 = vmatpush.bf16.msra.mxu0 %v4241
        %5299 = vmatpush.bf16.msra.mxu0 %v4237
        %5300 = vmatpush.bf16.msra.mxu0 %v4233
        %5301 = vmatmul.bf16.gmra.mxu0 %v2385
        %v5302 = vpop.f32.mrf.mxu0
        %v5303 = vadd.f32 %v5290, %v5302
        %v5304 = vpop.f32.mrf.mxu0
        %5305 = vdwg.mxu0
        %5306 = vmatpush.bf16.msra.mxu0 %v4293
        %5307 = vmatpush.bf16.msra.mxu0 %v4289
        %5308 = vmatpush.bf16.msra.mxu0 %v4285
        %5309 = vmatpush.bf16.msra.mxu0 %v4281
        %5310 = vmatpush.bf16.msra.mxu0 %v4277
        %5311 = vmatpush.bf16.msra.mxu0 %v4273
        %5312 = vmatpush.bf16.msra.mxu0 %v4269
        %5313 = vmatpush.bf16.msra.mxu0 %v4265
        %5314 = vmatmul.bf16.gmra.mxu0 %v2386
        %v5315 = vpop.f32.mrf.mxu0
        %v5316 = vadd.f32 %v5303, %v5315
        %v5317 = vpop.f32.mrf.mxu0
        %5318 = vdwg.mxu0
        %5319 = vmatpush.bf16.msra.mxu0 %v4325
        %5320 = vmatpush.bf16.msra.mxu0 %v4321
        %5321 = vmatpush.bf16.msra.mxu0 %v4317
        %5322 = vmatpush.bf16.msra.mxu0 %v4313
        %5323 = vmatpush.bf16.msra.mxu0 %v4309
        %5324 = vmatpush.bf16.msra.mxu0 %v4305
        %5325 = vmatpush.bf16.msra.mxu0 %v4301
        %5326 = vmatpush.bf16.msra.mxu0 %v4297
        %5327 = vmatmul.bf16.gmra.mxu0 %v2387
        %v5328 = vpop.f32.mrf.mxu0
        %v5329 = vadd.f32 %v5316, %v5328
        %v5330 = vpop.f32.mrf.mxu0
        %5331 = vdwg.mxu0
        %5332 = vmatpush.bf16.msra.mxu0 %v4357
        %5333 = vmatpush.bf16.msra.mxu0 %v4353
        %5334 = vmatpush.bf16.msra.mxu0 %v4349
        %5335 = vmatpush.bf16.msra.mxu0 %v4345
        %5336 = vmatpush.bf16.msra.mxu0 %v4341
        %5337 = vmatpush.bf16.msra.mxu0 %v4337
        %5338 = vmatpush.bf16.msra.mxu0 %v4333
        %5339 = vmatpush.bf16.msra.mxu0 %v4329
        %5340 = vmatmul.bf16.gmra.mxu0 %v2388
        %v5341 = vpop.f32.mrf.mxu0
        %v5342 = vadd.f32 %v5329, %v5341
        %v5343 = vpop.f32.mrf.mxu0
        %5344 = vdwg.mxu0
        %5345 = vmatpush.bf16.msra.mxu0 %v4389
        %5346 = vmatpush.bf16.msra.mxu0 %v4385
        %5347 = vmatpush.bf16.msra.mxu0 %v4381
        %5348 = vmatpush.bf16.msra.mxu0 %v4377
        %5349 = vmatpush.bf16.msra.mxu0 %v4373
        %5350 = vmatpush.bf16.msra.mxu0 %v4369
        %5351 = vmatpush.bf16.msra.mxu0 %v4365
        %5352 = vmatpush.bf16.msra.mxu0 %v4361
        %5353 = vmatmul.bf16.gmra.mxu0 %v2389
        %v5354 = vpop.f32.mrf.mxu0
        %v5355 = vadd.f32 %v5342, %v5354
        %v5356 = vpop.f32.mrf.mxu0
        %5357 = vdwg.mxu0
        %5358 = vmatpush.bf16.msra.mxu0 %v4421
        %5359 = vmatpush.bf16.msra.mxu0 %v4417
        %5360 = vmatpush.bf16.msra.mxu0 %v4413
        %5361 = vmatpush.bf16.msra.mxu0 %v4409
        %5362 = vmatpush.bf16.msra.mxu0 %v4405
        %5363 = vmatpush.bf16.msra.mxu0 %v4401
        %5364 = vmatpush.bf16.msra.mxu0 %v4397
        %5365 = vmatpush.bf16.msra.mxu0 %v4393
        %5366 = vmatmul.bf16.gmra.mxu0 %v2390
        %v5367 = vpop.f32.mrf.mxu0
        %v5368 = vadd.f32 %v5355, %v5367
        %v5369 = vpop.f32.mrf.mxu0
        %5370 = vdwg.mxu0
        %5371 = vmatpush.bf16.msra.mxu0 %v4453
        %5372 = vmatpush.bf16.msra.mxu0 %v4449
        %5373 = vmatpush.bf16.msra.mxu0 %v4445
        %5374 = vmatpush.bf16.msra.mxu0 %v4441
        %5375 = vmatpush.bf16.msra.mxu0 %v4437
        %5376 = vmatpush.bf16.msra.mxu0 %v4433
        %5377 = vmatpush.bf16.msra.mxu0 %v4429
        %5378 = vmatpush.bf16.msra.mxu0 %v4425
        %5379 = vmatmul.bf16.gmra.mxu0 %v2391
        %v5380 = vpop.f32.mrf.mxu0
        %v5381 = vadd.f32 %v5368, %v5380
        %v5382 = vpop.f32.mrf.mxu0
        %5383 = vdwg.mxu0
        %5384 = vmatpush.bf16.msra.mxu0 %v3974
        %5385 = vmatpush.bf16.msra.mxu0 %v3970
        %5386 = vmatpush.bf16.msra.mxu0 %v3966
        %5387 = vmatpush.bf16.msra.mxu0 %v3962
        %5388 = vmatpush.bf16.msra.mxu0 %v3958
        %5389 = vmatpush.bf16.msra.mxu0 %v3954
        %5390 = vmatpush.bf16.msra.mxu0 %v3950
        %5391 = vmatpush.bf16.msra.mxu0 %v3946
        %5392 = vmatmul.bf16.gmra.mxu0 %v2374
        %v5393 = vpop.f32.mrf.mxu0
        %v5394 = vadd.f32 %v2366, %v5393
        %v5395 = vpop.f32.mrf.mxu0
        %5396 = vdwg.mxu0
        %5397 = vmatpush.bf16.msra.mxu0 %v4006
        %5398 = vmatpush.bf16.msra.mxu0 %v4002
        %5399 = vmatpush.bf16.msra.mxu0 %v3998
        %5400 = vmatpush.bf16.msra.mxu0 %v3994
        %5401 = vmatpush.bf16.msra.mxu0 %v3990
        %5402 = vmatpush.bf16.msra.mxu0 %v3986
        %5403 = vmatpush.bf16.msra.mxu0 %v3982
        %5404 = vmatpush.bf16.msra.mxu0 %v3978
        %5405 = vmatmul.bf16.gmra.mxu0 %v2375
        %v5406 = vpop.f32.mrf.mxu0
        %v5407 = vadd.f32 %v5394, %v5406
        %v5408 = vpop.f32.mrf.mxu0
        %5409 = vdwg.mxu0
        %5410 = vmatpush.bf16.msra.mxu0 %v4038
        %5411 = vmatpush.bf16.msra.mxu0 %v4034
        %5412 = vmatpush.bf16.msra.mxu0 %v4030
        %5413 = vmatpush.bf16.msra.mxu0 %v4026
        %5414 = vmatpush.bf16.msra.mxu0 %v4022
        %5415 = vmatpush.bf16.msra.mxu0 %v4018
        %5416 = vmatpush.bf16.msra.mxu0 %v4014
        %5417 = vmatpush.bf16.msra.mxu0 %v4010
        %5418 = vmatmul.bf16.gmra.mxu0 %v2376
        %v5419 = vpop.f32.mrf.mxu0
        %v5420 = vadd.f32 %v5407, %v5419
        %v5421 = vpop.f32.mrf.mxu0
        %5422 = vdwg.mxu0
        %5423 = vmatpush.bf16.msra.mxu0 %v4070
        %5424 = vmatpush.bf16.msra.mxu0 %v4066
        %5425 = vmatpush.bf16.msra.mxu0 %v4062
        %5426 = vmatpush.bf16.msra.mxu0 %v4058
        %5427 = vmatpush.bf16.msra.mxu0 %v4054
        %5428 = vmatpush.bf16.msra.mxu0 %v4050
        %5429 = vmatpush.bf16.msra.mxu0 %v4046
        %5430 = vmatpush.bf16.msra.mxu0 %v4042
        %5431 = vmatmul.bf16.gmra.mxu0 %v2377
        %v5432 = vpop.f32.mrf.mxu0
        %v5433 = vadd.f32 %v5420, %v5432
        %v5434 = vpop.f32.mrf.mxu0
        %5435 = vdwg.mxu0
        %5436 = vmatpush.bf16.msra.mxu0 %v4102
        %5437 = vmatpush.bf16.msra.mxu0 %v4098
        %5438 = vmatpush.bf16.msra.mxu0 %v4094
        %5439 = vmatpush.bf16.msra.mxu0 %v4090
        %5440 = vmatpush.bf16.msra.mxu0 %v4086
        %5441 = vmatpush.bf16.msra.mxu0 %v4082
        %5442 = vmatpush.bf16.msra.mxu0 %v4078
        %5443 = vmatpush.bf16.msra.mxu0 %v4074
        %5444 = vmatmul.bf16.gmra.mxu0 %v2378
        %v5445 = vpop.f32.mrf.mxu0
        %v5446 = vadd.f32 %v5433, %v5445
        %v5447 = vpop.f32.mrf.mxu0
        %5448 = vdwg.mxu0
        %5449 = vmatpush.bf16.msra.mxu0 %v4134
        %5450 = vmatpush.bf16.msra.mxu0 %v4130
        %5451 = vmatpush.bf16.msra.mxu0 %v4126
        %5452 = vmatpush.bf16.msra.mxu0 %v4122
        %5453 = vmatpush.bf16.msra.mxu0 %v4118
        %5454 = vmatpush.bf16.msra.mxu0 %v4114
        %5455 = vmatpush.bf16.msra.mxu0 %v4110
        %5456 = vmatpush.bf16.msra.mxu0 %v4106
        %5457 = vmatmul.bf16.gmra.mxu0 %v2379
        %v5458 = vpop.f32.mrf.mxu0
        %v5459 = vadd.f32 %v5446, %v5458
        %v5460 = vpop.f32.mrf.mxu0
        %5461 = vdwg.mxu0
        %5462 = vmatpush.bf16.msra.mxu0 %v4166
        %5463 = vmatpush.bf16.msra.mxu0 %v4162
        %5464 = vmatpush.bf16.msra.mxu0 %v4158
        %5465 = vmatpush.bf16.msra.mxu0 %v4154
        %5466 = vmatpush.bf16.msra.mxu0 %v4150
        %5467 = vmatpush.bf16.msra.mxu0 %v4146
        %5468 = vmatpush.bf16.msra.mxu0 %v4142
        %5469 = vmatpush.bf16.msra.mxu0 %v4138
        %5470 = vmatmul.bf16.gmra.mxu0 %v2380
        %v5471 = vpop.f32.mrf.mxu0
        %v5472 = vadd.f32 %v5459, %v5471
        %v5473 = vpop.f32.mrf.mxu0
        %5474 = vdwg.mxu0
        %5475 = vmatpush.bf16.msra.mxu0 %v4198
        %5476 = vmatpush.bf16.msra.mxu0 %v4194
        %5477 = vmatpush.bf16.msra.mxu0 %v4190
        %5478 = vmatpush.bf16.msra.mxu0 %v4186
        %5479 = vmatpush.bf16.msra.mxu0 %v4182
        %5480 = vmatpush.bf16.msra.mxu0 %v4178
        %5481 = vmatpush.bf16.msra.mxu0 %v4174
        %5482 = vmatpush.bf16.msra.mxu0 %v4170
        %5483 = vmatmul.bf16.gmra.mxu0 %v2381
        %v5484 = vpop.f32.mrf.mxu0
        %v5485 = vadd.f32 %v5472, %v5484
        %v5486 = vpop.f32.mrf.mxu0
        %5487 = vdwg.mxu0
        %5488 = vmatpush.bf16.msra.mxu0 %v4230
        %5489 = vmatpush.bf16.msra.mxu0 %v4226
        %5490 = vmatpush.bf16.msra.mxu0 %v4222
        %5491 = vmatpush.bf16.msra.mxu0 %v4218
        %5492 = vmatpush.bf16.msra.mxu0 %v4214
        %5493 = vmatpush.bf16.msra.mxu0 %v4210
        %5494 = vmatpush.bf16.msra.mxu0 %v4206
        %5495 = vmatpush.bf16.msra.mxu0 %v4202
        %5496 = vmatmul.bf16.gmra.mxu0 %v2384
        %v5497 = vpop.f32.mrf.mxu0
        %v5498 = vadd.f32 %v5485, %v5497
        %v5499 = vpop.f32.mrf.mxu0
        %5500 = vdwg.mxu0
        %5501 = vmatpush.bf16.msra.mxu0 %v4262
        %5502 = vmatpush.bf16.msra.mxu0 %v4258
        %5503 = vmatpush.bf16.msra.mxu0 %v4254
        %5504 = vmatpush.bf16.msra.mxu0 %v4250
        %5505 = vmatpush.bf16.msra.mxu0 %v4246
        %5506 = vmatpush.bf16.msra.mxu0 %v4242
        %5507 = vmatpush.bf16.msra.mxu0 %v4238
        %5508 = vmatpush.bf16.msra.mxu0 %v4234
        %5509 = vmatmul.bf16.gmra.mxu0 %v2385
        %v5510 = vpop.f32.mrf.mxu0
        %v5511 = vadd.f32 %v5498, %v5510
        %v5512 = vpop.f32.mrf.mxu0
        %5513 = vdwg.mxu0
        %5514 = vmatpush.bf16.msra.mxu0 %v4294
        %5515 = vmatpush.bf16.msra.mxu0 %v4290
        %5516 = vmatpush.bf16.msra.mxu0 %v4286
        %5517 = vmatpush.bf16.msra.mxu0 %v4282
        %5518 = vmatpush.bf16.msra.mxu0 %v4278
        %5519 = vmatpush.bf16.msra.mxu0 %v4274
        %5520 = vmatpush.bf16.msra.mxu0 %v4270
        %5521 = vmatpush.bf16.msra.mxu0 %v4266
        %5522 = vmatmul.bf16.gmra.mxu0 %v2386
        %v5523 = vpop.f32.mrf.mxu0
        %v5524 = vadd.f32 %v5511, %v5523
        %v5525 = vpop.f32.mrf.mxu0
        %5526 = vdwg.mxu0
        %5527 = vmatpush.bf16.msra.mxu0 %v4326
        %5528 = vmatpush.bf16.msra.mxu0 %v4322
        %5529 = vmatpush.bf16.msra.mxu0 %v4318
        %5530 = vmatpush.bf16.msra.mxu0 %v4314
        %5531 = vmatpush.bf16.msra.mxu0 %v4310
        %5532 = vmatpush.bf16.msra.mxu0 %v4306
        %5533 = vmatpush.bf16.msra.mxu0 %v4302
        %5534 = vmatpush.bf16.msra.mxu0 %v4298
        %5535 = vmatmul.bf16.gmra.mxu0 %v2387
        %v5536 = vpop.f32.mrf.mxu0
        %v5537 = vadd.f32 %v5524, %v5536
        %v5538 = vpop.f32.mrf.mxu0
        %5539 = vdwg.mxu0
        %5540 = vmatpush.bf16.msra.mxu0 %v4358
        %5541 = vmatpush.bf16.msra.mxu0 %v4354
        %5542 = vmatpush.bf16.msra.mxu0 %v4350
        %5543 = vmatpush.bf16.msra.mxu0 %v4346
        %5544 = vmatpush.bf16.msra.mxu0 %v4342
        %5545 = vmatpush.bf16.msra.mxu0 %v4338
        %5546 = vmatpush.bf16.msra.mxu0 %v4334
        %5547 = vmatpush.bf16.msra.mxu0 %v4330
        %5548 = vmatmul.bf16.gmra.mxu0 %v2388
        %v5549 = vpop.f32.mrf.mxu0
        %v5550 = vadd.f32 %v5537, %v5549
        %v5551 = vpop.f32.mrf.mxu0
        %5552 = vdwg.mxu0
        %5553 = vmatpush.bf16.msra.mxu0 %v4390
        %5554 = vmatpush.bf16.msra.mxu0 %v4386
        %5555 = vmatpush.bf16.msra.mxu0 %v4382
        %5556 = vmatpush.bf16.msra.mxu0 %v4378
        %5557 = vmatpush.bf16.msra.mxu0 %v4374
        %5558 = vmatpush.bf16.msra.mxu0 %v4370
        %5559 = vmatpush.bf16.msra.mxu0 %v4366
        %5560 = vmatpush.bf16.msra.mxu0 %v4362
        %5561 = vmatmul.bf16.gmra.mxu0 %v2389
        %v5562 = vpop.f32.mrf.mxu0
        %v5563 = vadd.f32 %v5550, %v5562
        %v5564 = vpop.f32.mrf.mxu0
        %5565 = vdwg.mxu0
        %5566 = vmatpush.bf16.msra.mxu0 %v4422
        %5567 = vmatpush.bf16.msra.mxu0 %v4418
        %5568 = vmatpush.bf16.msra.mxu0 %v4414
        %5569 = vmatpush.bf16.msra.mxu0 %v4410
        %5570 = vmatpush.bf16.msra.mxu0 %v4406
        %5571 = vmatpush.bf16.msra.mxu0 %v4402
        %5572 = vmatpush.bf16.msra.mxu0 %v4398
        %5573 = vmatpush.bf16.msra.mxu0 %v4394
        %5574 = vmatmul.bf16.gmra.mxu0 %v2390
        %v5575 = vpop.f32.mrf.mxu0
        %v5576 = vadd.f32 %v5563, %v5575
        %v5577 = vpop.f32.mrf.mxu0
        %5578 = vdwg.mxu0
        %5579 = vmatpush.bf16.msra.mxu0 %v4454
        %5580 = vmatpush.bf16.msra.mxu0 %v4450
        %5581 = vmatpush.bf16.msra.mxu0 %v4446
        %5582 = vmatpush.bf16.msra.mxu0 %v4442
        %5583 = vmatpush.bf16.msra.mxu0 %v4438
        %5584 = vmatpush.bf16.msra.mxu0 %v4434
        %5585 = vmatpush.bf16.msra.mxu0 %v4430
        %5586 = vmatpush.bf16.msra.mxu0 %v4426
        %5587 = vmatmul.bf16.gmra.mxu0 %v2391
        %v5588 = vpop.f32.mrf.mxu0
        %v5589 = vadd.f32 %v5576, %v5588
        %v5590 = vpop.f32.mrf.mxu0
        %5591 = vdwg.mxu0
        %5592 = vmatpush.bf16.msra.mxu0 %v3975
        %5593 = vmatpush.bf16.msra.mxu0 %v3971
        %5594 = vmatpush.bf16.msra.mxu0 %v3967
        %5595 = vmatpush.bf16.msra.mxu0 %v3963
        %5596 = vmatpush.bf16.msra.mxu0 %v3959
        %5597 = vmatpush.bf16.msra.mxu0 %v3955
        %5598 = vmatpush.bf16.msra.mxu0 %v3951
        %5599 = vmatpush.bf16.msra.mxu0 %v3947
        %5600 = vmatmul.bf16.gmra.mxu0 %v2374
        %v5601 = vpop.f32.mrf.mxu0
        %v5602 = vadd.f32 %v2367, %v5601
        %v5603 = vpop.f32.mrf.mxu0
        %5604 = vdwg.mxu0
        %5605 = vmatpush.bf16.msra.mxu0 %v4007
        %5606 = vmatpush.bf16.msra.mxu0 %v4003
        %5607 = vmatpush.bf16.msra.mxu0 %v3999
        %5608 = vmatpush.bf16.msra.mxu0 %v3995
        %5609 = vmatpush.bf16.msra.mxu0 %v3991
        %5610 = vmatpush.bf16.msra.mxu0 %v3987
        %5611 = vmatpush.bf16.msra.mxu0 %v3983
        %5612 = vmatpush.bf16.msra.mxu0 %v3979
        %5613 = vmatmul.bf16.gmra.mxu0 %v2375
        %v5614 = vpop.f32.mrf.mxu0
        %v5615 = vadd.f32 %v5602, %v5614
        %v5616 = vpop.f32.mrf.mxu0
        %5617 = vdwg.mxu0
        %5618 = vmatpush.bf16.msra.mxu0 %v4039
        %5619 = vmatpush.bf16.msra.mxu0 %v4035
        %5620 = vmatpush.bf16.msra.mxu0 %v4031
        %5621 = vmatpush.bf16.msra.mxu0 %v4027
        %5622 = vmatpush.bf16.msra.mxu0 %v4023
        %5623 = vmatpush.bf16.msra.mxu0 %v4019
        %5624 = vmatpush.bf16.msra.mxu0 %v4015
        %5625 = vmatpush.bf16.msra.mxu0 %v4011
        %5626 = vmatmul.bf16.gmra.mxu0 %v2376
        %v5627 = vpop.f32.mrf.mxu0
        %v5628 = vadd.f32 %v5615, %v5627
        %v5629 = vpop.f32.mrf.mxu0
        %5630 = vdwg.mxu0
        %5631 = vmatpush.bf16.msra.mxu0 %v4071
        %5632 = vmatpush.bf16.msra.mxu0 %v4067
        %5633 = vmatpush.bf16.msra.mxu0 %v4063
        %5634 = vmatpush.bf16.msra.mxu0 %v4059
        %5635 = vmatpush.bf16.msra.mxu0 %v4055
        %5636 = vmatpush.bf16.msra.mxu0 %v4051
        %5637 = vmatpush.bf16.msra.mxu0 %v4047
        %5638 = vmatpush.bf16.msra.mxu0 %v4043
        %5639 = vmatmul.bf16.gmra.mxu0 %v2377
        %v5640 = vpop.f32.mrf.mxu0
        %v5641 = vadd.f32 %v5628, %v5640
        %v5642 = vpop.f32.mrf.mxu0
        %5643 = vdwg.mxu0
        %5644 = vmatpush.bf16.msra.mxu0 %v4103
        %5645 = vmatpush.bf16.msra.mxu0 %v4099
        %5646 = vmatpush.bf16.msra.mxu0 %v4095
        %5647 = vmatpush.bf16.msra.mxu0 %v4091
        %5648 = vmatpush.bf16.msra.mxu0 %v4087
        %5649 = vmatpush.bf16.msra.mxu0 %v4083
        %5650 = vmatpush.bf16.msra.mxu0 %v4079
        %5651 = vmatpush.bf16.msra.mxu0 %v4075
        %5652 = vmatmul.bf16.gmra.mxu0 %v2378
        %v5653 = vpop.f32.mrf.mxu0
        %v5654 = vadd.f32 %v5641, %v5653
        %v5655 = vpop.f32.mrf.mxu0
        %5656 = vdwg.mxu0
        %5657 = vmatpush.bf16.msra.mxu0 %v4135
        %5658 = vmatpush.bf16.msra.mxu0 %v4131
        %5659 = vmatpush.bf16.msra.mxu0 %v4127
        %5660 = vmatpush.bf16.msra.mxu0 %v4123
        %5661 = vmatpush.bf16.msra.mxu0 %v4119
        %5662 = vmatpush.bf16.msra.mxu0 %v4115
        %5663 = vmatpush.bf16.msra.mxu0 %v4111
        %5664 = vmatpush.bf16.msra.mxu0 %v4107
        %5665 = vmatmul.bf16.gmra.mxu0 %v2379
        %v5666 = vpop.f32.mrf.mxu0
        %v5667 = vadd.f32 %v5654, %v5666
        %v5668 = vpop.f32.mrf.mxu0
        %5669 = vdwg.mxu0
        %5670 = vmatpush.bf16.msra.mxu0 %v4167
        %5671 = vmatpush.bf16.msra.mxu0 %v4163
        %5672 = vmatpush.bf16.msra.mxu0 %v4159
        %5673 = vmatpush.bf16.msra.mxu0 %v4155
        %5674 = vmatpush.bf16.msra.mxu0 %v4151
        %5675 = vmatpush.bf16.msra.mxu0 %v4147
        %5676 = vmatpush.bf16.msra.mxu0 %v4143
        %5677 = vmatpush.bf16.msra.mxu0 %v4139
        %5678 = vmatmul.bf16.gmra.mxu0 %v2380
        %v5679 = vpop.f32.mrf.mxu0
        %v5680 = vadd.f32 %v5667, %v5679
        %v5681 = vpop.f32.mrf.mxu0
        %5682 = vdwg.mxu0
        %5683 = vmatpush.bf16.msra.mxu0 %v4199
        %5684 = vmatpush.bf16.msra.mxu0 %v4195
        %5685 = vmatpush.bf16.msra.mxu0 %v4191
        %5686 = vmatpush.bf16.msra.mxu0 %v4187
        %5687 = vmatpush.bf16.msra.mxu0 %v4183
        %5688 = vmatpush.bf16.msra.mxu0 %v4179
        %5689 = vmatpush.bf16.msra.mxu0 %v4175
        %5690 = vmatpush.bf16.msra.mxu0 %v4171
        %5691 = vmatmul.bf16.gmra.mxu0 %v2381
        %v5692 = vpop.f32.mrf.mxu0
        %v5693 = vadd.f32 %v5680, %v5692
        %v5694 = vpop.f32.mrf.mxu0
        %5695 = vdwg.mxu0
        %5696 = vmatpush.bf16.msra.mxu0 %v4231
        %5697 = vmatpush.bf16.msra.mxu0 %v4227
        %5698 = vmatpush.bf16.msra.mxu0 %v4223
        %5699 = vmatpush.bf16.msra.mxu0 %v4219
        %5700 = vmatpush.bf16.msra.mxu0 %v4215
        %5701 = vmatpush.bf16.msra.mxu0 %v4211
        %5702 = vmatpush.bf16.msra.mxu0 %v4207
        %5703 = vmatpush.bf16.msra.mxu0 %v4203
        %5704 = vmatmul.bf16.gmra.mxu0 %v2384
        %v5705 = vpop.f32.mrf.mxu0
        %v5706 = vadd.f32 %v5693, %v5705
        %v5707 = vpop.f32.mrf.mxu0
        %5708 = vdwg.mxu0
        %5709 = vmatpush.bf16.msra.mxu0 %v4263
        %5710 = vmatpush.bf16.msra.mxu0 %v4259
        %5711 = vmatpush.bf16.msra.mxu0 %v4255
        %5712 = vmatpush.bf16.msra.mxu0 %v4251
        %5713 = vmatpush.bf16.msra.mxu0 %v4247
        %5714 = vmatpush.bf16.msra.mxu0 %v4243
        %5715 = vmatpush.bf16.msra.mxu0 %v4239
        %5716 = vmatpush.bf16.msra.mxu0 %v4235
        %5717 = vmatmul.bf16.gmra.mxu0 %v2385
        %v5718 = vpop.f32.mrf.mxu0
        %v5719 = vadd.f32 %v5706, %v5718
        %v5720 = vpop.f32.mrf.mxu0
        %5721 = vdwg.mxu0
        %5722 = vmatpush.bf16.msra.mxu0 %v4295
        %5723 = vmatpush.bf16.msra.mxu0 %v4291
        %5724 = vmatpush.bf16.msra.mxu0 %v4287
        %5725 = vmatpush.bf16.msra.mxu0 %v4283
        %5726 = vmatpush.bf16.msra.mxu0 %v4279
        %5727 = vmatpush.bf16.msra.mxu0 %v4275
        %5728 = vmatpush.bf16.msra.mxu0 %v4271
        %5729 = vmatpush.bf16.msra.mxu0 %v4267
        %5730 = vmatmul.bf16.gmra.mxu0 %v2386
        %v5731 = vpop.f32.mrf.mxu0
        %v5732 = vadd.f32 %v5719, %v5731
        %v5733 = vpop.f32.mrf.mxu0
        %5734 = vdwg.mxu0
        %5735 = vmatpush.bf16.msra.mxu0 %v4327
        %5736 = vmatpush.bf16.msra.mxu0 %v4323
        %5737 = vmatpush.bf16.msra.mxu0 %v4319
        %5738 = vmatpush.bf16.msra.mxu0 %v4315
        %5739 = vmatpush.bf16.msra.mxu0 %v4311
        %5740 = vmatpush.bf16.msra.mxu0 %v4307
        %5741 = vmatpush.bf16.msra.mxu0 %v4303
        %5742 = vmatpush.bf16.msra.mxu0 %v4299
        %5743 = vmatmul.bf16.gmra.mxu0 %v2387
        %v5744 = vpop.f32.mrf.mxu0
        %v5745 = vadd.f32 %v5732, %v5744
        %v5746 = vpop.f32.mrf.mxu0
        %5747 = vdwg.mxu0
        %5748 = vmatpush.bf16.msra.mxu0 %v4359
        %5749 = vmatpush.bf16.msra.mxu0 %v4355
        %5750 = vmatpush.bf16.msra.mxu0 %v4351
        %5751 = vmatpush.bf16.msra.mxu0 %v4347
        %5752 = vmatpush.bf16.msra.mxu0 %v4343
        %5753 = vmatpush.bf16.msra.mxu0 %v4339
        %5754 = vmatpush.bf16.msra.mxu0 %v4335
        %5755 = vmatpush.bf16.msra.mxu0 %v4331
        %5756 = vmatmul.bf16.gmra.mxu0 %v2388
        %v5757 = vpop.f32.mrf.mxu0
        %v5758 = vadd.f32 %v5745, %v5757
        %v5759 = vpop.f32.mrf.mxu0
        %5760 = vdwg.mxu0
        %5761 = vmatpush.bf16.msra.mxu0 %v4391
        %5762 = vmatpush.bf16.msra.mxu0 %v4387
        %5763 = vmatpush.bf16.msra.mxu0 %v4383
        %5764 = vmatpush.bf16.msra.mxu0 %v4379
        %5765 = vmatpush.bf16.msra.mxu0 %v4375
        %5766 = vmatpush.bf16.msra.mxu0 %v4371
        %5767 = vmatpush.bf16.msra.mxu0 %v4367
        %5768 = vmatpush.bf16.msra.mxu0 %v4363
        %5769 = vmatmul.bf16.gmra.mxu0 %v2389
        %v5770 = vpop.f32.mrf.mxu0
        %v5771 = vadd.f32 %v5758, %v5770
        %v5772 = vpop.f32.mrf.mxu0
        %5773 = vdwg.mxu0
        %5774 = vmatpush.bf16.msra.mxu0 %v4423
        %5775 = vmatpush.bf16.msra.mxu0 %v4419
        %5776 = vmatpush.bf16.msra.mxu0 %v4415
        %5777 = vmatpush.bf16.msra.mxu0 %v4411
        %5778 = vmatpush.bf16.msra.mxu0 %v4407
        %5779 = vmatpush.bf16.msra.mxu0 %v4403
        %5780 = vmatpush.bf16.msra.mxu0 %v4399
        %5781 = vmatpush.bf16.msra.mxu0 %v4395
        %5782 = vmatmul.bf16.gmra.mxu0 %v2390
        %v5783 = vpop.f32.mrf.mxu0
        %v5784 = vadd.f32 %v5771, %v5783
        %v5785 = vpop.f32.mrf.mxu0
        %5786 = vdwg.mxu0
        %5787 = vmatpush.bf16.msra.mxu0 %v4455
        %5788 = vmatpush.bf16.msra.mxu0 %v4451
        %5789 = vmatpush.bf16.msra.mxu0 %v4447
        %5790 = vmatpush.bf16.msra.mxu0 %v4443
        %5791 = vmatpush.bf16.msra.mxu0 %v4439
        %5792 = vmatpush.bf16.msra.mxu0 %v4435
        %5793 = vmatpush.bf16.msra.mxu0 %v4431
        %5794 = vmatpush.bf16.msra.mxu0 %v4427
        %5795 = vmatmul.bf16.gmra.mxu0 %v2391
        %v5796 = vpop.f32.mrf.mxu0
        %v5797 = vadd.f32 %v5784, %v5796
        %v5798 = vpop.f32.mrf.mxu0
        %5799 = vdwg.mxu0
        %v5800 = vld [vmem:[#allocation2] sm:$0x3]
        %v5801 = vpack.c.bf16 %v5173, %v5173
        %v5802 = vpack.c.bf16 %v5381, %v5381
        %v5803 = vpack.c.bf16 %v5589, %v5589
        %v5804 = vpack.c.bf16 %v5797, %v5797
        %v5805 = vld [vmem:[%s1841] sm:$0xf]
        %v5806 = vld [vmem:[%s1841 + $0x4] sm:$0xf]
        %v5807 = vld [vmem:[%s1841 + $0x8] sm:$0xf]
        %v5808 = vld [vmem:[%s1841 + $0xc] sm:$0xf]
        %v5809 = vld [vmem:[%s1841 + $0x10] sm:$0xf]
        %v5810 = vld [vmem:[%s1841 + $0x14] sm:$0xf]
        %v5811 = vld [vmem:[%s1841 + $0x18] sm:$0xf]
        %v5812 = vld [vmem:[%s1841 + $0x1c] sm:$0xf]
        %v5813 = vld [vmem:[%s1841 + $0x20] sm:$0xf]
        %v5814 = vld [vmem:[%s1841 + $0x24] sm:$0xf]
        %v5815 = vld [vmem:[%s1841 + $0x28] sm:$0xf]
        %v5816 = vld [vmem:[%s1841 + $0x2c] sm:$0xf]
        %v5817 = vld [vmem:[%s1841 + $0x30] sm:$0xf]
        %v5818 = vld [vmem:[%s1841 + $0x34] sm:$0xf]
        %v5819 = vld [vmem:[%s1841 + $0x38] sm:$0xf]
        %v5820 = vld [vmem:[%s1841 + $0x3c] sm:$0xf]
        %v5821 = vld [vmem:[%s1841 + $0x40] sm:$0xf]
        %v5822 = vld [vmem:[%s1841 + $0x44] sm:$0xf]
        %v5823 = vld [vmem:[%s1841 + $0x48] sm:$0xf]
        %v5824 = vld [vmem:[%s1841 + $0x4c] sm:$0xf]
        %v5825 = vld [vmem:[%s1841 + $0x50] sm:$0xf]
        %v5826 = vld [vmem:[%s1841 + $0x54] sm:$0xf]
        %v5827 = vld [vmem:[%s1841 + $0x58] sm:$0xf]
        %v5828 = vld [vmem:[%s1841 + $0x5c] sm:$0xf]
        %v5829 = vld [vmem:[%s1841 + $0x60] sm:$0xf]
        %v5830 = vld [vmem:[%s1841 + $0x64] sm:$0xf]
        %v5831 = vld [vmem:[%s1841 + $0x68] sm:$0xf]
        %v5832 = vld [vmem:[%s1841 + $0x6c] sm:$0xf]
        %v5833 = vld [vmem:[%s1841 + $0x70] sm:$0xf]
        %v5834 = vld [vmem:[%s1841 + $0x74] sm:$0xf]
        %v5835 = vld [vmem:[%s1841 + $0x78] sm:$0xf]
        %v5836 = vld [vmem:[%s1841 + $0x7c] sm:$0xf]
        %v5837 = vld [vmem:[%s1841 + $0x80] sm:$0xf]
        %v5838 = vld [vmem:[%s1841 + $0x84] sm:$0xf]
        %v5839 = vld [vmem:[%s1841 + $0x88] sm:$0xf]
        %v5840 = vld [vmem:[%s1841 + $0x8c] sm:$0xf]
        %v5841 = vld [vmem:[%s1841 + $0x90] sm:$0xf]
        %v5842 = vld [vmem:[%s1841 + $0x94] sm:$0xf]
        %v5843 = vld [vmem:[%s1841 + $0x98] sm:$0xf]
        %v5844 = vld [vmem:[%s1841 + $0x9c] sm:$0xf]
        %v5845 = vld [vmem:[%s1841 + $0xa0] sm:$0xf]
        %v5846 = vld [vmem:[%s1841 + $0xa4] sm:$0xf]
        %v5847 = vld [vmem:[%s1841 + $0xa8] sm:$0xf]
        %v5848 = vld [vmem:[%s1841 + $0xac] sm:$0xf]
        %v5849 = vld [vmem:[%s1841 + $0xb0] sm:$0xf]
        %v5850 = vld [vmem:[%s1841 + $0xb4] sm:$0xf]
        %v5851 = vld [vmem:[%s1841 + $0xb8] sm:$0xf]
        %v5852 = vld [vmem:[%s1841 + $0xbc] sm:$0xf]
        %v5853 = vld [vmem:[%s1841 + $0xc0] sm:$0xf]
        %v5854 = vld [vmem:[%s1841 + $0xc4] sm:$0xf]
        %v5855 = vld [vmem:[%s1841 + $0xc8] sm:$0xf]
        %v5856 = vld [vmem:[%s1841 + $0xcc] sm:$0xf]
        %v5857 = vld [vmem:[%s1841 + $0xd0] sm:$0xf]
        %v5858 = vld [vmem:[%s1841 + $0xd4] sm:$0xf]
        %v5859 = vld [vmem:[%s1841 + $0xd8] sm:$0xf]
        %v5860 = vld [vmem:[%s1841 + $0xdc] sm:$0xf]
        %v5861 = vld [vmem:[%s1841 + $0xe0] sm:$0xf]
        %v5862 = vld [vmem:[%s1841 + $0xe4] sm:$0xf]
        %v5863 = vld [vmem:[%s1841 + $0xe8] sm:$0xf]
        %v5864 = vld [vmem:[%s1841 + $0xec] sm:$0xf]
        %v5865 = vld [vmem:[%s1841 + $0xf0] sm:$0xf]
        %v5866 = vld [vmem:[%s1841 + $0xf4] sm:$0xf]
        %v5867 = vld [vmem:[%s1841 + $0xf8] sm:$0xf]
        %v5868 = vld [vmem:[%s1841 + $0xfc] sm:$0xf]
        %v5933 = vunpack.c.l.b16 %v5805
        %v5934 = vunpack.c.l.b16 %v5806
        %v5935 = vunpack.c.l.b16 %v5807
        %v5936 = vunpack.c.l.b16 %v5808
        %v5937 = vunpack.c.l.b16 %v5809
        %v5938 = vunpack.c.l.b16 %v5810
        %v5939 = vunpack.c.l.b16 %v5811
        %v5940 = vunpack.c.l.b16 %v5812
        %v5941 = vunpack.c.l.b16 %v5813
        %v5942 = vunpack.c.l.b16 %v5814
        %v5943 = vunpack.c.l.b16 %v5815
        %v5944 = vunpack.c.l.b16 %v5816
        %v5945 = vunpack.c.l.b16 %v5817
        %v5946 = vunpack.c.l.b16 %v5818
        %v5947 = vunpack.c.l.b16 %v5819
        %v5948 = vunpack.c.l.b16 %v5820
        %v5949 = vunpack.c.l.b16 %v5821
        %v5950 = vunpack.c.l.b16 %v5822
        %v5951 = vunpack.c.l.b16 %v5823
        %v5952 = vunpack.c.l.b16 %v5824
        %v5953 = vunpack.c.l.b16 %v5825
        %v5954 = vunpack.c.l.b16 %v5826
        %v5955 = vunpack.c.l.b16 %v5827
        %v5956 = vunpack.c.l.b16 %v5828
        %v5957 = vunpack.c.l.b16 %v5829
        %v5958 = vunpack.c.l.b16 %v5830
        %v5959 = vunpack.c.l.b16 %v5831
        %v5960 = vunpack.c.l.b16 %v5832
        %v5961 = vunpack.c.l.b16 %v5833
        %v5962 = vunpack.c.l.b16 %v5834
        %v5963 = vunpack.c.l.b16 %v5835
        %v5964 = vunpack.c.l.b16 %v5836
        %v5965 = vunpack.c.l.b16 %v5837
        %v5966 = vunpack.c.l.b16 %v5838
        %v5967 = vunpack.c.l.b16 %v5839
        %v5968 = vunpack.c.l.b16 %v5840
        %v5969 = vunpack.c.l.b16 %v5841
        %v5970 = vunpack.c.l.b16 %v5842
        %v5971 = vunpack.c.l.b16 %v5843
        %v5972 = vunpack.c.l.b16 %v5844
        %v5973 = vunpack.c.l.b16 %v5845
        %v5974 = vunpack.c.l.b16 %v5846
        %v5975 = vunpack.c.l.b16 %v5847
        %v5976 = vunpack.c.l.b16 %v5848
        %v5977 = vunpack.c.l.b16 %v5849
        %v5978 = vunpack.c.l.b16 %v5850
        %v5979 = vunpack.c.l.b16 %v5851
        %v5980 = vunpack.c.l.b16 %v5852
        %v5981 = vunpack.c.l.b16 %v5853
        %v5982 = vunpack.c.l.b16 %v5854
        %v5983 = vunpack.c.l.b16 %v5855
        %v5984 = vunpack.c.l.b16 %v5856
        %v5985 = vunpack.c.l.b16 %v5857
        %v5986 = vunpack.c.l.b16 %v5858
        %v5987 = vunpack.c.l.b16 %v5859
        %v5988 = vunpack.c.l.b16 %v5860
        %v5989 = vunpack.c.l.b16 %v5861
        %v5990 = vunpack.c.l.b16 %v5862
        %v5991 = vunpack.c.l.b16 %v5863
        %v5992 = vunpack.c.l.b16 %v5864
        %v5993 = vunpack.c.l.b16 %v5865
        %v5994 = vunpack.c.l.b16 %v5866
        %v5995 = vunpack.c.l.b16 %v5867
        %v5996 = vunpack.c.l.b16 %v5868
        %v5997 = vpack.c.b16 %v5934, %v5933
        %v5998 = vpack.c.b16 %v5936, %v5935
        %v5999 = vpack.c.b16 %v5938, %v5937
        %v6000 = vpack.c.b16 %v5940, %v5939
        %v6001 = vpack.c.b16 %v5942, %v5941
        %v6002 = vpack.c.b16 %v5944, %v5943
        %v6003 = vpack.c.b16 %v5946, %v5945
        %v6004 = vpack.c.b16 %v5948, %v5947
        %v6005 = vpack.c.b16 %v5950, %v5949
        %v6006 = vpack.c.b16 %v5952, %v5951
        %v6007 = vpack.c.b16 %v5954, %v5953
        %v6008 = vpack.c.b16 %v5956, %v5955
        %v6009 = vpack.c.b16 %v5958, %v5957
        %v6010 = vpack.c.b16 %v5960, %v5959
        %v6011 = vpack.c.b16 %v5962, %v5961
        %v6012 = vpack.c.b16 %v5964, %v5963
        %v6013 = vpack.c.b16 %v5966, %v5965
        %v6014 = vpack.c.b16 %v5968, %v5967
        %v6015 = vpack.c.b16 %v5970, %v5969
        %v6016 = vpack.c.b16 %v5972, %v5971
        %v6017 = vpack.c.b16 %v5974, %v5973
        %v6018 = vpack.c.b16 %v5976, %v5975
        %v6019 = vpack.c.b16 %v5978, %v5977
        %v6020 = vpack.c.b16 %v5980, %v5979
        %v6021 = vpack.c.b16 %v5982, %v5981
        %v6022 = vpack.c.b16 %v5984, %v5983
        %v6023 = vpack.c.b16 %v5986, %v5985
        %v6024 = vpack.c.b16 %v5988, %v5987
        %v6025 = vpack.c.b16 %v5990, %v5989
        %v6026 = vpack.c.b16 %v5992, %v5991
        %v6027 = vpack.c.b16 %v5994, %v5993
        %v6028 = vpack.c.b16 %v5996, %v5995
        %6061 = vmatpush.bf16.msra.mxu0 %v6004
        %6062 = vmatpush.bf16.msra.mxu0 %v6003
        %6063 = vmatpush.bf16.msra.mxu0 %v6002
        %6064 = vmatpush.bf16.msra.mxu0 %v6001
        %6065 = vmatpush.bf16.msra.mxu0 %v6000
        %6066 = vmatpush.bf16.msra.mxu0 %v5999
        %6067 = vmatpush.bf16.msra.mxu0 %v5998
        %6068 = vmatpush.bf16.msra.mxu0 %v5997
        %6069 = vmatmul.bf16.gmra.mxu0 %v5801
        %v6070 = vpop.f32.mrf.mxu0
        %v6071 = vadd.f32 0.0, %v6070
        %v6072 = vpop.f32.mrf.mxu0
        %6073 = vdwg.mxu0
        %6074 = vmatpush.bf16.msra.mxu0 %v6012
        %6075 = vmatpush.bf16.msra.mxu0 %v6011
        %6076 = vmatpush.bf16.msra.mxu0 %v6010
        %6077 = vmatpush.bf16.msra.mxu0 %v6009
        %6078 = vmatpush.bf16.msra.mxu0 %v6008
        %6079 = vmatpush.bf16.msra.mxu0 %v6007
        %6080 = vmatpush.bf16.msra.mxu0 %v6006
        %6081 = vmatpush.bf16.msra.mxu0 %v6005
        %6082 = vmatmul.bf16.gmra.mxu0 %v5802
        %v6083 = vpop.f32.mrf.mxu0
        %v6084 = vadd.f32 %v6071, %v6083
        %v6085 = vpop.f32.mrf.mxu0
        %6086 = vdwg.mxu0
        %6087 = vmatpush.bf16.msra.mxu0 %v6020
        %6088 = vmatpush.bf16.msra.mxu0 %v6019
        %6089 = vmatpush.bf16.msra.mxu0 %v6018
        %6090 = vmatpush.bf16.msra.mxu0 %v6017
        %6091 = vmatpush.bf16.msra.mxu0 %v6016
        %6092 = vmatpush.bf16.msra.mxu0 %v6015
        %6093 = vmatpush.bf16.msra.mxu0 %v6014
        %6094 = vmatpush.bf16.msra.mxu0 %v6013
        %6095 = vmatmul.bf16.gmra.mxu0 %v5803
        %v6096 = vpop.f32.mrf.mxu0
        %v6097 = vadd.f32 %v6084, %v6096
        %v6098 = vpop.f32.mrf.mxu0
        %6099 = vdwg.mxu0
        %6100 = vmatpush.bf16.msra.mxu0 %v6028
        %6101 = vmatpush.bf16.msra.mxu0 %v6027
        %6102 = vmatpush.bf16.msra.mxu0 %v6026
        %6103 = vmatpush.bf16.msra.mxu0 %v6025
        %6104 = vmatpush.bf16.msra.mxu0 %v6024
        %6105 = vmatpush.bf16.msra.mxu0 %v6023
        %6106 = vmatpush.bf16.msra.mxu0 %v6022
        %6107 = vmatpush.bf16.msra.mxu0 %v6021
        %6108 = vmatmul.bf16.gmra.mxu0 %v5804
        %v6109 = vpop.f32.mrf.mxu0
        %v6110 = vadd.f32 %v6097, %v6109
        %v6111 = vpop.f32.mrf.mxu0
        %6112 = vdwg.mxu0
        %v6113 = vadd.f32 %v5800, %v6110
        %6114 = vst [vmem:[#allocation2] sm:$0x3] %v6113
        %p6115 = scmp.eq.s32.totalorder %s17, 1
        // Predicated region
        $region82: #{convnet_forward.5} parent=72 // pred_check
          %p6116 = pneg %p6115
        $region83: #{convnet_forward.5} parent=72 // pred_check_branch
          %6118 = sbr.rel (%p6116) target = $region85
        $region84: #{convnet_forward.5} parent=72 // pred_region
          %v6119 = vld [vmem:[#allocation2] sm:$0x3]
          %v6120 = vld [vmem:[%s4] sm:$0x1]
          %v6122 = vperm.slane %v6120, 0
          %v6124 = vadd.f32 %v6119, %v6122
          %6125 = vst [vmem:[#allocation4] sm:$0x3] %v6124
        $region85: #{convnet_forward.5} parent=72 // pred_fallthru
          _
        // Predicated region
        $region86: #{convnet_forward.5} parent=72 // pred_check
          %p6126 = pneg %p150
        $region87: #{convnet_forward.5} parent=72 // pred_check_branch
          %6128 = sbr.rel (%p6126) target = $region89
        $region88: #{convnet_forward.5} parent=72 // pred_region
          %6130 = vsyncadd [#allocation5], 0
          %s6132 = sshll.u32 [#allocation4], 4
          %s6133 = int_to_ptr.vmem [resolvable:$true] %s6132
          %s6134 = sshll.u32 %s5, 4
          %s6135 = int_to_ptr.hbm [resolvable:$true] %s6134
          %6137 = dma.vmem_to_hbm [thread:$0]  %s6133, 32, %s6135, [#allocation5]
        $region89: #{convnet_forward.5} parent=72 // pred_fallthru
          _
        // Predicated region
        $region90: #{convnet_forward.5} parent=72 // pred_check
          %p6138 = pneg %p150
        $region91: #{convnet_forward.5} parent=72 // pred_check_branch
          %6140 = sbr.rel (%p6138) target = $region93
        $region92: #{convnet_forward.5} parent=72 // pred_region
          %6142 = dma.done [#allocation5], 32
        $region93: #{convnet_forward.5} parent=72 // pred_fallthru
          _
      $region73: #{convnet_forward.5} parent=5 // pred_fallthru
        _
      %p6143 = scmp.le.s32.totalorder 2, %s12
      // Predicated region
      $region94: #{convnet_forward.5} parent=5 // pred_check
        %p6144 = pneg %p6143
      $region95: #{convnet_forward.5} parent=5 // pred_check_branch
        %6146 = sbr.rel (%p6144) target = $region97
      $region96: #{convnet_forward.5} parent=5 // pred_region
        %s6147 = ssub.s32 %s12, 2
      $region97: #{convnet_forward.5} parent=5 // pred_fallthru
        _
    $region6: #{convnet_forward.5} parent=1 // loop_footer
      %s16 = sadd.s32 1, %s12
    $region7: #{convnet_forward.5} parent=1 // loop_footer_branch
      %11 = sbr.rel target = $region3
    $region8: #{convnet_forward.5} parent=1 // loop_exit
      _
    %6148 = vsyncpa [#allocation5], 1
    %s6149 = scalar_lea.sflag [#allocation5], 1
    %6150 = vsyncpa %s6149, 1

</llo_original>
